<compile_context>
chip_gen: v7x
topology: tpu7x:2x2x1
jax: 0.10.0
libtpu: 0.0.40
codegen_flags: <defaults>
</compile_context>

<pallas_src>
import math
import functools

import jax
import jax.numpy as jnp
from jax.experimental import pallas as pl
from jax.experimental.pallas import tpu as pltpu

NEG_INF = -1e9     # matches masked_fill(mask, -1e9)
LN_EPS = 1e-5      # PyTorch nn.LayerNorm default


# ------------------------------ fused kernel --------------------------------

def _decoder_kernel(
    # per-batch activations / masks
    x0_ref, eco_ref, tmask_ref, smask_ref,
    # self-attention (per-layer, per-head packed)
    sa_wqkv, sa_bqkv, sa_wo, sa_bo, sa_g, sa_b,
    # encoder-decoder attention
    ca_wqkv, ca_bqkv, ca_wo, ca_bo, ca_g, ca_b,
    # position-wise feed-forward
    ff_w1, ff_b1, ff_w2, ff_b2, ff_g, ff_b,
    # output + resident-activation scratch
    out_ref, x_s,
    *, n_head, d_head,
):
    layer = pl.program_id(1)
    scale = 1.0 / math.sqrt(d_head)

    # Load the embedded input only for the first layer of this batch row;
    # afterwards the activation lives in VMEM scratch across the layer axis.
    @pl.when(layer == 0)
    def _():
        x_s[...] = x0_ref[...]

    x = x_s[...]            # (Lq, D) f32, resident
    enc = eco_ref[...]      # (Lk, D) f32

    def add_layernorm(y, residual, g_ref, b_ref):
        y = y + residual
        mu = jnp.mean(y, axis=-1, keepdims=True)
        var = jnp.mean((y - mu) ** 2, axis=-1, keepdims=True)
        return (y - mu) * jax.lax.rsqrt(var + LN_EPS) * g_ref[...] + b_ref[...]

    def mha(xq, xkv, mask, wqkv_ref, bqkv_ref, wo_ref, bo_ref, g_ref, b_ref):
        # xq: (Lq, D), xkv: (Lk, D), mask: (Lq, Lk) f32 with 1.0 == masked.
        masked = mask > 0.0
        o = None
        for h in range(n_head):                       # trace-time unroll (small H)
            q = jnp.dot(xq, wqkv_ref[h],
                        preferred_element_type=jnp.float32) + bqkv_ref[h]
            k = jnp.dot(xkv, wqkv_ref[n_head + h],
                        preferred_element_type=jnp.float32) + bqkv_ref[n_head + h]
            v = jnp.dot(xkv, wqkv_ref[2 * n_head + h],
                        preferred_element_type=jnp.float32) + bqkv_ref[2 * n_head + h]
            # scores = q @ k^T / sqrt(d_head)
            s = jax.lax.dot_general(q, k, (((1,), (1,)), ((), ())),
                                    preferred_element_type=jnp.float32) * scale
            s = jnp.where(masked, NEG_INF, s)          # exact masked_fill semantics
            s = s - jnp.max(s, axis=-1, keepdims=True)
            p = jnp.exp(s)
            p = p * pl.reciprocal(jnp.sum(p, axis=-1, keepdims=True), approx=True)
            ctx = jnp.dot(p, v, preferred_element_type=jnp.float32)        # (Lq, dh)
            ho = jnp.dot(ctx, wo_ref[h], preferred_element_type=jnp.float32)  # (Lq, D)
            o = ho if o is None else o + ho
        return add_layernorm(o + bo_ref[...], xq, g_ref, b_ref)

    # masked self-attention + add & LN
    x = mha(x, x, tmask_ref[...], sa_wqkv, sa_bqkv, sa_wo, sa_bo, sa_g, sa_b)
    # encoder-decoder attention + add & LN
    x = mha(x, enc, smask_ref[...], ca_wqkv, ca_bqkv, ca_wo, ca_bo, ca_g, ca_b)
    # position-wise FFN + add & LN
    h1 = jnp.maximum(
        jnp.dot(x, ff_w1[...], preferred_element_type=jnp.float32) + ff_b1[...], 0.0)
    o = jnp.dot(h1, ff_w2[...], preferred_element_type=jnp.float32) + ff_b2[...]
    x = add_layernorm(o, x, ff_g, ff_b)

    x_s[...] = x            # carry to the next layer
    out_ref[...] = x        # final layer's write is what lands in HBM


def decoder_pallas(x0, ec_out, tgt_mask, src_mask, packed, n_head):
    """x0: [B, Lt, D]; ec_out: [B, Ls, D]; masks: [B, Lt, L*] f32 (1 = masked)."""
    B, Lt, D = x0.shape
    Ls = ec_out.shape[1]
    N = packed["sa_wqkv"].shape[0]
    dh = D // n_head
    F = packed["ff_w1"].shape[-1]

    _pb3 = lambda b, l: (b, 0, 0)       # per-batch blocks
    _pl3 = lambda b, l: (l, 0, 0)       # per-layer blocks (3-D stacked)
    _pl4 = lambda b, l: (l, 0, 0, 0)    # per-layer blocks (4-D stacked)

    attn_specs = [
        pl.BlockSpec((None, 3 * n_head, D, dh), _pl4),   # wqkv  (q|k|v per head)
        pl.BlockSpec((None, 3 * n_head, 1, dh), _pl4),   # bqkv
        pl.BlockSpec((None, n_head, dh, D), _pl4),       # wo (per-head rows)
        pl.BlockSpec((None, 1, D), _pl3),                # bo
        pl.BlockSpec((None, 1, D), _pl3),                # ln gamma
        pl.BlockSpec((None, 1, D), _pl3),                # ln beta
    ]
    in_specs = [
        pl.BlockSpec((None, Lt, D), _pb3),               # x0
        pl.BlockSpec((None, Ls, D), _pb3),               # ec_out
        pl.BlockSpec((None, Lt, Lt), _pb3),              # tgt_mask
        pl.BlockSpec((None, Lt, Ls), _pb3),              # src_mask
        *attn_specs,                                     # self-attention
        *attn_specs,                                     # cross-attention
        pl.BlockSpec((None, D, F), _pl3),                # ff_w1
        pl.BlockSpec((None, 1, F), _pl3),                # ff_b1
        pl.BlockSpec((None, F, D), _pl3),                # ff_w2
        pl.BlockSpec((None, 1, D), _pl3),                # ff_b2
        pl.BlockSpec((None, 1, D), _pl3),                # ff_g
        pl.BlockSpec((None, 1, D), _pl3),                # ff_b
    ]

    kernel = functools.partial(_decoder_kernel, n_head=n_head, d_head=dh)

    return pl.pallas_call(
        kernel,
        grid=(B, N),
        in_specs=in_specs,
        out_specs=pl.BlockSpec((None, Lt, D), _pb3),
        out_shape=jax.ShapeDtypeStruct((B, Lt, D), jnp.float32),
        scratch_shapes=[pltpu.VMEM((Lt, D), jnp.float32)],     # resident activation
        compiler_params=pltpu.CompilerParams(
            dimension_semantics=("parallel", "arbitrary")),
    )(x0, ec_out, tgt_mask, src_mask,
      packed["sa_wqkv"], packed["sa_bqkv"], packed["sa_wo"], packed["sa_bo"],
      packed["sa_g"], packed["sa_b"],
      packed["ca_wqkv"], packed["ca_bqkv"], packed["ca_wo"], packed["ca_bo"],
      packed["ca_g"], packed["ca_b"],
      packed["ff_w1"], packed["ff_b1"], packed["ff_w2"], packed["ff_b2"],
      packed["ff_g"], packed["ff_b"])


# ------------------------------ JAX glue code --------------------------------

def positional_encoding(L, D):
    pos = jnp.arange(L, dtype=jnp.float32)[:, None]
    i = jnp.arange(0, D, 2, dtype=jnp.float32)
    div = jnp.exp(-i * (math.log(10000.0) / D))
    pe = jnp.zeros((L, D), dtype=jnp.float32)
    pe = pe.at[:, 0::2].set(jnp.sin(pos * div))
    pe = pe.at[:, 1::2].set(jnp.cos(pos * div)[:, : D // 2])   # odd-D safe
    return pe


def get_pad_mask(seq_q, seq_k):
    # [B, Lq, Lk] True where the key token is padding (token id 0)
    B, Lq = seq_q.shape
    Lk = seq_k.shape[1]
    return jnp.broadcast_to((seq_k == 0)[:, None, :], (B, Lq, Lk))


def get_subsequence_mask(seq):
    B, L = seq.shape
    tri = jnp.triu(jnp.ones((L, L), dtype=jnp.int32), k=1)
    return jnp.broadcast_to(tri[None], (B, L, L))


def pack_decoder_params(params, n_head):
    """Re-layout per-layer params into layer-stacked, per-head-split arrays the
    fused kernel indexes with the layer grid axis (done once, outside jit)."""
    D = params["emb"].shape[1]
    dh = D // n_head

    def attn_pack(p):
        def w_heads(w):                      # [D, D] -> [H, D, dh]; head h = w[:, h*dh:(h+1)*dh]
            return w.reshape(D, n_head, dh).transpose(1, 0, 2)
        def b_heads(b):                      # [D] -> [H, 1, dh]
            return b.reshape(n_head, 1, dh)
        wqkv = jnp.concatenate([w_heads(p["wq"]), w_heads(p["wk"]), w_heads(p["wv"])], axis=0)
        bqkv = jnp.concatenate([b_heads(p["bq"]), b_heads(p["bk"]), b_heads(p["bv"])], axis=0)
        wo = p["wo"].reshape(n_head, dh, D)  # head h multiplies rows h*dh:(h+1)*dh of wo
        return (wqkv, bqkv, wo, p["bo"].reshape(1, D),
                p["ln_g"].reshape(1, D), p["ln_b"].reshape(1, D))

    def stack(fn):
        cols = [fn(lp) for lp in params["layers"]]
        return [jnp.stack([c[i] for c in cols], axis=0) for i in range(len(cols[0]))]

    d_ff = params["layers"][0]["ffn"]["w1"].shape[1]
    sa = stack(lambda lp: attn_pack(lp["self_attn"]))
    ca = stack(lambda lp: attn_pack(lp["cross_attn"]))
    ff = stack(lambda lp: (lp["ffn"]["w1"], lp["ffn"]["b1"].reshape(1, d_ff),
                           lp["ffn"]["w2"], lp["ffn"]["b2"].reshape(1, D),
                           lp["ffn"]["ln_g"].reshape(1, D), lp["ffn"]["ln_b"].reshape(1, D)))

    packed = {"emb": params["emb"]}
    a_names = ("wqkv", "bqkv", "wo", "bo", "g", "b")
    packed.update({f"sa_{n}": a for n, a in zip(a_names, sa)})
    packed.update({f"ca_{n}": a for n, a in zip(a_names, ca)})
    f_names = ("w1", "b1", "w2", "b2", "g", "b")
    packed.update({f"ff_{n}": a for n, a in zip(f_names, ff)})
    return packed


def decoder_forward(packed, dc_inp, ec_inp, ec_out, *, n_head):
    """dc_inp: [B, Lt] int32 ; ec_inp: [B, Ls] int32 ; ec_out: [B, Ls, D] f32."""
    B, Lt = dc_inp.shape
    D = packed["emb"].shape[1]

    # Embedding lookup + PE stay in XLA (tiny data-dependent gather); dropout p=0 -> id.
    x0 = packed["emb"][dc_inp] + positional_encoding(Lt, D)[None]

    pad = get_pad_mask(dc_inp, dc_inp).astype(jnp.int32)
    sbsq = get_subsequence_mask(dc_inp)
    tgt_mask = ((pad + sbsq) > 0).astype(jnp.float32)     # torch.gt(pad + sbsq, 0)
    src_mask = get_pad_mask(dc_inp, ec_inp).astype(jnp.float32)

    return decoder_pallas(x0.astype(jnp.float32), ec_out.astype(jnp.float32),
                          tgt_mask, src_mask, packed, n_head)


# --------------------------- deterministic params ---------------------------

def init_params(key, tgt_v_size, d_model, d_ff, N):
    keys = iter(jax.random.split(key, 2 + N * 14))

    def nrm(shape, scale=0.02):
        return scale * jax.random.normal(next(keys), shape, dtype=jnp.float32)

    def attn_params():
        return {
            "wq": nrm((d_model, d_model)), "bq": jnp.zeros((d_model,), jnp.float32),
            "wk": nrm((d_model, d_model)), "bk": jnp.zeros((d_model,), jnp.float32),
            "wv": nrm((d_model, d_model)), "bv": jnp.zeros((d_model,), jnp.float32),
            "wo": nrm((d_model, d_model)), "bo": jnp.zeros((d_model,), jnp.float32),
            "ln_g": jnp.ones((d_model,), jnp.float32),
            "ln_b": jnp.zeros((d_model,), jnp.float32),
        }

    layers = []
    for _ in range(N):
        layers.append({
            "self_attn": attn_params(),
            "cross_attn": attn_params(),
            "ffn": {
                "w1": nrm((d_model, d_ff)), "b1": jnp.zeros((d_ff,), jnp.float32),
                "w2": nrm((d_ff, d_model)), "b2": jnp.zeros((d_model,), jnp.float32),
                "ln_g": jnp.ones((d_model,), jnp.float32),
                "ln_b": jnp.zeros((d_model,), jnp.float32),
            },
        })
    return {"emb": nrm((tgt_v_size, d_model), scale=1.0), "layers": layers}


# ---------------------------------- main -------------------------------------

if __name__ == "__main__":
    # Small, forward-consistent shapes
    tgt_v_size, d_model, d_ff, N, n_head = 50, 32, 64, 2, 4
    B, tgt_len, src_len = 2, 8, 12

    key = jax.random.PRNGKey(0)
    kp, kd, ke, ko = jax.random.split(key, 4)

    params = init_params(kp, tgt_v_size, d_model, d_ff, N)
    packed = pack_decoder_params(params, n_head)   # one-time weight re-layout

    # token 0 acts as padding to exercise pad masks
    dc_inp = jax.random.randint(kd, (B, tgt_len), 1, tgt_v_size, dtype=jnp.int32)
    dc_inp = dc_inp.at[:, -2:].set(0)
    ec_inp = jax.random.randint(ke, (B, src_len), 1, tgt_v_size, dtype=jnp.int32)
    ec_inp = ec_inp.at[:, -3:].set(0)
    ec_out = jax.random.normal(ko, (B, src_len, d_model), dtype=jnp.float32)

    fwd = jax.jit(functools.partial(decoder_forward, n_head=n_head))
    dc_out = jax.block_until_ready(fwd(packed, dc_inp, ec_inp, ec_out))

    assert dc_out.shape == (B, tgt_len, d_model)
    assert jnp.all(jnp.isfinite(dc_out))
    # TODO(synk): exact Embedding/DecoderLayer internals are not given in the
    # source; standard post-LN Transformer decoder-layer semantics are assumed.
    print("KERNEL_OK")
</pallas_src>

<mosaic_0001>
module attributes {stable_mosaic.version = 11 : i64} {
  func.func @_decoder_kernel(%arg0: i32, %arg1: i32, %arg2: memref<1x8x32xf32, #tpu.memory_space<vmem>>, %arg3: memref<1x12x32xf32, #tpu.memory_space<vmem>>, %arg4: memref<1x8x8xf32, #tpu.memory_space<vmem>>, %arg5: memref<1x8x12xf32, #tpu.memory_space<vmem>>, %arg6: memref<1x12x32x8xf32, #tpu.memory_space<vmem>>, %arg7: memref<1x12x1x8xf32, #tpu.memory_space<vmem>>, %arg8: memref<1x4x8x32xf32, #tpu.memory_space<vmem>>, %arg9: memref<1x1x32xf32, #tpu.memory_space<vmem>>, %arg10: memref<1x1x32xf32, #tpu.memory_space<vmem>>, %arg11: memref<1x1x32xf32, #tpu.memory_space<vmem>>, %arg12: memref<1x12x32x8xf32, #tpu.memory_space<vmem>>, %arg13: memref<1x12x1x8xf32, #tpu.memory_space<vmem>>, %arg14: memref<1x4x8x32xf32, #tpu.memory_space<vmem>>, %arg15: memref<1x1x32xf32, #tpu.memory_space<vmem>>, %arg16: memref<1x1x32xf32, #tpu.memory_space<vmem>>, %arg17: memref<1x1x32xf32, #tpu.memory_space<vmem>>, %arg18: memref<1x32x64xf32, #tpu.memory_space<vmem>>, %arg19: memref<1x1x64xf32, #tpu.memory_space<vmem>>, %arg20: memref<1x64x32xf32, #tpu.memory_space<vmem>>, %arg21: memref<1x1x32xf32, #tpu.memory_space<vmem>>, %arg22: memref<1x1x32xf32, #tpu.memory_space<vmem>>, %arg23: memref<1x1x32xf32, #tpu.memory_space<vmem>>, %arg24: memref<1x8x32xf32, #tpu.memory_space<vmem>>, %arg25: memref<8x32xf32, #tpu.memory_space<vmem>>) attributes {dimension_semantics = [#tpu.dimension_semantics<parallel>, #tpu.dimension_semantics<arbitrary>], iteration_bounds = array<i64: 2, 2>, scalar_prefetch = 0 : i64, scratch_operands = 1 : i64, tpu.core_type = #tpu.core_type<tc>, window_params = [{transform_indices = @transform_0, window_bounds = array<i64: 1, 8, 32>}, {transform_indices = @transform_1, window_bounds = array<i64: 1, 12, 32>}, {transform_indices = @transform_2, window_bounds = array<i64: 1, 8, 8>}, {transform_indices = @transform_3, window_bounds = array<i64: 1, 8, 12>}, {transform_indices = @transform_4, window_bounds = array<i64: 1, 12, 32, 8>}, {transform_indices = @transform_5, window_bounds = array<i64: 1, 12, 1, 8>}, {transform_indices = @transform_6, window_bounds = array<i64: 1, 4, 8, 32>}, {transform_indices = @transform_7, window_bounds = array<i64: 1, 1, 32>}, {transform_indices = @transform_8, window_bounds = array<i64: 1, 1, 32>}, {transform_indices = @transform_9, window_bounds = array<i64: 1, 1, 32>}, {transform_indices = @transform_10, window_bounds = array<i64: 1, 12, 32, 8>}, {transform_indices = @transform_11, window_bounds = array<i64: 1, 12, 1, 8>}, {transform_indices = @transform_12, window_bounds = array<i64: 1, 4, 8, 32>}, {transform_indices = @transform_13, window_bounds = array<i64: 1, 1, 32>}, {transform_indices = @transform_14, window_bounds = array<i64: 1, 1, 32>}, {transform_indices = @transform_15, window_bounds = array<i64: 1, 1, 32>}, {transform_indices = @transform_16, window_bounds = array<i64: 1, 32, 64>}, {transform_indices = @transform_17, window_bounds = array<i64: 1, 1, 64>}, {transform_indices = @transform_18, window_bounds = array<i64: 1, 64, 32>}, {transform_indices = @transform_19, window_bounds = array<i64: 1, 1, 32>}, {transform_indices = @transform_20, window_bounds = array<i64: 1, 1, 32>}, {transform_indices = @transform_21, window_bounds = array<i64: 1, 1, 32>}, {transform_indices = @transform_22, window_bounds = array<i64: 1, 8, 32>}]} {
    %c0_i32 = arith.constant 0 : i32
    %0 = arith.cmpi eq, %arg1, %c0_i32 : i32
    %1 = arith.extui %0 : i1 to i32
    %c0_i32_0 = arith.constant 0 : i32
    %2 = arith.cmpi ne, %1, %c0_i32_0 : i32
    scf.if %2 {
      %c0_364 = arith.constant 0 : index
      %c0_365 = arith.constant 0 : index
      %c0_366 = arith.constant 0 : index
      %449 = vector.load %arg2[%c0_364, %c0_365, %c0_366] : memref<1x8x32xf32, #tpu.memory_space<vmem>>, vector<1x8x32xf32>
      %450 = vector.shape_cast %449 : vector<1x8x32xf32> to vector<8x32xf32>
      %c0_367 = arith.constant 0 : index
      %c0_368 = arith.constant 0 : index
      %451 = vector.load %arg25[%c0_367, %c0_368] : memref<8x32xf32, #tpu.memory_space<vmem>>, vector<8x32xf32>
      tpu.vector_store %arg25[%c0_367, %c0_368], %450 {strides = array<i32>} : memref<8x32xf32, #tpu.memory_space<vmem>>, vector<8x32xf32>,
    } else {
    }
    %c0 = arith.constant 0 : index
    %c0_1 = arith.constant 0 : index
    %3 = vector.load %arg25[%c0, %c0_1] : memref<8x32xf32, #tpu.memory_space<vmem>>, vector<8x32xf32>
    %c0_2 = arith.constant 0 : index
    %c0_3 = arith.constant 0 : index
    %c0_4 = arith.constant 0 : index
    %4 = vector.load %arg3[%c0_2, %c0_3, %c0_4] : memref<1x12x32xf32, #tpu.memory_space<vmem>>, vector<1x12x32xf32>
    %5 = vector.shape_cast %4 : vector<1x12x32xf32> to vector<12x32xf32>
    %c0_5 = arith.constant 0 : index
    %c0_6 = arith.constant 0 : index
    %c0_7 = arith.constant 0 : index
    %6 = vector.load %arg4[%c0_5, %c0_6, %c0_7] : memref<1x8x8xf32, #tpu.memory_space<vmem>>, vector<1x8x8xf32>
    %7 = vector.shape_cast %6 : vector<1x8x8xf32> to vector<8x8xf32>
    %cst = arith.constant 0.000000e+00 : f32
    %8 = vector.broadcast %cst : f32 to vector<8x8xf32>
    %9 = arith.cmpf ogt, %7, %8 : vector<8x8xf32>
    %c0_8 = arith.constant 0 : index
    %c0_9 = arith.constant 0 : index
    %c0_10 = arith.constant 0 : index
    %c0_11 = arith.constant 0 : index
    %10 = vector.load %arg6[%c0_8, %c0_9, %c0_10, %c0_11] : memref<1x12x32x8xf32, #tpu.memory_space<vmem>>, vector<1x1x32x8xf32>
    %11 = vector.shape_cast %10 : vector<1x1x32x8xf32> to vector<32x8xf32>
    %cst_12 = arith.constant dense<0.000000e+00> : vector<8x8xf32>
    %12 = tpu.matmul %3, %11, %cst_12 {dimension_numbers = #tpu.dot_dimension_numbers<[1], [0], [0], [1], [0, 0, 1, 1], [], []>} : vector<8x32xf32>, vector<32x8xf32>, vector<8x8xf32> -> vector<8x8xf32>
    %c0_13 = arith.constant 0 : index
    %c0_14 = arith.constant 0 : index
    %c0_15 = arith.constant 0 : index
    %c0_16 = arith.constant 0 : index
    %13 = vector.load %arg7[%c0_13, %c0_14, %c0_15, %c0_16] : memref<1x12x1x8xf32, #tpu.memory_space<vmem>>, vector<1x1x1x8xf32>
    %14 = vector.shape_cast %13 : vector<1x1x1x8xf32> to vector<1x8xf32>
    %15 = vector.broadcast %14 : vector<1x8xf32> to vector<8x8xf32>
    %16 = arith.addf %12, %15 : vector<8x8xf32>
    %c0_17 = arith.constant 0 : index
    %c4 = arith.constant 4 : index
    %c0_18 = arith.constant 0 : index
    %c0_19 = arith.constant 0 : index
    %17 = vector.load %arg6[%c0_17, %c4, %c0_18, %c0_19] : memref<1x12x32x8xf32, #tpu.memory_space<vmem>>, vector<1x1x32x8xf32>
    %18 = vector.shape_cast %17 : vector<1x1x32x8xf32> to vector<32x8xf32>
    %cst_20 = arith.constant dense<0.000000e+00> : vector<8x8xf32>
    %19 = tpu.matmul %3, %18, %cst_20 {dimension_numbers = #tpu.dot_dimension_numbers<[1], [0], [0], [1], [0, 0, 1, 1], [], []>} : vector<8x32xf32>, vector<32x8xf32>, vector<8x8xf32> -> vector<8x8xf32>
    %c0_21 = arith.constant 0 : index
    %c4_22 = arith.constant 4 : index
    %c0_23 = arith.constant 0 : index
    %c0_24 = arith.constant 0 : index
    %20 = vector.load %arg7[%c0_21, %c4_22, %c0_23, %c0_24] : memref<1x12x1x8xf32, #tpu.memory_space<vmem>>, vector<1x1x1x8xf32>
    %21 = vector.shape_cast %20 : vector<1x1x1x8xf32> to vector<1x8xf32>
    %22 = vector.broadcast %21 : vector<1x8xf32> to vector<8x8xf32>
    %23 = arith.addf %19, %22 : vector<8x8xf32>
    %c0_25 = arith.constant 0 : index
    %c8 = arith.constant 8 : index
    %c0_26 = arith.constant 0 : index
    %c0_27 = arith.constant 0 : index
    %24 = vector.load %arg6[%c0_25, %c8, %c0_26, %c0_27] : memref<1x12x32x8xf32, #tpu.memory_space<vmem>>, vector<1x1x32x8xf32>
    %25 = vector.shape_cast %24 : vector<1x1x32x8xf32> to vector<32x8xf32>
    %cst_28 = arith.constant dense<0.000000e+00> : vector<8x8xf32>
    %26 = tpu.matmul %3, %25, %cst_28 {dimension_numbers = #tpu.dot_dimension_numbers<[1], [0], [0], [1], [0, 0, 1, 1], [], []>} : vector<8x32xf32>, vector<32x8xf32>, vector<8x8xf32> -> vector<8x8xf32>
    %c0_29 = arith.constant 0 : index
    %c8_30 = arith.constant 8 : index
    %c0_31 = arith.constant 0 : index
    %c0_32 = arith.constant 0 : index
    %27 = vector.load %arg7[%c0_29, %c8_30, %c0_31, %c0_32] : memref<1x12x1x8xf32, #tpu.memory_space<vmem>>, vector<1x1x1x8xf32>
    %28 = vector.shape_cast %27 : vector<1x1x1x8xf32> to vector<1x8xf32>
    %29 = vector.broadcast %28 : vector<1x8xf32> to vector<8x8xf32>
    %30 = arith.addf %26, %29 : vector<8x8xf32>
    %cst_33 = arith.constant dense<0.000000e+00> : vector<8x8xf32>
    %31 = tpu.matmul %16, %23, %cst_33 {dimension_numbers = #tpu.dot_dimension_numbers<[1], [1], [0], [0], [0, 0, 1, 0], [], []>} : vector<8x8xf32>, vector<8x8xf32>, vector<8x8xf32> -> vector<8x8xf32>
    %cst_34 = arith.constant 0.353553385 : f32
    %32 = vector.broadcast %cst_34 : f32 to vector<8x8xf32>
    %33 = arith.mulf %31, %32 : vector<8x8xf32>
    %cst_35 = arith.constant -1.000000e+09 : f32
    %34 = vector.broadcast %cst_35 : f32 to vector<8x8xf32>
    %35 = arith.select %9, %34, %33 : vector<8x8xi1>, vector<8x8xf32>
    %cst_36 = arith.constant dense<0xFF800000> : vector<8xf32>
    %36 = vector.multi_reduction <maximumf>, %35, %cst_36 [1] : vector<8x8xf32> to vector<8xf32>
    %37 = vector.shape_cast %36 : vector<8xf32> to vector<8x1xf32>
    %38 = vector.broadcast %37 : vector<8x1xf32> to vector<8x8xf32>
    %39 = arith.subf %35, %38 : vector<8x8xf32>
    %40 = math.exp %39 : vector<8x8xf32>
    %cst_37 = arith.constant dense<0.000000e+00> : vector<8xf32>
    %41 = vector.multi_reduction <add>, %40, %cst_37 [1] : vector<8x8xf32> to vector<8xf32>
    %42 = vector.shape_cast %41 : vector<8xf32> to vector<8x1xf32>
    %43 = tpu.reciprocal %42 {approx = true} : vector<8x1xf32> -> vector<8x1xf32>
    %44 = vector.broadcast %43 : vector<8x1xf32> to vector<8x8xf32>
    %45 = arith.mulf %40, %44 : vector<8x8xf32>
    %cst_38 = arith.constant dense<0.000000e+00> : vector<8x8xf32>
    %46 = tpu.matmul %45, %30, %cst_38 {dimension_numbers = #tpu.dot_dimension_numbers<[1], [0], [0], [1], [0, 0, 1, 1], [], []>} : vector<8x8xf32>, vector<8x8xf32>, vector<8x8xf32> -> vector<8x8xf32>
    %c0_39 = arith.constant 0 : index
    %c0_40 = arith.constant 0 : index
    %c0_41 = arith.constant 0 : index
    %c0_42 = arith.constant 0 : index
    %47 = vector.load %arg8[%c0_39, %c0_40, %c0_41, %c0_42] : memref<1x4x8x32xf32, #tpu.memory_space<vmem>>, vector<1x1x8x32xf32>
    %48 = vector.shape_cast %47 : vector<1x1x8x32xf32> to vector<8x32xf32>
    %cst_43 = arith.constant dense<0.000000e+00> : vector<8x32xf32>
    %49 = tpu.matmul %46, %48, %cst_43 {dimension_numbers = #tpu.dot_dimension_numbers<[1], [0], [0], [1], [0, 0, 1, 1], [], []>} : vector<8x8xf32>, vector<8x32xf32>, vector<8x32xf32> -> vector<8x32xf32>
    %c0_44 = arith.constant 0 : index
    %c1 = arith.constant 1 : index
    %c0_45 = arith.constant 0 : index
    %c0_46 = arith.constant 0 : index
    %50 = vector.load %arg6[%c0_44, %c1, %c0_45, %c0_46] : memref<1x12x32x8xf32, #tpu.memory_space<vmem>>, vector<1x1x32x8xf32>
    %51 = vector.shape_cast %50 : vector<1x1x32x8xf32> to vector<32x8xf32>
    %cst_47 = arith.constant dense<0.000000e+00> : vector<8x8xf32>
    %52 = tpu.matmul %3, %51, %cst_47 {dimension_numbers = #tpu.dot_dimension_numbers<[1], [0], [0], [1], [0, 0, 1, 1], [], []>} : vector<8x32xf32>, vector<32x8xf32>, vector<8x8xf32> -> vector<8x8xf32>
    %c0_48 = arith.constant 0 : index
    %c1_49 = arith.constant 1 : index
    %c0_50 = arith.constant 0 : index
    %c0_51 = arith.constant 0 : index
    %53 = vector.load %arg7[%c0_48, %c1_49, %c0_50, %c0_51] : memref<1x12x1x8xf32, #tpu.memory_space<vmem>>, vector<1x1x1x8xf32>
    %54 = vector.shape_cast %53 : vector<1x1x1x8xf32> to vector<1x8xf32>
    %55 = vector.broadcast %54 : vector<1x8xf32> to vector<8x8xf32>
    %56 = arith.addf %52, %55 : vector<8x8xf32>
    %c0_52 = arith.constant 0 : index
    %c5 = arith.constant 5 : index
    %c0_53 = arith.constant 0 : index
    %c0_54 = arith.constant 0 : index
    %57 = vector.load %arg6[%c0_52, %c5, %c0_53, %c0_54] : memref<1x12x32x8xf32, #tpu.memory_space<vmem>>, vector<1x1x32x8xf32>
    %58 = vector.shape_cast %57 : vector<1x1x32x8xf32> to vector<32x8xf32>
    %cst_55 = arith.constant dense<0.000000e+00> : vector<8x8xf32>
    %59 = tpu.matmul %3, %58, %cst_55 {dimension_numbers = #tpu.dot_dimension_numbers<[1], [0], [0], [1], [0, 0, 1, 1], [], []>} : vector<8x32xf32>, vector<32x8xf32>, vector<8x8xf32> -> vector<8x8xf32>
    %c0_56 = arith.constant 0 : index
    %c5_57 = arith.constant 5 : index
    %c0_58 = arith.constant 0 : index
    %c0_59 = arith.constant 0 : index
    %60 = vector.load %arg7[%c0_56, %c5_57, %c0_58, %c0_59] : memref<1x12x1x8xf32, #tpu.memory_space<vmem>>, vector<1x1x1x8xf32>
    %61 = vector.shape_cast %60 : vector<1x1x1x8xf32> to vector<1x8xf32>
    %62 = vector.broadcast %61 : vector<1x8xf32> to vector<8x8xf32>
    %63 = arith.addf %59, %62 : vector<8x8xf32>
    %c0_60 = arith.constant 0 : index
    %c9 = arith.constant 9 : index
    %c0_61 = arith.constant 0 : index
    %c0_62 = arith.constant 0 : index
    %64 = vector.load %arg6[%c0_60, %c9, %c0_61, %c0_62] : memref<1x12x32x8xf32, #tpu.memory_space<vmem>>, vector<1x1x32x8xf32>
    %65 = vector.shape_cast %64 : vector<1x1x32x8xf32> to vector<32x8xf32>
    %cst_63 = arith.constant dense<0.000000e+00> : vector<8x8xf32>
    %66 = tpu.matmul %3, %65, %cst_63 {dimension_numbers = #tpu.dot_dimension_numbers<[1], [0], [0], [1], [0, 0, 1, 1], [], []>} : vector<8x32xf32>, vector<32x8xf32>, vector<8x8xf32> -> vector<8x8xf32>
    %c0_64 = arith.constant 0 : index
    %c9_65 = arith.constant 9 : index
    %c0_66 = arith.constant 0 : index
    %c0_67 = arith.constant 0 : index
    %67 = vector.load %arg7[%c0_64, %c9_65, %c0_66, %c0_67] : memref<1x12x1x8xf32, #tpu.memory_space<vmem>>, vector<1x1x1x8xf32>
    %68 = vector.shape_cast %67 : vector<1x1x1x8xf32> to vector<1x8xf32>
    %69 = vector.broadcast %68 : vector<1x8xf32> to vector<8x8xf32>
    %70 = arith.addf %66, %69 : vector<8x8xf32>
    %cst_68 = arith.constant dense<0.000000e+00> : vector<8x8xf32>
    %71 = tpu.matmul %56, %63, %cst_68 {dimension_numbers = #tpu.dot_dimension_numbers<[1], [1], [0], [0], [0, 0, 1, 0], [], []>} : vector<8x8xf32>, vector<8x8xf32>, vector<8x8xf32> -> vector<8x8xf32>
    %cst_69 = arith.constant 0.353553385 : f32
    %72 = vector.broadcast %cst_69 : f32 to vector<8x8xf32>
    %73 = arith.mulf %71, %72 : vector<8x8xf32>
    %cst_70 = arith.constant -1.000000e+09 : f32
    %74 = vector.broadcast %cst_70 : f32 to vector<8x8xf32>
    %75 = arith.select %9, %74, %73 : vector<8x8xi1>, vector<8x8xf32>
    %cst_71 = arith.constant dense<0xFF800000> : vector<8xf32>
    %76 = vector.multi_reduction <maximumf>, %75, %cst_71 [1] : vector<8x8xf32> to vector<8xf32>
    %77 = vector.shape_cast %76 : vector<8xf32> to vector<8x1xf32>
    %78 = vector.broadcast %77 : vector<8x1xf32> to vector<8x8xf32>
    %79 = arith.subf %75, %78 : vector<8x8xf32>
    %80 = math.exp %79 : vector<8x8xf32>
    %cst_72 = arith.constant dense<0.000000e+00> : vector<8xf32>
    %81 = vector.multi_reduction <add>, %80, %cst_72 [1] : vector<8x8xf32> to vector<8xf32>
    %82 = vector.shape_cast %81 : vector<8xf32> to vector<8x1xf32>
    %83 = tpu.reciprocal %82 {approx = true} : vector<8x1xf32> -> vector<8x1xf32>
    %84 = vector.broadcast %83 : vector<8x1xf32> to vector<8x8xf32>
    %85 = arith.mulf %80, %84 : vector<8x8xf32>
    %cst_73 = arith.constant dense<0.000000e+00> : vector<8x8xf32>
    %86 = tpu.matmul %85, %70, %cst_73 {dimension_numbers = #tpu.dot_dimension_numbers<[1], [0], [0], [1], [0, 0, 1, 1], [], []>} : vector<8x8xf32>, vector<8x8xf32>, vector<8x8xf32> -> vector<8x8xf32>
    %c0_74 = arith.constant 0 : index
    %c1_75 = arith.constant 1 : index
    %c0_76 = arith.constant 0 : index
    %c0_77 = arith.constant 0 : index
    %87 = vector.load %arg8[%c0_74, %c1_75, %c0_76, %c0_77] : memref<1x4x8x32xf32, #tpu.memory_space<vmem>>, vector<1x1x8x32xf32>
    %88 = vector.shape_cast %87 : vector<1x1x8x32xf32> to vector<8x32xf32>
    %cst_78 = arith.constant dense<0.000000e+00> : vector<8x32xf32>
    %89 = tpu.matmul %86, %88, %cst_78 {dimension_numbers = #tpu.dot_dimension_numbers<[1], [0], [0], [1], [0, 0, 1, 1], [], []>} : vector<8x8xf32>, vector<8x32xf32>, vector<8x32xf32> -> vector<8x32xf32>
    %90 = arith.addf %49, %89 : vector<8x32xf32>
    %c0_79 = arith.constant 0 : index
    %c2 = arith.constant 2 : index
    %c0_80 = arith.constant 0 : index
    %c0_81 = arith.constant 0 : index
    %91 = vector.load %arg6[%c0_79, %c2, %c0_80, %c0_81] : memref<1x12x32x8xf32, #tpu.memory_space<vmem>>, vector<1x1x32x8xf32>
    %92 = vector.shape_cast %91 : vector<1x1x32x8xf32> to vector<32x8xf32>
    %cst_82 = arith.constant dense<0.000000e+00> : vector<8x8xf32>
    %93 = tpu.matmul %3, %92, %cst_82 {dimension_numbers = #tpu.dot_dimension_numbers<[1], [0], [0], [1], [0, 0, 1, 1], [], []>} : vector<8x32xf32>, vector<32x8xf32>, vector<8x8xf32> -> vector<8x8xf32>
    %c0_83 = arith.constant 0 : index
    %c2_84 = arith.constant 2 : index
    %c0_85 = arith.constant 0 : index
    %c0_86 = arith.constant 0 : index
    %94 = vector.load %arg7[%c0_83, %c2_84, %c0_85, %c0_86] : memref<1x12x1x8xf32, #tpu.memory_space<vmem>>, vector<1x1x1x8xf32>
    %95 = vector.shape_cast %94 : vector<1x1x1x8xf32> to vector<1x8xf32>
    %96 = vector.broadcast %95 : vector<1x8xf32> to vector<8x8xf32>
    %97 = arith.addf %93, %96 : vector<8x8xf32>
    %c0_87 = arith.constant 0 : index
    %c6 = arith.constant 6 : index
    %c0_88 = arith.constant 0 : index
    %c0_89 = arith.constant 0 : index
    %98 = vector.load %arg6[%c0_87, %c6, %c0_88, %c0_89] : memref<1x12x32x8xf32, #tpu.memory_space<vmem>>, vector<1x1x32x8xf32>
    %99 = vector.shape_cast %98 : vector<1x1x32x8xf32> to vector<32x8xf32>
    %cst_90 = arith.constant dense<0.000000e+00> : vector<8x8xf32>
    %100 = tpu.matmul %3, %99, %cst_90 {dimension_numbers = #tpu.dot_dimension_numbers<[1], [0], [0], [1], [0, 0, 1, 1], [], []>} : vector<8x32xf32>, vector<32x8xf32>, vector<8x8xf32> -> vector<8x8xf32>
    %c0_91 = arith.constant 0 : index
    %c6_92 = arith.constant 6 : index
    %c0_93 = arith.constant 0 : index
    %c0_94 = arith.constant 0 : index
    %101 = vector.load %arg7[%c0_91, %c6_92, %c0_93, %c0_94] : memref<1x12x1x8xf32, #tpu.memory_space<vmem>>, vector<1x1x1x8xf32>
    %102 = vector.shape_cast %101 : vector<1x1x1x8xf32> to vector<1x8xf32>
    %103 = vector.broadcast %102 : vector<1x8xf32> to vector<8x8xf32>
    %104 = arith.addf %100, %103 : vector<8x8xf32>
    %c0_95 = arith.constant 0 : index
    %c10 = arith.constant 10 : index
    %c0_96 = arith.constant 0 : index
    %c0_97 = arith.constant 0 : index
    %105 = vector.load %arg6[%c0_95, %c10, %c0_96, %c0_97] : memref<1x12x32x8xf32, #tpu.memory_space<vmem>>, vector<1x1x32x8xf32>
    %106 = vector.shape_cast %105 : vector<1x1x32x8xf32> to vector<32x8xf32>
    %cst_98 = arith.constant dense<0.000000e+00> : vector<8x8xf32>
    %107 = tpu.matmul %3, %106, %cst_98 {dimension_numbers = #tpu.dot_dimension_numbers<[1], [0], [0], [1], [0, 0, 1, 1], [], []>} : vector<8x32xf32>, vector<32x8xf32>, vector<8x8xf32> -> vector<8x8xf32>
    %c0_99 = arith.constant 0 : index
    %c10_100 = arith.constant 10 : index
    %c0_101 = arith.constant 0 : index
    %c0_102 = arith.constant 0 : index
    %108 = vector.load %arg7[%c0_99, %c10_100, %c0_101, %c0_102] : memref<1x12x1x8xf32, #tpu.memory_space<vmem>>, vector<1x1x1x8xf32>
    %109 = vector.shape_cast %108 : vector<1x1x1x8xf32> to vector<1x8xf32>
    %110 = vector.broadcast %109 : vector<1x8xf32> to vector<8x8xf32>
    %111 = arith.addf %107, %110 : vector<8x8xf32>
    %cst_103 = arith.constant dense<0.000000e+00> : vector<8x8xf32>
    %112 = tpu.matmul %97, %104, %cst_103 {dimension_numbers = #tpu.dot_dimension_numbers<[1], [1], [0], [0], [0, 0, 1, 0], [], []>} : vector<8x8xf32>, vector<8x8xf32>, vector<8x8xf32> -> vector<8x8xf32>
    %cst_104 = arith.constant 0.353553385 : f32
    %113 = vector.broadcast %cst_104 : f32 to vector<8x8xf32>
    %114 = arith.mulf %112, %113 : vector<8x8xf32>
    %cst_105 = arith.constant -1.000000e+09 : f32
    %115 = vector.broadcast %cst_105 : f32 to vector<8x8xf32>
    %116 = arith.select %9, %115, %114 : vector<8x8xi1>, vector<8x8xf32>
    %cst_106 = arith.constant dense<0xFF800000> : vector<8xf32>
    %117 = vector.multi_reduction <maximumf>, %116, %cst_106 [1] : vector<8x8xf32> to vector<8xf32>
    %118 = vector.shape_cast %117 : vector<8xf32> to vector<8x1xf32>
    %119 = vector.broadcast %118 : vector<8x1xf32> to vector<8x8xf32>
    %120 = arith.subf %116, %119 : vector<8x8xf32>
    %121 = math.exp %120 : vector<8x8xf32>
    %cst_107 = arith.constant dense<0.000000e+00> : vector<8xf32>
    %122 = vector.multi_reduction <add>, %121, %cst_107 [1] : vector<8x8xf32> to vector<8xf32>
    %123 = vector.shape_cast %122 : vector<8xf32> to vector<8x1xf32>
    %124 = tpu.reciprocal %123 {approx = true} : vector<8x1xf32> -> vector<8x1xf32>
    %125 = vector.broadcast %124 : vector<8x1xf32> to vector<8x8xf32>
    %126 = arith.mulf %121, %125 : vector<8x8xf32>
    %cst_108 = arith.constant dense<0.000000e+00> : vector<8x8xf32>
    %127 = tpu.matmul %126, %111, %cst_108 {dimension_numbers = #tpu.dot_dimension_numbers<[1], [0], [0], [1], [0, 0, 1, 1], [], []>} : vector<8x8xf32>, vector<8x8xf32>, vector<8x8xf32> -> vector<8x8xf32>
    %c0_109 = arith.constant 0 : index
    %c2_110 = arith.constant 2 : index
    %c0_111 = arith.constant 0 : index
    %c0_112 = arith.constant 0 : index
    %128 = vector.load %arg8[%c0_109, %c2_110, %c0_111, %c0_112] : memref<1x4x8x32xf32, #tpu.memory_space<vmem>>, vector<1x1x8x32xf32>
    %129 = vector.shape_cast %128 : vector<1x1x8x32xf32> to vector<8x32xf32>
    %cst_113 = arith.constant dense<0.000000e+00> : vector<8x32xf32>
    %130 = tpu.matmul %127, %129, %cst_113 {dimension_numbers = #tpu.dot_dimension_numbers<[1], [0], [0], [1], [0, 0, 1, 1], [], []>} : vector<8x8xf32>, vector<8x32xf32>, vector<8x32xf32> -> vector<8x32xf32>
    %131 = arith.addf %90, %130 : vector<8x32xf32>
    %c0_114 = arith.constant 0 : index
    %c3 = arith.constant 3 : index
    %c0_115 = arith.constant 0 : index
    %c0_116 = arith.constant 0 : index
    %132 = vector.load %arg6[%c0_114, %c3, %c0_115, %c0_116] : memref<1x12x32x8xf32, #tpu.memory_space<vmem>>, vector<1x1x32x8xf32>
    %133 = vector.shape_cast %132 : vector<1x1x32x8xf32> to vector<32x8xf32>
    %cst_117 = arith.constant dense<0.000000e+00> : vector<8x8xf32>
    %134 = tpu.matmul %3, %133, %cst_117 {dimension_numbers = #tpu.dot_dimension_numbers<[1], [0], [0], [1], [0, 0, 1, 1], [], []>} : vector<8x32xf32>, vector<32x8xf32>, vector<8x8xf32> -> vector<8x8xf32>
    %c0_118 = arith.constant 0 : index
    %c3_119 = arith.constant 3 : index
    %c0_120 = arith.constant 0 : index
    %c0_121 = arith.constant 0 : index
    %135 = vector.load %arg7[%c0_118, %c3_119, %c0_120, %c0_121] : memref<1x12x1x8xf32, #tpu.memory_space<vmem>>, vector<1x1x1x8xf32>
    %136 = vector.shape_cast %135 : vector<1x1x1x8xf32> to vector<1x8xf32>
    %137 = vector.broadcast %136 : vector<1x8xf32> to vector<8x8xf32>
    %138 = arith.addf %134, %137 : vector<8x8xf32>
    %c0_122 = arith.constant 0 : index
    %c7 = arith.constant 7 : index
    %c0_123 = arith.constant 0 : index
    %c0_124 = arith.constant 0 : index
    %139 = vector.load %arg6[%c0_122, %c7, %c0_123, %c0_124] : memref<1x12x32x8xf32, #tpu.memory_space<vmem>>, vector<1x1x32x8xf32>
    %140 = vector.shape_cast %139 : vector<1x1x32x8xf32> to vector<32x8xf32>
    %cst_125 = arith.constant dense<0.000000e+00> : vector<8x8xf32>
    %141 = tpu.matmul %3, %140, %cst_125 {dimension_numbers = #tpu.dot_dimension_numbers<[1], [0], [0], [1], [0, 0, 1, 1], [], []>} : vector<8x32xf32>, vector<32x8xf32>, vector<8x8xf32> -> vector<8x8xf32>
    %c0_126 = arith.constant 0 : index
    %c7_127 = arith.constant 7 : index
    %c0_128 = arith.constant 0 : index
    %c0_129 = arith.constant 0 : index
    %142 = vector.load %arg7[%c0_126, %c7_127, %c0_128, %c0_129] : memref<1x12x1x8xf32, #tpu.memory_space<vmem>>, vector<1x1x1x8xf32>
    %143 = vector.shape_cast %142 : vector<1x1x1x8xf32> to vector<1x8xf32>
    %144 = vector.broadcast %143 : vector<1x8xf32> to vector<8x8xf32>
    %145 = arith.addf %141, %144 : vector<8x8xf32>
    %c0_130 = arith.constant 0 : index
    %c11 = arith.constant 11 : index
    %c0_131 = arith.constant 0 : index
    %c0_132 = arith.constant 0 : index
    %146 = vector.load %arg6[%c0_130, %c11, %c0_131, %c0_132] : memref<1x12x32x8xf32, #tpu.memory_space<vmem>>, vector<1x1x32x8xf32>
    %147 = vector.shape_cast %146 : vector<1x1x32x8xf32> to vector<32x8xf32>
    %cst_133 = arith.constant dense<0.000000e+00> : vector<8x8xf32>
    %148 = tpu.matmul %3, %147, %cst_133 {dimension_numbers = #tpu.dot_dimension_numbers<[1], [0], [0], [1], [0, 0, 1, 1], [], []>} : vector<8x32xf32>, vector<32x8xf32>, vector<8x8xf32> -> vector<8x8xf32>
    %c0_134 = arith.constant 0 : index
    %c11_135 = arith.constant 11 : index
    %c0_136 = arith.constant 0 : index
    %c0_137 = arith.constant 0 : index
    %149 = vector.load %arg7[%c0_134, %c11_135, %c0_136, %c0_137] : memref<1x12x1x8xf32, #tpu.memory_space<vmem>>, vector<1x1x1x8xf32>
    %150 = vector.shape_cast %149 : vector<1x1x1x8xf32> to vector<1x8xf32>
    %151 = vector.broadcast %150 : vector<1x8xf32> to vector<8x8xf32>
    %152 = arith.addf %148, %151 : vector<8x8xf32>
    %cst_138 = arith.constant dense<0.000000e+00> : vector<8x8xf32>
    %153 = tpu.matmul %138, %145, %cst_138 {dimension_numbers = #tpu.dot_dimension_numbers<[1], [1], [0], [0], [0, 0, 1, 0], [], []>} : vector<8x8xf32>, vector<8x8xf32>, vector<8x8xf32> -> vector<8x8xf32>
    %cst_139 = arith.constant 0.353553385 : f32
    %154 = vector.broadcast %cst_139 : f32 to vector<8x8xf32>
    %155 = arith.mulf %153, %154 : vector<8x8xf32>
    %cst_140 = arith.constant -1.000000e+09 : f32
    %156 = vector.broadcast %cst_140 : f32 to vector<8x8xf32>
    %157 = arith.select %9, %156, %155 : vector<8x8xi1>, vector<8x8xf32>
    %cst_141 = arith.constant dense<0xFF800000> : vector<8xf32>
    %158 = vector.multi_reduction <maximumf>, %157, %cst_141 [1] : vector<8x8xf32> to vector<8xf32>
    %159 = vector.shape_cast %158 : vector<8xf32> to vector<8x1xf32>
    %160 = vector.broadcast %159 : vector<8x1xf32> to vector<8x8xf32>
    %161 = arith.subf %157, %160 : vector<8x8xf32>
    %162 = math.exp %161 : vector<8x8xf32>
    %cst_142 = arith.constant dense<0.000000e+00> : vector<8xf32>
    %163 = vector.multi_reduction <add>, %162, %cst_142 [1] : vector<8x8xf32> to vector<8xf32>
    %164 = vector.shape_cast %163 : vector<8xf32> to vector<8x1xf32>
    %165 = tpu.reciprocal %164 {approx = true} : vector<8x1xf32> -> vector<8x1xf32>
    %166 = vector.broadcast %165 : vector<8x1xf32> to vector<8x8xf32>
    %167 = arith.mulf %162, %166 : vector<8x8xf32>
    %cst_143 = arith.constant dense<0.000000e+00> : vector<8x8xf32>
    %168 = tpu.matmul %167, %152, %cst_143 {dimension_numbers = #tpu.dot_dimension_numbers<[1], [0], [0], [1], [0, 0, 1, 1], [], []>} : vector<8x8xf32>, vector<8x8xf32>, vector<8x8xf32> -> vector<8x8xf32>
    %c0_144 = arith.constant 0 : index
    %c3_145 = arith.constant 3 : index
    %c0_146 = arith.constant 0 : index
    %c0_147 = arith.constant 0 : index
    %169 = vector.load %arg8[%c0_144, %c3_145, %c0_146, %c0_147] : memref<1x4x8x32xf32, #tpu.memory_space<vmem>>, vector<1x1x8x32xf32>
    %170 = vector.shape_cast %169 : vector<1x1x8x32xf32> to vector<8x32xf32>
    %cst_148 = arith.constant dense<0.000000e+00> : vector<8x32xf32>
    %171 = tpu.matmul %168, %170, %cst_148 {dimension_numbers = #tpu.dot_dimension_numbers<[1], [0], [0], [1], [0, 0, 1, 1], [], []>} : vector<8x8xf32>, vector<8x32xf32>, vector<8x32xf32> -> vector<8x32xf32>
    %172 = arith.addf %131, %171 : vector<8x32xf32>
    %c0_149 = arith.constant 0 : index
    %c0_150 = arith.constant 0 : index
    %c0_151 = arith.constant 0 : index
    %173 = vector.load %arg9[%c0_149, %c0_150, %c0_151] : memref<1x1x32xf32, #tpu.memory_space<vmem>>, vector<1x1x32xf32>
    %174 = vector.shape_cast %173 : vector<1x1x32xf32> to vector<1x32xf32>
    %175 = vector.broadcast %174 : vector<1x32xf32> to vector<8x32xf32>
    %176 = arith.addf %172, %175 : vector<8x32xf32>
    %177 = arith.addf %176, %3 : vector<8x32xf32>
    %cst_152 = arith.constant dense<0.000000e+00> : vector<8xf32>
    %178 = vector.multi_reduction <add>, %177, %cst_152 [1] : vector<8x32xf32> to vector<8xf32>
    %179 = vector.shape_cast %178 : vector<8xf32> to vector<8x1xf32>
    %cst_153 = arith.constant 3.200000e+01 : f32
    %180 = vector.broadcast %cst_153 : f32 to vector<8x1xf32>
    %181 = arith.divf %179, %180 : vector<8x1xf32>
    %182 = vector.broadcast %181 : vector<8x1xf32> to vector<8x32xf32>
    %183 = arith.subf %177, %182 : vector<8x32xf32>
    %184 = arith.mulf %183, %183 : vector<8x32xf32>
    %cst_154 = arith.constant dense<0.000000e+00> : vector<8xf32>
    %185 = vector.multi_reduction <add>, %184, %cst_154 [1] : vector<8x32xf32> to vector<8xf32>
    %186 = vector.shape_cast %185 : vector<8xf32> to vector<8x1xf32>
    %cst_155 = arith.constant 3.200000e+01 : f32
    %187 = vector.broadcast %cst_155 : f32 to vector<8x1xf32>
    %188 = arith.divf %186, %187 : vector<8x1xf32>
    %189 = vector.broadcast %181 : vector<8x1xf32> to vector<8x32xf32>
    %190 = arith.subf %177, %189 : vector<8x32xf32>
    %cst_156 = arith.constant 9.99999974E-6 : f32
    %191 = vector.broadcast %cst_156 : f32 to vector<8x1xf32>
    %192 = arith.addf %188, %191 : vector<8x1xf32>
    %193 = math.rsqrt %192 : vector<8x1xf32>
    %194 = vector.broadcast %193 : vector<8x1xf32> to vector<8x32xf32>
    %195 = arith.mulf %190, %194 : vector<8x32xf32>
    %c0_157 = arith.constant 0 : index
    %c0_158 = arith.constant 0 : index
    %c0_159 = arith.constant 0 : index
    %196 = vector.load %arg10[%c0_157, %c0_158, %c0_159] : memref<1x1x32xf32, #tpu.memory_space<vmem>>, vector<1x1x32xf32>
    %197 = vector.shape_cast %196 : vector<1x1x32xf32> to vector<1x32xf32>
    %198 = vector.broadcast %197 : vector<1x32xf32> to vector<8x32xf32>
    %199 = arith.mulf %195, %198 : vector<8x32xf32>
    %c0_160 = arith.constant 0 : index
    %c0_161 = arith.constant 0 : index
    %c0_162 = arith.constant 0 : index
    %200 = vector.load %arg11[%c0_160, %c0_161, %c0_162] : memref<1x1x32xf32, #tpu.memory_space<vmem>>, vector<1x1x32xf32>
    %201 = vector.shape_cast %200 : vector<1x1x32xf32> to vector<1x32xf32>
    %202 = vector.broadcast %201 : vector<1x32xf32> to vector<8x32xf32>
    %203 = arith.addf %199, %202 : vector<8x32xf32>
    %c0_163 = arith.constant 0 : index
    %c0_164 = arith.constant 0 : index
    %c0_165 = arith.constant 0 : index
    %204 = vector.load %arg5[%c0_163, %c0_164, %c0_165] : memref<1x8x12xf32, #tpu.memory_space<vmem>>, vector<1x8x12xf32>
    %205 = vector.shape_cast %204 : vector<1x8x12xf32> to vector<8x12xf32>
    %cst_166 = arith.constant 0.000000e+00 : f32
    %206 = vector.broadcast %cst_166 : f32 to vector<8x12xf32>
    %207 = arith.cmpf ogt, %205, %206 : vector<8x12xf32>
    %c0_167 = arith.constant 0 : index
    %c0_168 = arith.constant 0 : index
    %c0_169 = arith.constant 0 : index
    %c0_170 = arith.constant 0 : index
    %208 = vector.load %arg12[%c0_167, %c0_168, %c0_169, %c0_170] : memref<1x12x32x8xf32, #tpu.memory_space<vmem>>, vector<1x1x32x8xf32>
    %209 = vector.shape_cast %208 : vector<1x1x32x8xf32> to vector<32x8xf32>
    %cst_171 = arith.constant dense<0.000000e+00> : vector<8x8xf32>
    %210 = tpu.matmul %203, %209, %cst_171 {dimension_numbers = #tpu.dot_dimension_numbers<[1], [0], [0], [1], [0, 0, 1, 1], [], []>} : vector<8x32xf32>, vector<32x8xf32>, vector<8x8xf32> -> vector<8x8xf32>
    %c0_172 = arith.constant 0 : index
    %c0_173 = arith.constant 0 : index
    %c0_174 = arith.constant 0 : index
    %c0_175 = arith.constant 0 : index
    %211 = vector.load %arg13[%c0_172, %c0_173, %c0_174, %c0_175] : memref<1x12x1x8xf32, #tpu.memory_space<vmem>>, vector<1x1x1x8xf32>
    %212 = vector.shape_cast %211 : vector<1x1x1x8xf32> to vector<1x8xf32>
    %213 = vector.broadcast %212 : vector<1x8xf32> to vector<8x8xf32>
    %214 = arith.addf %210, %213 : vector<8x8xf32>
    %c0_176 = arith.constant 0 : index
    %c4_177 = arith.constant 4 : index
    %c0_178 = arith.constant 0 : index
    %c0_179 = arith.constant 0 : index
    %215 = vector.load %arg12[%c0_176, %c4_177, %c0_178, %c0_179] : memref<1x12x32x8xf32, #tpu.memory_space<vmem>>, vector<1x1x32x8xf32>
    %216 = vector.shape_cast %215 : vector<1x1x32x8xf32> to vector<32x8xf32>
    %cst_180 = arith.constant dense<0.000000e+00> : vector<12x8xf32>
    %217 = tpu.matmul %5, %216, %cst_180 {dimension_numbers = #tpu.dot_dimension_numbers<[1], [0], [0], [1], [0, 0, 1, 1], [], []>} : vector<12x32xf32>, vector<32x8xf32>, vector<12x8xf32> -> vector<12x8xf32>
    %c0_181 = arith.constant 0 : index
    %c4_182 = arith.constant 4 : index
    %c0_183 = arith.constant 0 : index
    %c0_184 = arith.constant 0 : index
    %218 = vector.load %arg13[%c0_181, %c4_182, %c0_183, %c0_184] : memref<1x12x1x8xf32, #tpu.memory_space<vmem>>, vector<1x1x1x8xf32>
    %219 = vector.shape_cast %218 : vector<1x1x1x8xf32> to vector<1x8xf32>
    %220 = vector.broadcast %219 : vector<1x8xf32> to vector<12x8xf32>
    %221 = arith.addf %217, %220 : vector<12x8xf32>
    %c0_185 = arith.constant 0 : index
    %c8_186 = arith.constant 8 : index
    %c0_187 = arith.constant 0 : index
    %c0_188 = arith.constant 0 : index
    %222 = vector.load %arg12[%c0_185, %c8_186, %c0_187, %c0_188] : memref<1x12x32x8xf32, #tpu.memory_space<vmem>>, vector<1x1x32x8xf32>
    %223 = vector.shape_cast %222 : vector<1x1x32x8xf32> to vector<32x8xf32>
    %cst_189 = arith.constant dense<0.000000e+00> : vector<12x8xf32>
    %224 = tpu.matmul %5, %223, %cst_189 {dimension_numbers = #tpu.dot_dimension_numbers<[1], [0], [0], [1], [0, 0, 1, 1], [], []>} : vector<12x32xf32>, vector<32x8xf32>, vector<12x8xf32> -> vector<12x8xf32>
    %c0_190 = arith.constant 0 : index
    %c8_191 = arith.constant 8 : index
    %c0_192 = arith.constant 0 : index
    %c0_193 = arith.constant 0 : index
    %225 = vector.load %arg13[%c0_190, %c8_191, %c0_192, %c0_193] : memref<1x12x1x8xf32, #tpu.memory_space<vmem>>, vector<1x1x1x8xf32>
    %226 = vector.shape_cast %225 : vector<1x1x1x8xf32> to vector<1x8xf32>
    %227 = vector.broadcast %226 : vector<1x8xf32> to vector<12x8xf32>
    %228 = arith.addf %224, %227 : vector<12x8xf32>
    %cst_194 = arith.constant dense<0.000000e+00> : vector<8x12xf32>
    %229 = tpu.matmul %214, %221, %cst_194 {dimension_numbers = #tpu.dot_dimension_numbers<[1], [1], [0], [0], [0, 0, 1, 0], [], []>} : vector<8x8xf32>, vector<12x8xf32>, vector<8x12xf32> -> vector<8x12xf32>
    %cst_195 = arith.constant 0.353553385 : f32
    %230 = vector.broadcast %cst_195 : f32 to vector<8x12xf32>
    %231 = arith.mulf %229, %230 : vector<8x12xf32>
    %cst_196 = arith.constant -1.000000e+09 : f32
    %232 = vector.broadcast %cst_196 : f32 to vector<8x12xf32>
    %233 = arith.select %207, %232, %231 : vector<8x12xi1>, vector<8x12xf32>
    %cst_197 = arith.constant dense<0xFF800000> : vector<8xf32>
    %234 = vector.multi_reduction <maximumf>, %233, %cst_197 [1] : vector<8x12xf32> to vector<8xf32>
    %235 = vector.shape_cast %234 : vector<8xf32> to vector<8x1xf32>
    %236 = vector.broadcast %235 : vector<8x1xf32> to vector<8x12xf32>
    %237 = arith.subf %233, %236 : vector<8x12xf32>
    %238 = math.exp %237 : vector<8x12xf32>
    %cst_198 = arith.constant dense<0.000000e+00> : vector<8xf32>
    %239 = vector.multi_reduction <add>, %238, %cst_198 [1] : vector<8x12xf32> to vector<8xf32>
    %240 = vector.shape_cast %239 : vector<8xf32> to vector<8x1xf32>
    %241 = tpu.reciprocal %240 {approx = true} : vector<8x1xf32> -> vector<8x1xf32>
    %242 = vector.broadcast %241 : vector<8x1xf32> to vector<8x12xf32>
    %243 = arith.mulf %238, %242 : vector<8x12xf32>
    %cst_199 = arith.constant dense<0.000000e+00> : vector<8x8xf32>
    %244 = tpu.matmul %243, %228, %cst_199 {dimension_numbers = #tpu.dot_dimension_numbers<[1], [0], [0], [1], [0, 0, 1, 1], [], []>} : vector<8x12xf32>, vector<12x8xf32>, vector<8x8xf32> -> vector<8x8xf32>
    %c0_200 = arith.constant 0 : index
    %c0_201 = arith.constant 0 : index
    %c0_202 = arith.constant 0 : index
    %c0_203 = arith.constant 0 : index
    %245 = vector.load %arg14[%c0_200, %c0_201, %c0_202, %c0_203] : memref<1x4x8x32xf32, #tpu.memory_space<vmem>>, vector<1x1x8x32xf32>
    %246 = vector.shape_cast %245 : vector<1x1x8x32xf32> to vector<8x32xf32>
    %cst_204 = arith.constant dense<0.000000e+00> : vector<8x32xf32>
    %247 = tpu.matmul %244, %246, %cst_204 {dimension_numbers = #tpu.dot_dimension_numbers<[1], [0], [0], [1], [0, 0, 1, 1], [], []>} : vector<8x8xf32>, vector<8x32xf32>, vector<8x32xf32> -> vector<8x32xf32>
    %c0_205 = arith.constant 0 : index
    %c1_206 = arith.constant 1 : index
    %c0_207 = arith.constant 0 : index
    %c0_208 = arith.constant 0 : index
    %248 = vector.load %arg12[%c0_205, %c1_206, %c0_207, %c0_208] : memref<1x12x32x8xf32, #tpu.memory_space<vmem>>, vector<1x1x32x8xf32>
    %249 = vector.shape_cast %248 : vector<1x1x32x8xf32> to vector<32x8xf32>
    %cst_209 = arith.constant dense<0.000000e+00> : vector<8x8xf32>
    %250 = tpu.matmul %203, %249, %cst_209 {dimension_numbers = #tpu.dot_dimension_numbers<[1], [0], [0], [1], [0, 0, 1, 1], [], []>} : vector<8x32xf32>, vector<32x8xf32>, vector<8x8xf32> -> vector<8x8xf32>
    %c0_210 = arith.constant 0 : index
    %c1_211 = arith.constant 1 : index
    %c0_212 = arith.constant 0 : index
    %c0_213 = arith.constant 0 : index
    %251 = vector.load %arg13[%c0_210, %c1_211, %c0_212, %c0_213] : memref<1x12x1x8xf32, #tpu.memory_space<vmem>>, vector<1x1x1x8xf32>
    %252 = vector.shape_cast %251 : vector<1x1x1x8xf32> to vector<1x8xf32>
    %253 = vector.broadcast %252 : vector<1x8xf32> to vector<8x8xf32>
    %254 = arith.addf %250, %253 : vector<8x8xf32>
    %c0_214 = arith.constant 0 : index
    %c5_215 = arith.constant 5 : index
    %c0_216 = arith.constant 0 : index
    %c0_217 = arith.constant 0 : index
    %255 = vector.load %arg12[%c0_214, %c5_215, %c0_216, %c0_217] : memref<1x12x32x8xf32, #tpu.memory_space<vmem>>, vector<1x1x32x8xf32>
    %256 = vector.shape_cast %255 : vector<1x1x32x8xf32> to vector<32x8xf32>
    %cst_218 = arith.constant dense<0.000000e+00> : vector<12x8xf32>
    %257 = tpu.matmul %5, %256, %cst_218 {dimension_numbers = #tpu.dot_dimension_numbers<[1], [0], [0], [1], [0, 0, 1, 1], [], []>} : vector<12x32xf32>, vector<32x8xf32>, vector<12x8xf32> -> vector<12x8xf32>
    %c0_219 = arith.constant 0 : index
    %c5_220 = arith.constant 5 : index
    %c0_221 = arith.constant 0 : index
    %c0_222 = arith.constant 0 : index
    %258 = vector.load %arg13[%c0_219, %c5_220, %c0_221, %c0_222] : memref<1x12x1x8xf32, #tpu.memory_space<vmem>>, vector<1x1x1x8xf32>
    %259 = vector.shape_cast %258 : vector<1x1x1x8xf32> to vector<1x8xf32>
    %260 = vector.broadcast %259 : vector<1x8xf32> to vector<12x8xf32>
    %261 = arith.addf %257, %260 : vector<12x8xf32>
    %c0_223 = arith.constant 0 : index
    %c9_224 = arith.constant 9 : index
    %c0_225 = arith.constant 0 : index
    %c0_226 = arith.constant 0 : index
    %262 = vector.load %arg12[%c0_223, %c9_224, %c0_225, %c0_226] : memref<1x12x32x8xf32, #tpu.memory_space<vmem>>, vector<1x1x32x8xf32>
    %263 = vector.shape_cast %262 : vector<1x1x32x8xf32> to vector<32x8xf32>
    %cst_227 = arith.constant dense<0.000000e+00> : vector<12x8xf32>
    %264 = tpu.matmul %5, %263, %cst_227 {dimension_numbers = #tpu.dot_dimension_numbers<[1], [0], [0], [1], [0, 0, 1, 1], [], []>} : vector<12x32xf32>, vector<32x8xf32>, vector<12x8xf32> -> vector<12x8xf32>
    %c0_228 = arith.constant 0 : index
    %c9_229 = arith.constant 9 : index
    %c0_230 = arith.constant 0 : index
    %c0_231 = arith.constant 0 : index
    %265 = vector.load %arg13[%c0_228, %c9_229, %c0_230, %c0_231] : memref<1x12x1x8xf32, #tpu.memory_space<vmem>>, vector<1x1x1x8xf32>
    %266 = vector.shape_cast %265 : vector<1x1x1x8xf32> to vector<1x8xf32>
    %267 = vector.broadcast %266 : vector<1x8xf32> to vector<12x8xf32>
    %268 = arith.addf %264, %267 : vector<12x8xf32>
    %cst_232 = arith.constant dense<0.000000e+00> : vector<8x12xf32>
    %269 = tpu.matmul %254, %261, %cst_232 {dimension_numbers = #tpu.dot_dimension_numbers<[1], [1], [0], [0], [0, 0, 1, 0], [], []>} : vector<8x8xf32>, vector<12x8xf32>, vector<8x12xf32> -> vector<8x12xf32>
    %cst_233 = arith.constant 0.353553385 : f32
    %270 = vector.broadcast %cst_233 : f32 to vector<8x12xf32>
    %271 = arith.mulf %269, %270 : vector<8x12xf32>
    %cst_234 = arith.constant -1.000000e+09 : f32
    %272 = vector.broadcast %cst_234 : f32 to vector<8x12xf32>
    %273 = arith.select %207, %272, %271 : vector<8x12xi1>, vector<8x12xf32>
    %cst_235 = arith.constant dense<0xFF800000> : vector<8xf32>
    %274 = vector.multi_reduction <maximumf>, %273, %cst_235 [1] : vector<8x12xf32> to vector<8xf32>
    %275 = vector.shape_cast %274 : vector<8xf32> to vector<8x1xf32>
    %276 = vector.broadcast %275 : vector<8x1xf32> to vector<8x12xf32>
    %277 = arith.subf %273, %276 : vector<8x12xf32>
    %278 = math.exp %277 : vector<8x12xf32>
    %cst_236 = arith.constant dense<0.000000e+00> : vector<8xf32>
    %279 = vector.multi_reduction <add>, %278, %cst_236 [1] : vector<8x12xf32> to vector<8xf32>
    %280 = vector.shape_cast %279 : vector<8xf32> to vector<8x1xf32>
    %281 = tpu.reciprocal %280 {approx = true} : vector<8x1xf32> -> vector<8x1xf32>
    %282 = vector.broadcast %281 : vector<8x1xf32> to vector<8x12xf32>
    %283 = arith.mulf %278, %282 : vector<8x12xf32>
    %cst_237 = arith.constant dense<0.000000e+00> : vector<8x8xf32>
    %284 = tpu.matmul %283, %268, %cst_237 {dimension_numbers = #tpu.dot_dimension_numbers<[1], [0], [0], [1], [0, 0, 1, 1], [], []>} : vector<8x12xf32>, vector<12x8xf32>, vector<8x8xf32> -> vector<8x8xf32>
    %c0_238 = arith.constant 0 : index
    %c1_239 = arith.constant 1 : index
    %c0_240 = arith.constant 0 : index
    %c0_241 = arith.constant 0 : index
    %285 = vector.load %arg14[%c0_238, %c1_239, %c0_240, %c0_241] : memref<1x4x8x32xf32, #tpu.memory_space<vmem>>, vector<1x1x8x32xf32>
    %286 = vector.shape_cast %285 : vector<1x1x8x32xf32> to vector<8x32xf32>
    %cst_242 = arith.constant dense<0.000000e+00> : vector<8x32xf32>
    %287 = tpu.matmul %284, %286, %cst_242 {dimension_numbers = #tpu.dot_dimension_numbers<[1], [0], [0], [1], [0, 0, 1, 1], [], []>} : vector<8x8xf32>, vector<8x32xf32>, vector<8x32xf32> -> vector<8x32xf32>
    %288 = arith.addf %247, %287 : vector<8x32xf32>
    %c0_243 = arith.constant 0 : index
    %c2_244 = arith.constant 2 : index
    %c0_245 = arith.constant 0 : index
    %c0_246 = arith.constant 0 : index
    %289 = vector.load %arg12[%c0_243, %c2_244, %c0_245, %c0_246] : memref<1x12x32x8xf32, #tpu.memory_space<vmem>>, vector<1x1x32x8xf32>
    %290 = vector.shape_cast %289 : vector<1x1x32x8xf32> to vector<32x8xf32>
    %cst_247 = arith.constant dense<0.000000e+00> : vector<8x8xf32>
    %291 = tpu.matmul %203, %290, %cst_247 {dimension_numbers = #tpu.dot_dimension_numbers<[1], [0], [0], [1], [0, 0, 1, 1], [], []>} : vector<8x32xf32>, vector<32x8xf32>, vector<8x8xf32> -> vector<8x8xf32>
    %c0_248 = arith.constant 0 : index
    %c2_249 = arith.constant 2 : index
    %c0_250 = arith.constant 0 : index
    %c0_251 = arith.constant 0 : index
    %292 = vector.load %arg13[%c0_248, %c2_249, %c0_250, %c0_251] : memref<1x12x1x8xf32, #tpu.memory_space<vmem>>, vector<1x1x1x8xf32>
    %293 = vector.shape_cast %292 : vector<1x1x1x8xf32> to vector<1x8xf32>
    %294 = vector.broadcast %293 : vector<1x8xf32> to vector<8x8xf32>
    %295 = arith.addf %291, %294 : vector<8x8xf32>
    %c0_252 = arith.constant 0 : index
    %c6_253 = arith.constant 6 : index
    %c0_254 = arith.constant 0 : index
    %c0_255 = arith.constant 0 : index
    %296 = vector.load %arg12[%c0_252, %c6_253, %c0_254, %c0_255] : memref<1x12x32x8xf32, #tpu.memory_space<vmem>>, vector<1x1x32x8xf32>
    %297 = vector.shape_cast %296 : vector<1x1x32x8xf32> to vector<32x8xf32>
    %cst_256 = arith.constant dense<0.000000e+00> : vector<12x8xf32>
    %298 = tpu.matmul %5, %297, %cst_256 {dimension_numbers = #tpu.dot_dimension_numbers<[1], [0], [0], [1], [0, 0, 1, 1], [], []>} : vector<12x32xf32>, vector<32x8xf32>, vector<12x8xf32> -> vector<12x8xf32>
    %c0_257 = arith.constant 0 : index
    %c6_258 = arith.constant 6 : index
    %c0_259 = arith.constant 0 : index
    %c0_260 = arith.constant 0 : index
    %299 = vector.load %arg13[%c0_257, %c6_258, %c0_259, %c0_260] : memref<1x12x1x8xf32, #tpu.memory_space<vmem>>, vector<1x1x1x8xf32>
    %300 = vector.shape_cast %299 : vector<1x1x1x8xf32> to vector<1x8xf32>
    %301 = vector.broadcast %300 : vector<1x8xf32> to vector<12x8xf32>
    %302 = arith.addf %298, %301 : vector<12x8xf32>
    %c0_261 = arith.constant 0 : index
    %c10_262 = arith.constant 10 : index
    %c0_263 = arith.constant 0 : index
    %c0_264 = arith.constant 0 : index
    %303 = vector.load %arg12[%c0_261, %c10_262, %c0_263, %c0_264] : memref<1x12x32x8xf32, #tpu.memory_space<vmem>>, vector<1x1x32x8xf32>
    %304 = vector.shape_cast %303 : vector<1x1x32x8xf32> to vector<32x8xf32>
    %cst_265 = arith.constant dense<0.000000e+00> : vector<12x8xf32>
    %305 = tpu.matmul %5, %304, %cst_265 {dimension_numbers = #tpu.dot_dimension_numbers<[1], [0], [0], [1], [0, 0, 1, 1], [], []>} : vector<12x32xf32>, vector<32x8xf32>, vector<12x8xf32> -> vector<12x8xf32>
    %c0_266 = arith.constant 0 : index
    %c10_267 = arith.constant 10 : index
    %c0_268 = arith.constant 0 : index
    %c0_269 = arith.constant 0 : index
    %306 = vector.load %arg13[%c0_266, %c10_267, %c0_268, %c0_269] : memref<1x12x1x8xf32, #tpu.memory_space<vmem>>, vector<1x1x1x8xf32>
    %307 = vector.shape_cast %306 : vector<1x1x1x8xf32> to vector<1x8xf32>
    %308 = vector.broadcast %307 : vector<1x8xf32> to vector<12x8xf32>
    %309 = arith.addf %305, %308 : vector<12x8xf32>
    %cst_270 = arith.constant dense<0.000000e+00> : vector<8x12xf32>
    %310 = tpu.matmul %295, %302, %cst_270 {dimension_numbers = #tpu.dot_dimension_numbers<[1], [1], [0], [0], [0, 0, 1, 0], [], []>} : vector<8x8xf32>, vector<12x8xf32>, vector<8x12xf32> -> vector<8x12xf32>
    %cst_271 = arith.constant 0.353553385 : f32
    %311 = vector.broadcast %cst_271 : f32 to vector<8x12xf32>
    %312 = arith.mulf %310, %311 : vector<8x12xf32>
    %cst_272 = arith.constant -1.000000e+09 : f32
    %313 = vector.broadcast %cst_272 : f32 to vector<8x12xf32>
    %314 = arith.select %207, %313, %312 : vector<8x12xi1>, vector<8x12xf32>
    %cst_273 = arith.constant dense<0xFF800000> : vector<8xf32>
    %315 = vector.multi_reduction <maximumf>, %314, %cst_273 [1] : vector<8x12xf32> to vector<8xf32>
    %316 = vector.shape_cast %315 : vector<8xf32> to vector<8x1xf32>
    %317 = vector.broadcast %316 : vector<8x1xf32> to vector<8x12xf32>
    %318 = arith.subf %314, %317 : vector<8x12xf32>
    %319 = math.exp %318 : vector<8x12xf32>
    %cst_274 = arith.constant dense<0.000000e+00> : vector<8xf32>
    %320 = vector.multi_reduction <add>, %319, %cst_274 [1] : vector<8x12xf32> to vector<8xf32>
    %321 = vector.shape_cast %320 : vector<8xf32> to vector<8x1xf32>
    %322 = tpu.reciprocal %321 {approx = true} : vector<8x1xf32> -> vector<8x1xf32>
    %323 = vector.broadcast %322 : vector<8x1xf32> to vector<8x12xf32>
    %324 = arith.mulf %319, %323 : vector<8x12xf32>
    %cst_275 = arith.constant dense<0.000000e+00> : vector<8x8xf32>
    %325 = tpu.matmul %324, %309, %cst_275 {dimension_numbers = #tpu.dot_dimension_numbers<[1], [0], [0], [1], [0, 0, 1, 1], [], []>} : vector<8x12xf32>, vector<12x8xf32>, vector<8x8xf32> -> vector<8x8xf32>
    %c0_276 = arith.constant 0 : index
    %c2_277 = arith.constant 2 : index
    %c0_278 = arith.constant 0 : index
    %c0_279 = arith.constant 0 : index
    %326 = vector.load %arg14[%c0_276, %c2_277, %c0_278, %c0_279] : memref<1x4x8x32xf32, #tpu.memory_space<vmem>>, vector<1x1x8x32xf32>
    %327 = vector.shape_cast %326 : vector<1x1x8x32xf32> to vector<8x32xf32>
    %cst_280 = arith.constant dense<0.000000e+00> : vector<8x32xf32>
    %328 = tpu.matmul %325, %327, %cst_280 {dimension_numbers = #tpu.dot_dimension_numbers<[1], [0], [0], [1], [0, 0, 1, 1], [], []>} : vector<8x8xf32>, vector<8x32xf32>, vector<8x32xf32> -> vector<8x32xf32>
    %329 = arith.addf %288, %328 : vector<8x32xf32>
    %c0_281 = arith.constant 0 : index
    %c3_282 = arith.constant 3 : index
    %c0_283 = arith.constant 0 : index
    %c0_284 = arith.constant 0 : index
    %330 = vector.load %arg12[%c0_281, %c3_282, %c0_283, %c0_284] : memref<1x12x32x8xf32, #tpu.memory_space<vmem>>, vector<1x1x32x8xf32>
    %331 = vector.shape_cast %330 : vector<1x1x32x8xf32> to vector<32x8xf32>
    %cst_285 = arith.constant dense<0.000000e+00> : vector<8x8xf32>
    %332 = tpu.matmul %203, %331, %cst_285 {dimension_numbers = #tpu.dot_dimension_numbers<[1], [0], [0], [1], [0, 0, 1, 1], [], []>} : vector<8x32xf32>, vector<32x8xf32>, vector<8x8xf32> -> vector<8x8xf32>
    %c0_286 = arith.constant 0 : index
    %c3_287 = arith.constant 3 : index
    %c0_288 = arith.constant 0 : index
    %c0_289 = arith.constant 0 : index
    %333 = vector.load %arg13[%c0_286, %c3_287, %c0_288, %c0_289] : memref<1x12x1x8xf32, #tpu.memory_space<vmem>>, vector<1x1x1x8xf32>
    %334 = vector.shape_cast %333 : vector<1x1x1x8xf32> to vector<1x8xf32>
    %335 = vector.broadcast %334 : vector<1x8xf32> to vector<8x8xf32>
    %336 = arith.addf %332, %335 : vector<8x8xf32>
    %c0_290 = arith.constant 0 : index
    %c7_291 = arith.constant 7 : index
    %c0_292 = arith.constant 0 : index
    %c0_293 = arith.constant 0 : index
    %337 = vector.load %arg12[%c0_290, %c7_291, %c0_292, %c0_293] : memref<1x12x32x8xf32, #tpu.memory_space<vmem>>, vector<1x1x32x8xf32>
    %338 = vector.shape_cast %337 : vector<1x1x32x8xf32> to vector<32x8xf32>
    %cst_294 = arith.constant dense<0.000000e+00> : vector<12x8xf32>
    %339 = tpu.matmul %5, %338, %cst_294 {dimension_numbers = #tpu.dot_dimension_numbers<[1], [0], [0], [1], [0, 0, 1, 1], [], []>} : vector<12x32xf32>, vector<32x8xf32>, vector<12x8xf32> -> vector<12x8xf32>
    %c0_295 = arith.constant 0 : index
    %c7_296 = arith.constant 7 : index
    %c0_297 = arith.constant 0 : index
    %c0_298 = arith.constant 0 : index
    %340 = vector.load %arg13[%c0_295, %c7_296, %c0_297, %c0_298] : memref<1x12x1x8xf32, #tpu.memory_space<vmem>>, vector<1x1x1x8xf32>
    %341 = vector.shape_cast %340 : vector<1x1x1x8xf32> to vector<1x8xf32>
    %342 = vector.broadcast %341 : vector<1x8xf32> to vector<12x8xf32>
    %343 = arith.addf %339, %342 : vector<12x8xf32>
    %c0_299 = arith.constant 0 : index
    %c11_300 = arith.constant 11 : index
    %c0_301 = arith.constant 0 : index
    %c0_302 = arith.constant 0 : index
    %344 = vector.load %arg12[%c0_299, %c11_300, %c0_301, %c0_302] : memref<1x12x32x8xf32, #tpu.memory_space<vmem>>, vector<1x1x32x8xf32>
    %345 = vector.shape_cast %344 : vector<1x1x32x8xf32> to vector<32x8xf32>
    %cst_303 = arith.constant dense<0.000000e+00> : vector<12x8xf32>
    %346 = tpu.matmul %5, %345, %cst_303 {dimension_numbers = #tpu.dot_dimension_numbers<[1], [0], [0], [1], [0, 0, 1, 1], [], []>} : vector<12x32xf32>, vector<32x8xf32>, vector<12x8xf32> -> vector<12x8xf32>
    %c0_304 = arith.constant 0 : index
    %c11_305 = arith.constant 11 : index
    %c0_306 = arith.constant 0 : index
    %c0_307 = arith.constant 0 : index
    %347 = vector.load %arg13[%c0_304, %c11_305, %c0_306, %c0_307] : memref<1x12x1x8xf32, #tpu.memory_space<vmem>>, vector<1x1x1x8xf32>
    %348 = vector.shape_cast %347 : vector<1x1x1x8xf32> to vector<1x8xf32>
    %349 = vector.broadcast %348 : vector<1x8xf32> to vector<12x8xf32>
    %350 = arith.addf %346, %349 : vector<12x8xf32>
    %cst_308 = arith.constant dense<0.000000e+00> : vector<8x12xf32>
    %351 = tpu.matmul %336, %343, %cst_308 {dimension_numbers = #tpu.dot_dimension_numbers<[1], [1], [0], [0], [0, 0, 1, 0], [], []>} : vector<8x8xf32>, vector<12x8xf32>, vector<8x12xf32> -> vector<8x12xf32>
    %cst_309 = arith.constant 0.353553385 : f32
    %352 = vector.broadcast %cst_309 : f32 to vector<8x12xf32>
    %353 = arith.mulf %351, %352 : vector<8x12xf32>
    %cst_310 = arith.constant -1.000000e+09 : f32
    %354 = vector.broadcast %cst_310 : f32 to vector<8x12xf32>
    %355 = arith.select %207, %354, %353 : vector<8x12xi1>, vector<8x12xf32>
    %cst_311 = arith.constant dense<0xFF800000> : vector<8xf32>
    %356 = vector.multi_reduction <maximumf>, %355, %cst_311 [1] : vector<8x12xf32> to vector<8xf32>
    %357 = vector.shape_cast %356 : vector<8xf32> to vector<8x1xf32>
    %358 = vector.broadcast %357 : vector<8x1xf32> to vector<8x12xf32>
    %359 = arith.subf %355, %358 : vector<8x12xf32>
    %360 = math.exp %359 : vector<8x12xf32>
    %cst_312 = arith.constant dense<0.000000e+00> : vector<8xf32>
    %361 = vector.multi_reduction <add>, %360, %cst_312 [1] : vector<8x12xf32> to vector<8xf32>
    %362 = vector.shape_cast %361 : vector<8xf32> to vector<8x1xf32>
    %363 = tpu.reciprocal %362 {approx = true} : vector<8x1xf32> -> vector<8x1xf32>
    %364 = vector.broadcast %363 : vector<8x1xf32> to vector<8x12xf32>
    %365 = arith.mulf %360, %364 : vector<8x12xf32>
    %cst_313 = arith.constant dense<0.000000e+00> : vector<8x8xf32>
    %366 = tpu.matmul %365, %350, %cst_313 {dimension_numbers = #tpu.dot_dimension_numbers<[1], [0], [0], [1], [0, 0, 1, 1], [], []>} : vector<8x12xf32>, vector<12x8xf32>, vector<8x8xf32> -> vector<8x8xf32>
    %c0_314 = arith.constant 0 : index
    %c3_315 = arith.constant 3 : index
    %c0_316 = arith.constant 0 : index
    %c0_317 = arith.constant 0 : index
    %367 = vector.load %arg14[%c0_314, %c3_315, %c0_316, %c0_317] : memref<1x4x8x32xf32, #tpu.memory_space<vmem>>, vector<1x1x8x32xf32>
    %368 = vector.shape_cast %367 : vector<1x1x8x32xf32> to vector<8x32xf32>
    %cst_318 = arith.constant dense<0.000000e+00> : vector<8x32xf32>
    %369 = tpu.matmul %366, %368, %cst_318 {dimension_numbers = #tpu.dot_dimension_numbers<[1], [0], [0], [1], [0, 0, 1, 1], [], []>} : vector<8x8xf32>, vector<8x32xf32>, vector<8x32xf32> -> vector<8x32xf32>
    %370 = arith.addf %329, %369 : vector<8x32xf32>
    %c0_319 = arith.constant 0 : index
    %c0_320 = arith.constant 0 : index
    %c0_321 = arith.constant 0 : index
    %371 = vector.load %arg15[%c0_319, %c0_320, %c0_321] : memref<1x1x32xf32, #tpu.memory_space<vmem>>, vector<1x1x32xf32>
    %372 = vector.shape_cast %371 : vector<1x1x32xf32> to vector<1x32xf32>
    %373 = vector.broadcast %372 : vector<1x32xf32> to vector<8x32xf32>
    %374 = arith.addf %370, %373 : vector<8x32xf32>
    %375 = arith.addf %374, %203 : vector<8x32xf32>
    %cst_322 = arith.constant dense<0.000000e+00> : vector<8xf32>
    %376 = vector.multi_reduction <add>, %375, %cst_322 [1] : vector<8x32xf32> to vector<8xf32>
    %377 = vector.shape_cast %376 : vector<8xf32> to vector<8x1xf32>
    %cst_323 = arith.constant 3.200000e+01 : f32
    %378 = vector.broadcast %cst_323 : f32 to vector<8x1xf32>
    %379 = arith.divf %377, %378 : vector<8x1xf32>
    %380 = vector.broadcast %379 : vector<8x1xf32> to vector<8x32xf32>
    %381 = arith.subf %375, %380 : vector<8x32xf32>
    %382 = arith.mulf %381, %381 : vector<8x32xf32>
    %cst_324 = arith.constant dense<0.000000e+00> : vector<8xf32>
    %383 = vector.multi_reduction <add>, %382, %cst_324 [1] : vector<8x32xf32> to vector<8xf32>
    %384 = vector.shape_cast %383 : vector<8xf32> to vector<8x1xf32>
    %cst_325 = arith.constant 3.200000e+01 : f32
    %385 = vector.broadcast %cst_325 : f32 to vector<8x1xf32>
    %386 = arith.divf %384, %385 : vector<8x1xf32>
    %387 = vector.broadcast %379 : vector<8x1xf32> to vector<8x32xf32>
    %388 = arith.subf %375, %387 : vector<8x32xf32>
    %cst_326 = arith.constant 9.99999974E-6 : f32
    %389 = vector.broadcast %cst_326 : f32 to vector<8x1xf32>
    %390 = arith.addf %386, %389 : vector<8x1xf32>
    %391 = math.rsqrt %390 : vector<8x1xf32>
    %392 = vector.broadcast %391 : vector<8x1xf32> to vector<8x32xf32>
    %393 = arith.mulf %388, %392 : vector<8x32xf32>
    %c0_327 = arith.constant 0 : index
    %c0_328 = arith.constant 0 : index
    %c0_329 = arith.constant 0 : index
    %394 = vector.load %arg16[%c0_327, %c0_328, %c0_329] : memref<1x1x32xf32, #tpu.memory_space<vmem>>, vector<1x1x32xf32>
    %395 = vector.shape_cast %394 : vector<1x1x32xf32> to vector<1x32xf32>
    %396 = vector.broadcast %395 : vector<1x32xf32> to vector<8x32xf32>
    %397 = arith.mulf %393, %396 : vector<8x32xf32>
    %c0_330 = arith.constant 0 : index
    %c0_331 = arith.constant 0 : index
    %c0_332 = arith.constant 0 : index
    %398 = vector.load %arg17[%c0_330, %c0_331, %c0_332] : memref<1x1x32xf32, #tpu.memory_space<vmem>>, vector<1x1x32xf32>
    %399 = vector.shape_cast %398 : vector<1x1x32xf32> to vector<1x32xf32>
    %400 = vector.broadcast %399 : vector<1x32xf32> to vector<8x32xf32>
    %401 = arith.addf %397, %400 : vector<8x32xf32>
    %c0_333 = arith.constant 0 : index
    %c0_334 = arith.constant 0 : index
    %c0_335 = arith.constant 0 : index
    %402 = vector.load %arg18[%c0_333, %c0_334, %c0_335] : memref<1x32x64xf32, #tpu.memory_space<vmem>>, vector<1x32x64xf32>
    %403 = vector.shape_cast %402 : vector<1x32x64xf32> to vector<32x64xf32>
    %cst_336 = arith.constant dense<0.000000e+00> : vector<8x64xf32>
    %404 = tpu.matmul %401, %403, %cst_336 {dimension_numbers = #tpu.dot_dimension_numbers<[1], [0], [0], [1], [0, 0, 1, 1], [], []>} : vector<8x32xf32>, vector<32x64xf32>, vector<8x64xf32> -> vector<8x64xf32>
    %c0_337 = arith.constant 0 : index
    %c0_338 = arith.constant 0 : index
    %c0_339 = arith.constant 0 : index
    %405 = vector.load %arg19[%c0_337, %c0_338, %c0_339] : memref<1x1x64xf32, #tpu.memory_space<vmem>>, vector<1x1x64xf32>
    %406 = vector.shape_cast %405 : vector<1x1x64xf32> to vector<1x64xf32>
    %407 = vector.broadcast %406 : vector<1x64xf32> to vector<8x64xf32>
    %408 = arith.addf %404, %407 : vector<8x64xf32>
    %cst_340 = arith.constant 0.000000e+00 : f32
    %409 = vector.broadcast %cst_340 : f32 to vector<8x64xf32>
    %410 = arith.maximumf %408, %409 : vector<8x64xf32>
    %c0_341 = arith.constant 0 : index
    %c0_342 = arith.constant 0 : index
    %c0_343 = arith.constant 0 : index
    %411 = vector.load %arg20[%c0_341, %c0_342, %c0_343] : memref<1x64x32xf32, #tpu.memory_space<vmem>>, vector<1x64x32xf32>
    %412 = vector.shape_cast %411 : vector<1x64x32xf32> to vector<64x32xf32>
    %cst_344 = arith.constant dense<0.000000e+00> : vector<8x32xf32>
    %413 = tpu.matmul %410, %412, %cst_344 {dimension_numbers = #tpu.dot_dimension_numbers<[1], [0], [0], [1], [0, 0, 1, 1], [], []>} : vector<8x64xf32>, vector<64x32xf32>, vector<8x32xf32> -> vector<8x32xf32>
    %c0_345 = arith.constant 0 : index
    %c0_346 = arith.constant 0 : index
    %c0_347 = arith.constant 0 : index
    %414 = vector.load %arg21[%c0_345, %c0_346, %c0_347] : memref<1x1x32xf32, #tpu.memory_space<vmem>>, vector<1x1x32xf32>
    %415 = vector.shape_cast %414 : vector<1x1x32xf32> to vector<1x32xf32>
    %416 = vector.broadcast %415 : vector<1x32xf32> to vector<8x32xf32>
    %417 = arith.addf %413, %416 : vector<8x32xf32>
    %418 = arith.addf %417, %401 : vector<8x32xf32>
    %cst_348 = arith.constant dense<0.000000e+00> : vector<8xf32>
    %419 = vector.multi_reduction <add>, %418, %cst_348 [1] : vector<8x32xf32> to vector<8xf32>
    %420 = vector.shape_cast %419 : vector<8xf32> to vector<8x1xf32>
    %cst_349 = arith.constant 3.200000e+01 : f32
    %421 = vector.broadcast %cst_349 : f32 to vector<8x1xf32>
    %422 = arith.divf %420, %421 : vector<8x1xf32>
    %423 = vector.broadcast %422 : vector<8x1xf32> to vector<8x32xf32>
    %424 = arith.subf %418, %423 : vector<8x32xf32>
    %425 = arith.mulf %424, %424 : vector<8x32xf32>
    %cst_350 = arith.constant dense<0.000000e+00> : vector<8xf32>
    %426 = vector.multi_reduction <add>, %425, %cst_350 [1] : vector<8x32xf32> to vector<8xf32>
    %427 = vector.shape_cast %426 : vector<8xf32> to vector<8x1xf32>
    %cst_351 = arith.constant 3.200000e+01 : f32
    %428 = vector.broadcast %cst_351 : f32 to vector<8x1xf32>
    %429 = arith.divf %427, %428 : vector<8x1xf32>
    %430 = vector.broadcast %422 : vector<8x1xf32> to vector<8x32xf32>
    %431 = arith.subf %418, %430 : vector<8x32xf32>
    %cst_352 = arith.constant 9.99999974E-6 : f32
    %432 = vector.broadcast %cst_352 : f32 to vector<8x1xf32>
    %433 = arith.addf %429, %432 : vector<8x1xf32>
    %434 = math.rsqrt %433 : vector<8x1xf32>
    %435 = vector.broadcast %434 : vector<8x1xf32> to vector<8x32xf32>
    %436 = arith.mulf %431, %435 : vector<8x32xf32>
    %c0_353 = arith.constant 0 : index
    %c0_354 = arith.constant 0 : index
    %c0_355 = arith.constant 0 : index
    %437 = vector.load %arg22[%c0_353, %c0_354, %c0_355] : memref<1x1x32xf32, #tpu.memory_space<vmem>>, vector<1x1x32xf32>
    %438 = vector.shape_cast %437 : vector<1x1x32xf32> to vector<1x32xf32>
    %439 = vector.broadcast %438 : vector<1x32xf32> to vector<8x32xf32>
    %440 = arith.mulf %436, %439 : vector<8x32xf32>
    %c0_356 = arith.constant 0 : index
    %c0_357 = arith.constant 0 : index
    %c0_358 = arith.constant 0 : index
    %441 = vector.load %arg23[%c0_356, %c0_357, %c0_358] : memref<1x1x32xf32, #tpu.memory_space<vmem>>, vector<1x1x32xf32>
    %442 = vector.shape_cast %441 : vector<1x1x32xf32> to vector<1x32xf32>
    %443 = vector.broadcast %442 : vector<1x32xf32> to vector<8x32xf32>
    %444 = arith.addf %440, %443 : vector<8x32xf32>
    %c0_359 = arith.constant 0 : index
    %c0_360 = arith.constant 0 : index
    %445 = vector.load %arg25[%c0_359, %c0_360] : memref<8x32xf32, #tpu.memory_space<vmem>>, vector<8x32xf32>
    tpu.vector_store %arg25[%c0_359, %c0_360], %444 {strides = array<i32>} : memref<8x32xf32, #tpu.memory_space<vmem>>, vector<8x32xf32>,
    %c0_361 = arith.constant 0 : index
    %c0_362 = arith.constant 0 : index
    %c0_363 = arith.constant 0 : index
    %446 = vector.load %arg24[%c0_361, %c0_362, %c0_363] : memref<1x8x32xf32, #tpu.memory_space<vmem>>, vector<1x8x32xf32>
    %447 = vector.shape_cast %446 : vector<1x8x32xf32> to vector<8x32xf32>
    %448 = vector.shape_cast %444 : vector<8x32xf32> to vector<1x8x32xf32>
    tpu.vector_store %arg24[%c0_361, %c0_362, %c0_363], %448 {strides = array<i32>} : memref<1x8x32xf32, #tpu.memory_space<vmem>>, vector<1x8x32xf32>,
    return
  }
  func.func @transform_0(%arg0: i32, %arg1: i32) -> (i32, i32, i32) {
    %c0_i32 = arith.constant 0 : i32
    %c0_i32_0 = arith.constant 0 : i32
    %c0_i32_1 = arith.constant 0 : i32
    return %arg0, %c0_i32, %c0_i32_0 : i32, i32, i32
  }
  func.func @transform_1(%arg0: i32, %arg1: i32) -> (i32, i32, i32) {
    %c0_i32 = arith.constant 0 : i32
    %c0_i32_0 = arith.constant 0 : i32
    %c0_i32_1 = arith.constant 0 : i32
    return %arg0, %c0_i32, %c0_i32_0 : i32, i32, i32
  }
  func.func @transform_2(%arg0: i32, %arg1: i32) -> (i32, i32, i32) {
    %c0_i32 = arith.constant 0 : i32
    %c0_i32_0 = arith.constant 0 : i32
    %c0_i32_1 = arith.constant 0 : i32
    return %arg0, %c0_i32, %c0_i32_0 : i32, i32, i32
  }
  func.func @transform_3(%arg0: i32, %arg1: i32) -> (i32, i32, i32) {
    %c0_i32 = arith.constant 0 : i32
    %c0_i32_0 = arith.constant 0 : i32
    %c0_i32_1 = arith.constant 0 : i32
    return %arg0, %c0_i32, %c0_i32_0 : i32, i32, i32
  }
  func.func @transform_4(%arg0: i32, %arg1: i32) -> (i32, i32, i32, i32) {
    %c0_i32 = arith.constant 0 : i32
    %c0_i32_0 = arith.constant 0 : i32
    %c0_i32_1 = arith.constant 0 : i32
    %c0_i32_2 = arith.constant 0 : i32
    return %arg1, %c0_i32, %c0_i32_0, %c0_i32_1 : i32, i32, i32, i32
  }
  func.func @transform_5(%arg0: i32, %arg1: i32) -> (i32, i32, i32, i32) {
    %c0_i32 = arith.constant 0 : i32
    %c0_i32_0 = arith.constant 0 : i32
    %c0_i32_1 = arith.constant 0 : i32
    %c0_i32_2 = arith.constant 0 : i32
    return %arg1, %c0_i32, %c0_i32_0, %c0_i32_1 : i32, i32, i32, i32
  }
  func.func @transform_6(%arg0: i32, %arg1: i32) -> (i32, i32, i32, i32) {
    %c0_i32 = arith.constant 0 : i32
    %c0_i32_0 = arith.constant 0 : i32
    %c0_i32_1 = arith.constant 0 : i32
    %c0_i32_2 = arith.constant 0 : i32
    return %arg1, %c0_i32, %c0_i32_0, %c0_i32_1 : i32, i32, i32, i32
  }
  func.func @transform_7(%arg0: i32, %arg1: i32) -> (i32, i32, i32) {
    %c0_i32 = arith.constant 0 : i32
    %c0_i32_0 = arith.constant 0 : i32
    %c0_i32_1 = arith.constant 0 : i32
    return %arg1, %c0_i32, %c0_i32_0 : i32, i32, i32
  }
  func.func @transform_8(%arg0: i32, %arg1: i32) -> (i32, i32, i32) {
    %c0_i32 = arith.constant 0 : i32
    %c0_i32_0 = arith.constant 0 : i32
    %c0_i32_1 = arith.constant 0 : i32
    return %arg1, %c0_i32, %c0_i32_0 : i32, i32, i32
  }
  func.func @transform_9(%arg0: i32, %arg1: i32) -> (i32, i32, i32) {
    %c0_i32 = arith.constant 0 : i32
    %c0_i32_0 = arith.constant 0 : i32
    %c0_i32_1 = arith.constant 0 : i32
    return %arg1, %c0_i32, %c0_i32_0 : i32, i32, i32
  }
  func.func @transform_10(%arg0: i32, %arg1: i32) -> (i32, i32, i32, i32) {
    %c0_i32 = arith.constant 0 : i32
    %c0_i32_0 = arith.constant 0 : i32
    %c0_i32_1 = arith.constant 0 : i32
    %c0_i32_2 = arith.constant 0 : i32
    return %arg1, %c0_i32, %c0_i32_0, %c0_i32_1 : i32, i32, i32, i32
  }
  func.func @transform_11(%arg0: i32, %arg1: i32) -> (i32, i32, i32, i32) {
    %c0_i32 = arith.constant 0 : i32
    %c0_i32_0 = arith.constant 0 : i32
    %c0_i32_1 = arith.constant 0 : i32
    %c0_i32_2 = arith.constant 0 : i32
    return %arg1, %c0_i32, %c0_i32_0, %c0_i32_1 : i32, i32, i32, i32
  }
  func.func @transform_12(%arg0: i32, %arg1: i32) -> (i32, i32, i32, i32) {
    %c0_i32 = arith.constant 0 : i32
    %c0_i32_0 = arith.constant 0 : i32
    %c0_i32_1 = arith.constant 0 : i32
    %c0_i32_2 = arith.constant 0 : i32
    return %arg1, %c0_i32, %c0_i32_0, %c0_i32_1 : i32, i32, i32, i32
  }
  func.func @transform_13(%arg0: i32, %arg1: i32) -> (i32, i32, i32) {
    %c0_i32 = arith.constant 0 : i32
    %c0_i32_0 = arith.constant 0 : i32
    %c0_i32_1 = arith.constant 0 : i32
    return %arg1, %c0_i32, %c0_i32_0 : i32, i32, i32
  }
  func.func @transform_14(%arg0: i32, %arg1: i32) -> (i32, i32, i32) {
    %c0_i32 = arith.constant 0 : i32
    %c0_i32_0 = arith.constant 0 : i32
    %c0_i32_1 = arith.constant 0 : i32
    return %arg1, %c0_i32, %c0_i32_0 : i32, i32, i32
  }
  func.func @transform_15(%arg0: i32, %arg1: i32) -> (i32, i32, i32) {
    %c0_i32 = arith.constant 0 : i32
    %c0_i32_0 = arith.constant 0 : i32
    %c0_i32_1 = arith.constant 0 : i32
    return %arg1, %c0_i32, %c0_i32_0 : i32, i32, i32
  }
  func.func @transform_16(%arg0: i32, %arg1: i32) -> (i32, i32, i32) {
    %c0_i32 = arith.constant 0 : i32
    %c0_i32_0 = arith.constant 0 : i32
    %c0_i32_1 = arith.constant 0 : i32
    return %arg1, %c0_i32, %c0_i32_0 : i32, i32, i32
  }
  func.func @transform_17(%arg0: i32, %arg1: i32) -> (i32, i32, i32) {
    %c0_i32 = arith.constant 0 : i32
    %c0_i32_0 = arith.constant 0 : i32
    %c0_i32_1 = arith.constant 0 : i32
    return %arg1, %c0_i32, %c0_i32_0 : i32, i32, i32
  }
  func.func @transform_18(%arg0: i32, %arg1: i32) -> (i32, i32, i32) {
    %c0_i32 = arith.constant 0 : i32
    %c0_i32_0 = arith.constant 0 : i32
    %c0_i32_1 = arith.constant 0 : i32
    return %arg1, %c0_i32, %c0_i32_0 : i32, i32, i32
  }
  func.func @transform_19(%arg0: i32, %arg1: i32) -> (i32, i32, i32) {
    %c0_i32 = arith.constant 0 : i32
    %c0_i32_0 = arith.constant 0 : i32
    %c0_i32_1 = arith.constant 0 : i32
    return %arg1, %c0_i32, %c0_i32_0 : i32, i32, i32
  }
  func.func @transform_20(%arg0: i32, %arg1: i32) -> (i32, i32, i32) {
    %c0_i32 = arith.constant 0 : i32
    %c0_i32_0 = arith.constant 0 : i32
    %c0_i32_1 = arith.constant 0 : i32
    return %arg1, %c0_i32, %c0_i32_0 : i32, i32, i32
  }
  func.func @transform_21(%arg0: i32, %arg1: i32) -> (i32, i32, i32) {
    %c0_i32 = arith.constant 0 : i32
    %c0_i32_0 = arith.constant 0 : i32
    %c0_i32_1 = arith.constant 0 : i32
    return %arg1, %c0_i32, %c0_i32_0 : i32, i32, i32
  }
  func.func @transform_22(%arg0: i32, %arg1: i32) -> (i32, i32, i32) {
    %c0_i32 = arith.constant 0 : i32
    %c0_i32_0 = arith.constant 0 : i32
    %c0_i32_1 = arith.constant 0 : i32
    return %arg0, %c0_i32, %c0_i32_0 : i32, i32, i32
  }
}

</mosaic_0001>

<llo_original>
// kernel: decoder_forward.1
$region0: #{decoder_forward.1}
  #allocation0 [shape = 'u32[]', space=smem, size = 0x4, offset = 0x4, fixed_abs, tag = 'smem constant byte address 0x4 - core index']
  #allocation1 [shape = 'u32[144,128]{1,0:T(1,128)}', space=vmem, size = 0x12000, scoped, tag = 'internal scratch']
  #allocation2 [shape = 'f32[8,32]{1,0:T(8,128)}', space=vmem, size = 0x1000, scoped, tag = 'scratch operand']
  %s0 = inlined_call_operand.vmem [shape: f32[2,8,32], index: 0, kind: input, shape index: {}]
  %s1 = inlined_call_operand.vmem [shape: f32[2,12,32], index: 1, kind: input, shape index: {}]
  %s2 = inlined_call_operand.vmem [shape: f32[2,8,8], index: 2, kind: input, shape index: {}]
  %s3 = inlined_call_operand.vmem [shape: f32[2,8,12], index: 3, kind: input, shape index: {}]
  %s4 = inlined_call_operand.vmem [shape: f32[2,12,32,8], index: 4, kind: input, shape index: {}]
  %s5 = inlined_call_operand.vmem [shape: f32[2,12,1,8], index: 5, kind: input, shape index: {}]
  %s6 = inlined_call_operand.vmem [shape: f32[2,4,8,32], index: 6, kind: input, shape index: {}]
  %s7 = inlined_call_operand.vmem [shape: f32[2,1,32], index: 7, kind: input, shape index: {}]
  %s8 = inlined_call_operand.vmem [shape: f32[2,1,32], index: 8, kind: input, shape index: {}]
  %s9 = inlined_call_operand.vmem [shape: f32[2,1,32], index: 9, kind: input, shape index: {}]
  %s10 = inlined_call_operand.vmem [shape: f32[2,12,32,8], index: 10, kind: input, shape index: {}]
  %s11 = inlined_call_operand.vmem [shape: f32[2,12,1,8], index: 11, kind: input, shape index: {}]
  %s12 = inlined_call_operand.vmem [shape: f32[2,4,8,32], index: 12, kind: input, shape index: {}]
  %s13 = inlined_call_operand.vmem [shape: f32[2,1,32], index: 13, kind: input, shape index: {}]
  %s14 = inlined_call_operand.vmem [shape: f32[2,1,32], index: 14, kind: input, shape index: {}]
  %s15 = inlined_call_operand.vmem [shape: f32[2,1,32], index: 15, kind: input, shape index: {}]
  %s16 = inlined_call_operand.vmem [shape: f32[2,32,64], index: 16, kind: input, shape index: {}]
  %s17 = inlined_call_operand.vmem [shape: f32[2,1,64], index: 17, kind: input, shape index: {}]
  %s18 = inlined_call_operand.vmem [shape: f32[2,64,32], index: 18, kind: input, shape index: {}]
  %s19 = inlined_call_operand.vmem [shape: f32[2,1,32], index: 19, kind: input, shape index: {}]
  %s20 = inlined_call_operand.vmem [shape: f32[2,1,32], index: 20, kind: input, shape index: {}]
  %s21 = inlined_call_operand.vmem [shape: f32[2,1,32], index: 21, kind: input, shape index: {}]
  %s22 = inlined_call_operand.hbm [shape: f32[2,8,32], index: 22, kind: output, shape index: {}]
  %s23 = sld [smem:[#allocation0]]
  $region125: #{decoder_forward.1} parent=0
    _
  %s25 = ssub.s32 1, %s23
  %s26 = scalar_select 0, %s25, %s23
  $region1: #{decoder_forward.1} parent=0
    #allocation3 [shape = 'u8[8192]{0}', space=vmem, size = 0x2000, scoped, tag = 'output window, operand 0']
    #allocation4 [shape = 's32[2]{0}', space=sflag, size = 0x8, scoped, tag = 'scoped memory for decoder_forward.1']
    %27 = vsyncpa [#allocation4], 0
    %s28 = scalar_lea.sflag [#allocation4], 1
    %29 = vsyncpa %s28, 0
    loop: start=0, step=1, limit=6
    $region2: #{decoder_forward.1} parent=1 // loop_pre_header
      _
    $region3: #{decoder_forward.1} parent=1 // loop_header
      %s31 = sphi 0, %s35
      %p32 = scmp.ge.s32.totalorder %s31, 6
      %s38 = sphi 0, %s50
      %s39 = sphi 0, %s46
      %s40 = sphi 0, %s38
      %s41 = sphi 0, %s39
      %s42 = sphi 0, %s40
      %s43 = sphi 0, %s41
      %s53 = sphi 0, %s55
      %s56 = sphi 0, %s53
      %s57 = sphi 0, %s56
      %s73 = sphi 0, %s57
      %s79 = sphi 0, %s81
      %s82 = sphi 0, %s79
      %s83 = sphi 0, %s82
      %s99 = sphi 0, %s83
      %s105 = sphi 0, %s107
      %s108 = sphi 0, %s105
      %s109 = sphi 0, %s108
      %s125 = sphi 0, %s109
      %s131 = sphi 0, %s133
      %s134 = sphi 0, %s131
      %s135 = sphi 0, %s134
      %s151 = sphi 0, %s135
      %s157 = sphi 0, %s159
      %s160 = sphi 0, %s157
      %s161 = sphi 0, %s160
      %s177 = sphi 0, %s161
      %s183 = sphi 0, %s185
      %s186 = sphi 0, %s183
      %s187 = sphi 0, %s186
      %s203 = sphi 0, %s187
      %s209 = sphi 0, %s211
      %s212 = sphi 0, %s209
      %s213 = sphi 0, %s212
      %s229 = sphi 0, %s213
      %s235 = sphi 0, %s237
      %s238 = sphi 0, %s235
      %s239 = sphi 0, %s238
      %s255 = sphi 0, %s239
      %s261 = sphi 0, %s263
      %s264 = sphi 0, %s261
      %s265 = sphi 0, %s264
      %s281 = sphi 0, %s265
      %s287 = sphi 0, %s289
      %s290 = sphi 0, %s287
      %s291 = sphi 0, %s290
      %s307 = sphi 0, %s291
      %s313 = sphi 0, %s315
      %s316 = sphi 0, %s313
      %s317 = sphi 0, %s316
      %s333 = sphi 0, %s317
      %s339 = sphi 0, %s341
      %s342 = sphi 0, %s339
      %s343 = sphi 0, %s342
      %s359 = sphi 0, %s343
      %s365 = sphi 0, %s367
      %s368 = sphi 0, %s365
      %s369 = sphi 0, %s368
      %s385 = sphi 0, %s369
      %s391 = sphi 0, %s393
      %s394 = sphi 0, %s391
      %s395 = sphi 0, %s394
      %s411 = sphi 0, %s395
      %s417 = sphi 0, %s419
      %s420 = sphi 0, %s417
      %s421 = sphi 0, %s420
      %s437 = sphi 0, %s421
      %s443 = sphi 0, %s445
      %s446 = sphi 0, %s443
      %s447 = sphi 0, %s446
      %s463 = sphi 0, %s447
      %s469 = sphi 0, %s471
      %s472 = sphi 0, %s469
      %s473 = sphi 0, %s472
      %s489 = sphi 0, %s473
      %s495 = sphi 0, %s497
      %s498 = sphi 0, %s495
      %s499 = sphi 0, %s498
      %s515 = sphi 0, %s499
      %s521 = sphi 0, %s523
      %s524 = sphi 0, %s521
      %s525 = sphi 0, %s524
      %s541 = sphi 0, %s525
      %s547 = sphi 0, %s549
      %s550 = sphi 0, %s547
      %s551 = sphi 0, %s550
      %s567 = sphi 0, %s551
      %s573 = sphi 0, %s575
      %s576 = sphi 0, %s573
      %s577 = sphi 0, %s576
      %s593 = sphi 0, %s577
      %s599 = sphi 0, %s601
      %s602 = sphi 0, %s599
      %s603 = sphi 0, %s602
      %s619 = sphi 0, %s603
      %s625 = sphi 0, %s627
      %s628 = sphi 0, %s625
      %s629 = sphi 0, %s628
      %s645 = sphi 0, %s629
    $region4: #{decoder_forward.1} parent=1 // loop_header_branch
      %34 = sbr.rel (%p32) target = $region8
    $region5: #{decoder_forward.1} parent=1 // loop_body
      %s36 = ssub.s32 %s31, 1
      %s37 = ssub.s32 %s31, 2
      %s44 = sadd.s32 1, %s39
      %p45 = scmp.ge.s32.totalorder %s44, 2
      %s46 = scalar_select %p45, 0, %s44
      %s47 = sadd.s32 1, %s38
      %s48 = scalar_select %p45, %s47, %s38
      %p49 = scmp.ge.s32.totalorder %s48, 2
      %s50 = scalar_select %p49, 0, %s48
      %s51 = ssub.s32 %s38, %s50
      %p52 = scmp.eq.s32.totalorder %s51, 0
      %s54 = sadd.s32 %s53, 1
      %s55 = scalar_select %p52, %s53, %s54
      %p58 = pneg %p52
      %p59 = scmp.eq.s32.totalorder %s31, 3
      %p60 = por %p58, %p59
      %p61 = scmp.ne.s32.totalorder %s53, %s56
      %p62 = scmp.eq.s32.totalorder %s31, 0
      %p63 = por %p61, %p62
      %p64 = scmp.ne.s32.totalorder %s53, %s56
      %p65 = scmp.eq.s32.totalorder %s36, 3
      %p66 = por %p64, %p65
      %p67 = scmp.ne.s32.totalorder %s56, %s57
      %p68 = scmp.eq.s32.totalorder %s36, 0
      %p69 = por %p67, %p68
      %p70 = scmp.ne.s32.totalorder %s56, %s57
      %p71 = scmp.eq.s32.totalorder %s37, 3
      %p72 = por %p70, %p71
      %p74 = scmp.ne.s32.totalorder %s57, %s73
      %p75 = scmp.eq.s32.totalorder %s37, 0
      %p76 = por %p74, %p75
      %s77 = ssub.s32 %s38, %s50
      %p78 = scmp.eq.s32.totalorder %s77, 0
      %s80 = sadd.s32 %s79, 1
      %s81 = scalar_select %p78, %s79, %s80
      %p84 = pneg %p78
      %p85 = scmp.eq.s32.totalorder %s31, 3
      %p86 = por %p84, %p85
      %p87 = scmp.ne.s32.totalorder %s79, %s82
      %p88 = scmp.eq.s32.totalorder %s31, 0
      %p89 = por %p87, %p88
      %p90 = scmp.ne.s32.totalorder %s79, %s82
      %p91 = scmp.eq.s32.totalorder %s36, 3
      %p92 = por %p90, %p91
      %p93 = scmp.ne.s32.totalorder %s82, %s83
      %p94 = scmp.eq.s32.totalorder %s36, 0
      %p95 = por %p93, %p94
      %p96 = scmp.ne.s32.totalorder %s82, %s83
      %p97 = scmp.eq.s32.totalorder %s37, 3
      %p98 = por %p96, %p97
      %p100 = scmp.ne.s32.totalorder %s83, %s99
      %p101 = scmp.eq.s32.totalorder %s37, 0
      %p102 = por %p100, %p101
      %s103 = ssub.s32 %s38, %s50
      %p104 = scmp.eq.s32.totalorder %s103, 0
      %s106 = sadd.s32 %s105, 1
      %s107 = scalar_select %p104, %s105, %s106
      %p110 = pneg %p104
      %p111 = scmp.eq.s32.totalorder %s31, 3
      %p112 = por %p110, %p111
      %p113 = scmp.ne.s32.totalorder %s105, %s108
      %p114 = scmp.eq.s32.totalorder %s31, 0
      %p115 = por %p113, %p114
      %p116 = scmp.ne.s32.totalorder %s105, %s108
      %p117 = scmp.eq.s32.totalorder %s36, 3
      %p118 = por %p116, %p117
      %p119 = scmp.ne.s32.totalorder %s108, %s109
      %p120 = scmp.eq.s32.totalorder %s36, 0
      %p121 = por %p119, %p120
      %p122 = scmp.ne.s32.totalorder %s108, %s109
      %p123 = scmp.eq.s32.totalorder %s37, 3
      %p124 = por %p122, %p123
      %p126 = scmp.ne.s32.totalorder %s109, %s125
      %p127 = scmp.eq.s32.totalorder %s37, 0
      %p128 = por %p126, %p127
      %s129 = ssub.s32 %s38, %s50
      %p130 = scmp.eq.s32.totalorder %s129, 0
      %s132 = sadd.s32 %s131, 1
      %s133 = scalar_select %p130, %s131, %s132
      %p136 = pneg %p130
      %p137 = scmp.eq.s32.totalorder %s31, 3
      %p138 = por %p136, %p137
      %p139 = scmp.ne.s32.totalorder %s131, %s134
      %p140 = scmp.eq.s32.totalorder %s31, 0
      %p141 = por %p139, %p140
      %p142 = scmp.ne.s32.totalorder %s131, %s134
      %p143 = scmp.eq.s32.totalorder %s36, 3
      %p144 = por %p142, %p143
      %p145 = scmp.ne.s32.totalorder %s134, %s135
      %p146 = scmp.eq.s32.totalorder %s36, 0
      %p147 = por %p145, %p146
      %p148 = scmp.ne.s32.totalorder %s134, %s135
      %p149 = scmp.eq.s32.totalorder %s37, 3
      %p150 = por %p148, %p149
      %p152 = scmp.ne.s32.totalorder %s135, %s151
      %p153 = scmp.eq.s32.totalorder %s37, 0
      %p154 = por %p152, %p153
      %s155 = ssub.s32 %s39, %s46
      %p156 = scmp.eq.s32.totalorder %s155, 0
      %s158 = sadd.s32 %s157, 1
      %s159 = scalar_select %p156, %s157, %s158
      %p162 = pneg %p156
      %p163 = scmp.eq.s32.totalorder %s31, 3
      %p164 = por %p162, %p163
      %p165 = scmp.ne.s32.totalorder %s157, %s160
      %p166 = scmp.eq.s32.totalorder %s31, 0
      %p167 = por %p165, %p166
      %p168 = scmp.ne.s32.totalorder %s157, %s160
      %p169 = scmp.eq.s32.totalorder %s36, 3
      %p170 = por %p168, %p169
      %p171 = scmp.ne.s32.totalorder %s160, %s161
      %p172 = scmp.eq.s32.totalorder %s36, 0
      %p173 = por %p171, %p172
      %p174 = scmp.ne.s32.totalorder %s160, %s161
      %p175 = scmp.eq.s32.totalorder %s37, 3
      %p176 = por %p174, %p175
      %p178 = scmp.ne.s32.totalorder %s161, %s177
      %p179 = scmp.eq.s32.totalorder %s37, 0
      %p180 = por %p178, %p179
      %s181 = ssub.s32 %s39, %s46
      %p182 = scmp.eq.s32.totalorder %s181, 0
      %s184 = sadd.s32 %s183, 1
      %s185 = scalar_select %p182, %s183, %s184
      %p188 = pneg %p182
      %p189 = scmp.eq.s32.totalorder %s31, 3
      %p190 = por %p188, %p189
      %p191 = scmp.ne.s32.totalorder %s183, %s186
      %p192 = scmp.eq.s32.totalorder %s31, 0
      %p193 = por %p191, %p192
      %p194 = scmp.ne.s32.totalorder %s183, %s186
      %p195 = scmp.eq.s32.totalorder %s36, 3
      %p196 = por %p194, %p195
      %p197 = scmp.ne.s32.totalorder %s186, %s187
      %p198 = scmp.eq.s32.totalorder %s36, 0
      %p199 = por %p197, %p198
      %p200 = scmp.ne.s32.totalorder %s186, %s187
      %p201 = scmp.eq.s32.totalorder %s37, 3
      %p202 = por %p200, %p201
      %p204 = scmp.ne.s32.totalorder %s187, %s203
      %p205 = scmp.eq.s32.totalorder %s37, 0
      %p206 = por %p204, %p205
      %s207 = ssub.s32 %s39, %s46
      %p208 = scmp.eq.s32.totalorder %s207, 0
      %s210 = sadd.s32 %s209, 1
      %s211 = scalar_select %p208, %s209, %s210
      %p214 = pneg %p208
      %p215 = scmp.eq.s32.totalorder %s31, 3
      %p216 = por %p214, %p215
      %p217 = scmp.ne.s32.totalorder %s209, %s212
      %p218 = scmp.eq.s32.totalorder %s31, 0
      %p219 = por %p217, %p218
      %p220 = scmp.ne.s32.totalorder %s209, %s212
      %p221 = scmp.eq.s32.totalorder %s36, 3
      %p222 = por %p220, %p221
      %p223 = scmp.ne.s32.totalorder %s212, %s213
      %p224 = scmp.eq.s32.totalorder %s36, 0
      %p225 = por %p223, %p224
      %p226 = scmp.ne.s32.totalorder %s212, %s213
      %p227 = scmp.eq.s32.totalorder %s37, 3
      %p228 = por %p226, %p227
      %p230 = scmp.ne.s32.totalorder %s213, %s229
      %p231 = scmp.eq.s32.totalorder %s37, 0
      %p232 = por %p230, %p231
      %s233 = ssub.s32 %s39, %s46
      %p234 = scmp.eq.s32.totalorder %s233, 0
      %s236 = sadd.s32 %s235, 1
      %s237 = scalar_select %p234, %s235, %s236
      %p240 = pneg %p234
      %p241 = scmp.eq.s32.totalorder %s31, 3
      %p242 = por %p240, %p241
      %p243 = scmp.ne.s32.totalorder %s235, %s238
      %p244 = scmp.eq.s32.totalorder %s31, 0
      %p245 = por %p243, %p244
      %p246 = scmp.ne.s32.totalorder %s235, %s238
      %p247 = scmp.eq.s32.totalorder %s36, 3
      %p248 = por %p246, %p247
      %p249 = scmp.ne.s32.totalorder %s238, %s239
      %p250 = scmp.eq.s32.totalorder %s36, 0
      %p251 = por %p249, %p250
      %p252 = scmp.ne.s32.totalorder %s238, %s239
      %p253 = scmp.eq.s32.totalorder %s37, 3
      %p254 = por %p252, %p253
      %p256 = scmp.ne.s32.totalorder %s239, %s255
      %p257 = scmp.eq.s32.totalorder %s37, 0
      %p258 = por %p256, %p257
      %s259 = ssub.s32 %s39, %s46
      %p260 = scmp.eq.s32.totalorder %s259, 0
      %s262 = sadd.s32 %s261, 1
      %s263 = scalar_select %p260, %s261, %s262
      %p266 = pneg %p260
      %p267 = scmp.eq.s32.totalorder %s31, 3
      %p268 = por %p266, %p267
      %p269 = scmp.ne.s32.totalorder %s261, %s264
      %p270 = scmp.eq.s32.totalorder %s31, 0
      %p271 = por %p269, %p270
      %p272 = scmp.ne.s32.totalorder %s261, %s264
      %p273 = scmp.eq.s32.totalorder %s36, 3
      %p274 = por %p272, %p273
      %p275 = scmp.ne.s32.totalorder %s264, %s265
      %p276 = scmp.eq.s32.totalorder %s36, 0
      %p277 = por %p275, %p276
      %p278 = scmp.ne.s32.totalorder %s264, %s265
      %p279 = scmp.eq.s32.totalorder %s37, 3
      %p280 = por %p278, %p279
      %p282 = scmp.ne.s32.totalorder %s265, %s281
      %p283 = scmp.eq.s32.totalorder %s37, 0
      %p284 = por %p282, %p283
      %s285 = ssub.s32 %s39, %s46
      %p286 = scmp.eq.s32.totalorder %s285, 0
      %s288 = sadd.s32 %s287, 1
      %s289 = scalar_select %p286, %s287, %s288
      %p292 = pneg %p286
      %p293 = scmp.eq.s32.totalorder %s31, 3
      %p294 = por %p292, %p293
      %p295 = scmp.ne.s32.totalorder %s287, %s290
      %p296 = scmp.eq.s32.totalorder %s31, 0
      %p297 = por %p295, %p296
      %p298 = scmp.ne.s32.totalorder %s287, %s290
      %p299 = scmp.eq.s32.totalorder %s36, 3
      %p300 = por %p298, %p299
      %p301 = scmp.ne.s32.totalorder %s290, %s291
      %p302 = scmp.eq.s32.totalorder %s36, 0
      %p303 = por %p301, %p302
      %p304 = scmp.ne.s32.totalorder %s290, %s291
      %p305 = scmp.eq.s32.totalorder %s37, 3
      %p306 = por %p304, %p305
      %p308 = scmp.ne.s32.totalorder %s291, %s307
      %p309 = scmp.eq.s32.totalorder %s37, 0
      %p310 = por %p308, %p309
      %s311 = ssub.s32 %s39, %s46
      %p312 = scmp.eq.s32.totalorder %s311, 0
      %s314 = sadd.s32 %s313, 1
      %s315 = scalar_select %p312, %s313, %s314
      %p318 = pneg %p312
      %p319 = scmp.eq.s32.totalorder %s31, 3
      %p320 = por %p318, %p319
      %p321 = scmp.ne.s32.totalorder %s313, %s316
      %p322 = scmp.eq.s32.totalorder %s31, 0
      %p323 = por %p321, %p322
      %p324 = scmp.ne.s32.totalorder %s313, %s316
      %p325 = scmp.eq.s32.totalorder %s36, 3
      %p326 = por %p324, %p325
      %p327 = scmp.ne.s32.totalorder %s316, %s317
      %p328 = scmp.eq.s32.totalorder %s36, 0
      %p329 = por %p327, %p328
      %p330 = scmp.ne.s32.totalorder %s316, %s317
      %p331 = scmp.eq.s32.totalorder %s37, 3
      %p332 = por %p330, %p331
      %p334 = scmp.ne.s32.totalorder %s317, %s333
      %p335 = scmp.eq.s32.totalorder %s37, 0
      %p336 = por %p334, %p335
      %s337 = ssub.s32 %s39, %s46
      %p338 = scmp.eq.s32.totalorder %s337, 0
      %s340 = sadd.s32 %s339, 1
      %s341 = scalar_select %p338, %s339, %s340
      %p344 = pneg %p338
      %p345 = scmp.eq.s32.totalorder %s31, 3
      %p346 = por %p344, %p345
      %p347 = scmp.ne.s32.totalorder %s339, %s342
      %p348 = scmp.eq.s32.totalorder %s31, 0
      %p349 = por %p347, %p348
      %p350 = scmp.ne.s32.totalorder %s339, %s342
      %p351 = scmp.eq.s32.totalorder %s36, 3
      %p352 = por %p350, %p351
      %p353 = scmp.ne.s32.totalorder %s342, %s343
      %p354 = scmp.eq.s32.totalorder %s36, 0
      %p355 = por %p353, %p354
      %p356 = scmp.ne.s32.totalorder %s342, %s343
      %p357 = scmp.eq.s32.totalorder %s37, 3
      %p358 = por %p356, %p357
      %p360 = scmp.ne.s32.totalorder %s343, %s359
      %p361 = scmp.eq.s32.totalorder %s37, 0
      %p362 = por %p360, %p361
      %s363 = ssub.s32 %s39, %s46
      %p364 = scmp.eq.s32.totalorder %s363, 0
      %s366 = sadd.s32 %s365, 1
      %s367 = scalar_select %p364, %s365, %s366
      %p370 = pneg %p364
      %p371 = scmp.eq.s32.totalorder %s31, 3
      %p372 = por %p370, %p371
      %p373 = scmp.ne.s32.totalorder %s365, %s368
      %p374 = scmp.eq.s32.totalorder %s31, 0
      %p375 = por %p373, %p374
      %p376 = scmp.ne.s32.totalorder %s365, %s368
      %p377 = scmp.eq.s32.totalorder %s36, 3
      %p378 = por %p376, %p377
      %p379 = scmp.ne.s32.totalorder %s368, %s369
      %p380 = scmp.eq.s32.totalorder %s36, 0
      %p381 = por %p379, %p380
      %p382 = scmp.ne.s32.totalorder %s368, %s369
      %p383 = scmp.eq.s32.totalorder %s37, 3
      %p384 = por %p382, %p383
      %p386 = scmp.ne.s32.totalorder %s369, %s385
      %p387 = scmp.eq.s32.totalorder %s37, 0
      %p388 = por %p386, %p387
      %s389 = ssub.s32 %s39, %s46
      %p390 = scmp.eq.s32.totalorder %s389, 0
      %s392 = sadd.s32 %s391, 1
      %s393 = scalar_select %p390, %s391, %s392
      %p396 = pneg %p390
      %p397 = scmp.eq.s32.totalorder %s31, 3
      %p398 = por %p396, %p397
      %p399 = scmp.ne.s32.totalorder %s391, %s394
      %p400 = scmp.eq.s32.totalorder %s31, 0
      %p401 = por %p399, %p400
      %p402 = scmp.ne.s32.totalorder %s391, %s394
      %p403 = scmp.eq.s32.totalorder %s36, 3
      %p404 = por %p402, %p403
      %p405 = scmp.ne.s32.totalorder %s394, %s395
      %p406 = scmp.eq.s32.totalorder %s36, 0
      %p407 = por %p405, %p406
      %p408 = scmp.ne.s32.totalorder %s394, %s395
      %p409 = scmp.eq.s32.totalorder %s37, 3
      %p410 = por %p408, %p409
      %p412 = scmp.ne.s32.totalorder %s395, %s411
      %p413 = scmp.eq.s32.totalorder %s37, 0
      %p414 = por %p412, %p413
      %s415 = ssub.s32 %s39, %s46
      %p416 = scmp.eq.s32.totalorder %s415, 0
      %s418 = sadd.s32 %s417, 1
      %s419 = scalar_select %p416, %s417, %s418
      %p422 = pneg %p416
      %p423 = scmp.eq.s32.totalorder %s31, 3
      %p424 = por %p422, %p423
      %p425 = scmp.ne.s32.totalorder %s417, %s420
      %p426 = scmp.eq.s32.totalorder %s31, 0
      %p427 = por %p425, %p426
      %p428 = scmp.ne.s32.totalorder %s417, %s420
      %p429 = scmp.eq.s32.totalorder %s36, 3
      %p430 = por %p428, %p429
      %p431 = scmp.ne.s32.totalorder %s420, %s421
      %p432 = scmp.eq.s32.totalorder %s36, 0
      %p433 = por %p431, %p432
      %p434 = scmp.ne.s32.totalorder %s420, %s421
      %p435 = scmp.eq.s32.totalorder %s37, 3
      %p436 = por %p434, %p435
      %p438 = scmp.ne.s32.totalorder %s421, %s437
      %p439 = scmp.eq.s32.totalorder %s37, 0
      %p440 = por %p438, %p439
      %s441 = ssub.s32 %s39, %s46
      %p442 = scmp.eq.s32.totalorder %s441, 0
      %s444 = sadd.s32 %s443, 1
      %s445 = scalar_select %p442, %s443, %s444
      %p448 = pneg %p442
      %p449 = scmp.eq.s32.totalorder %s31, 3
      %p450 = por %p448, %p449
      %p451 = scmp.ne.s32.totalorder %s443, %s446
      %p452 = scmp.eq.s32.totalorder %s31, 0
      %p453 = por %p451, %p452
      %p454 = scmp.ne.s32.totalorder %s443, %s446
      %p455 = scmp.eq.s32.totalorder %s36, 3
      %p456 = por %p454, %p455
      %p457 = scmp.ne.s32.totalorder %s446, %s447
      %p458 = scmp.eq.s32.totalorder %s36, 0
      %p459 = por %p457, %p458
      %p460 = scmp.ne.s32.totalorder %s446, %s447
      %p461 = scmp.eq.s32.totalorder %s37, 3
      %p462 = por %p460, %p461
      %p464 = scmp.ne.s32.totalorder %s447, %s463
      %p465 = scmp.eq.s32.totalorder %s37, 0
      %p466 = por %p464, %p465
      %s467 = ssub.s32 %s39, %s46
      %p468 = scmp.eq.s32.totalorder %s467, 0
      %s470 = sadd.s32 %s469, 1
      %s471 = scalar_select %p468, %s469, %s470
      %p474 = pneg %p468
      %p475 = scmp.eq.s32.totalorder %s31, 3
      %p476 = por %p474, %p475
      %p477 = scmp.ne.s32.totalorder %s469, %s472
      %p478 = scmp.eq.s32.totalorder %s31, 0
      %p479 = por %p477, %p478
      %p480 = scmp.ne.s32.totalorder %s469, %s472
      %p481 = scmp.eq.s32.totalorder %s36, 3
      %p482 = por %p480, %p481
      %p483 = scmp.ne.s32.totalorder %s472, %s473
      %p484 = scmp.eq.s32.totalorder %s36, 0
      %p485 = por %p483, %p484
      %p486 = scmp.ne.s32.totalorder %s472, %s473
      %p487 = scmp.eq.s32.totalorder %s37, 3
      %p488 = por %p486, %p487
      %p490 = scmp.ne.s32.totalorder %s473, %s489
      %p491 = scmp.eq.s32.totalorder %s37, 0
      %p492 = por %p490, %p491
      %s493 = ssub.s32 %s39, %s46
      %p494 = scmp.eq.s32.totalorder %s493, 0
      %s496 = sadd.s32 %s495, 1
      %s497 = scalar_select %p494, %s495, %s496
      %p500 = pneg %p494
      %p501 = scmp.eq.s32.totalorder %s31, 3
      %p502 = por %p500, %p501
      %p503 = scmp.ne.s32.totalorder %s495, %s498
      %p504 = scmp.eq.s32.totalorder %s31, 0
      %p505 = por %p503, %p504
      %p506 = scmp.ne.s32.totalorder %s495, %s498
      %p507 = scmp.eq.s32.totalorder %s36, 3
      %p508 = por %p506, %p507
      %p509 = scmp.ne.s32.totalorder %s498, %s499
      %p510 = scmp.eq.s32.totalorder %s36, 0
      %p511 = por %p509, %p510
      %p512 = scmp.ne.s32.totalorder %s498, %s499
      %p513 = scmp.eq.s32.totalorder %s37, 3
      %p514 = por %p512, %p513
      %p516 = scmp.ne.s32.totalorder %s499, %s515
      %p517 = scmp.eq.s32.totalorder %s37, 0
      %p518 = por %p516, %p517
      %s519 = ssub.s32 %s39, %s46
      %p520 = scmp.eq.s32.totalorder %s519, 0
      %s522 = sadd.s32 %s521, 1
      %s523 = scalar_select %p520, %s521, %s522
      %p526 = pneg %p520
      %p527 = scmp.eq.s32.totalorder %s31, 3
      %p528 = por %p526, %p527
      %p529 = scmp.ne.s32.totalorder %s521, %s524
      %p530 = scmp.eq.s32.totalorder %s31, 0
      %p531 = por %p529, %p530
      %p532 = scmp.ne.s32.totalorder %s521, %s524
      %p533 = scmp.eq.s32.totalorder %s36, 3
      %p534 = por %p532, %p533
      %p535 = scmp.ne.s32.totalorder %s524, %s525
      %p536 = scmp.eq.s32.totalorder %s36, 0
      %p537 = por %p535, %p536
      %p538 = scmp.ne.s32.totalorder %s524, %s525
      %p539 = scmp.eq.s32.totalorder %s37, 3
      %p540 = por %p538, %p539
      %p542 = scmp.ne.s32.totalorder %s525, %s541
      %p543 = scmp.eq.s32.totalorder %s37, 0
      %p544 = por %p542, %p543
      %s545 = ssub.s32 %s39, %s46
      %p546 = scmp.eq.s32.totalorder %s545, 0
      %s548 = sadd.s32 %s547, 1
      %s549 = scalar_select %p546, %s547, %s548
      %p552 = pneg %p546
      %p553 = scmp.eq.s32.totalorder %s31, 3
      %p554 = por %p552, %p553
      %p555 = scmp.ne.s32.totalorder %s547, %s550
      %p556 = scmp.eq.s32.totalorder %s31, 0
      %p557 = por %p555, %p556
      %p558 = scmp.ne.s32.totalorder %s547, %s550
      %p559 = scmp.eq.s32.totalorder %s36, 3
      %p560 = por %p558, %p559
      %p561 = scmp.ne.s32.totalorder %s550, %s551
      %p562 = scmp.eq.s32.totalorder %s36, 0
      %p563 = por %p561, %p562
      %p564 = scmp.ne.s32.totalorder %s550, %s551
      %p565 = scmp.eq.s32.totalorder %s37, 3
      %p566 = por %p564, %p565
      %p568 = scmp.ne.s32.totalorder %s551, %s567
      %p569 = scmp.eq.s32.totalorder %s37, 0
      %p570 = por %p568, %p569
      %s571 = ssub.s32 %s39, %s46
      %p572 = scmp.eq.s32.totalorder %s571, 0
      %s574 = sadd.s32 %s573, 1
      %s575 = scalar_select %p572, %s573, %s574
      %p578 = pneg %p572
      %p579 = scmp.eq.s32.totalorder %s31, 3
      %p580 = por %p578, %p579
      %p581 = scmp.ne.s32.totalorder %s573, %s576
      %p582 = scmp.eq.s32.totalorder %s31, 0
      %p583 = por %p581, %p582
      %p584 = scmp.ne.s32.totalorder %s573, %s576
      %p585 = scmp.eq.s32.totalorder %s36, 3
      %p586 = por %p584, %p585
      %p587 = scmp.ne.s32.totalorder %s576, %s577
      %p588 = scmp.eq.s32.totalorder %s36, 0
      %p589 = por %p587, %p588
      %p590 = scmp.ne.s32.totalorder %s576, %s577
      %p591 = scmp.eq.s32.totalorder %s37, 3
      %p592 = por %p590, %p591
      %p594 = scmp.ne.s32.totalorder %s577, %s593
      %p595 = scmp.eq.s32.totalorder %s37, 0
      %p596 = por %p594, %p595
      %s597 = ssub.s32 %s39, %s46
      %p598 = scmp.eq.s32.totalorder %s597, 0
      %s600 = sadd.s32 %s599, 1
      %s601 = scalar_select %p598, %s599, %s600
      %p604 = pneg %p598
      %p605 = scmp.eq.s32.totalorder %s31, 3
      %p606 = por %p604, %p605
      %p607 = scmp.ne.s32.totalorder %s599, %s602
      %p608 = scmp.eq.s32.totalorder %s31, 0
      %p609 = por %p607, %p608
      %p610 = scmp.ne.s32.totalorder %s599, %s602
      %p611 = scmp.eq.s32.totalorder %s36, 3
      %p612 = por %p610, %p611
      %p613 = scmp.ne.s32.totalorder %s602, %s603
      %p614 = scmp.eq.s32.totalorder %s36, 0
      %p615 = por %p613, %p614
      %p616 = scmp.ne.s32.totalorder %s602, %s603
      %p617 = scmp.eq.s32.totalorder %s37, 3
      %p618 = por %p616, %p617
      %p620 = scmp.ne.s32.totalorder %s603, %s619
      %p621 = scmp.eq.s32.totalorder %s37, 0
      %p622 = por %p620, %p621
      %s623 = ssub.s32 %s38, %s50
      %p624 = scmp.eq.s32.totalorder %s623, 0
      %s626 = sadd.s32 %s625, 1
      %s627 = scalar_select %p624, %s625, %s626
      %p630 = pneg %p624
      %p631 = scmp.eq.s32.totalorder %s31, 3
      %p632 = por %p630, %p631
      %p633 = scmp.ne.s32.totalorder %s625, %s628
      %p634 = scmp.eq.s32.totalorder %s31, 0
      %p635 = por %p633, %p634
      %p636 = scmp.ne.s32.totalorder %s625, %s628
      %p637 = scmp.eq.s32.totalorder %s36, 3
      %p638 = por %p636, %p637
      %p639 = scmp.ne.s32.totalorder %s628, %s629
      %p640 = scmp.eq.s32.totalorder %s36, 0
      %p641 = por %p639, %p640
      %p642 = scmp.ne.s32.totalorder %s628, %s629
      %p643 = scmp.eq.s32.totalorder %s37, 3
      %p644 = por %p642, %p643
      %p646 = scmp.ne.s32.totalorder %s629, %s645
      %p647 = scmp.eq.s32.totalorder %s37, 0
      %p648 = por %p646, %p647
      %p649 = scmp.le.s32.totalorder 1, %s31
      %p650 = scmp.lt.s32.totalorder %s31, 5
      %p651 = pnand %p649, %p650
      %p652 = pneg %p651
      // Predicated region
      $region9: #{decoder_forward.1} parent=5 // pred_check
        _
      $region10: #{decoder_forward.1} parent=5 // pred_check_branch
        %654 = sbr.rel (%p651) target = $region12
      $region11: #{decoder_forward.1} parent=5 // pred_region
        %s655 = ssub.s32 %s31, 1
      $region12: #{decoder_forward.1} parent=5 // pred_fallthru
        _
      %p656 = scmp.lt.s32.totalorder %s31, 4
      // Predicated region
      $region13: #{decoder_forward.1} parent=5 // pred_check
        %p657 = pneg %p656
      $region14: #{decoder_forward.1} parent=5 // pred_check_branch
        %659 = sbr.rel (%p657) target = $region16
      $region15: #{decoder_forward.1} parent=5 // pred_region
        // Predicated region
        $region17: #{decoder_forward.1} parent=15 // pred_check
          %p660 = pneg %p63
        $region18: #{decoder_forward.1} parent=15 // pred_check_branch
          %662 = sbr.rel (%p660) target = $region20
        $region19: #{decoder_forward.1} parent=15 // pred_region
          %p663 = scmp.lt.s32.totalorder %s38, 1
          %s664 = scalar_select %p663, %s38, 1
          %s665 = smul.addr %s664, 8
          %s666 = scalar_lea.vmem %s0, %s665
        $region20: #{decoder_forward.1} parent=15 // pred_fallthru
          _
        // Predicated region
        $region21: #{decoder_forward.1} parent=15 // pred_check
          %p667 = pneg %p89
        $region22: #{decoder_forward.1} parent=15 // pred_check_branch
          %669 = sbr.rel (%p667) target = $region24
        $region23: #{decoder_forward.1} parent=15 // pred_region
          %p670 = scmp.lt.s32.totalorder %s38, 1
          %s671 = scalar_select %p670, %s38, 1
          %s672 = smul.addr %s671, 2
          %s673 = smul.addr %s672, 8
          %s674 = scalar_lea.vmem %s1, %s673
        $region24: #{decoder_forward.1} parent=15 // pred_fallthru
          _
        // Predicated region
        $region25: #{decoder_forward.1} parent=15 // pred_check
          %p675 = pneg %p115
        $region26: #{decoder_forward.1} parent=15 // pred_check_branch
          %677 = sbr.rel (%p675) target = $region28
        $region27: #{decoder_forward.1} parent=15 // pred_region
          %p678 = scmp.lt.s32.totalorder %s38, 1
          %s679 = scalar_select %p678, %s38, 1
          %s680 = smul.addr %s679, 8
          %s681 = scalar_lea.vmem %s2, %s680
        $region28: #{decoder_forward.1} parent=15 // pred_fallthru
          _
        // Predicated region
        $region29: #{decoder_forward.1} parent=15 // pred_check
          %p682 = pneg %p141
        $region30: #{decoder_forward.1} parent=15 // pred_check_branch
          %684 = sbr.rel (%p682) target = $region32
        $region31: #{decoder_forward.1} parent=15 // pred_region
          %p685 = scmp.lt.s32.totalorder %s38, 1
          %s686 = scalar_select %p685, %s38, 1
          %s687 = smul.addr %s686, 8
          %s688 = scalar_lea.vmem %s3, %s687
        $region32: #{decoder_forward.1} parent=15 // pred_fallthru
          _
        // Predicated region
        $region33: #{decoder_forward.1} parent=15 // pred_check
          %p689 = pneg %p167
        $region34: #{decoder_forward.1} parent=15 // pred_check_branch
          %691 = sbr.rel (%p689) target = $region36
        $region35: #{decoder_forward.1} parent=15 // pred_region
          %p692 = scmp.lt.s32.totalorder %s39, 1
          %s693 = scalar_select %p692, %s39, 1
          %s694 = smul.addr %s693, 48
          %s695 = smul.addr %s694, 8
          %s696 = scalar_lea.vmem %s4, %s695
        $region36: #{decoder_forward.1} parent=15 // pred_fallthru
          _
        // Predicated region
        $region37: #{decoder_forward.1} parent=15 // pred_check
          %p697 = pneg %p193
        $region38: #{decoder_forward.1} parent=15 // pred_check_branch
          %699 = sbr.rel (%p697) target = $region40
        $region39: #{decoder_forward.1} parent=15 // pred_region
          %p700 = scmp.lt.s32.totalorder %s39, 1
          %s701 = scalar_select %p700, %s39, 1
          %s702 = smul.addr %s701, 12
          %s703 = scalar_lea.vmem %s5, %s702
        $region40: #{decoder_forward.1} parent=15 // pred_fallthru
          _
        // Predicated region
        $region41: #{decoder_forward.1} parent=15 // pred_check
          %p704 = pneg %p219
        $region42: #{decoder_forward.1} parent=15 // pred_check_branch
          %706 = sbr.rel (%p704) target = $region44
        $region43: #{decoder_forward.1} parent=15 // pred_region
          %p707 = scmp.lt.s32.totalorder %s39, 1
          %s708 = scalar_select %p707, %s39, 1
          %s709 = smul.addr %s708, 4
          %s710 = smul.addr %s709, 8
          %s711 = scalar_lea.vmem %s6, %s710
        $region44: #{decoder_forward.1} parent=15 // pred_fallthru
          _
        // Predicated region
        $region45: #{decoder_forward.1} parent=15 // pred_check
          %p712 = pneg %p245
        $region46: #{decoder_forward.1} parent=15 // pred_check_branch
          %714 = sbr.rel (%p712) target = $region48
        $region47: #{decoder_forward.1} parent=15 // pred_region
          %p715 = scmp.lt.s32.totalorder %s39, 1
          %s716 = scalar_select %p715, %s39, 1
          %s717 = scalar_lea.vmem %s7, %s716
        $region48: #{decoder_forward.1} parent=15 // pred_fallthru
          _
        // Predicated region
        $region49: #{decoder_forward.1} parent=15 // pred_check
          %p718 = pneg %p271
        $region50: #{decoder_forward.1} parent=15 // pred_check_branch
          %720 = sbr.rel (%p718) target = $region52
        $region51: #{decoder_forward.1} parent=15 // pred_region
          %p721 = scmp.lt.s32.totalorder %s39, 1
          %s722 = scalar_select %p721, %s39, 1
          %s723 = scalar_lea.vmem %s8, %s722
        $region52: #{decoder_forward.1} parent=15 // pred_fallthru
          _
        // Predicated region
        $region53: #{decoder_forward.1} parent=15 // pred_check
          %p724 = pneg %p297
        $region54: #{decoder_forward.1} parent=15 // pred_check_branch
          %726 = sbr.rel (%p724) target = $region56
        $region55: #{decoder_forward.1} parent=15 // pred_region
          %p727 = scmp.lt.s32.totalorder %s39, 1
          %s728 = scalar_select %p727, %s39, 1
          %s729 = scalar_lea.vmem %s9, %s728
        $region56: #{decoder_forward.1} parent=15 // pred_fallthru
          _
        // Predicated region
        $region57: #{decoder_forward.1} parent=15 // pred_check
          %p730 = pneg %p323
        $region58: #{decoder_forward.1} parent=15 // pred_check_branch
          %732 = sbr.rel (%p730) target = $region60
        $region59: #{decoder_forward.1} parent=15 // pred_region
          %p733 = scmp.lt.s32.totalorder %s39, 1
          %s734 = scalar_select %p733, %s39, 1
          %s735 = smul.addr %s734, 48
          %s736 = smul.addr %s735, 8
          %s737 = scalar_lea.vmem %s10, %s736
        $region60: #{decoder_forward.1} parent=15 // pred_fallthru
          _
        // Predicated region
        $region61: #{decoder_forward.1} parent=15 // pred_check
          %p738 = pneg %p349
        $region62: #{decoder_forward.1} parent=15 // pred_check_branch
          %740 = sbr.rel (%p738) target = $region64
        $region63: #{decoder_forward.1} parent=15 // pred_region
          %p741 = scmp.lt.s32.totalorder %s39, 1
          %s742 = scalar_select %p741, %s39, 1
          %s743 = smul.addr %s742, 12
          %s744 = scalar_lea.vmem %s11, %s743
        $region64: #{decoder_forward.1} parent=15 // pred_fallthru
          _
        // Predicated region
        $region65: #{decoder_forward.1} parent=15 // pred_check
          %p745 = pneg %p375
        $region66: #{decoder_forward.1} parent=15 // pred_check_branch
          %747 = sbr.rel (%p745) target = $region68
        $region67: #{decoder_forward.1} parent=15 // pred_region
          %p748 = scmp.lt.s32.totalorder %s39, 1
          %s749 = scalar_select %p748, %s39, 1
          %s750 = smul.addr %s749, 4
          %s751 = smul.addr %s750, 8
          %s752 = scalar_lea.vmem %s12, %s751
        $region68: #{decoder_forward.1} parent=15 // pred_fallthru
          _
        // Predicated region
        $region69: #{decoder_forward.1} parent=15 // pred_check
          %p753 = pneg %p401
        $region70: #{decoder_forward.1} parent=15 // pred_check_branch
          %755 = sbr.rel (%p753) target = $region72
        $region71: #{decoder_forward.1} parent=15 // pred_region
          %p756 = scmp.lt.s32.totalorder %s39, 1
          %s757 = scalar_select %p756, %s39, 1
          %s758 = scalar_lea.vmem %s13, %s757
        $region72: #{decoder_forward.1} parent=15 // pred_fallthru
          _
        // Predicated region
        $region73: #{decoder_forward.1} parent=15 // pred_check
          %p759 = pneg %p427
        $region74: #{decoder_forward.1} parent=15 // pred_check_branch
          %761 = sbr.rel (%p759) target = $region76
        $region75: #{decoder_forward.1} parent=15 // pred_region
          %p762 = scmp.lt.s32.totalorder %s39, 1
          %s763 = scalar_select %p762, %s39, 1
          %s764 = scalar_lea.vmem %s14, %s763
        $region76: #{decoder_forward.1} parent=15 // pred_fallthru
          _
        // Predicated region
        $region77: #{decoder_forward.1} parent=15 // pred_check
          %p765 = pneg %p453
        $region78: #{decoder_forward.1} parent=15 // pred_check_branch
          %767 = sbr.rel (%p765) target = $region80
        $region79: #{decoder_forward.1} parent=15 // pred_region
          %p768 = scmp.lt.s32.totalorder %s39, 1
          %s769 = scalar_select %p768, %s39, 1
          %s770 = scalar_lea.vmem %s15, %s769
        $region80: #{decoder_forward.1} parent=15 // pred_fallthru
          _
        // Predicated region
        $region81: #{decoder_forward.1} parent=15 // pred_check
          %p771 = pneg %p479
        $region82: #{decoder_forward.1} parent=15 // pred_check_branch
          %773 = sbr.rel (%p771) target = $region84
        $region83: #{decoder_forward.1} parent=15 // pred_region
          %p774 = scmp.lt.s32.totalorder %s39, 1
          %s775 = scalar_select %p774, %s39, 1
          %s776 = smul.addr %s775, 4
          %s777 = smul.addr %s776, 8
          %s778 = scalar_lea.vmem %s16, %s777
        $region84: #{decoder_forward.1} parent=15 // pred_fallthru
          _
        // Predicated region
        $region85: #{decoder_forward.1} parent=15 // pred_check
          %p779 = pneg %p505
        $region86: #{decoder_forward.1} parent=15 // pred_check_branch
          %781 = sbr.rel (%p779) target = $region88
        $region87: #{decoder_forward.1} parent=15 // pred_region
          %p782 = scmp.lt.s32.totalorder %s39, 1
          %s783 = scalar_select %p782, %s39, 1
          %s784 = scalar_lea.vmem %s17, %s783
        $region88: #{decoder_forward.1} parent=15 // pred_fallthru
          _
        // Predicated region
        $region89: #{decoder_forward.1} parent=15 // pred_check
          %p785 = pneg %p531
        $region90: #{decoder_forward.1} parent=15 // pred_check_branch
          %787 = sbr.rel (%p785) target = $region92
        $region91: #{decoder_forward.1} parent=15 // pred_region
          %p788 = scmp.lt.s32.totalorder %s39, 1
          %s789 = scalar_select %p788, %s39, 1
          %s790 = smul.addr %s789, 8
          %s791 = smul.addr %s790, 8
          %s792 = scalar_lea.vmem %s18, %s791
        $region92: #{decoder_forward.1} parent=15 // pred_fallthru
          _
        // Predicated region
        $region93: #{decoder_forward.1} parent=15 // pred_check
          %p793 = pneg %p557
        $region94: #{decoder_forward.1} parent=15 // pred_check_branch
          %795 = sbr.rel (%p793) target = $region96
        $region95: #{decoder_forward.1} parent=15 // pred_region
          %p796 = scmp.lt.s32.totalorder %s39, 1
          %s797 = scalar_select %p796, %s39, 1
          %s798 = scalar_lea.vmem %s19, %s797
        $region96: #{decoder_forward.1} parent=15 // pred_fallthru
          _
        // Predicated region
        $region97: #{decoder_forward.1} parent=15 // pred_check
          %p799 = pneg %p583
        $region98: #{decoder_forward.1} parent=15 // pred_check_branch
          %801 = sbr.rel (%p799) target = $region100
        $region99: #{decoder_forward.1} parent=15 // pred_region
          %p802 = scmp.lt.s32.totalorder %s39, 1
          %s803 = scalar_select %p802, %s39, 1
          %s804 = scalar_lea.vmem %s20, %s803
        $region100: #{decoder_forward.1} parent=15 // pred_fallthru
          _
        // Predicated region
        $region101: #{decoder_forward.1} parent=15 // pred_check
          %p805 = pneg %p609
        $region102: #{decoder_forward.1} parent=15 // pred_check_branch
          %807 = sbr.rel (%p805) target = $region104
        $region103: #{decoder_forward.1} parent=15 // pred_region
          %p808 = scmp.lt.s32.totalorder %s39, 1
          %s809 = scalar_select %p808, %s39, 1
          %s810 = scalar_lea.vmem %s21, %s809
        $region104: #{decoder_forward.1} parent=15 // pred_fallthru
          _
      $region16: #{decoder_forward.1} parent=5 // pred_fallthru
        _
      %p811 = scmp.le.s32.totalorder 1, %s31
      %p812 = scmp.lt.s32.totalorder %s31, 5
      %p813 = pnand %p811, %p812
      %p814 = pneg %p813
      // Predicated region
      $region105: #{decoder_forward.1} parent=5 // pred_check
        _
      $region106: #{decoder_forward.1} parent=5 // pred_check_branch
        %816 = sbr.rel (%p813) target = $region108
      $region107: #{decoder_forward.1} parent=5 // pred_region
        %s817 = ssub.s32 %s31, 1
        %p818 = scmp.lt.s32.totalorder %s40, 1
        %s819 = scalar_select %p818, %s40, 1
        %s820 = smul.addr %s819, 8
        %s821 = scalar_lea.vmem %s0, %s820
        %p822 = pneg %p69
        %p823 = pneg %p66
        %p824 = scmp.lt.s32.totalorder %s40, 1
        %s825 = scalar_select %p824, %s40, 1
        %s826 = smul.addr %s825, 2
        %s827 = smul.addr %s826, 8
        %s828 = scalar_lea.vmem %s1, %s827
        %p829 = pneg %p95
        %p830 = pneg %p92
        %p831 = scmp.lt.s32.totalorder %s40, 1
        %s832 = scalar_select %p831, %s40, 1
        %s833 = smul.addr %s832, 8
        %s834 = scalar_lea.vmem %s2, %s833
        %p835 = pneg %p121
        %p836 = pneg %p118
        %p837 = scmp.lt.s32.totalorder %s40, 1
        %s838 = scalar_select %p837, %s40, 1
        %s839 = smul.addr %s838, 8
        %s840 = scalar_lea.vmem %s3, %s839
        %p841 = pneg %p147
        %p842 = pneg %p144
        %p843 = scmp.lt.s32.totalorder %s41, 1
        %s844 = scalar_select %p843, %s41, 1
        %s845 = smul.addr %s844, 48
        %s846 = smul.addr %s845, 8
        %s847 = scalar_lea.vmem %s4, %s846
        %p848 = pneg %p173
        %p849 = pneg %p170
        %p850 = scmp.lt.s32.totalorder %s41, 1
        %s851 = scalar_select %p850, %s41, 1
        %s852 = smul.addr %s851, 12
        %s853 = scalar_lea.vmem %s5, %s852
        %p854 = pneg %p199
        %p855 = pneg %p196
        %p856 = scmp.lt.s32.totalorder %s41, 1
        %s857 = scalar_select %p856, %s41, 1
        %s858 = smul.addr %s857, 4
        %s859 = smul.addr %s858, 8
        %s860 = scalar_lea.vmem %s6, %s859
        %p861 = pneg %p225
        %p862 = pneg %p222
        %p863 = scmp.lt.s32.totalorder %s41, 1
        %s864 = scalar_select %p863, %s41, 1
        %s865 = scalar_lea.vmem %s7, %s864
        %p866 = pneg %p251
        %p867 = pneg %p248
        %p868 = scmp.lt.s32.totalorder %s41, 1
        %s869 = scalar_select %p868, %s41, 1
        %s870 = scalar_lea.vmem %s8, %s869
        %p871 = pneg %p277
        %p872 = pneg %p274
        %p873 = scmp.lt.s32.totalorder %s41, 1
        %s874 = scalar_select %p873, %s41, 1
        %s875 = scalar_lea.vmem %s9, %s874
        %p876 = pneg %p303
        %p877 = pneg %p300
        %p878 = scmp.lt.s32.totalorder %s41, 1
        %s879 = scalar_select %p878, %s41, 1
        %s880 = smul.addr %s879, 48
        %s881 = smul.addr %s880, 8
        %s882 = scalar_lea.vmem %s10, %s881
        %p883 = pneg %p329
        %p884 = pneg %p326
        %p885 = scmp.lt.s32.totalorder %s41, 1
        %s886 = scalar_select %p885, %s41, 1
        %s887 = smul.addr %s886, 12
        %s888 = scalar_lea.vmem %s11, %s887
        %p889 = pneg %p355
        %p890 = pneg %p352
        %p891 = scmp.lt.s32.totalorder %s41, 1
        %s892 = scalar_select %p891, %s41, 1
        %s893 = smul.addr %s892, 4
        %s894 = smul.addr %s893, 8
        %s895 = scalar_lea.vmem %s12, %s894
        %p896 = pneg %p381
        %p897 = pneg %p378
        %p898 = scmp.lt.s32.totalorder %s41, 1
        %s899 = scalar_select %p898, %s41, 1
        %s900 = scalar_lea.vmem %s13, %s899
        %p901 = pneg %p407
        %p902 = pneg %p404
        %p903 = scmp.lt.s32.totalorder %s41, 1
        %s904 = scalar_select %p903, %s41, 1
        %s905 = scalar_lea.vmem %s14, %s904
        %p906 = pneg %p433
        %p907 = pneg %p430
        %p908 = scmp.lt.s32.totalorder %s41, 1
        %s909 = scalar_select %p908, %s41, 1
        %s910 = scalar_lea.vmem %s15, %s909
        %p911 = pneg %p459
        %p912 = pneg %p456
        %p913 = scmp.lt.s32.totalorder %s41, 1
        %s914 = scalar_select %p913, %s41, 1
        %s915 = smul.addr %s914, 4
        %s916 = smul.addr %s915, 8
        %s917 = scalar_lea.vmem %s16, %s916
        %p918 = pneg %p485
        %p919 = pneg %p482
        %p920 = scmp.lt.s32.totalorder %s41, 1
        %s921 = scalar_select %p920, %s41, 1
        %s922 = scalar_lea.vmem %s17, %s921
        %p923 = pneg %p511
        %p924 = pneg %p508
        %p925 = scmp.lt.s32.totalorder %s41, 1
        %s926 = scalar_select %p925, %s41, 1
        %s927 = smul.addr %s926, 8
        %s928 = smul.addr %s927, 8
        %s929 = scalar_lea.vmem %s18, %s928
        %p930 = pneg %p537
        %p931 = pneg %p534
        %p932 = scmp.lt.s32.totalorder %s41, 1
        %s933 = scalar_select %p932, %s41, 1
        %s934 = scalar_lea.vmem %s19, %s933
        %p935 = pneg %p563
        %p936 = pneg %p560
        %p937 = scmp.lt.s32.totalorder %s41, 1
        %s938 = scalar_select %p937, %s41, 1
        %s939 = scalar_lea.vmem %s20, %s938
        %p940 = pneg %p589
        %p941 = pneg %p586
        %p942 = scmp.lt.s32.totalorder %s41, 1
        %s943 = scalar_select %p942, %s41, 1
        %s944 = scalar_lea.vmem %s21, %s943
        %p945 = pneg %p615
        %p946 = pneg %p612
        %p947 = pneg %p641
        %p948 = pneg %p638
        %s949 = sand.u32 %s628, 1
        %s950 = scalar_lea.sflag [#allocation4], %s949
        %s951 = sand.u32 %s628, 1
        %s952 = smul.addr %s951, 8
        %s953 = scalar_lea.vmem [#allocation3], %s952
        %p954 = scmp.lt.s32.totalorder %s40, 1
        %s955 = scalar_select %p954, %s40, 1
        %s956 = smul.addr %s955, 8
        %s957 = scalar_lea.vmem %s0, %s956
        %p958 = scmp.lt.s32.totalorder %s40, 1
        %s959 = scalar_select %p958, %s40, 1
        %s960 = smul.addr %s959, 2
        %s961 = smul.addr %s960, 8
        %s962 = scalar_lea.vmem %s1, %s961
        %p963 = scmp.lt.s32.totalorder %s40, 1
        %s964 = scalar_select %p963, %s40, 1
        %s965 = smul.addr %s964, 8
        %s966 = scalar_lea.vmem %s2, %s965
        %p967 = scmp.lt.s32.totalorder %s40, 1
        %s968 = scalar_select %p967, %s40, 1
        %s969 = smul.addr %s968, 8
        %s970 = scalar_lea.vmem %s3, %s969
        %p971 = scmp.lt.s32.totalorder %s41, 1
        %s972 = scalar_select %p971, %s41, 1
        %s973 = smul.addr %s972, 48
        %s974 = smul.addr %s973, 8
        %s975 = scalar_lea.vmem %s4, %s974
        %p976 = scmp.lt.s32.totalorder %s41, 1
        %s977 = scalar_select %p976, %s41, 1
        %s978 = smul.addr %s977, 12
        %s979 = scalar_lea.vmem %s5, %s978
        %p980 = scmp.lt.s32.totalorder %s41, 1
        %s981 = scalar_select %p980, %s41, 1
        %s982 = smul.addr %s981, 4
        %s983 = smul.addr %s982, 8
        %s984 = scalar_lea.vmem %s6, %s983
        %p985 = scmp.lt.s32.totalorder %s41, 1
        %s986 = scalar_select %p985, %s41, 1
        %s987 = scalar_lea.vmem %s7, %s986
        %p988 = scmp.lt.s32.totalorder %s41, 1
        %s989 = scalar_select %p988, %s41, 1
        %s990 = scalar_lea.vmem %s8, %s989
        %p991 = scmp.lt.s32.totalorder %s41, 1
        %s992 = scalar_select %p991, %s41, 1
        %s993 = scalar_lea.vmem %s9, %s992
        %p994 = scmp.lt.s32.totalorder %s41, 1
        %s995 = scalar_select %p994, %s41, 1
        %s996 = smul.addr %s995, 48
        %s997 = smul.addr %s996, 8
        %s998 = scalar_lea.vmem %s10, %s997
        %p999 = scmp.lt.s32.totalorder %s41, 1
        %s1000 = scalar_select %p999, %s41, 1
        %s1001 = smul.addr %s1000, 12
        %s1002 = scalar_lea.vmem %s11, %s1001
        %p1003 = scmp.lt.s32.totalorder %s41, 1
        %s1004 = scalar_select %p1003, %s41, 1
        %s1005 = smul.addr %s1004, 4
        %s1006 = smul.addr %s1005, 8
        %s1007 = scalar_lea.vmem %s12, %s1006
        %p1008 = scmp.lt.s32.totalorder %s41, 1
        %s1009 = scalar_select %p1008, %s41, 1
        %s1010 = scalar_lea.vmem %s13, %s1009
        %p1011 = scmp.lt.s32.totalorder %s41, 1
        %s1012 = scalar_select %p1011, %s41, 1
        %s1013 = scalar_lea.vmem %s14, %s1012
        %p1014 = scmp.lt.s32.totalorder %s41, 1
        %s1015 = scalar_select %p1014, %s41, 1
        %s1016 = scalar_lea.vmem %s15, %s1015
        %p1017 = scmp.lt.s32.totalorder %s41, 1
        %s1018 = scalar_select %p1017, %s41, 1
        %s1019 = smul.addr %s1018, 4
        %s1020 = smul.addr %s1019, 8
        %s1021 = scalar_lea.vmem %s16, %s1020
        %p1022 = scmp.lt.s32.totalorder %s41, 1
        %s1023 = scalar_select %p1022, %s41, 1
        %s1024 = scalar_lea.vmem %s17, %s1023
        %p1025 = scmp.lt.s32.totalorder %s41, 1
        %s1026 = scalar_select %p1025, %s41, 1
        %s1027 = smul.addr %s1026, 8
        %s1028 = smul.addr %s1027, 8
        %s1029 = scalar_lea.vmem %s18, %s1028
        %p1030 = scmp.lt.s32.totalorder %s41, 1
        %s1031 = scalar_select %p1030, %s41, 1
        %s1032 = scalar_lea.vmem %s19, %s1031
        %p1033 = scmp.lt.s32.totalorder %s41, 1
        %s1034 = scalar_select %p1033, %s41, 1
        %s1035 = scalar_lea.vmem %s20, %s1034
        %p1036 = scmp.lt.s32.totalorder %s41, 1
        %s1037 = scalar_select %p1036, %s41, 1
        %s1038 = scalar_lea.vmem %s21, %s1037
        %p1039 = scmp.eq.s32.totalorder %s41, 0
        // Predicated region
        $region109: #{decoder_forward.1} parent=107 // pred_check
          %p1040 = pneg %p1039
        $region110: #{decoder_forward.1} parent=107 // pred_check_branch
          %1042 = sbr.rel (%p1040) target = $region112
        $region111: #{decoder_forward.1} parent=107 // pred_region
          %v1043 = vld [vmem:[%s957] sm:$0xff]
          %vm1044 = vcmask 261120
          %1045 = vst.msk [vmem:[#allocation2] sm:$0xff] %vm1044, %v1043
        $region112: #{decoder_forward.1} parent=107 // pred_fallthru
          _
        %v1046 = vld [vmem:[#allocation2] sm:$0xff]
        %v1047 = vld [vmem:[%s962] sm:$0xff]
        %v1048 = vld [vmem:[%s962 + $0x8] sm:$0xf]
        %v1049 = vld [vmem:[%s966] sm:$0xff]
        %vm1050 = vcmp.gt.f32.partialorder %v1049, 0.0
        %v1051 = vld [vmem:[%s975] sm:$0xff]
        %v1052 = vld [vmem:[%s975 + $0x8] sm:$0xff]
        %v1053 = vld [vmem:[%s975 + $0x10] sm:$0xff]
        %v1054 = vld [vmem:[%s975 + $0x18] sm:$0xff]
        %v1055 = vld [vmem:[%s979] sm:$0x1]
        %v1057 = vlaneseq
        %v1058 = vshrl.u32 %v1057, 7
        %v1059 = vsub.s32 0, %v1058
        %v1060 = vrot.slane %v1055, %v1059
        %vm1062 = vcmask 261120
        %v1064 = vsel %vm1062, %v1046, 0
        %1066 = vmatprep.subr.mxu0 0.0
        %1067 = vmatpush1.msra.mxu0 %v1051
        %1068 = vmatprep.subr.mxu0 0.0
        %1069 = vmatpush1.msra.mxu0 %v1052
        %1070 = vmatprep.subr.mxu0 0.0
        %1071 = vmatpush1.msra.mxu0 %v1053
        %1072 = vmatprep.subr.mxu0 0.0
        %1073 = vmatpush1.msra.mxu0 %v1054
        %1074 = vmatprep.subr.mxu0 0.0
        %1075 = vmatpush1.msra.mxu0 0.0
        %1076 = vmatprep.subr.mxu0 0.0
        %1077 = vmatpush1.msra.mxu0 0.0
        %1078 = vmatprep.subr.mxu0 0.0
        %1079 = vmatpush1.msra.mxu0 0.0
        %1080 = vmatprep.subr.mxu0 0.0
        %1081 = vmatpush1.msra.mxu0 0.0
        %1082 = vmatprep.subr.mxu0 0.0
        %1083 = vmatpush1.msra.mxu0 0.0
        %1084 = vmatprep.subr.mxu0 0.0
        %1085 = vmatpush1.msra.mxu0 0.0
        %1086 = vmatprep.subr.mxu0 0.0
        %1087 = vmatpush1.msra.mxu0 0.0
        %1088 = vmatprep.subr.mxu0 0.0
        %1089 = vmatpush1.msra.mxu0 0.0
        %1090 = vmatprep.subr.mxu0 0.0
        %1091 = vmatpush1.msra.mxu0 0.0
        %1092 = vmatprep.subr.mxu0 0.0
        %1093 = vmatpush1.msra.mxu0 0.0
        %1094 = vmatprep.subr.mxu0 0.0
        %1095 = vmatpush1.msra.mxu0 0.0
        %1096 = vmatprep.subr.mxu0 0.0
        %1097 = vmatpush1.msra.mxu0 0.0
        %1098 = vmatprep.subr.mxu0 0.0
        %1099 = vmatpush1.msra.mxu0 0.0
        %1100 = vmatprep.subr.mxu0 0.0
        %1101 = vmatpush1.msra.mxu0 0.0
        %1102 = vmatprep.subr.mxu0 0.0
        %1103 = vmatpush1.msra.mxu0 0.0
        %1104 = vmatprep.subr.mxu0 0.0
        %1105 = vmatpush1.msra.mxu0 0.0
        %1106 = vmatprep.subr.mxu0 0.0
        %1107 = vmatpush1.msra.mxu0 0.0
        %1108 = vmatprep.subr.mxu0 0.0
        %1109 = vmatpush1.msra.mxu0 0.0
        %1110 = vmatprep.subr.mxu0 0.0
        %1111 = vmatpush1.msra.mxu0 0.0
        %1112 = vmatprep.subr.mxu0 0.0
        %1113 = vmatpush1.msra.mxu0 0.0
        %1114 = vmatprep.subr.mxu0 0.0
        %1115 = vmatpush1.msra.mxu0 0.0
        %1116 = vmatprep.subr.mxu0 0.0
        %1117 = vmatpush1.msra.mxu0 0.0
        %1118 = vmatprep.subr.mxu0 0.0
        %1119 = vmatpush1.msra.mxu0 0.0
        %1120 = vmatprep.subr.mxu0 0.0
        %1121 = vmatpush1.msra.mxu0 0.0
        %1122 = vmatprep.subr.mxu0 0.0
        %1123 = vmatpush1.msra.mxu0 0.0
        %1124 = vmatprep.subr.mxu0 0.0
        %1125 = vmatpush1.msra.mxu0 0.0
        %1126 = vmatprep.subr.mxu0 0.0
        %1127 = vmatpush1.msra.mxu0 0.0
        %1128 = vmatprep.subr.mxu0 0.0
        %1129 = vmatpush1.msra.mxu0 0.0
        %1130 = vmatprep.mubr.f32.mxu0 0.0
        %1131 = vmatmul.mubr.f32.gmra.mrb[0].mxu0 %v1064
        %v1132 = vpop.f32.mrb[0].mxu0
        %v1133 = vadd.f32 %v1060, %v1132
        %v1134 = vpop.f32.mrb[0].mxu0
        %1135 = vdwg.mxu0
        %s1136 = scalar_lea.vmem %s975, 128
        %v1137 = vld [vmem:[%s1136] sm:$0xff]
        %v1138 = vld [vmem:[%s1136 + $0x8] sm:$0xff]
        %v1139 = vld [vmem:[%s1136 + $0x10] sm:$0xff]
        %v1140 = vld [vmem:[%s1136 + $0x18] sm:$0xff]
        %s1141 = scalar_lea.vmem %s979, 4
        %v1142 = vld [vmem:[%s1141] sm:$0x1]
        %v1144 = vlaneseq
        %v1145 = vshrl.u32 %v1144, 7
        %v1146 = vsub.s32 0, %v1145
        %v1147 = vrot.slane %v1142, %v1146
        %1149 = vmatprep.subr.mxu0 0.0
        %1150 = vmatpush1.msra.mxu0 %v1137
        %1151 = vmatprep.subr.mxu0 0.0
        %1152 = vmatpush1.msra.mxu0 %v1138
        %1153 = vmatprep.subr.mxu0 0.0
        %1154 = vmatpush1.msra.mxu0 %v1139
        %1155 = vmatprep.subr.mxu0 0.0
        %1156 = vmatpush1.msra.mxu0 %v1140
        %1157 = vmatprep.subr.mxu0 0.0
        %1158 = vmatpush1.msra.mxu0 0.0
        %1159 = vmatprep.subr.mxu0 0.0
        %1160 = vmatpush1.msra.mxu0 0.0
        %1161 = vmatprep.subr.mxu0 0.0
        %1162 = vmatpush1.msra.mxu0 0.0
        %1163 = vmatprep.subr.mxu0 0.0
        %1164 = vmatpush1.msra.mxu0 0.0
        %1165 = vmatprep.subr.mxu0 0.0
        %1166 = vmatpush1.msra.mxu0 0.0
        %1167 = vmatprep.subr.mxu0 0.0
        %1168 = vmatpush1.msra.mxu0 0.0
        %1169 = vmatprep.subr.mxu0 0.0
        %1170 = vmatpush1.msra.mxu0 0.0
        %1171 = vmatprep.subr.mxu0 0.0
        %1172 = vmatpush1.msra.mxu0 0.0
        %1173 = vmatprep.subr.mxu0 0.0
        %1174 = vmatpush1.msra.mxu0 0.0
        %1175 = vmatprep.subr.mxu0 0.0
        %1176 = vmatpush1.msra.mxu0 0.0
        %1177 = vmatprep.subr.mxu0 0.0
        %1178 = vmatpush1.msra.mxu0 0.0
        %1179 = vmatprep.subr.mxu0 0.0
        %1180 = vmatpush1.msra.mxu0 0.0
        %1181 = vmatprep.subr.mxu0 0.0
        %1182 = vmatpush1.msra.mxu0 0.0
        %1183 = vmatprep.subr.mxu0 0.0
        %1184 = vmatpush1.msra.mxu0 0.0
        %1185 = vmatprep.subr.mxu0 0.0
        %1186 = vmatpush1.msra.mxu0 0.0
        %1187 = vmatprep.subr.mxu0 0.0
        %1188 = vmatpush1.msra.mxu0 0.0
        %1189 = vmatprep.subr.mxu0 0.0
        %1190 = vmatpush1.msra.mxu0 0.0
        %1191 = vmatprep.subr.mxu0 0.0
        %1192 = vmatpush1.msra.mxu0 0.0
        %1193 = vmatprep.subr.mxu0 0.0
        %1194 = vmatpush1.msra.mxu0 0.0
        %1195 = vmatprep.subr.mxu0 0.0
        %1196 = vmatpush1.msra.mxu0 0.0
        %1197 = vmatprep.subr.mxu0 0.0
        %1198 = vmatpush1.msra.mxu0 0.0
        %1199 = vmatprep.subr.mxu0 0.0
        %1200 = vmatpush1.msra.mxu0 0.0
        %1201 = vmatprep.subr.mxu0 0.0
        %1202 = vmatpush1.msra.mxu0 0.0
        %1203 = vmatprep.subr.mxu0 0.0
        %1204 = vmatpush1.msra.mxu0 0.0
        %1205 = vmatprep.subr.mxu0 0.0
        %1206 = vmatpush1.msra.mxu0 0.0
        %1207 = vmatprep.subr.mxu0 0.0
        %1208 = vmatpush1.msra.mxu0 0.0
        %1209 = vmatprep.subr.mxu0 0.0
        %1210 = vmatpush1.msra.mxu0 0.0
        %1211 = vmatprep.subr.mxu0 0.0
        %1212 = vmatpush1.msra.mxu0 0.0
        %1213 = vmatprep.mubr.f32.mxu0 0.0
        %1214 = vmatmul.mubr.f32.gmra.mrb[0].mxu0 %v1064
        %v1215 = vpop.f32.mrb[0].mxu0
        %v1216 = vadd.f32 %v1147, %v1215
        %v1217 = vpop.f32.mrb[0].mxu0
        %1218 = vdwg.mxu0
        %s1219 = scalar_lea.vmem %s975, 256
        %v1220 = vld [vmem:[%s1219] sm:$0xff]
        %v1221 = vld [vmem:[%s1219 + $0x8] sm:$0xff]
        %v1222 = vld [vmem:[%s1219 + $0x10] sm:$0xff]
        %v1223 = vld [vmem:[%s1219 + $0x18] sm:$0xff]
        %s1224 = scalar_lea.vmem %s979, 8
        %v1225 = vld [vmem:[%s1224] sm:$0x1]
        %v1227 = vlaneseq
        %v1228 = vshrl.u32 %v1227, 7
        %v1229 = vsub.s32 0, %v1228
        %v1230 = vrot.slane %v1225, %v1229
        %1232 = vmatprep.subr.mxu0 0.0
        %1233 = vmatpush1.msra.mxu0 %v1220
        %1234 = vmatprep.subr.mxu0 0.0
        %1235 = vmatpush1.msra.mxu0 %v1221
        %1236 = vmatprep.subr.mxu0 0.0
        %1237 = vmatpush1.msra.mxu0 %v1222
        %1238 = vmatprep.subr.mxu0 0.0
        %1239 = vmatpush1.msra.mxu0 %v1223
        %1240 = vmatprep.subr.mxu0 0.0
        %1241 = vmatpush1.msra.mxu0 0.0
        %1242 = vmatprep.subr.mxu0 0.0
        %1243 = vmatpush1.msra.mxu0 0.0
        %1244 = vmatprep.subr.mxu0 0.0
        %1245 = vmatpush1.msra.mxu0 0.0
        %1246 = vmatprep.subr.mxu0 0.0
        %1247 = vmatpush1.msra.mxu0 0.0
        %1248 = vmatprep.subr.mxu0 0.0
        %1249 = vmatpush1.msra.mxu0 0.0
        %1250 = vmatprep.subr.mxu0 0.0
        %1251 = vmatpush1.msra.mxu0 0.0
        %1252 = vmatprep.subr.mxu0 0.0
        %1253 = vmatpush1.msra.mxu0 0.0
        %1254 = vmatprep.subr.mxu0 0.0
        %1255 = vmatpush1.msra.mxu0 0.0
        %1256 = vmatprep.subr.mxu0 0.0
        %1257 = vmatpush1.msra.mxu0 0.0
        %1258 = vmatprep.subr.mxu0 0.0
        %1259 = vmatpush1.msra.mxu0 0.0
        %1260 = vmatprep.subr.mxu0 0.0
        %1261 = vmatpush1.msra.mxu0 0.0
        %1262 = vmatprep.subr.mxu0 0.0
        %1263 = vmatpush1.msra.mxu0 0.0
        %1264 = vmatprep.subr.mxu0 0.0
        %1265 = vmatpush1.msra.mxu0 0.0
        %1266 = vmatprep.subr.mxu0 0.0
        %1267 = vmatpush1.msra.mxu0 0.0
        %1268 = vmatprep.subr.mxu0 0.0
        %1269 = vmatpush1.msra.mxu0 0.0
        %1270 = vmatprep.subr.mxu0 0.0
        %1271 = vmatpush1.msra.mxu0 0.0
        %1272 = vmatprep.subr.mxu0 0.0
        %1273 = vmatpush1.msra.mxu0 0.0
        %1274 = vmatprep.subr.mxu0 0.0
        %1275 = vmatpush1.msra.mxu0 0.0
        %1276 = vmatprep.subr.mxu0 0.0
        %1277 = vmatpush1.msra.mxu0 0.0
        %1278 = vmatprep.subr.mxu0 0.0
        %1279 = vmatpush1.msra.mxu0 0.0
        %1280 = vmatprep.subr.mxu0 0.0
        %1281 = vmatpush1.msra.mxu0 0.0
        %1282 = vmatprep.subr.mxu0 0.0
        %1283 = vmatpush1.msra.mxu0 0.0
        %1284 = vmatprep.subr.mxu0 0.0
        %1285 = vmatpush1.msra.mxu0 0.0
        %1286 = vmatprep.subr.mxu0 0.0
        %1287 = vmatpush1.msra.mxu0 0.0
        %1288 = vmatprep.subr.mxu0 0.0
        %1289 = vmatpush1.msra.mxu0 0.0
        %1290 = vmatprep.subr.mxu0 0.0
        %1291 = vmatpush1.msra.mxu0 0.0
        %1292 = vmatprep.subr.mxu0 0.0
        %1293 = vmatpush1.msra.mxu0 0.0
        %1294 = vmatprep.subr.mxu0 0.0
        %1295 = vmatpush1.msra.mxu0 0.0
        %1296 = vmatprep.mubr.f32.mxu0 0.0
        %1297 = vmatmul.mubr.f32.gmra.mrb[0].mxu0 %v1064
        %v1298 = vpop.f32.mrb[0].mxu0
        %v1299 = vadd.f32 %v1230, %v1298
        %v1300 = vpop.f32.mrb[0].mxu0
        %1301 = vdwg.mxu0
        %vm1302 = vcmask 64512
        %v1304 = vsel %vm1302, %v1133, 0
        %v1307 = vsel %vm1302, %v1216, 0
        %1309 = vmatprep.subr.mxu0 0.0
        %1310 = vmatpush1.xpose.msra.mxu0 %v1307
        %1311 = vmatprep.subr.mxu0 0.0
        %1312 = vmatpush1.xpose.msra.mxu0 0.0
        %1313 = vmatprep.subr.mxu0 0.0
        %1314 = vmatpush1.xpose.msra.mxu0 0.0
        %1315 = vmatprep.subr.mxu0 0.0
        %1316 = vmatpush1.xpose.msra.mxu0 0.0
        %1317 = vmatprep.subr.mxu0 0.0
        %1318 = vmatpush1.xpose.msra.mxu0 0.0
        %1319 = vmatprep.subr.mxu0 0.0
        %1320 = vmatpush1.xpose.msra.mxu0 0.0
        %1321 = vmatprep.subr.mxu0 0.0
        %1322 = vmatpush1.xpose.msra.mxu0 0.0
        %1323 = vmatprep.subr.mxu0 0.0
        %1324 = vmatpush1.xpose.msra.mxu0 0.0
        %1325 = vmatprep.subr.mxu0 0.0
        %1326 = vmatpush1.xpose.msra.mxu0 0.0
        %1327 = vmatprep.subr.mxu0 0.0
        %1328 = vmatpush1.xpose.msra.mxu0 0.0
        %1329 = vmatprep.subr.mxu0 0.0
        %1330 = vmatpush1.xpose.msra.mxu0 0.0
        %1331 = vmatprep.subr.mxu0 0.0
        %1332 = vmatpush1.xpose.msra.mxu0 0.0
        %1333 = vmatprep.subr.mxu0 0.0
        %1334 = vmatpush1.xpose.msra.mxu0 0.0
        %1335 = vmatprep.subr.mxu0 0.0
        %1336 = vmatpush1.xpose.msra.mxu0 0.0
        %1337 = vmatprep.subr.mxu0 0.0
        %1338 = vmatpush1.xpose.msra.mxu0 0.0
        %1339 = vmatprep.subr.mxu0 0.0
        %1340 = vmatpush1.xpose.msra.mxu0 0.0
        %1341 = vmatprep.subr.mxu0 0.0
        %1342 = vmatpush1.xpose.msra.mxu0 0.0
        %1343 = vmatprep.subr.mxu0 0.0
        %1344 = vmatpush1.xpose.msra.mxu0 0.0
        %1345 = vmatprep.subr.mxu0 0.0
        %1346 = vmatpush1.xpose.msra.mxu0 0.0
        %1347 = vmatprep.subr.mxu0 0.0
        %1348 = vmatpush1.xpose.msra.mxu0 0.0
        %1349 = vmatprep.subr.mxu0 0.0
        %1350 = vmatpush1.xpose.msra.mxu0 0.0
        %1351 = vmatprep.subr.mxu0 0.0
        %1352 = vmatpush1.xpose.msra.mxu0 0.0
        %1353 = vmatprep.subr.mxu0 0.0
        %1354 = vmatpush1.xpose.msra.mxu0 0.0
        %1355 = vmatprep.subr.mxu0 0.0
        %1356 = vmatpush1.xpose.msra.mxu0 0.0
        %1357 = vmatprep.subr.mxu0 0.0
        %1358 = vmatpush1.xpose.msra.mxu0 0.0
        %1359 = vmatprep.subr.mxu0 0.0
        %1360 = vmatpush1.xpose.msra.mxu0 0.0
        %1361 = vmatprep.subr.mxu0 0.0
        %1362 = vmatpush1.xpose.msra.mxu0 0.0
        %1363 = vmatprep.subr.mxu0 0.0
        %1364 = vmatpush1.xpose.msra.mxu0 0.0
        %1365 = vmatprep.subr.mxu0 0.0
        %1366 = vmatpush1.xpose.msra.mxu0 0.0
        %1367 = vmatprep.subr.mxu0 0.0
        %1368 = vmatpush1.xpose.msra.mxu0 0.0
        %1369 = vmatprep.subr.mxu0 0.0
        %1370 = vmatpush1.xpose.msra.mxu0 0.0
        %1371 = vmatprep.subr.mxu0 0.0
        %1372 = vmatpush1.xpose.msra.mxu0 0.0
        %1373 = vmatprep.mubr.f32.mxu0 0.0
        %1374 = vmatmul.mubr.f32.gmra.mrb[0].mxu0 %v1304
        %v1375 = vpop.f32.mrb[0].mxu0
        %v1376 = vadd.f32 0.0, %v1375
        %v1377 = vpop.f32.mrb[0].mxu0
        %1378 = vdwg.mxu0
        %v1379 = vmul.f32 %v1376, 0.35355338
        %v1380 = vsel %vm1050, -1e+09, %v1379
        %v1381 = vsel %vm1302, %v1380, -inf
        %1382 = vmax.xlane.f32.xlu0 %v1381
        %v1383 = vpop.xlane.xlu0 %1382
        %v1384 = vsub.f32 %v1380, %v1383
        %v1385 = vmul.f32 %v1384, 1.442695
        %v1386 = vpow.pop %v1385
        %v1387 = vsel %vm1302, %v1386, 0.0
        %1388 = vadd.xlane.f32.xlu0 %v1387
        %v1389 = vpop.xlane.xlu0 %1388
        %v1390 = vrcp.pop %v1389
        %v1391 = vmul.f32 %v1386, %v1390
        %v1393 = vsel %vm1302, %v1391, 0
        %1395 = vmatprep.subr.mxu0 0.0
        %1396 = vmatpush1.msra.mxu0 %v1299
        %1397 = vmatprep.subr.mxu0 0.0
        %1398 = vmatpush1.msra.mxu0 0.0
        %1399 = vmatprep.subr.mxu0 0.0
        %1400 = vmatpush1.msra.mxu0 0.0
        %1401 = vmatprep.subr.mxu0 0.0
        %1402 = vmatpush1.msra.mxu0 0.0
        %1403 = vmatprep.subr.mxu0 0.0
        %1404 = vmatpush1.msra.mxu0 0.0
        %1405 = vmatprep.subr.mxu0 0.0
        %1406 = vmatpush1.msra.mxu0 0.0
        %1407 = vmatprep.subr.mxu0 0.0
        %1408 = vmatpush1.msra.mxu0 0.0
        %1409 = vmatprep.subr.mxu0 0.0
        %1410 = vmatpush1.msra.mxu0 0.0
        %1411 = vmatprep.subr.mxu0 0.0
        %1412 = vmatpush1.msra.mxu0 0.0
        %1413 = vmatprep.subr.mxu0 0.0
        %1414 = vmatpush1.msra.mxu0 0.0
        %1415 = vmatprep.subr.mxu0 0.0
        %1416 = vmatpush1.msra.mxu0 0.0
        %1417 = vmatprep.subr.mxu0 0.0
        %1418 = vmatpush1.msra.mxu0 0.0
        %1419 = vmatprep.subr.mxu0 0.0
        %1420 = vmatpush1.msra.mxu0 0.0
        %1421 = vmatprep.subr.mxu0 0.0
        %1422 = vmatpush1.msra.mxu0 0.0
        %1423 = vmatprep.subr.mxu0 0.0
        %1424 = vmatpush1.msra.mxu0 0.0
        %1425 = vmatprep.subr.mxu0 0.0
        %1426 = vmatpush1.msra.mxu0 0.0
        %1427 = vmatprep.subr.mxu0 0.0
        %1428 = vmatpush1.msra.mxu0 0.0
        %1429 = vmatprep.subr.mxu0 0.0
        %1430 = vmatpush1.msra.mxu0 0.0
        %1431 = vmatprep.subr.mxu0 0.0
        %1432 = vmatpush1.msra.mxu0 0.0
        %1433 = vmatprep.subr.mxu0 0.0
        %1434 = vmatpush1.msra.mxu0 0.0
        %1435 = vmatprep.subr.mxu0 0.0
        %1436 = vmatpush1.msra.mxu0 0.0
        %1437 = vmatprep.subr.mxu0 0.0
        %1438 = vmatpush1.msra.mxu0 0.0
        %1439 = vmatprep.subr.mxu0 0.0
        %1440 = vmatpush1.msra.mxu0 0.0
        %1441 = vmatprep.subr.mxu0 0.0
        %1442 = vmatpush1.msra.mxu0 0.0
        %1443 = vmatprep.subr.mxu0 0.0
        %1444 = vmatpush1.msra.mxu0 0.0
        %1445 = vmatprep.subr.mxu0 0.0
        %1446 = vmatpush1.msra.mxu0 0.0
        %1447 = vmatprep.subr.mxu0 0.0
        %1448 = vmatpush1.msra.mxu0 0.0
        %1449 = vmatprep.subr.mxu0 0.0
        %1450 = vmatpush1.msra.mxu0 0.0
        %1451 = vmatprep.subr.mxu0 0.0
        %1452 = vmatpush1.msra.mxu0 0.0
        %1453 = vmatprep.subr.mxu0 0.0
        %1454 = vmatpush1.msra.mxu0 0.0
        %1455 = vmatprep.subr.mxu0 0.0
        %1456 = vmatpush1.msra.mxu0 0.0
        %1457 = vmatprep.subr.mxu0 0.0
        %1458 = vmatpush1.msra.mxu0 0.0
        %1459 = vmatprep.mubr.f32.mxu0 0.0
        %1460 = vmatmul.mubr.f32.gmra.mrb[0].mxu0 %v1393
        %v1461 = vpop.f32.mrb[0].mxu0
        %v1462 = vadd.f32 0.0, %v1461
        %v1463 = vpop.f32.mrb[0].mxu0
        %1464 = vdwg.mxu0
        %v1465 = vld [vmem:[%s984] sm:$0xff]
        %s1466 = scalar_lea.vmem %s975, 32
        %v1467 = vld [vmem:[%s1466] sm:$0xff]
        %v1468 = vld [vmem:[%s1466 + $0x8] sm:$0xff]
        %v1469 = vld [vmem:[%s1466 + $0x10] sm:$0xff]
        %v1470 = vld [vmem:[%s1466 + $0x18] sm:$0xff]
        %s1471 = scalar_lea.vmem %s979, 1
        %v1472 = vld [vmem:[%s1471] sm:$0x1]
        %v1474 = vlaneseq
        %v1475 = vshrl.u32 %v1474, 7
        %v1476 = vsub.s32 0, %v1475
        %v1477 = vrot.slane %v1472, %v1476
        %1479 = vmatprep.subr.mxu0 0.0
        %1480 = vmatpush1.msra.mxu0 %v1467
        %1481 = vmatprep.subr.mxu0 0.0
        %1482 = vmatpush1.msra.mxu0 %v1468
        %1483 = vmatprep.subr.mxu0 0.0
        %1484 = vmatpush1.msra.mxu0 %v1469
        %1485 = vmatprep.subr.mxu0 0.0
        %1486 = vmatpush1.msra.mxu0 %v1470
        %1487 = vmatprep.subr.mxu0 0.0
        %1488 = vmatpush1.msra.mxu0 0.0
        %1489 = vmatprep.subr.mxu0 0.0
        %1490 = vmatpush1.msra.mxu0 0.0
        %1491 = vmatprep.subr.mxu0 0.0
        %1492 = vmatpush1.msra.mxu0 0.0
        %1493 = vmatprep.subr.mxu0 0.0
        %1494 = vmatpush1.msra.mxu0 0.0
        %1495 = vmatprep.subr.mxu0 0.0
        %1496 = vmatpush1.msra.mxu0 0.0
        %1497 = vmatprep.subr.mxu0 0.0
        %1498 = vmatpush1.msra.mxu0 0.0
        %1499 = vmatprep.subr.mxu0 0.0
        %1500 = vmatpush1.msra.mxu0 0.0
        %1501 = vmatprep.subr.mxu0 0.0
        %1502 = vmatpush1.msra.mxu0 0.0
        %1503 = vmatprep.subr.mxu0 0.0
        %1504 = vmatpush1.msra.mxu0 0.0
        %1505 = vmatprep.subr.mxu0 0.0
        %1506 = vmatpush1.msra.mxu0 0.0
        %1507 = vmatprep.subr.mxu0 0.0
        %1508 = vmatpush1.msra.mxu0 0.0
        %1509 = vmatprep.subr.mxu0 0.0
        %1510 = vmatpush1.msra.mxu0 0.0
        %1511 = vmatprep.subr.mxu0 0.0
        %1512 = vmatpush1.msra.mxu0 0.0
        %1513 = vmatprep.subr.mxu0 0.0
        %1514 = vmatpush1.msra.mxu0 0.0
        %1515 = vmatprep.subr.mxu0 0.0
        %1516 = vmatpush1.msra.mxu0 0.0
        %1517 = vmatprep.subr.mxu0 0.0
        %1518 = vmatpush1.msra.mxu0 0.0
        %1519 = vmatprep.subr.mxu0 0.0
        %1520 = vmatpush1.msra.mxu0 0.0
        %1521 = vmatprep.subr.mxu0 0.0
        %1522 = vmatpush1.msra.mxu0 0.0
        %1523 = vmatprep.subr.mxu0 0.0
        %1524 = vmatpush1.msra.mxu0 0.0
        %1525 = vmatprep.subr.mxu0 0.0
        %1526 = vmatpush1.msra.mxu0 0.0
        %1527 = vmatprep.subr.mxu0 0.0
        %1528 = vmatpush1.msra.mxu0 0.0
        %1529 = vmatprep.subr.mxu0 0.0
        %1530 = vmatpush1.msra.mxu0 0.0
        %1531 = vmatprep.subr.mxu0 0.0
        %1532 = vmatpush1.msra.mxu0 0.0
        %1533 = vmatprep.subr.mxu0 0.0
        %1534 = vmatpush1.msra.mxu0 0.0
        %1535 = vmatprep.subr.mxu0 0.0
        %1536 = vmatpush1.msra.mxu0 0.0
        %1537 = vmatprep.subr.mxu0 0.0
        %1538 = vmatpush1.msra.mxu0 0.0
        %1539 = vmatprep.subr.mxu0 0.0
        %1540 = vmatpush1.msra.mxu0 0.0
        %1541 = vmatprep.subr.mxu0 0.0
        %1542 = vmatpush1.msra.mxu0 0.0
        %1543 = vmatprep.mubr.f32.mxu0 0.0
        %1544 = vmatmul.mubr.f32.gmra.mrb[0].mxu0 %v1064
        %v1545 = vpop.f32.mrb[0].mxu0
        %v1546 = vadd.f32 %v1477, %v1545
        %v1547 = vpop.f32.mrb[0].mxu0
        %1548 = vdwg.mxu0
        %s1549 = scalar_lea.vmem %s975, 160
        %v1550 = vld [vmem:[%s1549] sm:$0xff]
        %v1551 = vld [vmem:[%s1549 + $0x8] sm:$0xff]
        %v1552 = vld [vmem:[%s1549 + $0x10] sm:$0xff]
        %v1553 = vld [vmem:[%s1549 + $0x18] sm:$0xff]
        %s1554 = scalar_lea.vmem %s979, 5
        %v1555 = vld [vmem:[%s1554] sm:$0x1]
        %v1557 = vlaneseq
        %v1558 = vshrl.u32 %v1557, 7
        %v1559 = vsub.s32 0, %v1558
        %v1560 = vrot.slane %v1555, %v1559
        %1562 = vmatprep.subr.mxu0 0.0
        %1563 = vmatpush1.msra.mxu0 %v1550
        %1564 = vmatprep.subr.mxu0 0.0
        %1565 = vmatpush1.msra.mxu0 %v1551
        %1566 = vmatprep.subr.mxu0 0.0
        %1567 = vmatpush1.msra.mxu0 %v1552
        %1568 = vmatprep.subr.mxu0 0.0
        %1569 = vmatpush1.msra.mxu0 %v1553
        %1570 = vmatprep.subr.mxu0 0.0
        %1571 = vmatpush1.msra.mxu0 0.0
        %1572 = vmatprep.subr.mxu0 0.0
        %1573 = vmatpush1.msra.mxu0 0.0
        %1574 = vmatprep.subr.mxu0 0.0
        %1575 = vmatpush1.msra.mxu0 0.0
        %1576 = vmatprep.subr.mxu0 0.0
        %1577 = vmatpush1.msra.mxu0 0.0
        %1578 = vmatprep.subr.mxu0 0.0
        %1579 = vmatpush1.msra.mxu0 0.0
        %1580 = vmatprep.subr.mxu0 0.0
        %1581 = vmatpush1.msra.mxu0 0.0
        %1582 = vmatprep.subr.mxu0 0.0
        %1583 = vmatpush1.msra.mxu0 0.0
        %1584 = vmatprep.subr.mxu0 0.0
        %1585 = vmatpush1.msra.mxu0 0.0
        %1586 = vmatprep.subr.mxu0 0.0
        %1587 = vmatpush1.msra.mxu0 0.0
        %1588 = vmatprep.subr.mxu0 0.0
        %1589 = vmatpush1.msra.mxu0 0.0
        %1590 = vmatprep.subr.mxu0 0.0
        %1591 = vmatpush1.msra.mxu0 0.0
        %1592 = vmatprep.subr.mxu0 0.0
        %1593 = vmatpush1.msra.mxu0 0.0
        %1594 = vmatprep.subr.mxu0 0.0
        %1595 = vmatpush1.msra.mxu0 0.0
        %1596 = vmatprep.subr.mxu0 0.0
        %1597 = vmatpush1.msra.mxu0 0.0
        %1598 = vmatprep.subr.mxu0 0.0
        %1599 = vmatpush1.msra.mxu0 0.0
        %1600 = vmatprep.subr.mxu0 0.0
        %1601 = vmatpush1.msra.mxu0 0.0
        %1602 = vmatprep.subr.mxu0 0.0
        %1603 = vmatpush1.msra.mxu0 0.0
        %1604 = vmatprep.subr.mxu0 0.0
        %1605 = vmatpush1.msra.mxu0 0.0
        %1606 = vmatprep.subr.mxu0 0.0
        %1607 = vmatpush1.msra.mxu0 0.0
        %1608 = vmatprep.subr.mxu0 0.0
        %1609 = vmatpush1.msra.mxu0 0.0
        %1610 = vmatprep.subr.mxu0 0.0
        %1611 = vmatpush1.msra.mxu0 0.0
        %1612 = vmatprep.subr.mxu0 0.0
        %1613 = vmatpush1.msra.mxu0 0.0
        %1614 = vmatprep.subr.mxu0 0.0
        %1615 = vmatpush1.msra.mxu0 0.0
        %1616 = vmatprep.subr.mxu0 0.0
        %1617 = vmatpush1.msra.mxu0 0.0
        %1618 = vmatprep.subr.mxu0 0.0
        %1619 = vmatpush1.msra.mxu0 0.0
        %1620 = vmatprep.subr.mxu0 0.0
        %1621 = vmatpush1.msra.mxu0 0.0
        %1622 = vmatprep.subr.mxu0 0.0
        %1623 = vmatpush1.msra.mxu0 0.0
        %1624 = vmatprep.subr.mxu0 0.0
        %1625 = vmatpush1.msra.mxu0 0.0
        %1626 = vmatprep.mubr.f32.mxu0 0.0
        %1627 = vmatmul.mubr.f32.gmra.mrb[0].mxu0 %v1064
        %v1628 = vpop.f32.mrb[0].mxu0
        %v1629 = vadd.f32 %v1560, %v1628
        %v1630 = vpop.f32.mrb[0].mxu0
        %1631 = vdwg.mxu0
        %s1632 = scalar_lea.vmem %s975, 288
        %v1633 = vld [vmem:[%s1632] sm:$0xff]
        %v1634 = vld [vmem:[%s1632 + $0x8] sm:$0xff]
        %v1635 = vld [vmem:[%s1632 + $0x10] sm:$0xff]
        %v1636 = vld [vmem:[%s1632 + $0x18] sm:$0xff]
        %s1637 = scalar_lea.vmem %s979, 9
        %v1638 = vld [vmem:[%s1637] sm:$0x1]
        %v1640 = vlaneseq
        %v1641 = vshrl.u32 %v1640, 7
        %v1642 = vsub.s32 0, %v1641
        %v1643 = vrot.slane %v1638, %v1642
        %1645 = vmatprep.subr.mxu0 0.0
        %1646 = vmatpush1.msra.mxu0 %v1633
        %1647 = vmatprep.subr.mxu0 0.0
        %1648 = vmatpush1.msra.mxu0 %v1634
        %1649 = vmatprep.subr.mxu0 0.0
        %1650 = vmatpush1.msra.mxu0 %v1635
        %1651 = vmatprep.subr.mxu0 0.0
        %1652 = vmatpush1.msra.mxu0 %v1636
        %1653 = vmatprep.subr.mxu0 0.0
        %1654 = vmatpush1.msra.mxu0 0.0
        %1655 = vmatprep.subr.mxu0 0.0
        %1656 = vmatpush1.msra.mxu0 0.0
        %1657 = vmatprep.subr.mxu0 0.0
        %1658 = vmatpush1.msra.mxu0 0.0
        %1659 = vmatprep.subr.mxu0 0.0
        %1660 = vmatpush1.msra.mxu0 0.0
        %1661 = vmatprep.subr.mxu0 0.0
        %1662 = vmatpush1.msra.mxu0 0.0
        %1663 = vmatprep.subr.mxu0 0.0
        %1664 = vmatpush1.msra.mxu0 0.0
        %1665 = vmatprep.subr.mxu0 0.0
        %1666 = vmatpush1.msra.mxu0 0.0
        %1667 = vmatprep.subr.mxu0 0.0
        %1668 = vmatpush1.msra.mxu0 0.0
        %1669 = vmatprep.subr.mxu0 0.0
        %1670 = vmatpush1.msra.mxu0 0.0
        %1671 = vmatprep.subr.mxu0 0.0
        %1672 = vmatpush1.msra.mxu0 0.0
        %1673 = vmatprep.subr.mxu0 0.0
        %1674 = vmatpush1.msra.mxu0 0.0
        %1675 = vmatprep.subr.mxu0 0.0
        %1676 = vmatpush1.msra.mxu0 0.0
        %1677 = vmatprep.subr.mxu0 0.0
        %1678 = vmatpush1.msra.mxu0 0.0
        %1679 = vmatprep.subr.mxu0 0.0
        %1680 = vmatpush1.msra.mxu0 0.0
        %1681 = vmatprep.subr.mxu0 0.0
        %1682 = vmatpush1.msra.mxu0 0.0
        %1683 = vmatprep.subr.mxu0 0.0
        %1684 = vmatpush1.msra.mxu0 0.0
        %1685 = vmatprep.subr.mxu0 0.0
        %1686 = vmatpush1.msra.mxu0 0.0
        %1687 = vmatprep.subr.mxu0 0.0
        %1688 = vmatpush1.msra.mxu0 0.0
        %1689 = vmatprep.subr.mxu0 0.0
        %1690 = vmatpush1.msra.mxu0 0.0
        %1691 = vmatprep.subr.mxu0 0.0
        %1692 = vmatpush1.msra.mxu0 0.0
        %1693 = vmatprep.subr.mxu0 0.0
        %1694 = vmatpush1.msra.mxu0 0.0
        %1695 = vmatprep.subr.mxu0 0.0
        %1696 = vmatpush1.msra.mxu0 0.0
        %1697 = vmatprep.subr.mxu0 0.0
        %1698 = vmatpush1.msra.mxu0 0.0
        %1699 = vmatprep.subr.mxu0 0.0
        %1700 = vmatpush1.msra.mxu0 0.0
        %1701 = vmatprep.subr.mxu0 0.0
        %1702 = vmatpush1.msra.mxu0 0.0
        %1703 = vmatprep.subr.mxu0 0.0
        %1704 = vmatpush1.msra.mxu0 0.0
        %1705 = vmatprep.subr.mxu0 0.0
        %1706 = vmatpush1.msra.mxu0 0.0
        %1707 = vmatprep.subr.mxu0 0.0
        %1708 = vmatpush1.msra.mxu0 0.0
        %1709 = vmatprep.mubr.f32.mxu0 0.0
        %1710 = vmatmul.mubr.f32.gmra.mrb[0].mxu0 %v1064
        %v1711 = vpop.f32.mrb[0].mxu0
        %v1712 = vadd.f32 %v1643, %v1711
        %v1713 = vpop.f32.mrb[0].mxu0
        %1714 = vdwg.mxu0
        %v1716 = vsel %vm1302, %v1546, 0
        %v1719 = vsel %vm1302, %v1629, 0
        %1721 = vmatprep.subr.mxu0 0.0
        %1722 = vmatpush1.xpose.msra.mxu0 %v1719
        %1723 = vmatprep.subr.mxu0 0.0
        %1724 = vmatpush1.xpose.msra.mxu0 0.0
        %1725 = vmatprep.subr.mxu0 0.0
        %1726 = vmatpush1.xpose.msra.mxu0 0.0
        %1727 = vmatprep.subr.mxu0 0.0
        %1728 = vmatpush1.xpose.msra.mxu0 0.0
        %1729 = vmatprep.subr.mxu0 0.0
        %1730 = vmatpush1.xpose.msra.mxu0 0.0
        %1731 = vmatprep.subr.mxu0 0.0
        %1732 = vmatpush1.xpose.msra.mxu0 0.0
        %1733 = vmatprep.subr.mxu0 0.0
        %1734 = vmatpush1.xpose.msra.mxu0 0.0
        %1735 = vmatprep.subr.mxu0 0.0
        %1736 = vmatpush1.xpose.msra.mxu0 0.0
        %1737 = vmatprep.subr.mxu0 0.0
        %1738 = vmatpush1.xpose.msra.mxu0 0.0
        %1739 = vmatprep.subr.mxu0 0.0
        %1740 = vmatpush1.xpose.msra.mxu0 0.0
        %1741 = vmatprep.subr.mxu0 0.0
        %1742 = vmatpush1.xpose.msra.mxu0 0.0
        %1743 = vmatprep.subr.mxu0 0.0
        %1744 = vmatpush1.xpose.msra.mxu0 0.0
        %1745 = vmatprep.subr.mxu0 0.0
        %1746 = vmatpush1.xpose.msra.mxu0 0.0
        %1747 = vmatprep.subr.mxu0 0.0
        %1748 = vmatpush1.xpose.msra.mxu0 0.0
        %1749 = vmatprep.subr.mxu0 0.0
        %1750 = vmatpush1.xpose.msra.mxu0 0.0
        %1751 = vmatprep.subr.mxu0 0.0
        %1752 = vmatpush1.xpose.msra.mxu0 0.0
        %1753 = vmatprep.subr.mxu0 0.0
        %1754 = vmatpush1.xpose.msra.mxu0 0.0
        %1755 = vmatprep.subr.mxu0 0.0
        %1756 = vmatpush1.xpose.msra.mxu0 0.0
        %1757 = vmatprep.subr.mxu0 0.0
        %1758 = vmatpush1.xpose.msra.mxu0 0.0
        %1759 = vmatprep.subr.mxu0 0.0
        %1760 = vmatpush1.xpose.msra.mxu0 0.0
        %1761 = vmatprep.subr.mxu0 0.0
        %1762 = vmatpush1.xpose.msra.mxu0 0.0
        %1763 = vmatprep.subr.mxu0 0.0
        %1764 = vmatpush1.xpose.msra.mxu0 0.0
        %1765 = vmatprep.subr.mxu0 0.0
        %1766 = vmatpush1.xpose.msra.mxu0 0.0
        %1767 = vmatprep.subr.mxu0 0.0
        %1768 = vmatpush1.xpose.msra.mxu0 0.0
        %1769 = vmatprep.subr.mxu0 0.0
        %1770 = vmatpush1.xpose.msra.mxu0 0.0
        %1771 = vmatprep.subr.mxu0 0.0
        %1772 = vmatpush1.xpose.msra.mxu0 0.0
        %1773 = vmatprep.subr.mxu0 0.0
        %1774 = vmatpush1.xpose.msra.mxu0 0.0
        %1775 = vmatprep.subr.mxu0 0.0
        %1776 = vmatpush1.xpose.msra.mxu0 0.0
        %1777 = vmatprep.subr.mxu0 0.0
        %1778 = vmatpush1.xpose.msra.mxu0 0.0
        %1779 = vmatprep.subr.mxu0 0.0
        %1780 = vmatpush1.xpose.msra.mxu0 0.0
        %1781 = vmatprep.subr.mxu0 0.0
        %1782 = vmatpush1.xpose.msra.mxu0 0.0
        %1783 = vmatprep.subr.mxu0 0.0
        %1784 = vmatpush1.xpose.msra.mxu0 0.0
        %1785 = vmatprep.mubr.f32.mxu0 0.0
        %1786 = vmatmul.mubr.f32.gmra.mrb[0].mxu0 %v1716
        %v1787 = vpop.f32.mrb[0].mxu0
        %v1788 = vadd.f32 0.0, %v1787
        %v1789 = vpop.f32.mrb[0].mxu0
        %1790 = vdwg.mxu0
        %v1791 = vmul.f32 %v1788, 0.35355338
        %v1792 = vsel %vm1050, -1e+09, %v1791
        %v1793 = vsel %vm1302, %v1792, -inf
        %1794 = vmax.xlane.f32.xlu0 %v1793
        %v1795 = vpop.xlane.xlu0 %1794
        %v1796 = vsub.f32 %v1792, %v1795
        %v1797 = vmul.f32 %v1796, 1.442695
        %v1798 = vpow.pop %v1797
        %v1799 = vsel %vm1302, %v1798, 0.0
        %1800 = vadd.xlane.f32.xlu0 %v1799
        %v1801 = vpop.xlane.xlu0 %1800
        %v1802 = vrcp.pop %v1801
        %v1803 = vmul.f32 %v1798, %v1802
        %v1805 = vsel %vm1302, %v1803, 0
        %1807 = vmatprep.subr.mxu0 0.0
        %1808 = vmatpush1.msra.mxu0 %v1712
        %1809 = vmatprep.subr.mxu0 0.0
        %1810 = vmatpush1.msra.mxu0 0.0
        %1811 = vmatprep.subr.mxu0 0.0
        %1812 = vmatpush1.msra.mxu0 0.0
        %1813 = vmatprep.subr.mxu0 0.0
        %1814 = vmatpush1.msra.mxu0 0.0
        %1815 = vmatprep.subr.mxu0 0.0
        %1816 = vmatpush1.msra.mxu0 0.0
        %1817 = vmatprep.subr.mxu0 0.0
        %1818 = vmatpush1.msra.mxu0 0.0
        %1819 = vmatprep.subr.mxu0 0.0
        %1820 = vmatpush1.msra.mxu0 0.0
        %1821 = vmatprep.subr.mxu0 0.0
        %1822 = vmatpush1.msra.mxu0 0.0
        %1823 = vmatprep.subr.mxu0 0.0
        %1824 = vmatpush1.msra.mxu0 0.0
        %1825 = vmatprep.subr.mxu0 0.0
        %1826 = vmatpush1.msra.mxu0 0.0
        %1827 = vmatprep.subr.mxu0 0.0
        %1828 = vmatpush1.msra.mxu0 0.0
        %1829 = vmatprep.subr.mxu0 0.0
        %1830 = vmatpush1.msra.mxu0 0.0
        %1831 = vmatprep.subr.mxu0 0.0
        %1832 = vmatpush1.msra.mxu0 0.0
        %1833 = vmatprep.subr.mxu0 0.0
        %1834 = vmatpush1.msra.mxu0 0.0
        %1835 = vmatprep.subr.mxu0 0.0
        %1836 = vmatpush1.msra.mxu0 0.0
        %1837 = vmatprep.subr.mxu0 0.0
        %1838 = vmatpush1.msra.mxu0 0.0
        %1839 = vmatprep.subr.mxu0 0.0
        %1840 = vmatpush1.msra.mxu0 0.0
        %1841 = vmatprep.subr.mxu0 0.0
        %1842 = vmatpush1.msra.mxu0 0.0
        %1843 = vmatprep.subr.mxu0 0.0
        %1844 = vmatpush1.msra.mxu0 0.0
        %1845 = vmatprep.subr.mxu0 0.0
        %1846 = vmatpush1.msra.mxu0 0.0
        %1847 = vmatprep.subr.mxu0 0.0
        %1848 = vmatpush1.msra.mxu0 0.0
        %1849 = vmatprep.subr.mxu0 0.0
        %1850 = vmatpush1.msra.mxu0 0.0
        %1851 = vmatprep.subr.mxu0 0.0
        %1852 = vmatpush1.msra.mxu0 0.0
        %1853 = vmatprep.subr.mxu0 0.0
        %1854 = vmatpush1.msra.mxu0 0.0
        %1855 = vmatprep.subr.mxu0 0.0
        %1856 = vmatpush1.msra.mxu0 0.0
        %1857 = vmatprep.subr.mxu0 0.0
        %1858 = vmatpush1.msra.mxu0 0.0
        %1859 = vmatprep.subr.mxu0 0.0
        %1860 = vmatpush1.msra.mxu0 0.0
        %1861 = vmatprep.subr.mxu0 0.0
        %1862 = vmatpush1.msra.mxu0 0.0
        %1863 = vmatprep.subr.mxu0 0.0
        %1864 = vmatpush1.msra.mxu0 0.0
        %1865 = vmatprep.subr.mxu0 0.0
        %1866 = vmatpush1.msra.mxu0 0.0
        %1867 = vmatprep.subr.mxu0 0.0
        %1868 = vmatpush1.msra.mxu0 0.0
        %1869 = vmatprep.subr.mxu0 0.0
        %1870 = vmatpush1.msra.mxu0 0.0
        %1871 = vmatprep.mubr.f32.mxu0 0.0
        %1872 = vmatmul.mubr.f32.gmra.mrb[0].mxu0 %v1805
        %v1873 = vpop.f32.mrb[0].mxu0
        %v1874 = vadd.f32 0.0, %v1873
        %v1875 = vpop.f32.mrb[0].mxu0
        %1876 = vdwg.mxu0
        %s1877 = scalar_lea.vmem %s984, 8
        %v1878 = vld [vmem:[%s1877] sm:$0xff]
        %v1880 = vsel %vm1302, %v1874, 0
        %1882 = vmatprep.subr.mxu0 0.0
        %1883 = vmatpush1.msra.mxu0 %v1878
        %1884 = vmatprep.subr.mxu0 0.0
        %1885 = vmatpush1.msra.mxu0 0.0
        %1886 = vmatprep.subr.mxu0 0.0
        %1887 = vmatpush1.msra.mxu0 0.0
        %1888 = vmatprep.subr.mxu0 0.0
        %1889 = vmatpush1.msra.mxu0 0.0
        %1890 = vmatprep.subr.mxu0 0.0
        %1891 = vmatpush1.msra.mxu0 0.0
        %1892 = vmatprep.subr.mxu0 0.0
        %1893 = vmatpush1.msra.mxu0 0.0
        %1894 = vmatprep.subr.mxu0 0.0
        %1895 = vmatpush1.msra.mxu0 0.0
        %1896 = vmatprep.subr.mxu0 0.0
        %1897 = vmatpush1.msra.mxu0 0.0
        %1898 = vmatprep.subr.mxu0 0.0
        %1899 = vmatpush1.msra.mxu0 0.0
        %1900 = vmatprep.subr.mxu0 0.0
        %1901 = vmatpush1.msra.mxu0 0.0
        %1902 = vmatprep.subr.mxu0 0.0
        %1903 = vmatpush1.msra.mxu0 0.0
        %1904 = vmatprep.subr.mxu0 0.0
        %1905 = vmatpush1.msra.mxu0 0.0
        %1906 = vmatprep.subr.mxu0 0.0
        %1907 = vmatpush1.msra.mxu0 0.0
        %1908 = vmatprep.subr.mxu0 0.0
        %1909 = vmatpush1.msra.mxu0 0.0
        %1910 = vmatprep.subr.mxu0 0.0
        %1911 = vmatpush1.msra.mxu0 0.0
        %1912 = vmatprep.subr.mxu0 0.0
        %1913 = vmatpush1.msra.mxu0 0.0
        %1914 = vmatprep.subr.mxu0 0.0
        %1915 = vmatpush1.msra.mxu0 0.0
        %1916 = vmatprep.subr.mxu0 0.0
        %1917 = vmatpush1.msra.mxu0 0.0
        %1918 = vmatprep.subr.mxu0 0.0
        %1919 = vmatpush1.msra.mxu0 0.0
        %1920 = vmatprep.subr.mxu0 0.0
        %1921 = vmatpush1.msra.mxu0 0.0
        %1922 = vmatprep.subr.mxu0 0.0
        %1923 = vmatpush1.msra.mxu0 0.0
        %1924 = vmatprep.subr.mxu0 0.0
        %1925 = vmatpush1.msra.mxu0 0.0
        %1926 = vmatprep.subr.mxu0 0.0
        %1927 = vmatpush1.msra.mxu0 0.0
        %1928 = vmatprep.subr.mxu0 0.0
        %1929 = vmatpush1.msra.mxu0 0.0
        %1930 = vmatprep.subr.mxu0 0.0
        %1931 = vmatpush1.msra.mxu0 0.0
        %1932 = vmatprep.subr.mxu0 0.0
        %1933 = vmatpush1.msra.mxu0 0.0
        %1934 = vmatprep.subr.mxu0 0.0
        %1935 = vmatpush1.msra.mxu0 0.0
        %1936 = vmatprep.subr.mxu0 0.0
        %1937 = vmatpush1.msra.mxu0 0.0
        %1938 = vmatprep.subr.mxu0 0.0
        %1939 = vmatpush1.msra.mxu0 0.0
        %1940 = vmatprep.subr.mxu0 0.0
        %1941 = vmatpush1.msra.mxu0 0.0
        %1942 = vmatprep.subr.mxu0 0.0
        %1943 = vmatpush1.msra.mxu0 0.0
        %1944 = vmatprep.subr.mxu0 0.0
        %1945 = vmatpush1.msra.mxu0 0.0
        %1946 = vmatprep.mubr.f32.mxu0 0.0
        %1947 = vmatmul.mubr.f32.gmra.mrb[0].mxu0 %v1880
        %v1948 = vpop.f32.mrb[0].mxu0
        %v1949 = vadd.f32 0.0, %v1948
        %v1950 = vpop.f32.mrb[0].mxu0
        %1951 = vdwg.mxu0
        %v1953 = vsel %vm1302, %v1462, 0
        %1955 = vmatprep.subr.mxu0 0.0
        %1956 = vmatpush1.msra.mxu0 %v1465
        %1957 = vmatprep.subr.mxu0 0.0
        %1958 = vmatpush1.msra.mxu0 0.0
        %1959 = vmatprep.subr.mxu0 0.0
        %1960 = vmatpush1.msra.mxu0 0.0
        %1961 = vmatprep.subr.mxu0 0.0
        %1962 = vmatpush1.msra.mxu0 0.0
        %1963 = vmatprep.subr.mxu0 0.0
        %1964 = vmatpush1.msra.mxu0 0.0
        %1965 = vmatprep.subr.mxu0 0.0
        %1966 = vmatpush1.msra.mxu0 0.0
        %1967 = vmatprep.subr.mxu0 0.0
        %1968 = vmatpush1.msra.mxu0 0.0
        %1969 = vmatprep.subr.mxu0 0.0
        %1970 = vmatpush1.msra.mxu0 0.0
        %1971 = vmatprep.subr.mxu0 0.0
        %1972 = vmatpush1.msra.mxu0 0.0
        %1973 = vmatprep.subr.mxu0 0.0
        %1974 = vmatpush1.msra.mxu0 0.0
        %1975 = vmatprep.subr.mxu0 0.0
        %1976 = vmatpush1.msra.mxu0 0.0
        %1977 = vmatprep.subr.mxu0 0.0
        %1978 = vmatpush1.msra.mxu0 0.0
        %1979 = vmatprep.subr.mxu0 0.0
        %1980 = vmatpush1.msra.mxu0 0.0
        %1981 = vmatprep.subr.mxu0 0.0
        %1982 = vmatpush1.msra.mxu0 0.0
        %1983 = vmatprep.subr.mxu0 0.0
        %1984 = vmatpush1.msra.mxu0 0.0
        %1985 = vmatprep.subr.mxu0 0.0
        %1986 = vmatpush1.msra.mxu0 0.0
        %1987 = vmatprep.subr.mxu0 0.0
        %1988 = vmatpush1.msra.mxu0 0.0
        %1989 = vmatprep.subr.mxu0 0.0
        %1990 = vmatpush1.msra.mxu0 0.0
        %1991 = vmatprep.subr.mxu0 0.0
        %1992 = vmatpush1.msra.mxu0 0.0
        %1993 = vmatprep.subr.mxu0 0.0
        %1994 = vmatpush1.msra.mxu0 0.0
        %1995 = vmatprep.subr.mxu0 0.0
        %1996 = vmatpush1.msra.mxu0 0.0
        %1997 = vmatprep.subr.mxu0 0.0
        %1998 = vmatpush1.msra.mxu0 0.0
        %1999 = vmatprep.subr.mxu0 0.0
        %2000 = vmatpush1.msra.mxu0 0.0
        %2001 = vmatprep.subr.mxu0 0.0
        %2002 = vmatpush1.msra.mxu0 0.0
        %2003 = vmatprep.subr.mxu0 0.0
        %2004 = vmatpush1.msra.mxu0 0.0
        %2005 = vmatprep.subr.mxu0 0.0
        %2006 = vmatpush1.msra.mxu0 0.0
        %2007 = vmatprep.subr.mxu0 0.0
        %2008 = vmatpush1.msra.mxu0 0.0
        %2009 = vmatprep.subr.mxu0 0.0
        %2010 = vmatpush1.msra.mxu0 0.0
        %2011 = vmatprep.subr.mxu0 0.0
        %2012 = vmatpush1.msra.mxu0 0.0
        %2013 = vmatprep.subr.mxu0 0.0
        %2014 = vmatpush1.msra.mxu0 0.0
        %2015 = vmatprep.subr.mxu0 0.0
        %2016 = vmatpush1.msra.mxu0 0.0
        %2017 = vmatprep.subr.mxu0 0.0
        %2018 = vmatpush1.msra.mxu0 0.0
        %2019 = vmatprep.mubr.f32.mxu0 0.0
        %2020 = vmatmul.mubr.f32.gmra.mrb[0].mxu0 %v1953
        %v2021 = vpop.f32.mrb[0].mxu0
        %v2022 = vadd.f32 %v1949, %v2021
        %v2023 = vpop.f32.mrb[0].mxu0
        %2024 = vdwg.mxu0
        %s2025 = scalar_lea.vmem %s975, 64
        %v2026 = vld [vmem:[%s2025] sm:$0xff]
        %v2027 = vld [vmem:[%s2025 + $0x8] sm:$0xff]
        %v2028 = vld [vmem:[%s2025 + $0x10] sm:$0xff]
        %v2029 = vld [vmem:[%s2025 + $0x18] sm:$0xff]
        %s2030 = scalar_lea.vmem %s979, 2
        %v2031 = vld [vmem:[%s2030] sm:$0x1]
        %v2033 = vlaneseq
        %v2034 = vshrl.u32 %v2033, 7
        %v2035 = vsub.s32 0, %v2034
        %v2036 = vrot.slane %v2031, %v2035
        %2038 = vmatprep.subr.mxu0 0.0
        %2039 = vmatpush1.msra.mxu0 %v2026
        %2040 = vmatprep.subr.mxu0 0.0
        %2041 = vmatpush1.msra.mxu0 %v2027
        %2042 = vmatprep.subr.mxu0 0.0
        %2043 = vmatpush1.msra.mxu0 %v2028
        %2044 = vmatprep.subr.mxu0 0.0
        %2045 = vmatpush1.msra.mxu0 %v2029
        %2046 = vmatprep.subr.mxu0 0.0
        %2047 = vmatpush1.msra.mxu0 0.0
        %2048 = vmatprep.subr.mxu0 0.0
        %2049 = vmatpush1.msra.mxu0 0.0
        %2050 = vmatprep.subr.mxu0 0.0
        %2051 = vmatpush1.msra.mxu0 0.0
        %2052 = vmatprep.subr.mxu0 0.0
        %2053 = vmatpush1.msra.mxu0 0.0
        %2054 = vmatprep.subr.mxu0 0.0
        %2055 = vmatpush1.msra.mxu0 0.0
        %2056 = vmatprep.subr.mxu0 0.0
        %2057 = vmatpush1.msra.mxu0 0.0
        %2058 = vmatprep.subr.mxu0 0.0
        %2059 = vmatpush1.msra.mxu0 0.0
        %2060 = vmatprep.subr.mxu0 0.0
        %2061 = vmatpush1.msra.mxu0 0.0
        %2062 = vmatprep.subr.mxu0 0.0
        %2063 = vmatpush1.msra.mxu0 0.0
        %2064 = vmatprep.subr.mxu0 0.0
        %2065 = vmatpush1.msra.mxu0 0.0
        %2066 = vmatprep.subr.mxu0 0.0
        %2067 = vmatpush1.msra.mxu0 0.0
        %2068 = vmatprep.subr.mxu0 0.0
        %2069 = vmatpush1.msra.mxu0 0.0
        %2070 = vmatprep.subr.mxu0 0.0
        %2071 = vmatpush1.msra.mxu0 0.0
        %2072 = vmatprep.subr.mxu0 0.0
        %2073 = vmatpush1.msra.mxu0 0.0
        %2074 = vmatprep.subr.mxu0 0.0
        %2075 = vmatpush1.msra.mxu0 0.0
        %2076 = vmatprep.subr.mxu0 0.0
        %2077 = vmatpush1.msra.mxu0 0.0
        %2078 = vmatprep.subr.mxu0 0.0
        %2079 = vmatpush1.msra.mxu0 0.0
        %2080 = vmatprep.subr.mxu0 0.0
        %2081 = vmatpush1.msra.mxu0 0.0
        %2082 = vmatprep.subr.mxu0 0.0
        %2083 = vmatpush1.msra.mxu0 0.0
        %2084 = vmatprep.subr.mxu0 0.0
        %2085 = vmatpush1.msra.mxu0 0.0
        %2086 = vmatprep.subr.mxu0 0.0
        %2087 = vmatpush1.msra.mxu0 0.0
        %2088 = vmatprep.subr.mxu0 0.0
        %2089 = vmatpush1.msra.mxu0 0.0
        %2090 = vmatprep.subr.mxu0 0.0
        %2091 = vmatpush1.msra.mxu0 0.0
        %2092 = vmatprep.subr.mxu0 0.0
        %2093 = vmatpush1.msra.mxu0 0.0
        %2094 = vmatprep.subr.mxu0 0.0
        %2095 = vmatpush1.msra.mxu0 0.0
        %2096 = vmatprep.subr.mxu0 0.0
        %2097 = vmatpush1.msra.mxu0 0.0
        %2098 = vmatprep.subr.mxu0 0.0
        %2099 = vmatpush1.msra.mxu0 0.0
        %2100 = vmatprep.subr.mxu0 0.0
        %2101 = vmatpush1.msra.mxu0 0.0
        %2102 = vmatprep.mubr.f32.mxu0 0.0
        %2103 = vmatmul.mubr.f32.gmra.mrb[0].mxu0 %v1064
        %v2104 = vpop.f32.mrb[0].mxu0
        %v2105 = vadd.f32 %v2036, %v2104
        %v2106 = vpop.f32.mrb[0].mxu0
        %2107 = vdwg.mxu0
        %s2108 = scalar_lea.vmem %s975, 192
        %v2109 = vld [vmem:[%s2108] sm:$0xff]
        %v2110 = vld [vmem:[%s2108 + $0x8] sm:$0xff]
        %v2111 = vld [vmem:[%s2108 + $0x10] sm:$0xff]
        %v2112 = vld [vmem:[%s2108 + $0x18] sm:$0xff]
        %s2113 = scalar_lea.vmem %s979, 6
        %v2114 = vld [vmem:[%s2113] sm:$0x1]
        %v2116 = vlaneseq
        %v2117 = vshrl.u32 %v2116, 7
        %v2118 = vsub.s32 0, %v2117
        %v2119 = vrot.slane %v2114, %v2118
        %2121 = vmatprep.subr.mxu0 0.0
        %2122 = vmatpush1.msra.mxu0 %v2109
        %2123 = vmatprep.subr.mxu0 0.0
        %2124 = vmatpush1.msra.mxu0 %v2110
        %2125 = vmatprep.subr.mxu0 0.0
        %2126 = vmatpush1.msra.mxu0 %v2111
        %2127 = vmatprep.subr.mxu0 0.0
        %2128 = vmatpush1.msra.mxu0 %v2112
        %2129 = vmatprep.subr.mxu0 0.0
        %2130 = vmatpush1.msra.mxu0 0.0
        %2131 = vmatprep.subr.mxu0 0.0
        %2132 = vmatpush1.msra.mxu0 0.0
        %2133 = vmatprep.subr.mxu0 0.0
        %2134 = vmatpush1.msra.mxu0 0.0
        %2135 = vmatprep.subr.mxu0 0.0
        %2136 = vmatpush1.msra.mxu0 0.0
        %2137 = vmatprep.subr.mxu0 0.0
        %2138 = vmatpush1.msra.mxu0 0.0
        %2139 = vmatprep.subr.mxu0 0.0
        %2140 = vmatpush1.msra.mxu0 0.0
        %2141 = vmatprep.subr.mxu0 0.0
        %2142 = vmatpush1.msra.mxu0 0.0
        %2143 = vmatprep.subr.mxu0 0.0
        %2144 = vmatpush1.msra.mxu0 0.0
        %2145 = vmatprep.subr.mxu0 0.0
        %2146 = vmatpush1.msra.mxu0 0.0
        %2147 = vmatprep.subr.mxu0 0.0
        %2148 = vmatpush1.msra.mxu0 0.0
        %2149 = vmatprep.subr.mxu0 0.0
        %2150 = vmatpush1.msra.mxu0 0.0
        %2151 = vmatprep.subr.mxu0 0.0
        %2152 = vmatpush1.msra.mxu0 0.0
        %2153 = vmatprep.subr.mxu0 0.0
        %2154 = vmatpush1.msra.mxu0 0.0
        %2155 = vmatprep.subr.mxu0 0.0
        %2156 = vmatpush1.msra.mxu0 0.0
        %2157 = vmatprep.subr.mxu0 0.0
        %2158 = vmatpush1.msra.mxu0 0.0
        %2159 = vmatprep.subr.mxu0 0.0
        %2160 = vmatpush1.msra.mxu0 0.0
        %2161 = vmatprep.subr.mxu0 0.0
        %2162 = vmatpush1.msra.mxu0 0.0
        %2163 = vmatprep.subr.mxu0 0.0
        %2164 = vmatpush1.msra.mxu0 0.0
        %2165 = vmatprep.subr.mxu0 0.0
        %2166 = vmatpush1.msra.mxu0 0.0
        %2167 = vmatprep.subr.mxu0 0.0
        %2168 = vmatpush1.msra.mxu0 0.0
        %2169 = vmatprep.subr.mxu0 0.0
        %2170 = vmatpush1.msra.mxu0 0.0
        %2171 = vmatprep.subr.mxu0 0.0
        %2172 = vmatpush1.msra.mxu0 0.0
        %2173 = vmatprep.subr.mxu0 0.0
        %2174 = vmatpush1.msra.mxu0 0.0
        %2175 = vmatprep.subr.mxu0 0.0
        %2176 = vmatpush1.msra.mxu0 0.0
        %2177 = vmatprep.subr.mxu0 0.0
        %2178 = vmatpush1.msra.mxu0 0.0
        %2179 = vmatprep.subr.mxu0 0.0
        %2180 = vmatpush1.msra.mxu0 0.0
        %2181 = vmatprep.subr.mxu0 0.0
        %2182 = vmatpush1.msra.mxu0 0.0
        %2183 = vmatprep.subr.mxu0 0.0
        %2184 = vmatpush1.msra.mxu0 0.0
        %2185 = vmatprep.mubr.f32.mxu0 0.0
        %2186 = vmatmul.mubr.f32.gmra.mrb[0].mxu0 %v1064
        %v2187 = vpop.f32.mrb[0].mxu0
        %v2188 = vadd.f32 %v2119, %v2187
        %v2189 = vpop.f32.mrb[0].mxu0
        %2190 = vdwg.mxu0
        %s2191 = scalar_lea.vmem %s975, 320
        %v2192 = vld [vmem:[%s2191] sm:$0xff]
        %v2193 = vld [vmem:[%s2191 + $0x8] sm:$0xff]
        %v2194 = vld [vmem:[%s2191 + $0x10] sm:$0xff]
        %v2195 = vld [vmem:[%s2191 + $0x18] sm:$0xff]
        %s2196 = scalar_lea.vmem %s979, 10
        %v2197 = vld [vmem:[%s2196] sm:$0x1]
        %v2199 = vlaneseq
        %v2200 = vshrl.u32 %v2199, 7
        %v2201 = vsub.s32 0, %v2200
        %v2202 = vrot.slane %v2197, %v2201
        %2204 = vmatprep.subr.mxu0 0.0
        %2205 = vmatpush1.msra.mxu0 %v2192
        %2206 = vmatprep.subr.mxu0 0.0
        %2207 = vmatpush1.msra.mxu0 %v2193
        %2208 = vmatprep.subr.mxu0 0.0
        %2209 = vmatpush1.msra.mxu0 %v2194
        %2210 = vmatprep.subr.mxu0 0.0
        %2211 = vmatpush1.msra.mxu0 %v2195
        %2212 = vmatprep.subr.mxu0 0.0
        %2213 = vmatpush1.msra.mxu0 0.0
        %2214 = vmatprep.subr.mxu0 0.0
        %2215 = vmatpush1.msra.mxu0 0.0
        %2216 = vmatprep.subr.mxu0 0.0
        %2217 = vmatpush1.msra.mxu0 0.0
        %2218 = vmatprep.subr.mxu0 0.0
        %2219 = vmatpush1.msra.mxu0 0.0
        %2220 = vmatprep.subr.mxu0 0.0
        %2221 = vmatpush1.msra.mxu0 0.0
        %2222 = vmatprep.subr.mxu0 0.0
        %2223 = vmatpush1.msra.mxu0 0.0
        %2224 = vmatprep.subr.mxu0 0.0
        %2225 = vmatpush1.msra.mxu0 0.0
        %2226 = vmatprep.subr.mxu0 0.0
        %2227 = vmatpush1.msra.mxu0 0.0
        %2228 = vmatprep.subr.mxu0 0.0
        %2229 = vmatpush1.msra.mxu0 0.0
        %2230 = vmatprep.subr.mxu0 0.0
        %2231 = vmatpush1.msra.mxu0 0.0
        %2232 = vmatprep.subr.mxu0 0.0
        %2233 = vmatpush1.msra.mxu0 0.0
        %2234 = vmatprep.subr.mxu0 0.0
        %2235 = vmatpush1.msra.mxu0 0.0
        %2236 = vmatprep.subr.mxu0 0.0
        %2237 = vmatpush1.msra.mxu0 0.0
        %2238 = vmatprep.subr.mxu0 0.0
        %2239 = vmatpush1.msra.mxu0 0.0
        %2240 = vmatprep.subr.mxu0 0.0
        %2241 = vmatpush1.msra.mxu0 0.0
        %2242 = vmatprep.subr.mxu0 0.0
        %2243 = vmatpush1.msra.mxu0 0.0
        %2244 = vmatprep.subr.mxu0 0.0
        %2245 = vmatpush1.msra.mxu0 0.0
        %2246 = vmatprep.subr.mxu0 0.0
        %2247 = vmatpush1.msra.mxu0 0.0
        %2248 = vmatprep.subr.mxu0 0.0
        %2249 = vmatpush1.msra.mxu0 0.0
        %2250 = vmatprep.subr.mxu0 0.0
        %2251 = vmatpush1.msra.mxu0 0.0
        %2252 = vmatprep.subr.mxu0 0.0
        %2253 = vmatpush1.msra.mxu0 0.0
        %2254 = vmatprep.subr.mxu0 0.0
        %2255 = vmatpush1.msra.mxu0 0.0
        %2256 = vmatprep.subr.mxu0 0.0
        %2257 = vmatpush1.msra.mxu0 0.0
        %2258 = vmatprep.subr.mxu0 0.0
        %2259 = vmatpush1.msra.mxu0 0.0
        %2260 = vmatprep.subr.mxu0 0.0
        %2261 = vmatpush1.msra.mxu0 0.0
        %2262 = vmatprep.subr.mxu0 0.0
        %2263 = vmatpush1.msra.mxu0 0.0
        %2264 = vmatprep.subr.mxu0 0.0
        %2265 = vmatpush1.msra.mxu0 0.0
        %2266 = vmatprep.subr.mxu0 0.0
        %2267 = vmatpush1.msra.mxu0 0.0
        %2268 = vmatprep.mubr.f32.mxu0 0.0
        %2269 = vmatmul.mubr.f32.gmra.mrb[0].mxu0 %v1064
        %v2270 = vpop.f32.mrb[0].mxu0
        %v2271 = vadd.f32 %v2202, %v2270
        %v2272 = vpop.f32.mrb[0].mxu0
        %2273 = vdwg.mxu0
        %v2275 = vsel %vm1302, %v2105, 0
        %v2278 = vsel %vm1302, %v2188, 0
        %2280 = vmatprep.subr.mxu0 0.0
        %2281 = vmatpush1.xpose.msra.mxu0 %v2278
        %2282 = vmatprep.subr.mxu0 0.0
        %2283 = vmatpush1.xpose.msra.mxu0 0.0
        %2284 = vmatprep.subr.mxu0 0.0
        %2285 = vmatpush1.xpose.msra.mxu0 0.0
        %2286 = vmatprep.subr.mxu0 0.0
        %2287 = vmatpush1.xpose.msra.mxu0 0.0
        %2288 = vmatprep.subr.mxu0 0.0
        %2289 = vmatpush1.xpose.msra.mxu0 0.0
        %2290 = vmatprep.subr.mxu0 0.0
        %2291 = vmatpush1.xpose.msra.mxu0 0.0
        %2292 = vmatprep.subr.mxu0 0.0
        %2293 = vmatpush1.xpose.msra.mxu0 0.0
        %2294 = vmatprep.subr.mxu0 0.0
        %2295 = vmatpush1.xpose.msra.mxu0 0.0
        %2296 = vmatprep.subr.mxu0 0.0
        %2297 = vmatpush1.xpose.msra.mxu0 0.0
        %2298 = vmatprep.subr.mxu0 0.0
        %2299 = vmatpush1.xpose.msra.mxu0 0.0
        %2300 = vmatprep.subr.mxu0 0.0
        %2301 = vmatpush1.xpose.msra.mxu0 0.0
        %2302 = vmatprep.subr.mxu0 0.0
        %2303 = vmatpush1.xpose.msra.mxu0 0.0
        %2304 = vmatprep.subr.mxu0 0.0
        %2305 = vmatpush1.xpose.msra.mxu0 0.0
        %2306 = vmatprep.subr.mxu0 0.0
        %2307 = vmatpush1.xpose.msra.mxu0 0.0
        %2308 = vmatprep.subr.mxu0 0.0
        %2309 = vmatpush1.xpose.msra.mxu0 0.0
        %2310 = vmatprep.subr.mxu0 0.0
        %2311 = vmatpush1.xpose.msra.mxu0 0.0
        %2312 = vmatprep.subr.mxu0 0.0
        %2313 = vmatpush1.xpose.msra.mxu0 0.0
        %2314 = vmatprep.subr.mxu0 0.0
        %2315 = vmatpush1.xpose.msra.mxu0 0.0
        %2316 = vmatprep.subr.mxu0 0.0
        %2317 = vmatpush1.xpose.msra.mxu0 0.0
        %2318 = vmatprep.subr.mxu0 0.0
        %2319 = vmatpush1.xpose.msra.mxu0 0.0
        %2320 = vmatprep.subr.mxu0 0.0
        %2321 = vmatpush1.xpose.msra.mxu0 0.0
        %2322 = vmatprep.subr.mxu0 0.0
        %2323 = vmatpush1.xpose.msra.mxu0 0.0
        %2324 = vmatprep.subr.mxu0 0.0
        %2325 = vmatpush1.xpose.msra.mxu0 0.0
        %2326 = vmatprep.subr.mxu0 0.0
        %2327 = vmatpush1.xpose.msra.mxu0 0.0
        %2328 = vmatprep.subr.mxu0 0.0
        %2329 = vmatpush1.xpose.msra.mxu0 0.0
        %2330 = vmatprep.subr.mxu0 0.0
        %2331 = vmatpush1.xpose.msra.mxu0 0.0
        %2332 = vmatprep.subr.mxu0 0.0
        %2333 = vmatpush1.xpose.msra.mxu0 0.0
        %2334 = vmatprep.subr.mxu0 0.0
        %2335 = vmatpush1.xpose.msra.mxu0 0.0
        %2336 = vmatprep.subr.mxu0 0.0
        %2337 = vmatpush1.xpose.msra.mxu0 0.0
        %2338 = vmatprep.subr.mxu0 0.0
        %2339 = vmatpush1.xpose.msra.mxu0 0.0
        %2340 = vmatprep.subr.mxu0 0.0
        %2341 = vmatpush1.xpose.msra.mxu0 0.0
        %2342 = vmatprep.subr.mxu0 0.0
        %2343 = vmatpush1.xpose.msra.mxu0 0.0
        %2344 = vmatprep.mubr.f32.mxu0 0.0
        %2345 = vmatmul.mubr.f32.gmra.mrb[0].mxu0 %v2275
        %v2346 = vpop.f32.mrb[0].mxu0
        %v2347 = vadd.f32 0.0, %v2346
        %v2348 = vpop.f32.mrb[0].mxu0
        %2349 = vdwg.mxu0
        %v2350 = vmul.f32 %v2347, 0.35355338
        %v2351 = vsel %vm1050, -1e+09, %v2350
        %v2352 = vsel %vm1302, %v2351, -inf
        %2353 = vmax.xlane.f32.xlu0 %v2352
        %v2354 = vpop.xlane.xlu0 %2353
        %v2355 = vsub.f32 %v2351, %v2354
        %v2356 = vmul.f32 %v2355, 1.442695
        %v2357 = vpow.pop %v2356
        %v2358 = vsel %vm1302, %v2357, 0.0
        %2359 = vadd.xlane.f32.xlu0 %v2358
        %v2360 = vpop.xlane.xlu0 %2359
        %v2361 = vrcp.pop %v2360
        %v2362 = vmul.f32 %v2357, %v2361
        %v2364 = vsel %vm1302, %v2362, 0
        %2366 = vmatprep.subr.mxu0 0.0
        %2367 = vmatpush1.msra.mxu0 %v2271
        %2368 = vmatprep.subr.mxu0 0.0
        %2369 = vmatpush1.msra.mxu0 0.0
        %2370 = vmatprep.subr.mxu0 0.0
        %2371 = vmatpush1.msra.mxu0 0.0
        %2372 = vmatprep.subr.mxu0 0.0
        %2373 = vmatpush1.msra.mxu0 0.0
        %2374 = vmatprep.subr.mxu0 0.0
        %2375 = vmatpush1.msra.mxu0 0.0
        %2376 = vmatprep.subr.mxu0 0.0
        %2377 = vmatpush1.msra.mxu0 0.0
        %2378 = vmatprep.subr.mxu0 0.0
        %2379 = vmatpush1.msra.mxu0 0.0
        %2380 = vmatprep.subr.mxu0 0.0
        %2381 = vmatpush1.msra.mxu0 0.0
        %2382 = vmatprep.subr.mxu0 0.0
        %2383 = vmatpush1.msra.mxu0 0.0
        %2384 = vmatprep.subr.mxu0 0.0
        %2385 = vmatpush1.msra.mxu0 0.0
        %2386 = vmatprep.subr.mxu0 0.0
        %2387 = vmatpush1.msra.mxu0 0.0
        %2388 = vmatprep.subr.mxu0 0.0
        %2389 = vmatpush1.msra.mxu0 0.0
        %2390 = vmatprep.subr.mxu0 0.0
        %2391 = vmatpush1.msra.mxu0 0.0
        %2392 = vmatprep.subr.mxu0 0.0
        %2393 = vmatpush1.msra.mxu0 0.0
        %2394 = vmatprep.subr.mxu0 0.0
        %2395 = vmatpush1.msra.mxu0 0.0
        %2396 = vmatprep.subr.mxu0 0.0
        %2397 = vmatpush1.msra.mxu0 0.0
        %2398 = vmatprep.subr.mxu0 0.0
        %2399 = vmatpush1.msra.mxu0 0.0
        %2400 = vmatprep.subr.mxu0 0.0
        %2401 = vmatpush1.msra.mxu0 0.0
        %2402 = vmatprep.subr.mxu0 0.0
        %2403 = vmatpush1.msra.mxu0 0.0
        %2404 = vmatprep.subr.mxu0 0.0
        %2405 = vmatpush1.msra.mxu0 0.0
        %2406 = vmatprep.subr.mxu0 0.0
        %2407 = vmatpush1.msra.mxu0 0.0
        %2408 = vmatprep.subr.mxu0 0.0
        %2409 = vmatpush1.msra.mxu0 0.0
        %2410 = vmatprep.subr.mxu0 0.0
        %2411 = vmatpush1.msra.mxu0 0.0
        %2412 = vmatprep.subr.mxu0 0.0
        %2413 = vmatpush1.msra.mxu0 0.0
        %2414 = vmatprep.subr.mxu0 0.0
        %2415 = vmatpush1.msra.mxu0 0.0
        %2416 = vmatprep.subr.mxu0 0.0
        %2417 = vmatpush1.msra.mxu0 0.0
        %2418 = vmatprep.subr.mxu0 0.0
        %2419 = vmatpush1.msra.mxu0 0.0
        %2420 = vmatprep.subr.mxu0 0.0
        %2421 = vmatpush1.msra.mxu0 0.0
        %2422 = vmatprep.subr.mxu0 0.0
        %2423 = vmatpush1.msra.mxu0 0.0
        %2424 = vmatprep.subr.mxu0 0.0
        %2425 = vmatpush1.msra.mxu0 0.0
        %2426 = vmatprep.subr.mxu0 0.0
        %2427 = vmatpush1.msra.mxu0 0.0
        %2428 = vmatprep.subr.mxu0 0.0
        %2429 = vmatpush1.msra.mxu0 0.0
        %2430 = vmatprep.mubr.f32.mxu0 0.0
        %2431 = vmatmul.mubr.f32.gmra.mrb[0].mxu0 %v2364
        %v2432 = vpop.f32.mrb[0].mxu0
        %v2433 = vadd.f32 0.0, %v2432
        %v2434 = vpop.f32.mrb[0].mxu0
        %2435 = vdwg.mxu0
        %s2436 = scalar_lea.vmem %s984, 16
        %v2437 = vld [vmem:[%s2436] sm:$0xff]
        %v2439 = vsel %vm1302, %v2433, 0
        %2441 = vmatprep.subr.mxu0 0.0
        %2442 = vmatpush1.msra.mxu0 %v2437
        %2443 = vmatprep.subr.mxu0 0.0
        %2444 = vmatpush1.msra.mxu0 0.0
        %2445 = vmatprep.subr.mxu0 0.0
        %2446 = vmatpush1.msra.mxu0 0.0
        %2447 = vmatprep.subr.mxu0 0.0
        %2448 = vmatpush1.msra.mxu0 0.0
        %2449 = vmatprep.subr.mxu0 0.0
        %2450 = vmatpush1.msra.mxu0 0.0
        %2451 = vmatprep.subr.mxu0 0.0
        %2452 = vmatpush1.msra.mxu0 0.0
        %2453 = vmatprep.subr.mxu0 0.0
        %2454 = vmatpush1.msra.mxu0 0.0
        %2455 = vmatprep.subr.mxu0 0.0
        %2456 = vmatpush1.msra.mxu0 0.0
        %2457 = vmatprep.subr.mxu0 0.0
        %2458 = vmatpush1.msra.mxu0 0.0
        %2459 = vmatprep.subr.mxu0 0.0
        %2460 = vmatpush1.msra.mxu0 0.0
        %2461 = vmatprep.subr.mxu0 0.0
        %2462 = vmatpush1.msra.mxu0 0.0
        %2463 = vmatprep.subr.mxu0 0.0
        %2464 = vmatpush1.msra.mxu0 0.0
        %2465 = vmatprep.subr.mxu0 0.0
        %2466 = vmatpush1.msra.mxu0 0.0
        %2467 = vmatprep.subr.mxu0 0.0
        %2468 = vmatpush1.msra.mxu0 0.0
        %2469 = vmatprep.subr.mxu0 0.0
        %2470 = vmatpush1.msra.mxu0 0.0
        %2471 = vmatprep.subr.mxu0 0.0
        %2472 = vmatpush1.msra.mxu0 0.0
        %2473 = vmatprep.subr.mxu0 0.0
        %2474 = vmatpush1.msra.mxu0 0.0
        %2475 = vmatprep.subr.mxu0 0.0
        %2476 = vmatpush1.msra.mxu0 0.0
        %2477 = vmatprep.subr.mxu0 0.0
        %2478 = vmatpush1.msra.mxu0 0.0
        %2479 = vmatprep.subr.mxu0 0.0
        %2480 = vmatpush1.msra.mxu0 0.0
        %2481 = vmatprep.subr.mxu0 0.0
        %2482 = vmatpush1.msra.mxu0 0.0
        %2483 = vmatprep.subr.mxu0 0.0
        %2484 = vmatpush1.msra.mxu0 0.0
        %2485 = vmatprep.subr.mxu0 0.0
        %2486 = vmatpush1.msra.mxu0 0.0
        %2487 = vmatprep.subr.mxu0 0.0
        %2488 = vmatpush1.msra.mxu0 0.0
        %2489 = vmatprep.subr.mxu0 0.0
        %2490 = vmatpush1.msra.mxu0 0.0
        %2491 = vmatprep.subr.mxu0 0.0
        %2492 = vmatpush1.msra.mxu0 0.0
        %2493 = vmatprep.subr.mxu0 0.0
        %2494 = vmatpush1.msra.mxu0 0.0
        %2495 = vmatprep.subr.mxu0 0.0
        %2496 = vmatpush1.msra.mxu0 0.0
        %2497 = vmatprep.subr.mxu0 0.0
        %2498 = vmatpush1.msra.mxu0 0.0
        %2499 = vmatprep.subr.mxu0 0.0
        %2500 = vmatpush1.msra.mxu0 0.0
        %2501 = vmatprep.subr.mxu0 0.0
        %2502 = vmatpush1.msra.mxu0 0.0
        %2503 = vmatprep.subr.mxu0 0.0
        %2504 = vmatpush1.msra.mxu0 0.0
        %2505 = vmatprep.mubr.f32.mxu0 0.0
        %2506 = vmatmul.mubr.f32.gmra.mrb[0].mxu0 %v2439
        %v2507 = vpop.f32.mrb[0].mxu0
        %v2508 = vadd.f32 0.0, %v2507
        %v2509 = vpop.f32.mrb[0].mxu0
        %2510 = vdwg.mxu0
        %v2511 = vadd.f32 %v2022, %v2508
        %s2512 = scalar_lea.vmem %s975, 96
        %v2513 = vld [vmem:[%s2512] sm:$0xff]
        %v2514 = vld [vmem:[%s2512 + $0x8] sm:$0xff]
        %v2515 = vld [vmem:[%s2512 + $0x10] sm:$0xff]
        %v2516 = vld [vmem:[%s2512 + $0x18] sm:$0xff]
        %s2517 = scalar_lea.vmem %s979, 3
        %v2518 = vld [vmem:[%s2517] sm:$0x1]
        %v2520 = vlaneseq
        %v2521 = vshrl.u32 %v2520, 7
        %v2522 = vsub.s32 0, %v2521
        %v2523 = vrot.slane %v2518, %v2522
        %2525 = vmatprep.subr.mxu0 0.0
        %2526 = vmatpush1.msra.mxu0 %v2513
        %2527 = vmatprep.subr.mxu0 0.0
        %2528 = vmatpush1.msra.mxu0 %v2514
        %2529 = vmatprep.subr.mxu0 0.0
        %2530 = vmatpush1.msra.mxu0 %v2515
        %2531 = vmatprep.subr.mxu0 0.0
        %2532 = vmatpush1.msra.mxu0 %v2516
        %2533 = vmatprep.subr.mxu0 0.0
        %2534 = vmatpush1.msra.mxu0 0.0
        %2535 = vmatprep.subr.mxu0 0.0
        %2536 = vmatpush1.msra.mxu0 0.0
        %2537 = vmatprep.subr.mxu0 0.0
        %2538 = vmatpush1.msra.mxu0 0.0
        %2539 = vmatprep.subr.mxu0 0.0
        %2540 = vmatpush1.msra.mxu0 0.0
        %2541 = vmatprep.subr.mxu0 0.0
        %2542 = vmatpush1.msra.mxu0 0.0
        %2543 = vmatprep.subr.mxu0 0.0
        %2544 = vmatpush1.msra.mxu0 0.0
        %2545 = vmatprep.subr.mxu0 0.0
        %2546 = vmatpush1.msra.mxu0 0.0
        %2547 = vmatprep.subr.mxu0 0.0
        %2548 = vmatpush1.msra.mxu0 0.0
        %2549 = vmatprep.subr.mxu0 0.0
        %2550 = vmatpush1.msra.mxu0 0.0
        %2551 = vmatprep.subr.mxu0 0.0
        %2552 = vmatpush1.msra.mxu0 0.0
        %2553 = vmatprep.subr.mxu0 0.0
        %2554 = vmatpush1.msra.mxu0 0.0
        %2555 = vmatprep.subr.mxu0 0.0
        %2556 = vmatpush1.msra.mxu0 0.0
        %2557 = vmatprep.subr.mxu0 0.0
        %2558 = vmatpush1.msra.mxu0 0.0
        %2559 = vmatprep.subr.mxu0 0.0
        %2560 = vmatpush1.msra.mxu0 0.0
        %2561 = vmatprep.subr.mxu0 0.0
        %2562 = vmatpush1.msra.mxu0 0.0
        %2563 = vmatprep.subr.mxu0 0.0
        %2564 = vmatpush1.msra.mxu0 0.0
        %2565 = vmatprep.subr.mxu0 0.0
        %2566 = vmatpush1.msra.mxu0 0.0
        %2567 = vmatprep.subr.mxu0 0.0
        %2568 = vmatpush1.msra.mxu0 0.0
        %2569 = vmatprep.subr.mxu0 0.0
        %2570 = vmatpush1.msra.mxu0 0.0
        %2571 = vmatprep.subr.mxu0 0.0
        %2572 = vmatpush1.msra.mxu0 0.0
        %2573 = vmatprep.subr.mxu0 0.0
        %2574 = vmatpush1.msra.mxu0 0.0
        %2575 = vmatprep.subr.mxu0 0.0
        %2576 = vmatpush1.msra.mxu0 0.0
        %2577 = vmatprep.subr.mxu0 0.0
        %2578 = vmatpush1.msra.mxu0 0.0
        %2579 = vmatprep.subr.mxu0 0.0
        %2580 = vmatpush1.msra.mxu0 0.0
        %2581 = vmatprep.subr.mxu0 0.0
        %2582 = vmatpush1.msra.mxu0 0.0
        %2583 = vmatprep.subr.mxu0 0.0
        %2584 = vmatpush1.msra.mxu0 0.0
        %2585 = vmatprep.subr.mxu0 0.0
        %2586 = vmatpush1.msra.mxu0 0.0
        %2587 = vmatprep.subr.mxu0 0.0
        %2588 = vmatpush1.msra.mxu0 0.0
        %2589 = vmatprep.mubr.f32.mxu0 0.0
        %2590 = vmatmul.mubr.f32.gmra.mrb[0].mxu0 %v1064
        %v2591 = vpop.f32.mrb[0].mxu0
        %v2592 = vadd.f32 %v2523, %v2591
        %v2593 = vpop.f32.mrb[0].mxu0
        %2594 = vdwg.mxu0
        %s2595 = scalar_lea.vmem %s975, 224
        %v2596 = vld [vmem:[%s2595] sm:$0xff]
        %v2597 = vld [vmem:[%s2595 + $0x8] sm:$0xff]
        %v2598 = vld [vmem:[%s2595 + $0x10] sm:$0xff]
        %v2599 = vld [vmem:[%s2595 + $0x18] sm:$0xff]
        %s2600 = scalar_lea.vmem %s979, 7
        %v2601 = vld [vmem:[%s2600] sm:$0x1]
        %v2603 = vlaneseq
        %v2604 = vshrl.u32 %v2603, 7
        %v2605 = vsub.s32 0, %v2604
        %v2606 = vrot.slane %v2601, %v2605
        %2608 = vmatprep.subr.mxu0 0.0
        %2609 = vmatpush1.msra.mxu0 %v2596
        %2610 = vmatprep.subr.mxu0 0.0
        %2611 = vmatpush1.msra.mxu0 %v2597
        %2612 = vmatprep.subr.mxu0 0.0
        %2613 = vmatpush1.msra.mxu0 %v2598
        %2614 = vmatprep.subr.mxu0 0.0
        %2615 = vmatpush1.msra.mxu0 %v2599
        %2616 = vmatprep.subr.mxu0 0.0
        %2617 = vmatpush1.msra.mxu0 0.0
        %2618 = vmatprep.subr.mxu0 0.0
        %2619 = vmatpush1.msra.mxu0 0.0
        %2620 = vmatprep.subr.mxu0 0.0
        %2621 = vmatpush1.msra.mxu0 0.0
        %2622 = vmatprep.subr.mxu0 0.0
        %2623 = vmatpush1.msra.mxu0 0.0
        %2624 = vmatprep.subr.mxu0 0.0
        %2625 = vmatpush1.msra.mxu0 0.0
        %2626 = vmatprep.subr.mxu0 0.0
        %2627 = vmatpush1.msra.mxu0 0.0
        %2628 = vmatprep.subr.mxu0 0.0
        %2629 = vmatpush1.msra.mxu0 0.0
        %2630 = vmatprep.subr.mxu0 0.0
        %2631 = vmatpush1.msra.mxu0 0.0
        %2632 = vmatprep.subr.mxu0 0.0
        %2633 = vmatpush1.msra.mxu0 0.0
        %2634 = vmatprep.subr.mxu0 0.0
        %2635 = vmatpush1.msra.mxu0 0.0
        %2636 = vmatprep.subr.mxu0 0.0
        %2637 = vmatpush1.msra.mxu0 0.0
        %2638 = vmatprep.subr.mxu0 0.0
        %2639 = vmatpush1.msra.mxu0 0.0
        %2640 = vmatprep.subr.mxu0 0.0
        %2641 = vmatpush1.msra.mxu0 0.0
        %2642 = vmatprep.subr.mxu0 0.0
        %2643 = vmatpush1.msra.mxu0 0.0
        %2644 = vmatprep.subr.mxu0 0.0
        %2645 = vmatpush1.msra.mxu0 0.0
        %2646 = vmatprep.subr.mxu0 0.0
        %2647 = vmatpush1.msra.mxu0 0.0
        %2648 = vmatprep.subr.mxu0 0.0
        %2649 = vmatpush1.msra.mxu0 0.0
        %2650 = vmatprep.subr.mxu0 0.0
        %2651 = vmatpush1.msra.mxu0 0.0
        %2652 = vmatprep.subr.mxu0 0.0
        %2653 = vmatpush1.msra.mxu0 0.0
        %2654 = vmatprep.subr.mxu0 0.0
        %2655 = vmatpush1.msra.mxu0 0.0
        %2656 = vmatprep.subr.mxu0 0.0
        %2657 = vmatpush1.msra.mxu0 0.0
        %2658 = vmatprep.subr.mxu0 0.0
        %2659 = vmatpush1.msra.mxu0 0.0
        %2660 = vmatprep.subr.mxu0 0.0
        %2661 = vmatpush1.msra.mxu0 0.0
        %2662 = vmatprep.subr.mxu0 0.0
        %2663 = vmatpush1.msra.mxu0 0.0
        %2664 = vmatprep.subr.mxu0 0.0
        %2665 = vmatpush1.msra.mxu0 0.0
        %2666 = vmatprep.subr.mxu0 0.0
        %2667 = vmatpush1.msra.mxu0 0.0
        %2668 = vmatprep.subr.mxu0 0.0
        %2669 = vmatpush1.msra.mxu0 0.0
        %2670 = vmatprep.subr.mxu0 0.0
        %2671 = vmatpush1.msra.mxu0 0.0
        %2672 = vmatprep.mubr.f32.mxu0 0.0
        %2673 = vmatmul.mubr.f32.gmra.mrb[0].mxu0 %v1064
        %v2674 = vpop.f32.mrb[0].mxu0
        %v2675 = vadd.f32 %v2606, %v2674
        %v2676 = vpop.f32.mrb[0].mxu0
        %2677 = vdwg.mxu0
        %s2678 = scalar_lea.vmem %s975, 352
        %v2679 = vld [vmem:[%s2678] sm:$0xff]
        %v2680 = vld [vmem:[%s2678 + $0x8] sm:$0xff]
        %v2681 = vld [vmem:[%s2678 + $0x10] sm:$0xff]
        %v2682 = vld [vmem:[%s2678 + $0x18] sm:$0xff]
        %s2683 = scalar_lea.vmem %s979, 11
        %v2684 = vld [vmem:[%s2683] sm:$0x1]
        %v2686 = vlaneseq
        %v2687 = vshrl.u32 %v2686, 7
        %v2688 = vsub.s32 0, %v2687
        %v2689 = vrot.slane %v2684, %v2688
        %2691 = vmatprep.subr.mxu0 0.0
        %2692 = vmatpush1.msra.mxu0 %v2679
        %2693 = vmatprep.subr.mxu0 0.0
        %2694 = vmatpush1.msra.mxu0 %v2680
        %2695 = vmatprep.subr.mxu0 0.0
        %2696 = vmatpush1.msra.mxu0 %v2681
        %2697 = vmatprep.subr.mxu0 0.0
        %2698 = vmatpush1.msra.mxu0 %v2682
        %2699 = vmatprep.subr.mxu0 0.0
        %2700 = vmatpush1.msra.mxu0 0.0
        %2701 = vmatprep.subr.mxu0 0.0
        %2702 = vmatpush1.msra.mxu0 0.0
        %2703 = vmatprep.subr.mxu0 0.0
        %2704 = vmatpush1.msra.mxu0 0.0
        %2705 = vmatprep.subr.mxu0 0.0
        %2706 = vmatpush1.msra.mxu0 0.0
        %2707 = vmatprep.subr.mxu0 0.0
        %2708 = vmatpush1.msra.mxu0 0.0
        %2709 = vmatprep.subr.mxu0 0.0
        %2710 = vmatpush1.msra.mxu0 0.0
        %2711 = vmatprep.subr.mxu0 0.0
        %2712 = vmatpush1.msra.mxu0 0.0
        %2713 = vmatprep.subr.mxu0 0.0
        %2714 = vmatpush1.msra.mxu0 0.0
        %2715 = vmatprep.subr.mxu0 0.0
        %2716 = vmatpush1.msra.mxu0 0.0
        %2717 = vmatprep.subr.mxu0 0.0
        %2718 = vmatpush1.msra.mxu0 0.0
        %2719 = vmatprep.subr.mxu0 0.0
        %2720 = vmatpush1.msra.mxu0 0.0
        %2721 = vmatprep.subr.mxu0 0.0
        %2722 = vmatpush1.msra.mxu0 0.0
        %2723 = vmatprep.subr.mxu0 0.0
        %2724 = vmatpush1.msra.mxu0 0.0
        %2725 = vmatprep.subr.mxu0 0.0
        %2726 = vmatpush1.msra.mxu0 0.0
        %2727 = vmatprep.subr.mxu0 0.0
        %2728 = vmatpush1.msra.mxu0 0.0
        %2729 = vmatprep.subr.mxu0 0.0
        %2730 = vmatpush1.msra.mxu0 0.0
        %2731 = vmatprep.subr.mxu0 0.0
        %2732 = vmatpush1.msra.mxu0 0.0
        %2733 = vmatprep.subr.mxu0 0.0
        %2734 = vmatpush1.msra.mxu0 0.0
        %2735 = vmatprep.subr.mxu0 0.0
        %2736 = vmatpush1.msra.mxu0 0.0
        %2737 = vmatprep.subr.mxu0 0.0
        %2738 = vmatpush1.msra.mxu0 0.0
        %2739 = vmatprep.subr.mxu0 0.0
        %2740 = vmatpush1.msra.mxu0 0.0
        %2741 = vmatprep.subr.mxu0 0.0
        %2742 = vmatpush1.msra.mxu0 0.0
        %2743 = vmatprep.subr.mxu0 0.0
        %2744 = vmatpush1.msra.mxu0 0.0
        %2745 = vmatprep.subr.mxu0 0.0
        %2746 = vmatpush1.msra.mxu0 0.0
        %2747 = vmatprep.subr.mxu0 0.0
        %2748 = vmatpush1.msra.mxu0 0.0
        %2749 = vmatprep.subr.mxu0 0.0
        %2750 = vmatpush1.msra.mxu0 0.0
        %2751 = vmatprep.subr.mxu0 0.0
        %2752 = vmatpush1.msra.mxu0 0.0
        %2753 = vmatprep.subr.mxu0 0.0
        %2754 = vmatpush1.msra.mxu0 0.0
        %2755 = vmatprep.mubr.f32.mxu0 0.0
        %2756 = vmatmul.mubr.f32.gmra.mrb[0].mxu0 %v1064
        %v2757 = vpop.f32.mrb[0].mxu0
        %v2758 = vadd.f32 %v2689, %v2757
        %v2759 = vpop.f32.mrb[0].mxu0
        %2760 = vdwg.mxu0
        %v2762 = vsel %vm1302, %v2592, 0
        %v2765 = vsel %vm1302, %v2675, 0
        %2767 = vmatprep.subr.mxu0 0.0
        %2768 = vmatpush1.xpose.msra.mxu0 %v2765
        %2769 = vmatprep.subr.mxu0 0.0
        %2770 = vmatpush1.xpose.msra.mxu0 0.0
        %2771 = vmatprep.subr.mxu0 0.0
        %2772 = vmatpush1.xpose.msra.mxu0 0.0
        %2773 = vmatprep.subr.mxu0 0.0
        %2774 = vmatpush1.xpose.msra.mxu0 0.0
        %2775 = vmatprep.subr.mxu0 0.0
        %2776 = vmatpush1.xpose.msra.mxu0 0.0
        %2777 = vmatprep.subr.mxu0 0.0
        %2778 = vmatpush1.xpose.msra.mxu0 0.0
        %2779 = vmatprep.subr.mxu0 0.0
        %2780 = vmatpush1.xpose.msra.mxu0 0.0
        %2781 = vmatprep.subr.mxu0 0.0
        %2782 = vmatpush1.xpose.msra.mxu0 0.0
        %2783 = vmatprep.subr.mxu0 0.0
        %2784 = vmatpush1.xpose.msra.mxu0 0.0
        %2785 = vmatprep.subr.mxu0 0.0
        %2786 = vmatpush1.xpose.msra.mxu0 0.0
        %2787 = vmatprep.subr.mxu0 0.0
        %2788 = vmatpush1.xpose.msra.mxu0 0.0
        %2789 = vmatprep.subr.mxu0 0.0
        %2790 = vmatpush1.xpose.msra.mxu0 0.0
        %2791 = vmatprep.subr.mxu0 0.0
        %2792 = vmatpush1.xpose.msra.mxu0 0.0
        %2793 = vmatprep.subr.mxu0 0.0
        %2794 = vmatpush1.xpose.msra.mxu0 0.0
        %2795 = vmatprep.subr.mxu0 0.0
        %2796 = vmatpush1.xpose.msra.mxu0 0.0
        %2797 = vmatprep.subr.mxu0 0.0
        %2798 = vmatpush1.xpose.msra.mxu0 0.0
        %2799 = vmatprep.subr.mxu0 0.0
        %2800 = vmatpush1.xpose.msra.mxu0 0.0
        %2801 = vmatprep.subr.mxu0 0.0
        %2802 = vmatpush1.xpose.msra.mxu0 0.0
        %2803 = vmatprep.subr.mxu0 0.0
        %2804 = vmatpush1.xpose.msra.mxu0 0.0
        %2805 = vmatprep.subr.mxu0 0.0
        %2806 = vmatpush1.xpose.msra.mxu0 0.0
        %2807 = vmatprep.subr.mxu0 0.0
        %2808 = vmatpush1.xpose.msra.mxu0 0.0
        %2809 = vmatprep.subr.mxu0 0.0
        %2810 = vmatpush1.xpose.msra.mxu0 0.0
        %2811 = vmatprep.subr.mxu0 0.0
        %2812 = vmatpush1.xpose.msra.mxu0 0.0
        %2813 = vmatprep.subr.mxu0 0.0
        %2814 = vmatpush1.xpose.msra.mxu0 0.0
        %2815 = vmatprep.subr.mxu0 0.0
        %2816 = vmatpush1.xpose.msra.mxu0 0.0
        %2817 = vmatprep.subr.mxu0 0.0
        %2818 = vmatpush1.xpose.msra.mxu0 0.0
        %2819 = vmatprep.subr.mxu0 0.0
        %2820 = vmatpush1.xpose.msra.mxu0 0.0
        %2821 = vmatprep.subr.mxu0 0.0
        %2822 = vmatpush1.xpose.msra.mxu0 0.0
        %2823 = vmatprep.subr.mxu0 0.0
        %2824 = vmatpush1.xpose.msra.mxu0 0.0
        %2825 = vmatprep.subr.mxu0 0.0
        %2826 = vmatpush1.xpose.msra.mxu0 0.0
        %2827 = vmatprep.subr.mxu0 0.0
        %2828 = vmatpush1.xpose.msra.mxu0 0.0
        %2829 = vmatprep.subr.mxu0 0.0
        %2830 = vmatpush1.xpose.msra.mxu0 0.0
        %2831 = vmatprep.mubr.f32.mxu0 0.0
        %2832 = vmatmul.mubr.f32.gmra.mrb[0].mxu0 %v2762
        %v2833 = vpop.f32.mrb[0].mxu0
        %v2834 = vadd.f32 0.0, %v2833
        %v2835 = vpop.f32.mrb[0].mxu0
        %2836 = vdwg.mxu0
        %v2837 = vmul.f32 %v2834, 0.35355338
        %v2838 = vsel %vm1050, -1e+09, %v2837
        %v2839 = vsel %vm1302, %v2838, -inf
        %2840 = vmax.xlane.f32.xlu0 %v2839
        %v2841 = vpop.xlane.xlu0 %2840
        %v2842 = vsub.f32 %v2838, %v2841
        %v2843 = vmul.f32 %v2842, 1.442695
        %v2844 = vpow.pop %v2843
        %v2845 = vsel %vm1302, %v2844, 0.0
        %2846 = vadd.xlane.f32.xlu0 %v2845
        %v2847 = vpop.xlane.xlu0 %2846
        %v2848 = vrcp.pop %v2847
        %v2849 = vmul.f32 %v2844, %v2848
        %v2851 = vsel %vm1302, %v2849, 0
        %2853 = vmatprep.subr.mxu0 0.0
        %2854 = vmatpush1.msra.mxu0 %v2758
        %2855 = vmatprep.subr.mxu0 0.0
        %2856 = vmatpush1.msra.mxu0 0.0
        %2857 = vmatprep.subr.mxu0 0.0
        %2858 = vmatpush1.msra.mxu0 0.0
        %2859 = vmatprep.subr.mxu0 0.0
        %2860 = vmatpush1.msra.mxu0 0.0
        %2861 = vmatprep.subr.mxu0 0.0
        %2862 = vmatpush1.msra.mxu0 0.0
        %2863 = vmatprep.subr.mxu0 0.0
        %2864 = vmatpush1.msra.mxu0 0.0
        %2865 = vmatprep.subr.mxu0 0.0
        %2866 = vmatpush1.msra.mxu0 0.0
        %2867 = vmatprep.subr.mxu0 0.0
        %2868 = vmatpush1.msra.mxu0 0.0
        %2869 = vmatprep.subr.mxu0 0.0
        %2870 = vmatpush1.msra.mxu0 0.0
        %2871 = vmatprep.subr.mxu0 0.0
        %2872 = vmatpush1.msra.mxu0 0.0
        %2873 = vmatprep.subr.mxu0 0.0
        %2874 = vmatpush1.msra.mxu0 0.0
        %2875 = vmatprep.subr.mxu0 0.0
        %2876 = vmatpush1.msra.mxu0 0.0
        %2877 = vmatprep.subr.mxu0 0.0
        %2878 = vmatpush1.msra.mxu0 0.0
        %2879 = vmatprep.subr.mxu0 0.0
        %2880 = vmatpush1.msra.mxu0 0.0
        %2881 = vmatprep.subr.mxu0 0.0
        %2882 = vmatpush1.msra.mxu0 0.0
        %2883 = vmatprep.subr.mxu0 0.0
        %2884 = vmatpush1.msra.mxu0 0.0
        %2885 = vmatprep.subr.mxu0 0.0
        %2886 = vmatpush1.msra.mxu0 0.0
        %2887 = vmatprep.subr.mxu0 0.0
        %2888 = vmatpush1.msra.mxu0 0.0
        %2889 = vmatprep.subr.mxu0 0.0
        %2890 = vmatpush1.msra.mxu0 0.0
        %2891 = vmatprep.subr.mxu0 0.0
        %2892 = vmatpush1.msra.mxu0 0.0
        %2893 = vmatprep.subr.mxu0 0.0
        %2894 = vmatpush1.msra.mxu0 0.0
        %2895 = vmatprep.subr.mxu0 0.0
        %2896 = vmatpush1.msra.mxu0 0.0
        %2897 = vmatprep.subr.mxu0 0.0
        %2898 = vmatpush1.msra.mxu0 0.0
        %2899 = vmatprep.subr.mxu0 0.0
        %2900 = vmatpush1.msra.mxu0 0.0
        %2901 = vmatprep.subr.mxu0 0.0
        %2902 = vmatpush1.msra.mxu0 0.0
        %2903 = vmatprep.subr.mxu0 0.0
        %2904 = vmatpush1.msra.mxu0 0.0
        %2905 = vmatprep.subr.mxu0 0.0
        %2906 = vmatpush1.msra.mxu0 0.0
        %2907 = vmatprep.subr.mxu0 0.0
        %2908 = vmatpush1.msra.mxu0 0.0
        %2909 = vmatprep.subr.mxu0 0.0
        %2910 = vmatpush1.msra.mxu0 0.0
        %2911 = vmatprep.subr.mxu0 0.0
        %2912 = vmatpush1.msra.mxu0 0.0
        %2913 = vmatprep.subr.mxu0 0.0
        %2914 = vmatpush1.msra.mxu0 0.0
        %2915 = vmatprep.subr.mxu0 0.0
        %2916 = vmatpush1.msra.mxu0 0.0
        %2917 = vmatprep.mubr.f32.mxu0 0.0
        %2918 = vmatmul.mubr.f32.gmra.mrb[0].mxu0 %v2851
        %v2919 = vpop.f32.mrb[0].mxu0
        %v2920 = vadd.f32 0.0, %v2919
        %v2921 = vpop.f32.mrb[0].mxu0
        %2922 = vdwg.mxu0
        %s2923 = scalar_lea.vmem %s984, 24
        %v2924 = vld [vmem:[%s2923] sm:$0xff]
        %v2926 = vsel %vm1302, %v2920, 0
        %2928 = vmatprep.subr.mxu0 0.0
        %2929 = vmatpush1.msra.mxu0 %v2924
        %2930 = vmatprep.subr.mxu0 0.0
        %2931 = vmatpush1.msra.mxu0 0.0
        %2932 = vmatprep.subr.mxu0 0.0
        %2933 = vmatpush1.msra.mxu0 0.0
        %2934 = vmatprep.subr.mxu0 0.0
        %2935 = vmatpush1.msra.mxu0 0.0
        %2936 = vmatprep.subr.mxu0 0.0
        %2937 = vmatpush1.msra.mxu0 0.0
        %2938 = vmatprep.subr.mxu0 0.0
        %2939 = vmatpush1.msra.mxu0 0.0
        %2940 = vmatprep.subr.mxu0 0.0
        %2941 = vmatpush1.msra.mxu0 0.0
        %2942 = vmatprep.subr.mxu0 0.0
        %2943 = vmatpush1.msra.mxu0 0.0
        %2944 = vmatprep.subr.mxu0 0.0
        %2945 = vmatpush1.msra.mxu0 0.0
        %2946 = vmatprep.subr.mxu0 0.0
        %2947 = vmatpush1.msra.mxu0 0.0
        %2948 = vmatprep.subr.mxu0 0.0
        %2949 = vmatpush1.msra.mxu0 0.0
        %2950 = vmatprep.subr.mxu0 0.0
        %2951 = vmatpush1.msra.mxu0 0.0
        %2952 = vmatprep.subr.mxu0 0.0
        %2953 = vmatpush1.msra.mxu0 0.0
        %2954 = vmatprep.subr.mxu0 0.0
        %2955 = vmatpush1.msra.mxu0 0.0
        %2956 = vmatprep.subr.mxu0 0.0
        %2957 = vmatpush1.msra.mxu0 0.0
        %2958 = vmatprep.subr.mxu0 0.0
        %2959 = vmatpush1.msra.mxu0 0.0
        %2960 = vmatprep.subr.mxu0 0.0
        %2961 = vmatpush1.msra.mxu0 0.0
        %2962 = vmatprep.subr.mxu0 0.0
        %2963 = vmatpush1.msra.mxu0 0.0
        %2964 = vmatprep.subr.mxu0 0.0
        %2965 = vmatpush1.msra.mxu0 0.0
        %2966 = vmatprep.subr.mxu0 0.0
        %2967 = vmatpush1.msra.mxu0 0.0
        %2968 = vmatprep.subr.mxu0 0.0
        %2969 = vmatpush1.msra.mxu0 0.0
        %2970 = vmatprep.subr.mxu0 0.0
        %2971 = vmatpush1.msra.mxu0 0.0
        %2972 = vmatprep.subr.mxu0 0.0
        %2973 = vmatpush1.msra.mxu0 0.0
        %2974 = vmatprep.subr.mxu0 0.0
        %2975 = vmatpush1.msra.mxu0 0.0
        %2976 = vmatprep.subr.mxu0 0.0
        %2977 = vmatpush1.msra.mxu0 0.0
        %2978 = vmatprep.subr.mxu0 0.0
        %2979 = vmatpush1.msra.mxu0 0.0
        %2980 = vmatprep.subr.mxu0 0.0
        %2981 = vmatpush1.msra.mxu0 0.0
        %2982 = vmatprep.subr.mxu0 0.0
        %2983 = vmatpush1.msra.mxu0 0.0
        %2984 = vmatprep.subr.mxu0 0.0
        %2985 = vmatpush1.msra.mxu0 0.0
        %2986 = vmatprep.subr.mxu0 0.0
        %2987 = vmatpush1.msra.mxu0 0.0
        %2988 = vmatprep.subr.mxu0 0.0
        %2989 = vmatpush1.msra.mxu0 0.0
        %2990 = vmatprep.subr.mxu0 0.0
        %2991 = vmatpush1.msra.mxu0 0.0
        %2992 = vmatprep.mubr.f32.mxu0 0.0
        %2993 = vmatmul.mubr.f32.gmra.mrb[0].mxu0 %v2926
        %v2994 = vpop.f32.mrb[0].mxu0
        %v2995 = vadd.f32 0.0, %v2994
        %v2996 = vpop.f32.mrb[0].mxu0
        %2997 = vdwg.mxu0
        %v2998 = vadd.f32 %v2511, %v2995
        %v2999 = vld [vmem:[%s987] sm:$0x1]
        %v3001 = vlaneseq
        %v3002 = vshrl.u32 %v3001, 7
        %v3003 = vsub.s32 0, %v3002
        %v3004 = vrot.slane %v2999, %v3003
        %v3006 = vadd.f32 %v2998, %v3004
        %v3007 = vadd.f32 %v3006, %v1046
        %v3008 = vsel %vm1062, %v3007, 0.0
        %3009 = vadd.xlane.f32.xlu0 %v3008
        %v3010 = vpop.xlane.xlu0 %3009
        %v3011 = vrcp.pop 32.0
        %v3012 = vmul.f32 %v3010, %v3011
        %v3013 = vsub.f32 %v3007, %v3012
        %v3014 = vmul.f32 %v3013, %v3013
        %v3015 = vsel %vm1062, %v3014, 0.0
        %3016 = vadd.xlane.f32.xlu0 %v3015
        %v3017 = vpop.xlane.xlu0 %3016
        %v3018 = vmul.f32 %v3017, %v3011
        %v3019 = vadd.f32 %v3018, 1e-05
        %v3020 = vrsqrt.pop %v3019
        %v3021 = vmul.f32 %v3013, %v3020
        %v3022 = vld [vmem:[%s990] sm:$0x1]
        %v3024 = vlaneseq
        %v3025 = vshrl.u32 %v3024, 7
        %v3026 = vsub.s32 0, %v3025
        %v3027 = vrot.slane %v3022, %v3026
        %v3029 = vmul.f32 %v3021, %v3027
        %v3030 = vld [vmem:[%s993] sm:$0x1]
        %v3032 = vlaneseq
        %v3033 = vshrl.u32 %v3032, 7
        %v3034 = vsub.s32 0, %v3033
        %v3035 = vrot.slane %v3030, %v3034
        %v3037 = vadd.f32 %v3029, %v3035
        %v3038 = vld [vmem:[%s970] sm:$0xff]
        %vm3039 = vcmp.gt.f32.partialorder %v3038, 0.0
        %v3040 = vld [vmem:[%s998] sm:$0xff]
        %v3041 = vld [vmem:[%s998 + $0x8] sm:$0xff]
        %v3042 = vld [vmem:[%s998 + $0x10] sm:$0xff]
        %v3043 = vld [vmem:[%s998 + $0x18] sm:$0xff]
        %v3044 = vld [vmem:[%s1002] sm:$0x1]
        %v3046 = vlaneseq
        %v3047 = vshrl.u32 %v3046, 7
        %v3048 = vsub.s32 0, %v3047
        %v3049 = vrot.slane %v3044, %v3048
        %v3052 = vsel %vm1062, %v3037, 0
        %3054 = vmatprep.subr.mxu0 0.0
        %3055 = vmatpush1.msra.mxu0 %v3040
        %3056 = vmatprep.subr.mxu0 0.0
        %3057 = vmatpush1.msra.mxu0 %v3041
        %3058 = vmatprep.subr.mxu0 0.0
        %3059 = vmatpush1.msra.mxu0 %v3042
        %3060 = vmatprep.subr.mxu0 0.0
        %3061 = vmatpush1.msra.mxu0 %v3043
        %3062 = vmatprep.subr.mxu0 0.0
        %3063 = vmatpush1.msra.mxu0 0.0
        %3064 = vmatprep.subr.mxu0 0.0
        %3065 = vmatpush1.msra.mxu0 0.0
        %3066 = vmatprep.subr.mxu0 0.0
        %3067 = vmatpush1.msra.mxu0 0.0
        %3068 = vmatprep.subr.mxu0 0.0
        %3069 = vmatpush1.msra.mxu0 0.0
        %3070 = vmatprep.subr.mxu0 0.0
        %3071 = vmatpush1.msra.mxu0 0.0
        %3072 = vmatprep.subr.mxu0 0.0
        %3073 = vmatpush1.msra.mxu0 0.0
        %3074 = vmatprep.subr.mxu0 0.0
        %3075 = vmatpush1.msra.mxu0 0.0
        %3076 = vmatprep.subr.mxu0 0.0
        %3077 = vmatpush1.msra.mxu0 0.0
        %3078 = vmatprep.subr.mxu0 0.0
        %3079 = vmatpush1.msra.mxu0 0.0
        %3080 = vmatprep.subr.mxu0 0.0
        %3081 = vmatpush1.msra.mxu0 0.0
        %3082 = vmatprep.subr.mxu0 0.0
        %3083 = vmatpush1.msra.mxu0 0.0
        %3084 = vmatprep.subr.mxu0 0.0
        %3085 = vmatpush1.msra.mxu0 0.0
        %3086 = vmatprep.subr.mxu0 0.0
        %3087 = vmatpush1.msra.mxu0 0.0
        %3088 = vmatprep.subr.mxu0 0.0
        %3089 = vmatpush1.msra.mxu0 0.0
        %3090 = vmatprep.subr.mxu0 0.0
        %3091 = vmatpush1.msra.mxu0 0.0
        %3092 = vmatprep.subr.mxu0 0.0
        %3093 = vmatpush1.msra.mxu0 0.0
        %3094 = vmatprep.subr.mxu0 0.0
        %3095 = vmatpush1.msra.mxu0 0.0
        %3096 = vmatprep.subr.mxu0 0.0
        %3097 = vmatpush1.msra.mxu0 0.0
        %3098 = vmatprep.subr.mxu0 0.0
        %3099 = vmatpush1.msra.mxu0 0.0
        %3100 = vmatprep.subr.mxu0 0.0
        %3101 = vmatpush1.msra.mxu0 0.0
        %3102 = vmatprep.subr.mxu0 0.0
        %3103 = vmatpush1.msra.mxu0 0.0
        %3104 = vmatprep.subr.mxu0 0.0
        %3105 = vmatpush1.msra.mxu0 0.0
        %3106 = vmatprep.subr.mxu0 0.0
        %3107 = vmatpush1.msra.mxu0 0.0
        %3108 = vmatprep.subr.mxu0 0.0
        %3109 = vmatpush1.msra.mxu0 0.0
        %3110 = vmatprep.subr.mxu0 0.0
        %3111 = vmatpush1.msra.mxu0 0.0
        %3112 = vmatprep.subr.mxu0 0.0
        %3113 = vmatpush1.msra.mxu0 0.0
        %3114 = vmatprep.subr.mxu0 0.0
        %3115 = vmatpush1.msra.mxu0 0.0
        %3116 = vmatprep.subr.mxu0 0.0
        %3117 = vmatpush1.msra.mxu0 0.0
        %3118 = vmatprep.mubr.f32.mxu0 0.0
        %3119 = vmatmul.mubr.f32.gmra.mrb[0].mxu0 %v3052
        %v3120 = vpop.f32.mrb[0].mxu0
        %v3121 = vadd.f32 %v3049, %v3120
        %v3122 = vpop.f32.mrb[0].mxu0
        %3123 = vdwg.mxu0
        %s3124 = scalar_lea.vmem %s998, 128
        %v3125 = vld [vmem:[%s3124] sm:$0xff]
        %v3126 = vld [vmem:[%s3124 + $0x8] sm:$0xff]
        %v3127 = vld [vmem:[%s3124 + $0x10] sm:$0xff]
        %v3128 = vld [vmem:[%s3124 + $0x18] sm:$0xff]
        %s3129 = scalar_lea.vmem %s1002, 4
        %v3130 = vld [vmem:[%s3129] sm:$0x1]
        %v3132 = vlaneseq
        %v3133 = vshrl.u32 %v3132, 7
        %v3134 = vsub.s32 0, %v3133
        %v3135 = vrot.slane %v3130, %v3134
        %v3138 = vsel %vm1062, %v1047, 0
        %v3141 = vsel %vm1062, %v1048, 0
        %3143 = vmatprep.subr.mxu0 0.0
        %3144 = vmatpush1.msra.mxu0 %v3125
        %3145 = vmatprep.subr.mxu0 0.0
        %3146 = vmatpush1.msra.mxu0 %v3126
        %3147 = vmatprep.subr.mxu0 0.0
        %3148 = vmatpush1.msra.mxu0 %v3127
        %3149 = vmatprep.subr.mxu0 0.0
        %3150 = vmatpush1.msra.mxu0 %v3128
        %3151 = vmatprep.subr.mxu0 0.0
        %3152 = vmatpush1.msra.mxu0 0.0
        %3153 = vmatprep.subr.mxu0 0.0
        %3154 = vmatpush1.msra.mxu0 0.0
        %3155 = vmatprep.subr.mxu0 0.0
        %3156 = vmatpush1.msra.mxu0 0.0
        %3157 = vmatprep.subr.mxu0 0.0
        %3158 = vmatpush1.msra.mxu0 0.0
        %3159 = vmatprep.subr.mxu0 0.0
        %3160 = vmatpush1.msra.mxu0 0.0
        %3161 = vmatprep.subr.mxu0 0.0
        %3162 = vmatpush1.msra.mxu0 0.0
        %3163 = vmatprep.subr.mxu0 0.0
        %3164 = vmatpush1.msra.mxu0 0.0
        %3165 = vmatprep.subr.mxu0 0.0
        %3166 = vmatpush1.msra.mxu0 0.0
        %3167 = vmatprep.subr.mxu0 0.0
        %3168 = vmatpush1.msra.mxu0 0.0
        %3169 = vmatprep.subr.mxu0 0.0
        %3170 = vmatpush1.msra.mxu0 0.0
        %3171 = vmatprep.subr.mxu0 0.0
        %3172 = vmatpush1.msra.mxu0 0.0
        %3173 = vmatprep.subr.mxu0 0.0
        %3174 = vmatpush1.msra.mxu0 0.0
        %3175 = vmatprep.subr.mxu0 0.0
        %3176 = vmatpush1.msra.mxu0 0.0
        %3177 = vmatprep.subr.mxu0 0.0
        %3178 = vmatpush1.msra.mxu0 0.0
        %3179 = vmatprep.subr.mxu0 0.0
        %3180 = vmatpush1.msra.mxu0 0.0
        %3181 = vmatprep.subr.mxu0 0.0
        %3182 = vmatpush1.msra.mxu0 0.0
        %3183 = vmatprep.subr.mxu0 0.0
        %3184 = vmatpush1.msra.mxu0 0.0
        %3185 = vmatprep.subr.mxu0 0.0
        %3186 = vmatpush1.msra.mxu0 0.0
        %3187 = vmatprep.subr.mxu0 0.0
        %3188 = vmatpush1.msra.mxu0 0.0
        %3189 = vmatprep.subr.mxu0 0.0
        %3190 = vmatpush1.msra.mxu0 0.0
        %3191 = vmatprep.subr.mxu0 0.0
        %3192 = vmatpush1.msra.mxu0 0.0
        %3193 = vmatprep.subr.mxu0 0.0
        %3194 = vmatpush1.msra.mxu0 0.0
        %3195 = vmatprep.subr.mxu0 0.0
        %3196 = vmatpush1.msra.mxu0 0.0
        %3197 = vmatprep.subr.mxu0 0.0
        %3198 = vmatpush1.msra.mxu0 0.0
        %3199 = vmatprep.subr.mxu0 0.0
        %3200 = vmatpush1.msra.mxu0 0.0
        %3201 = vmatprep.subr.mxu0 0.0
        %3202 = vmatpush1.msra.mxu0 0.0
        %3203 = vmatprep.subr.mxu0 0.0
        %3204 = vmatpush1.msra.mxu0 0.0
        %3205 = vmatprep.subr.mxu0 0.0
        %3206 = vmatpush1.msra.mxu0 0.0
        %3207 = vmatprep.mubr.f32.mxu0 0.0
        %3208 = vmatmul.mubr.f32.gmra.mrb[0].mxu0 %v3138
        %v3209 = vpop.f32.mrb[0].mxu0
        %v3210 = vadd.f32 %v3135, %v3209
        %v3211 = vpop.f32.mrb[0].mxu0
        %3212 = vmatprep.mubr.f32.mxu0 0.0
        %3213 = vmatmul.mubr.f32.gmra.mrb[0].mxu0 %v3141
        %v3214 = vpop.f32.mrb[0].mxu0
        %v3215 = vadd.f32 %v3135, %v3214
        %v3216 = vpop.f32.mrb[0].mxu0
        %3217 = vdwg.mxu0
        %s3218 = scalar_lea.vmem %s998, 256
        %v3219 = vld [vmem:[%s3218] sm:$0xff]
        %v3220 = vld [vmem:[%s3218 + $0x8] sm:$0xff]
        %v3221 = vld [vmem:[%s3218 + $0x10] sm:$0xff]
        %v3222 = vld [vmem:[%s3218 + $0x18] sm:$0xff]
        %s3223 = scalar_lea.vmem %s1002, 8
        %v3224 = vld [vmem:[%s3223] sm:$0x1]
        %v3226 = vlaneseq
        %v3227 = vshrl.u32 %v3226, 7
        %v3228 = vsub.s32 0, %v3227
        %v3229 = vrot.slane %v3224, %v3228
        %3231 = vmatprep.subr.mxu0 0.0
        %3232 = vmatpush1.msra.mxu0 %v3219
        %3233 = vmatprep.subr.mxu0 0.0
        %3234 = vmatpush1.msra.mxu0 %v3220
        %3235 = vmatprep.subr.mxu0 0.0
        %3236 = vmatpush1.msra.mxu0 %v3221
        %3237 = vmatprep.subr.mxu0 0.0
        %3238 = vmatpush1.msra.mxu0 %v3222
        %3239 = vmatprep.subr.mxu0 0.0
        %3240 = vmatpush1.msra.mxu0 0.0
        %3241 = vmatprep.subr.mxu0 0.0
        %3242 = vmatpush1.msra.mxu0 0.0
        %3243 = vmatprep.subr.mxu0 0.0
        %3244 = vmatpush1.msra.mxu0 0.0
        %3245 = vmatprep.subr.mxu0 0.0
        %3246 = vmatpush1.msra.mxu0 0.0
        %3247 = vmatprep.subr.mxu0 0.0
        %3248 = vmatpush1.msra.mxu0 0.0
        %3249 = vmatprep.subr.mxu0 0.0
        %3250 = vmatpush1.msra.mxu0 0.0
        %3251 = vmatprep.subr.mxu0 0.0
        %3252 = vmatpush1.msra.mxu0 0.0
        %3253 = vmatprep.subr.mxu0 0.0
        %3254 = vmatpush1.msra.mxu0 0.0
        %3255 = vmatprep.subr.mxu0 0.0
        %3256 = vmatpush1.msra.mxu0 0.0
        %3257 = vmatprep.subr.mxu0 0.0
        %3258 = vmatpush1.msra.mxu0 0.0
        %3259 = vmatprep.subr.mxu0 0.0
        %3260 = vmatpush1.msra.mxu0 0.0
        %3261 = vmatprep.subr.mxu0 0.0
        %3262 = vmatpush1.msra.mxu0 0.0
        %3263 = vmatprep.subr.mxu0 0.0
        %3264 = vmatpush1.msra.mxu0 0.0
        %3265 = vmatprep.subr.mxu0 0.0
        %3266 = vmatpush1.msra.mxu0 0.0
        %3267 = vmatprep.subr.mxu0 0.0
        %3268 = vmatpush1.msra.mxu0 0.0
        %3269 = vmatprep.subr.mxu0 0.0
        %3270 = vmatpush1.msra.mxu0 0.0
        %3271 = vmatprep.subr.mxu0 0.0
        %3272 = vmatpush1.msra.mxu0 0.0
        %3273 = vmatprep.subr.mxu0 0.0
        %3274 = vmatpush1.msra.mxu0 0.0
        %3275 = vmatprep.subr.mxu0 0.0
        %3276 = vmatpush1.msra.mxu0 0.0
        %3277 = vmatprep.subr.mxu0 0.0
        %3278 = vmatpush1.msra.mxu0 0.0
        %3279 = vmatprep.subr.mxu0 0.0
        %3280 = vmatpush1.msra.mxu0 0.0
        %3281 = vmatprep.subr.mxu0 0.0
        %3282 = vmatpush1.msra.mxu0 0.0
        %3283 = vmatprep.subr.mxu0 0.0
        %3284 = vmatpush1.msra.mxu0 0.0
        %3285 = vmatprep.subr.mxu0 0.0
        %3286 = vmatpush1.msra.mxu0 0.0
        %3287 = vmatprep.subr.mxu0 0.0
        %3288 = vmatpush1.msra.mxu0 0.0
        %3289 = vmatprep.subr.mxu0 0.0
        %3290 = vmatpush1.msra.mxu0 0.0
        %3291 = vmatprep.subr.mxu0 0.0
        %3292 = vmatpush1.msra.mxu0 0.0
        %3293 = vmatprep.subr.mxu0 0.0
        %3294 = vmatpush1.msra.mxu0 0.0
        %3295 = vmatprep.mubr.f32.mxu0 0.0
        %3296 = vmatmul.mubr.f32.gmra.mrb[0].mxu0 %v3138
        %v3297 = vpop.f32.mrb[0].mxu0
        %v3298 = vadd.f32 %v3229, %v3297
        %v3299 = vpop.f32.mrb[0].mxu0
        %3300 = vmatprep.mubr.f32.mxu0 0.0
        %3301 = vmatmul.mubr.f32.gmra.mrb[0].mxu0 %v3141
        %v3302 = vpop.f32.mrb[0].mxu0
        %v3303 = vadd.f32 %v3229, %v3302
        %v3304 = vpop.f32.mrb[0].mxu0
        %3305 = vdwg.mxu0
        %v3307 = vsel %vm1302, %v3121, 0
        %v3310 = vsel %vm1302, %v3210, 0
        %v3313 = vsel %vm1302, %v3215, 0
        %3315 = vmatprep.subr.mxu0 0.0
        %3316 = vmatpush1.xpose.msra.mxu0 %v3310
        %3317 = vmatprep.subr.mxu0 0.0
        %3318 = vmatpush1.xpose.msra.mxu0 %v3313
        %3319 = vmatprep.subr.mxu0 0.0
        %3320 = vmatpush1.xpose.msra.mxu0 0.0
        %3321 = vmatprep.subr.mxu0 0.0
        %3322 = vmatpush1.xpose.msra.mxu0 0.0
        %3323 = vmatprep.subr.mxu0 0.0
        %3324 = vmatpush1.xpose.msra.mxu0 0.0
        %3325 = vmatprep.subr.mxu0 0.0
        %3326 = vmatpush1.xpose.msra.mxu0 0.0
        %3327 = vmatprep.subr.mxu0 0.0
        %3328 = vmatpush1.xpose.msra.mxu0 0.0
        %3329 = vmatprep.subr.mxu0 0.0
        %3330 = vmatpush1.xpose.msra.mxu0 0.0
        %3331 = vmatprep.subr.mxu0 0.0
        %3332 = vmatpush1.xpose.msra.mxu0 0.0
        %3333 = vmatprep.subr.mxu0 0.0
        %3334 = vmatpush1.xpose.msra.mxu0 0.0
        %3335 = vmatprep.subr.mxu0 0.0
        %3336 = vmatpush1.xpose.msra.mxu0 0.0
        %3337 = vmatprep.subr.mxu0 0.0
        %3338 = vmatpush1.xpose.msra.mxu0 0.0
        %3339 = vmatprep.subr.mxu0 0.0
        %3340 = vmatpush1.xpose.msra.mxu0 0.0
        %3341 = vmatprep.subr.mxu0 0.0
        %3342 = vmatpush1.xpose.msra.mxu0 0.0
        %3343 = vmatprep.subr.mxu0 0.0
        %3344 = vmatpush1.xpose.msra.mxu0 0.0
        %3345 = vmatprep.subr.mxu0 0.0
        %3346 = vmatpush1.xpose.msra.mxu0 0.0
        %3347 = vmatprep.subr.mxu0 0.0
        %3348 = vmatpush1.xpose.msra.mxu0 0.0
        %3349 = vmatprep.subr.mxu0 0.0
        %3350 = vmatpush1.xpose.msra.mxu0 0.0
        %3351 = vmatprep.subr.mxu0 0.0
        %3352 = vmatpush1.xpose.msra.mxu0 0.0
        %3353 = vmatprep.subr.mxu0 0.0
        %3354 = vmatpush1.xpose.msra.mxu0 0.0
        %3355 = vmatprep.subr.mxu0 0.0
        %3356 = vmatpush1.xpose.msra.mxu0 0.0
        %3357 = vmatprep.subr.mxu0 0.0
        %3358 = vmatpush1.xpose.msra.mxu0 0.0
        %3359 = vmatprep.subr.mxu0 0.0
        %3360 = vmatpush1.xpose.msra.mxu0 0.0
        %3361 = vmatprep.subr.mxu0 0.0
        %3362 = vmatpush1.xpose.msra.mxu0 0.0
        %3363 = vmatprep.subr.mxu0 0.0
        %3364 = vmatpush1.xpose.msra.mxu0 0.0
        %3365 = vmatprep.subr.mxu0 0.0
        %3366 = vmatpush1.xpose.msra.mxu0 0.0
        %3367 = vmatprep.subr.mxu0 0.0
        %3368 = vmatpush1.xpose.msra.mxu0 0.0
        %3369 = vmatprep.subr.mxu0 0.0
        %3370 = vmatpush1.xpose.msra.mxu0 0.0
        %3371 = vmatprep.subr.mxu0 0.0
        %3372 = vmatpush1.xpose.msra.mxu0 0.0
        %3373 = vmatprep.subr.mxu0 0.0
        %3374 = vmatpush1.xpose.msra.mxu0 0.0
        %3375 = vmatprep.subr.mxu0 0.0
        %3376 = vmatpush1.xpose.msra.mxu0 0.0
        %3377 = vmatprep.subr.mxu0 0.0
        %3378 = vmatpush1.xpose.msra.mxu0 0.0
        %3379 = vmatprep.mubr.f32.mxu0 0.0
        %3380 = vmatmul.mubr.f32.gmra.mrb[0].mxu0 %v3307
        %v3381 = vpop.f32.mrb[0].mxu0
        %v3382 = vadd.f32 0.0, %v3381
        %v3383 = vpop.f32.mrb[0].mxu0
        %3384 = vdwg.mxu0
        %v3385 = vmul.f32 %v3382, 0.35355338
        %v3386 = vsel %vm3039, -1e+09, %v3385
        %vm3387 = vcmask 97280
        %v3388 = vsel %vm3387, %v3386, -inf
        %3389 = vmax.xlane.f32.xlu0 %v3388
        %v3390 = vpop.xlane.xlu0 %3389
        %v3391 = vsub.f32 %v3386, %v3390
        %v3392 = vmul.f32 %v3391, 1.442695
        %v3393 = vpow.pop %v3392
        %v3394 = vsel %vm3387, %v3393, 0.0
        %3395 = vadd.xlane.f32.xlu0 %v3394
        %v3396 = vpop.xlane.xlu0 %3395
        %v3397 = vrcp.pop %v3396
        %v3398 = vmul.f32 %v3393, %v3397
        %v3400 = vsel %vm3387, %v3398, 0
        %vm3402 = vcmask 1043456
        %v3404 = vsel %vm3402, %v3303, 0
        %3406 = vmatprep.subr.mxu0 0.0
        %3407 = vmatpush1.msra.mxu0 %v3298
        %3408 = vmatprep.subr.mxu0 0.0
        %3409 = vmatpush1.msra.mxu0 %v3404
        %3410 = vmatprep.subr.mxu0 0.0
        %3411 = vmatpush1.msra.mxu0 0.0
        %3412 = vmatprep.subr.mxu0 0.0
        %3413 = vmatpush1.msra.mxu0 0.0
        %3414 = vmatprep.subr.mxu0 0.0
        %3415 = vmatpush1.msra.mxu0 0.0
        %3416 = vmatprep.subr.mxu0 0.0
        %3417 = vmatpush1.msra.mxu0 0.0
        %3418 = vmatprep.subr.mxu0 0.0
        %3419 = vmatpush1.msra.mxu0 0.0
        %3420 = vmatprep.subr.mxu0 0.0
        %3421 = vmatpush1.msra.mxu0 0.0
        %3422 = vmatprep.subr.mxu0 0.0
        %3423 = vmatpush1.msra.mxu0 0.0
        %3424 = vmatprep.subr.mxu0 0.0
        %3425 = vmatpush1.msra.mxu0 0.0
        %3426 = vmatprep.subr.mxu0 0.0
        %3427 = vmatpush1.msra.mxu0 0.0
        %3428 = vmatprep.subr.mxu0 0.0
        %3429 = vmatpush1.msra.mxu0 0.0
        %3430 = vmatprep.subr.mxu0 0.0
        %3431 = vmatpush1.msra.mxu0 0.0
        %3432 = vmatprep.subr.mxu0 0.0
        %3433 = vmatpush1.msra.mxu0 0.0
        %3434 = vmatprep.subr.mxu0 0.0
        %3435 = vmatpush1.msra.mxu0 0.0
        %3436 = vmatprep.subr.mxu0 0.0
        %3437 = vmatpush1.msra.mxu0 0.0
        %3438 = vmatprep.subr.mxu0 0.0
        %3439 = vmatpush1.msra.mxu0 0.0
        %3440 = vmatprep.subr.mxu0 0.0
        %3441 = vmatpush1.msra.mxu0 0.0
        %3442 = vmatprep.subr.mxu0 0.0
        %3443 = vmatpush1.msra.mxu0 0.0
        %3444 = vmatprep.subr.mxu0 0.0
        %3445 = vmatpush1.msra.mxu0 0.0
        %3446 = vmatprep.subr.mxu0 0.0
        %3447 = vmatpush1.msra.mxu0 0.0
        %3448 = vmatprep.subr.mxu0 0.0
        %3449 = vmatpush1.msra.mxu0 0.0
        %3450 = vmatprep.subr.mxu0 0.0
        %3451 = vmatpush1.msra.mxu0 0.0
        %3452 = vmatprep.subr.mxu0 0.0
        %3453 = vmatpush1.msra.mxu0 0.0
        %3454 = vmatprep.subr.mxu0 0.0
        %3455 = vmatpush1.msra.mxu0 0.0
        %3456 = vmatprep.subr.mxu0 0.0
        %3457 = vmatpush1.msra.mxu0 0.0
        %3458 = vmatprep.subr.mxu0 0.0
        %3459 = vmatpush1.msra.mxu0 0.0
        %3460 = vmatprep.subr.mxu0 0.0
        %3461 = vmatpush1.msra.mxu0 0.0
        %3462 = vmatprep.subr.mxu0 0.0
        %3463 = vmatpush1.msra.mxu0 0.0
        %3464 = vmatprep.subr.mxu0 0.0
        %3465 = vmatpush1.msra.mxu0 0.0
        %3466 = vmatprep.subr.mxu0 0.0
        %3467 = vmatpush1.msra.mxu0 0.0
        %3468 = vmatprep.subr.mxu0 0.0
        %3469 = vmatpush1.msra.mxu0 0.0
        %3470 = vmatprep.mubr.f32.mxu0 0.0
        %3471 = vmatmul.mubr.f32.gmra.mrb[0].mxu0 %v3400
        %v3472 = vpop.f32.mrb[0].mxu0
        %v3473 = vadd.f32 0.0, %v3472
        %v3474 = vpop.f32.mrb[0].mxu0
        %3475 = vdwg.mxu0
        %v3476 = vld [vmem:[%s1007] sm:$0xff]
        %s3477 = scalar_lea.vmem %s998, 32
        %v3478 = vld [vmem:[%s3477] sm:$0xff]
        %v3479 = vld [vmem:[%s3477 + $0x8] sm:$0xff]
        %v3480 = vld [vmem:[%s3477 + $0x10] sm:$0xff]
        %v3481 = vld [vmem:[%s3477 + $0x18] sm:$0xff]
        %s3482 = scalar_lea.vmem %s1002, 1
        %v3483 = vld [vmem:[%s3482] sm:$0x1]
        %v3485 = vlaneseq
        %v3486 = vshrl.u32 %v3485, 7
        %v3487 = vsub.s32 0, %v3486
        %v3488 = vrot.slane %v3483, %v3487
        %3490 = vmatprep.subr.mxu0 0.0
        %3491 = vmatpush1.msra.mxu0 %v3478
        %3492 = vmatprep.subr.mxu0 0.0
        %3493 = vmatpush1.msra.mxu0 %v3479
        %3494 = vmatprep.subr.mxu0 0.0
        %3495 = vmatpush1.msra.mxu0 %v3480
        %3496 = vmatprep.subr.mxu0 0.0
        %3497 = vmatpush1.msra.mxu0 %v3481
        %3498 = vmatprep.subr.mxu0 0.0
        %3499 = vmatpush1.msra.mxu0 0.0
        %3500 = vmatprep.subr.mxu0 0.0
        %3501 = vmatpush1.msra.mxu0 0.0
        %3502 = vmatprep.subr.mxu0 0.0
        %3503 = vmatpush1.msra.mxu0 0.0
        %3504 = vmatprep.subr.mxu0 0.0
        %3505 = vmatpush1.msra.mxu0 0.0
        %3506 = vmatprep.subr.mxu0 0.0
        %3507 = vmatpush1.msra.mxu0 0.0
        %3508 = vmatprep.subr.mxu0 0.0
        %3509 = vmatpush1.msra.mxu0 0.0
        %3510 = vmatprep.subr.mxu0 0.0
        %3511 = vmatpush1.msra.mxu0 0.0
        %3512 = vmatprep.subr.mxu0 0.0
        %3513 = vmatpush1.msra.mxu0 0.0
        %3514 = vmatprep.subr.mxu0 0.0
        %3515 = vmatpush1.msra.mxu0 0.0
        %3516 = vmatprep.subr.mxu0 0.0
        %3517 = vmatpush1.msra.mxu0 0.0
        %3518 = vmatprep.subr.mxu0 0.0
        %3519 = vmatpush1.msra.mxu0 0.0
        %3520 = vmatprep.subr.mxu0 0.0
        %3521 = vmatpush1.msra.mxu0 0.0
        %3522 = vmatprep.subr.mxu0 0.0
        %3523 = vmatpush1.msra.mxu0 0.0
        %3524 = vmatprep.subr.mxu0 0.0
        %3525 = vmatpush1.msra.mxu0 0.0
        %3526 = vmatprep.subr.mxu0 0.0
        %3527 = vmatpush1.msra.mxu0 0.0
        %3528 = vmatprep.subr.mxu0 0.0
        %3529 = vmatpush1.msra.mxu0 0.0
        %3530 = vmatprep.subr.mxu0 0.0
        %3531 = vmatpush1.msra.mxu0 0.0
        %3532 = vmatprep.subr.mxu0 0.0
        %3533 = vmatpush1.msra.mxu0 0.0
        %3534 = vmatprep.subr.mxu0 0.0
        %3535 = vmatpush1.msra.mxu0 0.0
        %3536 = vmatprep.subr.mxu0 0.0
        %3537 = vmatpush1.msra.mxu0 0.0
        %3538 = vmatprep.subr.mxu0 0.0
        %3539 = vmatpush1.msra.mxu0 0.0
        %3540 = vmatprep.subr.mxu0 0.0
        %3541 = vmatpush1.msra.mxu0 0.0
        %3542 = vmatprep.subr.mxu0 0.0
        %3543 = vmatpush1.msra.mxu0 0.0
        %3544 = vmatprep.subr.mxu0 0.0
        %3545 = vmatpush1.msra.mxu0 0.0
        %3546 = vmatprep.subr.mxu0 0.0
        %3547 = vmatpush1.msra.mxu0 0.0
        %3548 = vmatprep.subr.mxu0 0.0
        %3549 = vmatpush1.msra.mxu0 0.0
        %3550 = vmatprep.subr.mxu0 0.0
        %3551 = vmatpush1.msra.mxu0 0.0
        %3552 = vmatprep.subr.mxu0 0.0
        %3553 = vmatpush1.msra.mxu0 0.0
        %3554 = vmatprep.mubr.f32.mxu0 0.0
        %3555 = vmatmul.mubr.f32.gmra.mrb[0].mxu0 %v3052
        %v3556 = vpop.f32.mrb[0].mxu0
        %v3557 = vadd.f32 %v3488, %v3556
        %v3558 = vpop.f32.mrb[0].mxu0
        %3559 = vdwg.mxu0
        %s3560 = scalar_lea.vmem %s998, 160
        %v3561 = vld [vmem:[%s3560] sm:$0xff]
        %v3562 = vld [vmem:[%s3560 + $0x8] sm:$0xff]
        %v3563 = vld [vmem:[%s3560 + $0x10] sm:$0xff]
        %v3564 = vld [vmem:[%s3560 + $0x18] sm:$0xff]
        %s3565 = scalar_lea.vmem %s1002, 5
        %v3566 = vld [vmem:[%s3565] sm:$0x1]
        %v3568 = vlaneseq
        %v3569 = vshrl.u32 %v3568, 7
        %v3570 = vsub.s32 0, %v3569
        %v3571 = vrot.slane %v3566, %v3570
        %3573 = vmatprep.subr.mxu0 0.0
        %3574 = vmatpush1.msra.mxu0 %v3561
        %3575 = vmatprep.subr.mxu0 0.0
        %3576 = vmatpush1.msra.mxu0 %v3562
        %3577 = vmatprep.subr.mxu0 0.0
        %3578 = vmatpush1.msra.mxu0 %v3563
        %3579 = vmatprep.subr.mxu0 0.0
        %3580 = vmatpush1.msra.mxu0 %v3564
        %3581 = vmatprep.subr.mxu0 0.0
        %3582 = vmatpush1.msra.mxu0 0.0
        %3583 = vmatprep.subr.mxu0 0.0
        %3584 = vmatpush1.msra.mxu0 0.0
        %3585 = vmatprep.subr.mxu0 0.0
        %3586 = vmatpush1.msra.mxu0 0.0
        %3587 = vmatprep.subr.mxu0 0.0
        %3588 = vmatpush1.msra.mxu0 0.0
        %3589 = vmatprep.subr.mxu0 0.0
        %3590 = vmatpush1.msra.mxu0 0.0
        %3591 = vmatprep.subr.mxu0 0.0
        %3592 = vmatpush1.msra.mxu0 0.0
        %3593 = vmatprep.subr.mxu0 0.0
        %3594 = vmatpush1.msra.mxu0 0.0
        %3595 = vmatprep.subr.mxu0 0.0
        %3596 = vmatpush1.msra.mxu0 0.0
        %3597 = vmatprep.subr.mxu0 0.0
        %3598 = vmatpush1.msra.mxu0 0.0
        %3599 = vmatprep.subr.mxu0 0.0
        %3600 = vmatpush1.msra.mxu0 0.0
        %3601 = vmatprep.subr.mxu0 0.0
        %3602 = vmatpush1.msra.mxu0 0.0
        %3603 = vmatprep.subr.mxu0 0.0
        %3604 = vmatpush1.msra.mxu0 0.0
        %3605 = vmatprep.subr.mxu0 0.0
        %3606 = vmatpush1.msra.mxu0 0.0
        %3607 = vmatprep.subr.mxu0 0.0
        %3608 = vmatpush1.msra.mxu0 0.0
        %3609 = vmatprep.subr.mxu0 0.0
        %3610 = vmatpush1.msra.mxu0 0.0
        %3611 = vmatprep.subr.mxu0 0.0
        %3612 = vmatpush1.msra.mxu0 0.0
        %3613 = vmatprep.subr.mxu0 0.0
        %3614 = vmatpush1.msra.mxu0 0.0
        %3615 = vmatprep.subr.mxu0 0.0
        %3616 = vmatpush1.msra.mxu0 0.0
        %3617 = vmatprep.subr.mxu0 0.0
        %3618 = vmatpush1.msra.mxu0 0.0
        %3619 = vmatprep.subr.mxu0 0.0
        %3620 = vmatpush1.msra.mxu0 0.0
        %3621 = vmatprep.subr.mxu0 0.0
        %3622 = vmatpush1.msra.mxu0 0.0
        %3623 = vmatprep.subr.mxu0 0.0
        %3624 = vmatpush1.msra.mxu0 0.0
        %3625 = vmatprep.subr.mxu0 0.0
        %3626 = vmatpush1.msra.mxu0 0.0
        %3627 = vmatprep.subr.mxu0 0.0
        %3628 = vmatpush1.msra.mxu0 0.0
        %3629 = vmatprep.subr.mxu0 0.0
        %3630 = vmatpush1.msra.mxu0 0.0
        %3631 = vmatprep.subr.mxu0 0.0
        %3632 = vmatpush1.msra.mxu0 0.0
        %3633 = vmatprep.subr.mxu0 0.0
        %3634 = vmatpush1.msra.mxu0 0.0
        %3635 = vmatprep.subr.mxu0 0.0
        %3636 = vmatpush1.msra.mxu0 0.0
        %3637 = vmatprep.mubr.f32.mxu0 0.0
        %3638 = vmatmul.mubr.f32.gmra.mrb[0].mxu0 %v3138
        %v3639 = vpop.f32.mrb[0].mxu0
        %v3640 = vadd.f32 %v3571, %v3639
        %v3641 = vpop.f32.mrb[0].mxu0
        %3642 = vmatprep.mubr.f32.mxu0 0.0
        %3643 = vmatmul.mubr.f32.gmra.mrb[0].mxu0 %v3141
        %v3644 = vpop.f32.mrb[0].mxu0
        %v3645 = vadd.f32 %v3571, %v3644
        %v3646 = vpop.f32.mrb[0].mxu0
        %3647 = vdwg.mxu0
        %s3648 = scalar_lea.vmem %s998, 288
        %v3649 = vld [vmem:[%s3648] sm:$0xff]
        %v3650 = vld [vmem:[%s3648 + $0x8] sm:$0xff]
        %v3651 = vld [vmem:[%s3648 + $0x10] sm:$0xff]
        %v3652 = vld [vmem:[%s3648 + $0x18] sm:$0xff]
        %s3653 = scalar_lea.vmem %s1002, 9
        %v3654 = vld [vmem:[%s3653] sm:$0x1]
        %v3656 = vlaneseq
        %v3657 = vshrl.u32 %v3656, 7
        %v3658 = vsub.s32 0, %v3657
        %v3659 = vrot.slane %v3654, %v3658
        %3661 = vmatprep.subr.mxu0 0.0
        %3662 = vmatpush1.msra.mxu0 %v3649
        %3663 = vmatprep.subr.mxu0 0.0
        %3664 = vmatpush1.msra.mxu0 %v3650
        %3665 = vmatprep.subr.mxu0 0.0
        %3666 = vmatpush1.msra.mxu0 %v3651
        %3667 = vmatprep.subr.mxu0 0.0
        %3668 = vmatpush1.msra.mxu0 %v3652
        %3669 = vmatprep.subr.mxu0 0.0
        %3670 = vmatpush1.msra.mxu0 0.0
        %3671 = vmatprep.subr.mxu0 0.0
        %3672 = vmatpush1.msra.mxu0 0.0
        %3673 = vmatprep.subr.mxu0 0.0
        %3674 = vmatpush1.msra.mxu0 0.0
        %3675 = vmatprep.subr.mxu0 0.0
        %3676 = vmatpush1.msra.mxu0 0.0
        %3677 = vmatprep.subr.mxu0 0.0
        %3678 = vmatpush1.msra.mxu0 0.0
        %3679 = vmatprep.subr.mxu0 0.0
        %3680 = vmatpush1.msra.mxu0 0.0
        %3681 = vmatprep.subr.mxu0 0.0
        %3682 = vmatpush1.msra.mxu0 0.0
        %3683 = vmatprep.subr.mxu0 0.0
        %3684 = vmatpush1.msra.mxu0 0.0
        %3685 = vmatprep.subr.mxu0 0.0
        %3686 = vmatpush1.msra.mxu0 0.0
        %3687 = vmatprep.subr.mxu0 0.0
        %3688 = vmatpush1.msra.mxu0 0.0
        %3689 = vmatprep.subr.mxu0 0.0
        %3690 = vmatpush1.msra.mxu0 0.0
        %3691 = vmatprep.subr.mxu0 0.0
        %3692 = vmatpush1.msra.mxu0 0.0
        %3693 = vmatprep.subr.mxu0 0.0
        %3694 = vmatpush1.msra.mxu0 0.0
        %3695 = vmatprep.subr.mxu0 0.0
        %3696 = vmatpush1.msra.mxu0 0.0
        %3697 = vmatprep.subr.mxu0 0.0
        %3698 = vmatpush1.msra.mxu0 0.0
        %3699 = vmatprep.subr.mxu0 0.0
        %3700 = vmatpush1.msra.mxu0 0.0
        %3701 = vmatprep.subr.mxu0 0.0
        %3702 = vmatpush1.msra.mxu0 0.0
        %3703 = vmatprep.subr.mxu0 0.0
        %3704 = vmatpush1.msra.mxu0 0.0
        %3705 = vmatprep.subr.mxu0 0.0
        %3706 = vmatpush1.msra.mxu0 0.0
        %3707 = vmatprep.subr.mxu0 0.0
        %3708 = vmatpush1.msra.mxu0 0.0
        %3709 = vmatprep.subr.mxu0 0.0
        %3710 = vmatpush1.msra.mxu0 0.0
        %3711 = vmatprep.subr.mxu0 0.0
        %3712 = vmatpush1.msra.mxu0 0.0
        %3713 = vmatprep.subr.mxu0 0.0
        %3714 = vmatpush1.msra.mxu0 0.0
        %3715 = vmatprep.subr.mxu0 0.0
        %3716 = vmatpush1.msra.mxu0 0.0
        %3717 = vmatprep.subr.mxu0 0.0
        %3718 = vmatpush1.msra.mxu0 0.0
        %3719 = vmatprep.subr.mxu0 0.0
        %3720 = vmatpush1.msra.mxu0 0.0
        %3721 = vmatprep.subr.mxu0 0.0
        %3722 = vmatpush1.msra.mxu0 0.0
        %3723 = vmatprep.subr.mxu0 0.0
        %3724 = vmatpush1.msra.mxu0 0.0
        %3725 = vmatprep.mubr.f32.mxu0 0.0
        %3726 = vmatmul.mubr.f32.gmra.mrb[0].mxu0 %v3138
        %v3727 = vpop.f32.mrb[0].mxu0
        %v3728 = vadd.f32 %v3659, %v3727
        %v3729 = vpop.f32.mrb[0].mxu0
        %3730 = vmatprep.mubr.f32.mxu0 0.0
        %3731 = vmatmul.mubr.f32.gmra.mrb[0].mxu0 %v3141
        %v3732 = vpop.f32.mrb[0].mxu0
        %v3733 = vadd.f32 %v3659, %v3732
        %v3734 = vpop.f32.mrb[0].mxu0
        %3735 = vdwg.mxu0
        %v3737 = vsel %vm1302, %v3557, 0
        %v3740 = vsel %vm1302, %v3640, 0
        %v3743 = vsel %vm1302, %v3645, 0
        %3745 = vmatprep.subr.mxu0 0.0
        %3746 = vmatpush1.xpose.msra.mxu0 %v3740
        %3747 = vmatprep.subr.mxu0 0.0
        %3748 = vmatpush1.xpose.msra.mxu0 %v3743
        %3749 = vmatprep.subr.mxu0 0.0
        %3750 = vmatpush1.xpose.msra.mxu0 0.0
        %3751 = vmatprep.subr.mxu0 0.0
        %3752 = vmatpush1.xpose.msra.mxu0 0.0
        %3753 = vmatprep.subr.mxu0 0.0
        %3754 = vmatpush1.xpose.msra.mxu0 0.0
        %3755 = vmatprep.subr.mxu0 0.0
        %3756 = vmatpush1.xpose.msra.mxu0 0.0
        %3757 = vmatprep.subr.mxu0 0.0
        %3758 = vmatpush1.xpose.msra.mxu0 0.0
        %3759 = vmatprep.subr.mxu0 0.0
        %3760 = vmatpush1.xpose.msra.mxu0 0.0
        %3761 = vmatprep.subr.mxu0 0.0
        %3762 = vmatpush1.xpose.msra.mxu0 0.0
        %3763 = vmatprep.subr.mxu0 0.0
        %3764 = vmatpush1.xpose.msra.mxu0 0.0
        %3765 = vmatprep.subr.mxu0 0.0
        %3766 = vmatpush1.xpose.msra.mxu0 0.0
        %3767 = vmatprep.subr.mxu0 0.0
        %3768 = vmatpush1.xpose.msra.mxu0 0.0
        %3769 = vmatprep.subr.mxu0 0.0
        %3770 = vmatpush1.xpose.msra.mxu0 0.0
        %3771 = vmatprep.subr.mxu0 0.0
        %3772 = vmatpush1.xpose.msra.mxu0 0.0
        %3773 = vmatprep.subr.mxu0 0.0
        %3774 = vmatpush1.xpose.msra.mxu0 0.0
        %3775 = vmatprep.subr.mxu0 0.0
        %3776 = vmatpush1.xpose.msra.mxu0 0.0
        %3777 = vmatprep.subr.mxu0 0.0
        %3778 = vmatpush1.xpose.msra.mxu0 0.0
        %3779 = vmatprep.subr.mxu0 0.0
        %3780 = vmatpush1.xpose.msra.mxu0 0.0
        %3781 = vmatprep.subr.mxu0 0.0
        %3782 = vmatpush1.xpose.msra.mxu0 0.0
        %3783 = vmatprep.subr.mxu0 0.0
        %3784 = vmatpush1.xpose.msra.mxu0 0.0
        %3785 = vmatprep.subr.mxu0 0.0
        %3786 = vmatpush1.xpose.msra.mxu0 0.0
        %3787 = vmatprep.subr.mxu0 0.0
        %3788 = vmatpush1.xpose.msra.mxu0 0.0
        %3789 = vmatprep.subr.mxu0 0.0
        %3790 = vmatpush1.xpose.msra.mxu0 0.0
        %3791 = vmatprep.subr.mxu0 0.0
        %3792 = vmatpush1.xpose.msra.mxu0 0.0
        %3793 = vmatprep.subr.mxu0 0.0
        %3794 = vmatpush1.xpose.msra.mxu0 0.0
        %3795 = vmatprep.subr.mxu0 0.0
        %3796 = vmatpush1.xpose.msra.mxu0 0.0
        %3797 = vmatprep.subr.mxu0 0.0
        %3798 = vmatpush1.xpose.msra.mxu0 0.0
        %3799 = vmatprep.subr.mxu0 0.0
        %3800 = vmatpush1.xpose.msra.mxu0 0.0
        %3801 = vmatprep.subr.mxu0 0.0
        %3802 = vmatpush1.xpose.msra.mxu0 0.0
        %3803 = vmatprep.subr.mxu0 0.0
        %3804 = vmatpush1.xpose.msra.mxu0 0.0
        %3805 = vmatprep.subr.mxu0 0.0
        %3806 = vmatpush1.xpose.msra.mxu0 0.0
        %3807 = vmatprep.subr.mxu0 0.0
        %3808 = vmatpush1.xpose.msra.mxu0 0.0
        %3809 = vmatprep.mubr.f32.mxu0 0.0
        %3810 = vmatmul.mubr.f32.gmra.mrb[0].mxu0 %v3737
        %v3811 = vpop.f32.mrb[0].mxu0
        %v3812 = vadd.f32 0.0, %v3811
        %v3813 = vpop.f32.mrb[0].mxu0
        %3814 = vdwg.mxu0
        %v3815 = vmul.f32 %v3812, 0.35355338
        %v3816 = vsel %vm3039, -1e+09, %v3815
        %v3817 = vsel %vm3387, %v3816, -inf
        %3818 = vmax.xlane.f32.xlu0 %v3817
        %v3819 = vpop.xlane.xlu0 %3818
        %v3820 = vsub.f32 %v3816, %v3819
        %v3821 = vmul.f32 %v3820, 1.442695
        %v3822 = vpow.pop %v3821
        %v3823 = vsel %vm3387, %v3822, 0.0
        %3824 = vadd.xlane.f32.xlu0 %v3823
        %v3825 = vpop.xlane.xlu0 %3824
        %v3826 = vrcp.pop %v3825
        %v3827 = vmul.f32 %v3822, %v3826
        %v3829 = vsel %vm3387, %v3827, 0
        %v3832 = vsel %vm3402, %v3733, 0
        %3834 = vmatprep.subr.mxu0 0.0
        %3835 = vmatpush1.msra.mxu0 %v3728
        %3836 = vmatprep.subr.mxu0 0.0
        %3837 = vmatpush1.msra.mxu0 %v3832
        %3838 = vmatprep.subr.mxu0 0.0
        %3839 = vmatpush1.msra.mxu0 0.0
        %3840 = vmatprep.subr.mxu0 0.0
        %3841 = vmatpush1.msra.mxu0 0.0
        %3842 = vmatprep.subr.mxu0 0.0
        %3843 = vmatpush1.msra.mxu0 0.0
        %3844 = vmatprep.subr.mxu0 0.0
        %3845 = vmatpush1.msra.mxu0 0.0
        %3846 = vmatprep.subr.mxu0 0.0
        %3847 = vmatpush1.msra.mxu0 0.0
        %3848 = vmatprep.subr.mxu0 0.0
        %3849 = vmatpush1.msra.mxu0 0.0
        %3850 = vmatprep.subr.mxu0 0.0
        %3851 = vmatpush1.msra.mxu0 0.0
        %3852 = vmatprep.subr.mxu0 0.0
        %3853 = vmatpush1.msra.mxu0 0.0
        %3854 = vmatprep.subr.mxu0 0.0
        %3855 = vmatpush1.msra.mxu0 0.0
        %3856 = vmatprep.subr.mxu0 0.0
        %3857 = vmatpush1.msra.mxu0 0.0
        %3858 = vmatprep.subr.mxu0 0.0
        %3859 = vmatpush1.msra.mxu0 0.0
        %3860 = vmatprep.subr.mxu0 0.0
        %3861 = vmatpush1.msra.mxu0 0.0
        %3862 = vmatprep.subr.mxu0 0.0
        %3863 = vmatpush1.msra.mxu0 0.0
        %3864 = vmatprep.subr.mxu0 0.0
        %3865 = vmatpush1.msra.mxu0 0.0
        %3866 = vmatprep.subr.mxu0 0.0
        %3867 = vmatpush1.msra.mxu0 0.0
        %3868 = vmatprep.subr.mxu0 0.0
        %3869 = vmatpush1.msra.mxu0 0.0
        %3870 = vmatprep.subr.mxu0 0.0
        %3871 = vmatpush1.msra.mxu0 0.0
        %3872 = vmatprep.subr.mxu0 0.0
        %3873 = vmatpush1.msra.mxu0 0.0
        %3874 = vmatprep.subr.mxu0 0.0
        %3875 = vmatpush1.msra.mxu0 0.0
        %3876 = vmatprep.subr.mxu0 0.0
        %3877 = vmatpush1.msra.mxu0 0.0
        %3878 = vmatprep.subr.mxu0 0.0
        %3879 = vmatpush1.msra.mxu0 0.0
        %3880 = vmatprep.subr.mxu0 0.0
        %3881 = vmatpush1.msra.mxu0 0.0
        %3882 = vmatprep.subr.mxu0 0.0
        %3883 = vmatpush1.msra.mxu0 0.0
        %3884 = vmatprep.subr.mxu0 0.0
        %3885 = vmatpush1.msra.mxu0 0.0
        %3886 = vmatprep.subr.mxu0 0.0
        %3887 = vmatpush1.msra.mxu0 0.0
        %3888 = vmatprep.subr.mxu0 0.0
        %3889 = vmatpush1.msra.mxu0 0.0
        %3890 = vmatprep.subr.mxu0 0.0
        %3891 = vmatpush1.msra.mxu0 0.0
        %3892 = vmatprep.subr.mxu0 0.0
        %3893 = vmatpush1.msra.mxu0 0.0
        %3894 = vmatprep.subr.mxu0 0.0
        %3895 = vmatpush1.msra.mxu0 0.0
        %3896 = vmatprep.subr.mxu0 0.0
        %3897 = vmatpush1.msra.mxu0 0.0
        %3898 = vmatprep.mubr.f32.mxu0 0.0
        %3899 = vmatmul.mubr.f32.gmra.mrb[0].mxu0 %v3829
        %v3900 = vpop.f32.mrb[0].mxu0
        %v3901 = vadd.f32 0.0, %v3900
        %v3902 = vpop.f32.mrb[0].mxu0
        %3903 = vdwg.mxu0
        %s3904 = scalar_lea.vmem %s1007, 8
        %v3905 = vld [vmem:[%s3904] sm:$0xff]
        %v3907 = vsel %vm1302, %v3901, 0
        %3909 = vmatprep.subr.mxu0 0.0
        %3910 = vmatpush1.msra.mxu0 %v3905
        %3911 = vmatprep.subr.mxu0 0.0
        %3912 = vmatpush1.msra.mxu0 0.0
        %3913 = vmatprep.subr.mxu0 0.0
        %3914 = vmatpush1.msra.mxu0 0.0
        %3915 = vmatprep.subr.mxu0 0.0
        %3916 = vmatpush1.msra.mxu0 0.0
        %3917 = vmatprep.subr.mxu0 0.0
        %3918 = vmatpush1.msra.mxu0 0.0
        %3919 = vmatprep.subr.mxu0 0.0
        %3920 = vmatpush1.msra.mxu0 0.0
        %3921 = vmatprep.subr.mxu0 0.0
        %3922 = vmatpush1.msra.mxu0 0.0
        %3923 = vmatprep.subr.mxu0 0.0
        %3924 = vmatpush1.msra.mxu0 0.0
        %3925 = vmatprep.subr.mxu0 0.0
        %3926 = vmatpush1.msra.mxu0 0.0
        %3927 = vmatprep.subr.mxu0 0.0
        %3928 = vmatpush1.msra.mxu0 0.0
        %3929 = vmatprep.subr.mxu0 0.0
        %3930 = vmatpush1.msra.mxu0 0.0
        %3931 = vmatprep.subr.mxu0 0.0
        %3932 = vmatpush1.msra.mxu0 0.0
        %3933 = vmatprep.subr.mxu0 0.0
        %3934 = vmatpush1.msra.mxu0 0.0
        %3935 = vmatprep.subr.mxu0 0.0
        %3936 = vmatpush1.msra.mxu0 0.0
        %3937 = vmatprep.subr.mxu0 0.0
        %3938 = vmatpush1.msra.mxu0 0.0
        %3939 = vmatprep.subr.mxu0 0.0
        %3940 = vmatpush1.msra.mxu0 0.0
        %3941 = vmatprep.subr.mxu0 0.0
        %3942 = vmatpush1.msra.mxu0 0.0
        %3943 = vmatprep.subr.mxu0 0.0
        %3944 = vmatpush1.msra.mxu0 0.0
        %3945 = vmatprep.subr.mxu0 0.0
        %3946 = vmatpush1.msra.mxu0 0.0
        %3947 = vmatprep.subr.mxu0 0.0
        %3948 = vmatpush1.msra.mxu0 0.0
        %3949 = vmatprep.subr.mxu0 0.0
        %3950 = vmatpush1.msra.mxu0 0.0
        %3951 = vmatprep.subr.mxu0 0.0
        %3952 = vmatpush1.msra.mxu0 0.0
        %3953 = vmatprep.subr.mxu0 0.0
        %3954 = vmatpush1.msra.mxu0 0.0
        %3955 = vmatprep.subr.mxu0 0.0
        %3956 = vmatpush1.msra.mxu0 0.0
        %3957 = vmatprep.subr.mxu0 0.0
        %3958 = vmatpush1.msra.mxu0 0.0
        %3959 = vmatprep.subr.mxu0 0.0
        %3960 = vmatpush1.msra.mxu0 0.0
        %3961 = vmatprep.subr.mxu0 0.0
        %3962 = vmatpush1.msra.mxu0 0.0
        %3963 = vmatprep.subr.mxu0 0.0
        %3964 = vmatpush1.msra.mxu0 0.0
        %3965 = vmatprep.subr.mxu0 0.0
        %3966 = vmatpush1.msra.mxu0 0.0
        %3967 = vmatprep.subr.mxu0 0.0
        %3968 = vmatpush1.msra.mxu0 0.0
        %3969 = vmatprep.subr.mxu0 0.0
        %3970 = vmatpush1.msra.mxu0 0.0
        %3971 = vmatprep.subr.mxu0 0.0
        %3972 = vmatpush1.msra.mxu0 0.0
        %3973 = vmatprep.mubr.f32.mxu0 0.0
        %3974 = vmatmul.mubr.f32.gmra.mrb[0].mxu0 %v3907
        %v3975 = vpop.f32.mrb[0].mxu0
        %v3976 = vadd.f32 0.0, %v3975
        %v3977 = vpop.f32.mrb[0].mxu0
        %3978 = vdwg.mxu0
        %v3980 = vsel %vm1302, %v3473, 0
        %3982 = vmatprep.subr.mxu0 0.0
        %3983 = vmatpush1.msra.mxu0 %v3476
        %3984 = vmatprep.subr.mxu0 0.0
        %3985 = vmatpush1.msra.mxu0 0.0
        %3986 = vmatprep.subr.mxu0 0.0
        %3987 = vmatpush1.msra.mxu0 0.0
        %3988 = vmatprep.subr.mxu0 0.0
        %3989 = vmatpush1.msra.mxu0 0.0
        %3990 = vmatprep.subr.mxu0 0.0
        %3991 = vmatpush1.msra.mxu0 0.0
        %3992 = vmatprep.subr.mxu0 0.0
        %3993 = vmatpush1.msra.mxu0 0.0
        %3994 = vmatprep.subr.mxu0 0.0
        %3995 = vmatpush1.msra.mxu0 0.0
        %3996 = vmatprep.subr.mxu0 0.0
        %3997 = vmatpush1.msra.mxu0 0.0
        %3998 = vmatprep.subr.mxu0 0.0
        %3999 = vmatpush1.msra.mxu0 0.0
        %4000 = vmatprep.subr.mxu0 0.0
        %4001 = vmatpush1.msra.mxu0 0.0
        %4002 = vmatprep.subr.mxu0 0.0
        %4003 = vmatpush1.msra.mxu0 0.0
        %4004 = vmatprep.subr.mxu0 0.0
        %4005 = vmatpush1.msra.mxu0 0.0
        %4006 = vmatprep.subr.mxu0 0.0
        %4007 = vmatpush1.msra.mxu0 0.0
        %4008 = vmatprep.subr.mxu0 0.0
        %4009 = vmatpush1.msra.mxu0 0.0
        %4010 = vmatprep.subr.mxu0 0.0
        %4011 = vmatpush1.msra.mxu0 0.0
        %4012 = vmatprep.subr.mxu0 0.0
        %4013 = vmatpush1.msra.mxu0 0.0
        %4014 = vmatprep.subr.mxu0 0.0
        %4015 = vmatpush1.msra.mxu0 0.0
        %4016 = vmatprep.subr.mxu0 0.0
        %4017 = vmatpush1.msra.mxu0 0.0
        %4018 = vmatprep.subr.mxu0 0.0
        %4019 = vmatpush1.msra.mxu0 0.0
        %4020 = vmatprep.subr.mxu0 0.0
        %4021 = vmatpush1.msra.mxu0 0.0
        %4022 = vmatprep.subr.mxu0 0.0
        %4023 = vmatpush1.msra.mxu0 0.0
        %4024 = vmatprep.subr.mxu0 0.0
        %4025 = vmatpush1.msra.mxu0 0.0
        %4026 = vmatprep.subr.mxu0 0.0
        %4027 = vmatpush1.msra.mxu0 0.0
        %4028 = vmatprep.subr.mxu0 0.0
        %4029 = vmatpush1.msra.mxu0 0.0
        %4030 = vmatprep.subr.mxu0 0.0
        %4031 = vmatpush1.msra.mxu0 0.0
        %4032 = vmatprep.subr.mxu0 0.0
        %4033 = vmatpush1.msra.mxu0 0.0
        %4034 = vmatprep.subr.mxu0 0.0
        %4035 = vmatpush1.msra.mxu0 0.0
        %4036 = vmatprep.subr.mxu0 0.0
        %4037 = vmatpush1.msra.mxu0 0.0
        %4038 = vmatprep.subr.mxu0 0.0
        %4039 = vmatpush1.msra.mxu0 0.0
        %4040 = vmatprep.subr.mxu0 0.0
        %4041 = vmatpush1.msra.mxu0 0.0
        %4042 = vmatprep.subr.mxu0 0.0
        %4043 = vmatpush1.msra.mxu0 0.0
        %4044 = vmatprep.subr.mxu0 0.0
        %4045 = vmatpush1.msra.mxu0 0.0
        %4046 = vmatprep.mubr.f32.mxu0 0.0
        %4047 = vmatmul.mubr.f32.gmra.mrb[0].mxu0 %v3980
        %v4048 = vpop.f32.mrb[0].mxu0
        %v4049 = vadd.f32 %v3976, %v4048
        %v4050 = vpop.f32.mrb[0].mxu0
        %4051 = vdwg.mxu0
        %s4052 = scalar_lea.vmem %s998, 64
        %v4053 = vld [vmem:[%s4052] sm:$0xff]
        %v4054 = vld [vmem:[%s4052 + $0x8] sm:$0xff]
        %v4055 = vld [vmem:[%s4052 + $0x10] sm:$0xff]
        %v4056 = vld [vmem:[%s4052 + $0x18] sm:$0xff]
        %s4057 = scalar_lea.vmem %s1002, 2
        %v4058 = vld [vmem:[%s4057] sm:$0x1]
        %v4060 = vlaneseq
        %v4061 = vshrl.u32 %v4060, 7
        %v4062 = vsub.s32 0, %v4061
        %v4063 = vrot.slane %v4058, %v4062
        %4065 = vmatprep.subr.mxu0 0.0
        %4066 = vmatpush1.msra.mxu0 %v4053
        %4067 = vmatprep.subr.mxu0 0.0
        %4068 = vmatpush1.msra.mxu0 %v4054
        %4069 = vmatprep.subr.mxu0 0.0
        %4070 = vmatpush1.msra.mxu0 %v4055
        %4071 = vmatprep.subr.mxu0 0.0
        %4072 = vmatpush1.msra.mxu0 %v4056
        %4073 = vmatprep.subr.mxu0 0.0
        %4074 = vmatpush1.msra.mxu0 0.0
        %4075 = vmatprep.subr.mxu0 0.0
        %4076 = vmatpush1.msra.mxu0 0.0
        %4077 = vmatprep.subr.mxu0 0.0
        %4078 = vmatpush1.msra.mxu0 0.0
        %4079 = vmatprep.subr.mxu0 0.0
        %4080 = vmatpush1.msra.mxu0 0.0
        %4081 = vmatprep.subr.mxu0 0.0
        %4082 = vmatpush1.msra.mxu0 0.0
        %4083 = vmatprep.subr.mxu0 0.0
        %4084 = vmatpush1.msra.mxu0 0.0
        %4085 = vmatprep.subr.mxu0 0.0
        %4086 = vmatpush1.msra.mxu0 0.0
        %4087 = vmatprep.subr.mxu0 0.0
        %4088 = vmatpush1.msra.mxu0 0.0
        %4089 = vmatprep.subr.mxu0 0.0
        %4090 = vmatpush1.msra.mxu0 0.0
        %4091 = vmatprep.subr.mxu0 0.0
        %4092 = vmatpush1.msra.mxu0 0.0
        %4093 = vmatprep.subr.mxu0 0.0
        %4094 = vmatpush1.msra.mxu0 0.0
        %4095 = vmatprep.subr.mxu0 0.0
        %4096 = vmatpush1.msra.mxu0 0.0
        %4097 = vmatprep.subr.mxu0 0.0
        %4098 = vmatpush1.msra.mxu0 0.0
        %4099 = vmatprep.subr.mxu0 0.0
        %4100 = vmatpush1.msra.mxu0 0.0
        %4101 = vmatprep.subr.mxu0 0.0
        %4102 = vmatpush1.msra.mxu0 0.0
        %4103 = vmatprep.subr.mxu0 0.0
        %4104 = vmatpush1.msra.mxu0 0.0
        %4105 = vmatprep.subr.mxu0 0.0
        %4106 = vmatpush1.msra.mxu0 0.0
        %4107 = vmatprep.subr.mxu0 0.0
        %4108 = vmatpush1.msra.mxu0 0.0
        %4109 = vmatprep.subr.mxu0 0.0
        %4110 = vmatpush1.msra.mxu0 0.0
        %4111 = vmatprep.subr.mxu0 0.0
        %4112 = vmatpush1.msra.mxu0 0.0
        %4113 = vmatprep.subr.mxu0 0.0
        %4114 = vmatpush1.msra.mxu0 0.0
        %4115 = vmatprep.subr.mxu0 0.0
        %4116 = vmatpush1.msra.mxu0 0.0
        %4117 = vmatprep.subr.mxu0 0.0
        %4118 = vmatpush1.msra.mxu0 0.0
        %4119 = vmatprep.subr.mxu0 0.0
        %4120 = vmatpush1.msra.mxu0 0.0
        %4121 = vmatprep.subr.mxu0 0.0
        %4122 = vmatpush1.msra.mxu0 0.0
        %4123 = vmatprep.subr.mxu0 0.0
        %4124 = vmatpush1.msra.mxu0 0.0
        %4125 = vmatprep.subr.mxu0 0.0
        %4126 = vmatpush1.msra.mxu0 0.0
        %4127 = vmatprep.subr.mxu0 0.0
        %4128 = vmatpush1.msra.mxu0 0.0
        %4129 = vmatprep.mubr.f32.mxu0 0.0
        %4130 = vmatmul.mubr.f32.gmra.mrb[0].mxu0 %v3052
        %v4131 = vpop.f32.mrb[0].mxu0
        %v4132 = vadd.f32 %v4063, %v4131
        %v4133 = vpop.f32.mrb[0].mxu0
        %4134 = vdwg.mxu0
        %s4135 = scalar_lea.vmem %s998, 192
        %v4136 = vld [vmem:[%s4135] sm:$0xff]
        %v4137 = vld [vmem:[%s4135 + $0x8] sm:$0xff]
        %v4138 = vld [vmem:[%s4135 + $0x10] sm:$0xff]
        %v4139 = vld [vmem:[%s4135 + $0x18] sm:$0xff]
        %s4140 = scalar_lea.vmem %s1002, 6
        %v4141 = vld [vmem:[%s4140] sm:$0x1]
        %v4143 = vlaneseq
        %v4144 = vshrl.u32 %v4143, 7
        %v4145 = vsub.s32 0, %v4144
        %v4146 = vrot.slane %v4141, %v4145
        %4148 = vmatprep.subr.mxu0 0.0
        %4149 = vmatpush1.msra.mxu0 %v4136
        %4150 = vmatprep.subr.mxu0 0.0
        %4151 = vmatpush1.msra.mxu0 %v4137
        %4152 = vmatprep.subr.mxu0 0.0
        %4153 = vmatpush1.msra.mxu0 %v4138
        %4154 = vmatprep.subr.mxu0 0.0
        %4155 = vmatpush1.msra.mxu0 %v4139
        %4156 = vmatprep.subr.mxu0 0.0
        %4157 = vmatpush1.msra.mxu0 0.0
        %4158 = vmatprep.subr.mxu0 0.0
        %4159 = vmatpush1.msra.mxu0 0.0
        %4160 = vmatprep.subr.mxu0 0.0
        %4161 = vmatpush1.msra.mxu0 0.0
        %4162 = vmatprep.subr.mxu0 0.0
        %4163 = vmatpush1.msra.mxu0 0.0
        %4164 = vmatprep.subr.mxu0 0.0
        %4165 = vmatpush1.msra.mxu0 0.0
        %4166 = vmatprep.subr.mxu0 0.0
        %4167 = vmatpush1.msra.mxu0 0.0
        %4168 = vmatprep.subr.mxu0 0.0
        %4169 = vmatpush1.msra.mxu0 0.0
        %4170 = vmatprep.subr.mxu0 0.0
        %4171 = vmatpush1.msra.mxu0 0.0
        %4172 = vmatprep.subr.mxu0 0.0
        %4173 = vmatpush1.msra.mxu0 0.0
        %4174 = vmatprep.subr.mxu0 0.0
        %4175 = vmatpush1.msra.mxu0 0.0
        %4176 = vmatprep.subr.mxu0 0.0
        %4177 = vmatpush1.msra.mxu0 0.0
        %4178 = vmatprep.subr.mxu0 0.0
        %4179 = vmatpush1.msra.mxu0 0.0
        %4180 = vmatprep.subr.mxu0 0.0
        %4181 = vmatpush1.msra.mxu0 0.0
        %4182 = vmatprep.subr.mxu0 0.0
        %4183 = vmatpush1.msra.mxu0 0.0
        %4184 = vmatprep.subr.mxu0 0.0
        %4185 = vmatpush1.msra.mxu0 0.0
        %4186 = vmatprep.subr.mxu0 0.0
        %4187 = vmatpush1.msra.mxu0 0.0
        %4188 = vmatprep.subr.mxu0 0.0
        %4189 = vmatpush1.msra.mxu0 0.0
        %4190 = vmatprep.subr.mxu0 0.0
        %4191 = vmatpush1.msra.mxu0 0.0
        %4192 = vmatprep.subr.mxu0 0.0
        %4193 = vmatpush1.msra.mxu0 0.0
        %4194 = vmatprep.subr.mxu0 0.0
        %4195 = vmatpush1.msra.mxu0 0.0
        %4196 = vmatprep.subr.mxu0 0.0
        %4197 = vmatpush1.msra.mxu0 0.0
        %4198 = vmatprep.subr.mxu0 0.0
        %4199 = vmatpush1.msra.mxu0 0.0
        %4200 = vmatprep.subr.mxu0 0.0
        %4201 = vmatpush1.msra.mxu0 0.0
        %4202 = vmatprep.subr.mxu0 0.0
        %4203 = vmatpush1.msra.mxu0 0.0
        %4204 = vmatprep.subr.mxu0 0.0
        %4205 = vmatpush1.msra.mxu0 0.0
        %4206 = vmatprep.subr.mxu0 0.0
        %4207 = vmatpush1.msra.mxu0 0.0
        %4208 = vmatprep.subr.mxu0 0.0
        %4209 = vmatpush1.msra.mxu0 0.0
        %4210 = vmatprep.subr.mxu0 0.0
        %4211 = vmatpush1.msra.mxu0 0.0
        %4212 = vmatprep.mubr.f32.mxu0 0.0
        %4213 = vmatmul.mubr.f32.gmra.mrb[0].mxu0 %v3138
        %v4214 = vpop.f32.mrb[0].mxu0
        %v4215 = vadd.f32 %v4146, %v4214
        %v4216 = vpop.f32.mrb[0].mxu0
        %4217 = vmatprep.mubr.f32.mxu0 0.0
        %4218 = vmatmul.mubr.f32.gmra.mrb[0].mxu0 %v3141
        %v4219 = vpop.f32.mrb[0].mxu0
        %v4220 = vadd.f32 %v4146, %v4219
        %v4221 = vpop.f32.mrb[0].mxu0
        %4222 = vdwg.mxu0
        %s4223 = scalar_lea.vmem %s998, 320
        %v4224 = vld [vmem:[%s4223] sm:$0xff]
        %v4225 = vld [vmem:[%s4223 + $0x8] sm:$0xff]
        %v4226 = vld [vmem:[%s4223 + $0x10] sm:$0xff]
        %v4227 = vld [vmem:[%s4223 + $0x18] sm:$0xff]
        %s4228 = scalar_lea.vmem %s1002, 10
        %v4229 = vld [vmem:[%s4228] sm:$0x1]
        %v4231 = vlaneseq
        %v4232 = vshrl.u32 %v4231, 7
        %v4233 = vsub.s32 0, %v4232
        %v4234 = vrot.slane %v4229, %v4233
        %4236 = vmatprep.subr.mxu0 0.0
        %4237 = vmatpush1.msra.mxu0 %v4224
        %4238 = vmatprep.subr.mxu0 0.0
        %4239 = vmatpush1.msra.mxu0 %v4225
        %4240 = vmatprep.subr.mxu0 0.0
        %4241 = vmatpush1.msra.mxu0 %v4226
        %4242 = vmatprep.subr.mxu0 0.0
        %4243 = vmatpush1.msra.mxu0 %v4227
        %4244 = vmatprep.subr.mxu0 0.0
        %4245 = vmatpush1.msra.mxu0 0.0
        %4246 = vmatprep.subr.mxu0 0.0
        %4247 = vmatpush1.msra.mxu0 0.0
        %4248 = vmatprep.subr.mxu0 0.0
        %4249 = vmatpush1.msra.mxu0 0.0
        %4250 = vmatprep.subr.mxu0 0.0
        %4251 = vmatpush1.msra.mxu0 0.0
        %4252 = vmatprep.subr.mxu0 0.0
        %4253 = vmatpush1.msra.mxu0 0.0
        %4254 = vmatprep.subr.mxu0 0.0
        %4255 = vmatpush1.msra.mxu0 0.0
        %4256 = vmatprep.subr.mxu0 0.0
        %4257 = vmatpush1.msra.mxu0 0.0
        %4258 = vmatprep.subr.mxu0 0.0
        %4259 = vmatpush1.msra.mxu0 0.0
        %4260 = vmatprep.subr.mxu0 0.0
        %4261 = vmatpush1.msra.mxu0 0.0
        %4262 = vmatprep.subr.mxu0 0.0
        %4263 = vmatpush1.msra.mxu0 0.0
        %4264 = vmatprep.subr.mxu0 0.0
        %4265 = vmatpush1.msra.mxu0 0.0
        %4266 = vmatprep.subr.mxu0 0.0
        %4267 = vmatpush1.msra.mxu0 0.0
        %4268 = vmatprep.subr.mxu0 0.0
        %4269 = vmatpush1.msra.mxu0 0.0
        %4270 = vmatprep.subr.mxu0 0.0
        %4271 = vmatpush1.msra.mxu0 0.0
        %4272 = vmatprep.subr.mxu0 0.0
        %4273 = vmatpush1.msra.mxu0 0.0
        %4274 = vmatprep.subr.mxu0 0.0
        %4275 = vmatpush1.msra.mxu0 0.0
        %4276 = vmatprep.subr.mxu0 0.0
        %4277 = vmatpush1.msra.mxu0 0.0
        %4278 = vmatprep.subr.mxu0 0.0
        %4279 = vmatpush1.msra.mxu0 0.0
        %4280 = vmatprep.subr.mxu0 0.0
        %4281 = vmatpush1.msra.mxu0 0.0
        %4282 = vmatprep.subr.mxu0 0.0
        %4283 = vmatpush1.msra.mxu0 0.0
        %4284 = vmatprep.subr.mxu0 0.0
        %4285 = vmatpush1.msra.mxu0 0.0
        %4286 = vmatprep.subr.mxu0 0.0
        %4287 = vmatpush1.msra.mxu0 0.0
        %4288 = vmatprep.subr.mxu0 0.0
        %4289 = vmatpush1.msra.mxu0 0.0
        %4290 = vmatprep.subr.mxu0 0.0
        %4291 = vmatpush1.msra.mxu0 0.0
        %4292 = vmatprep.subr.mxu0 0.0
        %4293 = vmatpush1.msra.mxu0 0.0
        %4294 = vmatprep.subr.mxu0 0.0
        %4295 = vmatpush1.msra.mxu0 0.0
        %4296 = vmatprep.subr.mxu0 0.0
        %4297 = vmatpush1.msra.mxu0 0.0
        %4298 = vmatprep.subr.mxu0 0.0
        %4299 = vmatpush1.msra.mxu0 0.0
        %4300 = vmatprep.mubr.f32.mxu0 0.0
        %4301 = vmatmul.mubr.f32.gmra.mrb[0].mxu0 %v3138
        %v4302 = vpop.f32.mrb[0].mxu0
        %v4303 = vadd.f32 %v4234, %v4302
        %v4304 = vpop.f32.mrb[0].mxu0
        %4305 = vmatprep.mubr.f32.mxu0 0.0
        %4306 = vmatmul.mubr.f32.gmra.mrb[0].mxu0 %v3141
        %v4307 = vpop.f32.mrb[0].mxu0
        %v4308 = vadd.f32 %v4234, %v4307
        %v4309 = vpop.f32.mrb[0].mxu0
        %4310 = vdwg.mxu0
        %v4312 = vsel %vm1302, %v4132, 0
        %v4315 = vsel %vm1302, %v4215, 0
        %v4318 = vsel %vm1302, %v4220, 0
        %4320 = vmatprep.subr.mxu0 0.0
        %4321 = vmatpush1.xpose.msra.mxu0 %v4315
        %4322 = vmatprep.subr.mxu0 0.0
        %4323 = vmatpush1.xpose.msra.mxu0 %v4318
        %4324 = vmatprep.subr.mxu0 0.0
        %4325 = vmatpush1.xpose.msra.mxu0 0.0
        %4326 = vmatprep.subr.mxu0 0.0
        %4327 = vmatpush1.xpose.msra.mxu0 0.0
        %4328 = vmatprep.subr.mxu0 0.0
        %4329 = vmatpush1.xpose.msra.mxu0 0.0
        %4330 = vmatprep.subr.mxu0 0.0
        %4331 = vmatpush1.xpose.msra.mxu0 0.0
        %4332 = vmatprep.subr.mxu0 0.0
        %4333 = vmatpush1.xpose.msra.mxu0 0.0
        %4334 = vmatprep.subr.mxu0 0.0
        %4335 = vmatpush1.xpose.msra.mxu0 0.0
        %4336 = vmatprep.subr.mxu0 0.0
        %4337 = vmatpush1.xpose.msra.mxu0 0.0
        %4338 = vmatprep.subr.mxu0 0.0
        %4339 = vmatpush1.xpose.msra.mxu0 0.0
        %4340 = vmatprep.subr.mxu0 0.0
        %4341 = vmatpush1.xpose.msra.mxu0 0.0
        %4342 = vmatprep.subr.mxu0 0.0
        %4343 = vmatpush1.xpose.msra.mxu0 0.0
        %4344 = vmatprep.subr.mxu0 0.0
        %4345 = vmatpush1.xpose.msra.mxu0 0.0
        %4346 = vmatprep.subr.mxu0 0.0
        %4347 = vmatpush1.xpose.msra.mxu0 0.0
        %4348 = vmatprep.subr.mxu0 0.0
        %4349 = vmatpush1.xpose.msra.mxu0 0.0
        %4350 = vmatprep.subr.mxu0 0.0
        %4351 = vmatpush1.xpose.msra.mxu0 0.0
        %4352 = vmatprep.subr.mxu0 0.0
        %4353 = vmatpush1.xpose.msra.mxu0 0.0
        %4354 = vmatprep.subr.mxu0 0.0
        %4355 = vmatpush1.xpose.msra.mxu0 0.0
        %4356 = vmatprep.subr.mxu0 0.0
        %4357 = vmatpush1.xpose.msra.mxu0 0.0
        %4358 = vmatprep.subr.mxu0 0.0
        %4359 = vmatpush1.xpose.msra.mxu0 0.0
        %4360 = vmatprep.subr.mxu0 0.0
        %4361 = vmatpush1.xpose.msra.mxu0 0.0
        %4362 = vmatprep.subr.mxu0 0.0
        %4363 = vmatpush1.xpose.msra.mxu0 0.0
        %4364 = vmatprep.subr.mxu0 0.0
        %4365 = vmatpush1.xpose.msra.mxu0 0.0
        %4366 = vmatprep.subr.mxu0 0.0
        %4367 = vmatpush1.xpose.msra.mxu0 0.0
        %4368 = vmatprep.subr.mxu0 0.0
        %4369 = vmatpush1.xpose.msra.mxu0 0.0
        %4370 = vmatprep.subr.mxu0 0.0
        %4371 = vmatpush1.xpose.msra.mxu0 0.0
        %4372 = vmatprep.subr.mxu0 0.0
        %4373 = vmatpush1.xpose.msra.mxu0 0.0
        %4374 = vmatprep.subr.mxu0 0.0
        %4375 = vmatpush1.xpose.msra.mxu0 0.0
        %4376 = vmatprep.subr.mxu0 0.0
        %4377 = vmatpush1.xpose.msra.mxu0 0.0
        %4378 = vmatprep.subr.mxu0 0.0
        %4379 = vmatpush1.xpose.msra.mxu0 0.0
        %4380 = vmatprep.subr.mxu0 0.0
        %4381 = vmatpush1.xpose.msra.mxu0 0.0
        %4382 = vmatprep.subr.mxu0 0.0
        %4383 = vmatpush1.xpose.msra.mxu0 0.0
        %4384 = vmatprep.mubr.f32.mxu0 0.0
        %4385 = vmatmul.mubr.f32.gmra.mrb[0].mxu0 %v4312
        %v4386 = vpop.f32.mrb[0].mxu0
        %v4387 = vadd.f32 0.0, %v4386
        %v4388 = vpop.f32.mrb[0].mxu0
        %4389 = vdwg.mxu0
        %v4390 = vmul.f32 %v4387, 0.35355338
        %v4391 = vsel %vm3039, -1e+09, %v4390
        %v4392 = vsel %vm3387, %v4391, -inf
        %4393 = vmax.xlane.f32.xlu0 %v4392
        %v4394 = vpop.xlane.xlu0 %4393
        %v4395 = vsub.f32 %v4391, %v4394
        %v4396 = vmul.f32 %v4395, 1.442695
        %v4397 = vpow.pop %v4396
        %v4398 = vsel %vm3387, %v4397, 0.0
        %4399 = vadd.xlane.f32.xlu0 %v4398
        %v4400 = vpop.xlane.xlu0 %4399
        %v4401 = vrcp.pop %v4400
        %v4402 = vmul.f32 %v4397, %v4401
        %v4404 = vsel %vm3387, %v4402, 0
        %v4407 = vsel %vm3402, %v4308, 0
        %4409 = vmatprep.subr.mxu0 0.0
        %4410 = vmatpush1.msra.mxu0 %v4303
        %4411 = vmatprep.subr.mxu0 0.0
        %4412 = vmatpush1.msra.mxu0 %v4407
        %4413 = vmatprep.subr.mxu0 0.0
        %4414 = vmatpush1.msra.mxu0 0.0
        %4415 = vmatprep.subr.mxu0 0.0
        %4416 = vmatpush1.msra.mxu0 0.0
        %4417 = vmatprep.subr.mxu0 0.0
        %4418 = vmatpush1.msra.mxu0 0.0
        %4419 = vmatprep.subr.mxu0 0.0
        %4420 = vmatpush1.msra.mxu0 0.0
        %4421 = vmatprep.subr.mxu0 0.0
        %4422 = vmatpush1.msra.mxu0 0.0
        %4423 = vmatprep.subr.mxu0 0.0
        %4424 = vmatpush1.msra.mxu0 0.0
        %4425 = vmatprep.subr.mxu0 0.0
        %4426 = vmatpush1.msra.mxu0 0.0
        %4427 = vmatprep.subr.mxu0 0.0
        %4428 = vmatpush1.msra.mxu0 0.0
        %4429 = vmatprep.subr.mxu0 0.0
        %4430 = vmatpush1.msra.mxu0 0.0
        %4431 = vmatprep.subr.mxu0 0.0
        %4432 = vmatpush1.msra.mxu0 0.0
        %4433 = vmatprep.subr.mxu0 0.0
        %4434 = vmatpush1.msra.mxu0 0.0
        %4435 = vmatprep.subr.mxu0 0.0
        %4436 = vmatpush1.msra.mxu0 0.0
        %4437 = vmatprep.subr.mxu0 0.0
        %4438 = vmatpush1.msra.mxu0 0.0
        %4439 = vmatprep.subr.mxu0 0.0
        %4440 = vmatpush1.msra.mxu0 0.0
        %4441 = vmatprep.subr.mxu0 0.0
        %4442 = vmatpush1.msra.mxu0 0.0
        %4443 = vmatprep.subr.mxu0 0.0
        %4444 = vmatpush1.msra.mxu0 0.0
        %4445 = vmatprep.subr.mxu0 0.0
        %4446 = vmatpush1.msra.mxu0 0.0
        %4447 = vmatprep.subr.mxu0 0.0
        %4448 = vmatpush1.msra.mxu0 0.0
        %4449 = vmatprep.subr.mxu0 0.0
        %4450 = vmatpush1.msra.mxu0 0.0
        %4451 = vmatprep.subr.mxu0 0.0
        %4452 = vmatpush1.msra.mxu0 0.0
        %4453 = vmatprep.subr.mxu0 0.0
        %4454 = vmatpush1.msra.mxu0 0.0
        %4455 = vmatprep.subr.mxu0 0.0
        %4456 = vmatpush1.msra.mxu0 0.0
        %4457 = vmatprep.subr.mxu0 0.0
        %4458 = vmatpush1.msra.mxu0 0.0
        %4459 = vmatprep.subr.mxu0 0.0
        %4460 = vmatpush1.msra.mxu0 0.0
        %4461 = vmatprep.subr.mxu0 0.0
        %4462 = vmatpush1.msra.mxu0 0.0
        %4463 = vmatprep.subr.mxu0 0.0
        %4464 = vmatpush1.msra.mxu0 0.0
        %4465 = vmatprep.subr.mxu0 0.0
        %4466 = vmatpush1.msra.mxu0 0.0
        %4467 = vmatprep.subr.mxu0 0.0
        %4468 = vmatpush1.msra.mxu0 0.0
        %4469 = vmatprep.subr.mxu0 0.0
        %4470 = vmatpush1.msra.mxu0 0.0
        %4471 = vmatprep.subr.mxu0 0.0
        %4472 = vmatpush1.msra.mxu0 0.0
        %4473 = vmatprep.mubr.f32.mxu0 0.0
        %4474 = vmatmul.mubr.f32.gmra.mrb[0].mxu0 %v4404
        %v4475 = vpop.f32.mrb[0].mxu0
        %v4476 = vadd.f32 0.0, %v4475
        %v4477 = vpop.f32.mrb[0].mxu0
        %4478 = vdwg.mxu0
        %s4479 = scalar_lea.vmem %s1007, 16
        %v4480 = vld [vmem:[%s4479] sm:$0xff]
        %v4482 = vsel %vm1302, %v4476, 0
        %4484 = vmatprep.subr.mxu0 0.0
        %4485 = vmatpush1.msra.mxu0 %v4480
        %4486 = vmatprep.subr.mxu0 0.0
        %4487 = vmatpush1.msra.mxu0 0.0
        %4488 = vmatprep.subr.mxu0 0.0
        %4489 = vmatpush1.msra.mxu0 0.0
        %4490 = vmatprep.subr.mxu0 0.0
        %4491 = vmatpush1.msra.mxu0 0.0
        %4492 = vmatprep.subr.mxu0 0.0
        %4493 = vmatpush1.msra.mxu0 0.0
        %4494 = vmatprep.subr.mxu0 0.0
        %4495 = vmatpush1.msra.mxu0 0.0
        %4496 = vmatprep.subr.mxu0 0.0
        %4497 = vmatpush1.msra.mxu0 0.0
        %4498 = vmatprep.subr.mxu0 0.0
        %4499 = vmatpush1.msra.mxu0 0.0
        %4500 = vmatprep.subr.mxu0 0.0
        %4501 = vmatpush1.msra.mxu0 0.0
        %4502 = vmatprep.subr.mxu0 0.0
        %4503 = vmatpush1.msra.mxu0 0.0
        %4504 = vmatprep.subr.mxu0 0.0
        %4505 = vmatpush1.msra.mxu0 0.0
        %4506 = vmatprep.subr.mxu0 0.0
        %4507 = vmatpush1.msra.mxu0 0.0
        %4508 = vmatprep.subr.mxu0 0.0
        %4509 = vmatpush1.msra.mxu0 0.0
        %4510 = vmatprep.subr.mxu0 0.0
        %4511 = vmatpush1.msra.mxu0 0.0
        %4512 = vmatprep.subr.mxu0 0.0
        %4513 = vmatpush1.msra.mxu0 0.0
        %4514 = vmatprep.subr.mxu0 0.0
        %4515 = vmatpush1.msra.mxu0 0.0
        %4516 = vmatprep.subr.mxu0 0.0
        %4517 = vmatpush1.msra.mxu0 0.0
        %4518 = vmatprep.subr.mxu0 0.0
        %4519 = vmatpush1.msra.mxu0 0.0
        %4520 = vmatprep.subr.mxu0 0.0
        %4521 = vmatpush1.msra.mxu0 0.0
        %4522 = vmatprep.subr.mxu0 0.0
        %4523 = vmatpush1.msra.mxu0 0.0
        %4524 = vmatprep.subr.mxu0 0.0
        %4525 = vmatpush1.msra.mxu0 0.0
        %4526 = vmatprep.subr.mxu0 0.0
        %4527 = vmatpush1.msra.mxu0 0.0
        %4528 = vmatprep.subr.mxu0 0.0
        %4529 = vmatpush1.msra.mxu0 0.0
        %4530 = vmatprep.subr.mxu0 0.0
        %4531 = vmatpush1.msra.mxu0 0.0
        %4532 = vmatprep.subr.mxu0 0.0
        %4533 = vmatpush1.msra.mxu0 0.0
        %4534 = vmatprep.subr.mxu0 0.0
        %4535 = vmatpush1.msra.mxu0 0.0
        %4536 = vmatprep.subr.mxu0 0.0
        %4537 = vmatpush1.msra.mxu0 0.0
        %4538 = vmatprep.subr.mxu0 0.0
        %4539 = vmatpush1.msra.mxu0 0.0
        %4540 = vmatprep.subr.mxu0 0.0
        %4541 = vmatpush1.msra.mxu0 0.0
        %4542 = vmatprep.subr.mxu0 0.0
        %4543 = vmatpush1.msra.mxu0 0.0
        %4544 = vmatprep.subr.mxu0 0.0
        %4545 = vmatpush1.msra.mxu0 0.0
        %4546 = vmatprep.subr.mxu0 0.0
        %4547 = vmatpush1.msra.mxu0 0.0
        %4548 = vmatprep.mubr.f32.mxu0 0.0
        %4549 = vmatmul.mubr.f32.gmra.mrb[0].mxu0 %v4482
        %v4550 = vpop.f32.mrb[0].mxu0
        %v4551 = vadd.f32 0.0, %v4550
        %v4552 = vpop.f32.mrb[0].mxu0
        %4553 = vdwg.mxu0
        %v4554 = vadd.f32 %v4049, %v4551
        %s4555 = scalar_lea.vmem %s998, 96
        %v4556 = vld [vmem:[%s4555] sm:$0xff]
        %v4557 = vld [vmem:[%s4555 + $0x8] sm:$0xff]
        %v4558 = vld [vmem:[%s4555 + $0x10] sm:$0xff]
        %v4559 = vld [vmem:[%s4555 + $0x18] sm:$0xff]
        %s4560 = scalar_lea.vmem %s1002, 3
        %v4561 = vld [vmem:[%s4560] sm:$0x1]
        %v4563 = vlaneseq
        %v4564 = vshrl.u32 %v4563, 7
        %v4565 = vsub.s32 0, %v4564
        %v4566 = vrot.slane %v4561, %v4565
        %4568 = vmatprep.subr.mxu0 0.0
        %4569 = vmatpush1.msra.mxu0 %v4556
        %4570 = vmatprep.subr.mxu0 0.0
        %4571 = vmatpush1.msra.mxu0 %v4557
        %4572 = vmatprep.subr.mxu0 0.0
        %4573 = vmatpush1.msra.mxu0 %v4558
        %4574 = vmatprep.subr.mxu0 0.0
        %4575 = vmatpush1.msra.mxu0 %v4559
        %4576 = vmatprep.subr.mxu0 0.0
        %4577 = vmatpush1.msra.mxu0 0.0
        %4578 = vmatprep.subr.mxu0 0.0
        %4579 = vmatpush1.msra.mxu0 0.0
        %4580 = vmatprep.subr.mxu0 0.0
        %4581 = vmatpush1.msra.mxu0 0.0
        %4582 = vmatprep.subr.mxu0 0.0
        %4583 = vmatpush1.msra.mxu0 0.0
        %4584 = vmatprep.subr.mxu0 0.0
        %4585 = vmatpush1.msra.mxu0 0.0
        %4586 = vmatprep.subr.mxu0 0.0
        %4587 = vmatpush1.msra.mxu0 0.0
        %4588 = vmatprep.subr.mxu0 0.0
        %4589 = vmatpush1.msra.mxu0 0.0
        %4590 = vmatprep.subr.mxu0 0.0
        %4591 = vmatpush1.msra.mxu0 0.0
        %4592 = vmatprep.subr.mxu0 0.0
        %4593 = vmatpush1.msra.mxu0 0.0
        %4594 = vmatprep.subr.mxu0 0.0
        %4595 = vmatpush1.msra.mxu0 0.0
        %4596 = vmatprep.subr.mxu0 0.0
        %4597 = vmatpush1.msra.mxu0 0.0
        %4598 = vmatprep.subr.mxu0 0.0
        %4599 = vmatpush1.msra.mxu0 0.0
        %4600 = vmatprep.subr.mxu0 0.0
        %4601 = vmatpush1.msra.mxu0 0.0
        %4602 = vmatprep.subr.mxu0 0.0
        %4603 = vmatpush1.msra.mxu0 0.0
        %4604 = vmatprep.subr.mxu0 0.0
        %4605 = vmatpush1.msra.mxu0 0.0
        %4606 = vmatprep.subr.mxu0 0.0
        %4607 = vmatpush1.msra.mxu0 0.0
        %4608 = vmatprep.subr.mxu0 0.0
        %4609 = vmatpush1.msra.mxu0 0.0
        %4610 = vmatprep.subr.mxu0 0.0
        %4611 = vmatpush1.msra.mxu0 0.0
        %4612 = vmatprep.subr.mxu0 0.0
        %4613 = vmatpush1.msra.mxu0 0.0
        %4614 = vmatprep.subr.mxu0 0.0
        %4615 = vmatpush1.msra.mxu0 0.0
        %4616 = vmatprep.subr.mxu0 0.0
        %4617 = vmatpush1.msra.mxu0 0.0
        %4618 = vmatprep.subr.mxu0 0.0
        %4619 = vmatpush1.msra.mxu0 0.0
        %4620 = vmatprep.subr.mxu0 0.0
        %4621 = vmatpush1.msra.mxu0 0.0
        %4622 = vmatprep.subr.mxu0 0.0
        %4623 = vmatpush1.msra.mxu0 0.0
        %4624 = vmatprep.subr.mxu0 0.0
        %4625 = vmatpush1.msra.mxu0 0.0
        %4626 = vmatprep.subr.mxu0 0.0
        %4627 = vmatpush1.msra.mxu0 0.0
        %4628 = vmatprep.subr.mxu0 0.0
        %4629 = vmatpush1.msra.mxu0 0.0
        %4630 = vmatprep.subr.mxu0 0.0
        %4631 = vmatpush1.msra.mxu0 0.0
        %4632 = vmatprep.mubr.f32.mxu0 0.0
        %4633 = vmatmul.mubr.f32.gmra.mrb[0].mxu0 %v3052
        %v4634 = vpop.f32.mrb[0].mxu0
        %v4635 = vadd.f32 %v4566, %v4634
        %v4636 = vpop.f32.mrb[0].mxu0
        %4637 = vdwg.mxu0
        %s4638 = scalar_lea.vmem %s998, 224
        %v4639 = vld [vmem:[%s4638] sm:$0xff]
        %v4640 = vld [vmem:[%s4638 + $0x8] sm:$0xff]
        %v4641 = vld [vmem:[%s4638 + $0x10] sm:$0xff]
        %v4642 = vld [vmem:[%s4638 + $0x18] sm:$0xff]
        %s4643 = scalar_lea.vmem %s1002, 7
        %v4644 = vld [vmem:[%s4643] sm:$0x1]
        %v4646 = vlaneseq
        %v4647 = vshrl.u32 %v4646, 7
        %v4648 = vsub.s32 0, %v4647
        %v4649 = vrot.slane %v4644, %v4648
        %4651 = vmatprep.subr.mxu0 0.0
        %4652 = vmatpush1.msra.mxu0 %v4639
        %4653 = vmatprep.subr.mxu0 0.0
        %4654 = vmatpush1.msra.mxu0 %v4640
        %4655 = vmatprep.subr.mxu0 0.0
        %4656 = vmatpush1.msra.mxu0 %v4641
        %4657 = vmatprep.subr.mxu0 0.0
        %4658 = vmatpush1.msra.mxu0 %v4642
        %4659 = vmatprep.subr.mxu0 0.0
        %4660 = vmatpush1.msra.mxu0 0.0
        %4661 = vmatprep.subr.mxu0 0.0
        %4662 = vmatpush1.msra.mxu0 0.0
        %4663 = vmatprep.subr.mxu0 0.0
        %4664 = vmatpush1.msra.mxu0 0.0
        %4665 = vmatprep.subr.mxu0 0.0
        %4666 = vmatpush1.msra.mxu0 0.0
        %4667 = vmatprep.subr.mxu0 0.0
        %4668 = vmatpush1.msra.mxu0 0.0
        %4669 = vmatprep.subr.mxu0 0.0
        %4670 = vmatpush1.msra.mxu0 0.0
        %4671 = vmatprep.subr.mxu0 0.0
        %4672 = vmatpush1.msra.mxu0 0.0
        %4673 = vmatprep.subr.mxu0 0.0
        %4674 = vmatpush1.msra.mxu0 0.0
        %4675 = vmatprep.subr.mxu0 0.0
        %4676 = vmatpush1.msra.mxu0 0.0
        %4677 = vmatprep.subr.mxu0 0.0
        %4678 = vmatpush1.msra.mxu0 0.0
        %4679 = vmatprep.subr.mxu0 0.0
        %4680 = vmatpush1.msra.mxu0 0.0
        %4681 = vmatprep.subr.mxu0 0.0
        %4682 = vmatpush1.msra.mxu0 0.0
        %4683 = vmatprep.subr.mxu0 0.0
        %4684 = vmatpush1.msra.mxu0 0.0
        %4685 = vmatprep.subr.mxu0 0.0
        %4686 = vmatpush1.msra.mxu0 0.0
        %4687 = vmatprep.subr.mxu0 0.0
        %4688 = vmatpush1.msra.mxu0 0.0
        %4689 = vmatprep.subr.mxu0 0.0
        %4690 = vmatpush1.msra.mxu0 0.0
        %4691 = vmatprep.subr.mxu0 0.0
        %4692 = vmatpush1.msra.mxu0 0.0
        %4693 = vmatprep.subr.mxu0 0.0
        %4694 = vmatpush1.msra.mxu0 0.0
        %4695 = vmatprep.subr.mxu0 0.0
        %4696 = vmatpush1.msra.mxu0 0.0
        %4697 = vmatprep.subr.mxu0 0.0
        %4698 = vmatpush1.msra.mxu0 0.0
        %4699 = vmatprep.subr.mxu0 0.0
        %4700 = vmatpush1.msra.mxu0 0.0
        %4701 = vmatprep.subr.mxu0 0.0
        %4702 = vmatpush1.msra.mxu0 0.0
        %4703 = vmatprep.subr.mxu0 0.0
        %4704 = vmatpush1.msra.mxu0 0.0
        %4705 = vmatprep.subr.mxu0 0.0
        %4706 = vmatpush1.msra.mxu0 0.0
        %4707 = vmatprep.subr.mxu0 0.0
        %4708 = vmatpush1.msra.mxu0 0.0
        %4709 = vmatprep.subr.mxu0 0.0
        %4710 = vmatpush1.msra.mxu0 0.0
        %4711 = vmatprep.subr.mxu0 0.0
        %4712 = vmatpush1.msra.mxu0 0.0
        %4713 = vmatprep.subr.mxu0 0.0
        %4714 = vmatpush1.msra.mxu0 0.0
        %4715 = vmatprep.mubr.f32.mxu0 0.0
        %4716 = vmatmul.mubr.f32.gmra.mrb[0].mxu0 %v3138
        %v4717 = vpop.f32.mrb[0].mxu0
        %v4718 = vadd.f32 %v4649, %v4717
        %v4719 = vpop.f32.mrb[0].mxu0
        %4720 = vmatprep.mubr.f32.mxu0 0.0
        %4721 = vmatmul.mubr.f32.gmra.mrb[0].mxu0 %v3141
        %v4722 = vpop.f32.mrb[0].mxu0
        %v4723 = vadd.f32 %v4649, %v4722
        %v4724 = vpop.f32.mrb[0].mxu0
        %4725 = vdwg.mxu0
        %s4726 = scalar_lea.vmem %s998, 352
        %v4727 = vld [vmem:[%s4726] sm:$0xff]
        %v4728 = vld [vmem:[%s4726 + $0x8] sm:$0xff]
        %v4729 = vld [vmem:[%s4726 + $0x10] sm:$0xff]
        %v4730 = vld [vmem:[%s4726 + $0x18] sm:$0xff]
        %s4731 = scalar_lea.vmem %s1002, 11
        %v4732 = vld [vmem:[%s4731] sm:$0x1]
        %v4734 = vlaneseq
        %v4735 = vshrl.u32 %v4734, 7
        %v4736 = vsub.s32 0, %v4735
        %v4737 = vrot.slane %v4732, %v4736
        %4739 = vmatprep.subr.mxu0 0.0
        %4740 = vmatpush1.msra.mxu0 %v4727
        %4741 = vmatprep.subr.mxu0 0.0
        %4742 = vmatpush1.msra.mxu0 %v4728
        %4743 = vmatprep.subr.mxu0 0.0
        %4744 = vmatpush1.msra.mxu0 %v4729
        %4745 = vmatprep.subr.mxu0 0.0
        %4746 = vmatpush1.msra.mxu0 %v4730
        %4747 = vmatprep.subr.mxu0 0.0
        %4748 = vmatpush1.msra.mxu0 0.0
        %4749 = vmatprep.subr.mxu0 0.0
        %4750 = vmatpush1.msra.mxu0 0.0
        %4751 = vmatprep.subr.mxu0 0.0
        %4752 = vmatpush1.msra.mxu0 0.0
        %4753 = vmatprep.subr.mxu0 0.0
        %4754 = vmatpush1.msra.mxu0 0.0
        %4755 = vmatprep.subr.mxu0 0.0
        %4756 = vmatpush1.msra.mxu0 0.0
        %4757 = vmatprep.subr.mxu0 0.0
        %4758 = vmatpush1.msra.mxu0 0.0
        %4759 = vmatprep.subr.mxu0 0.0
        %4760 = vmatpush1.msra.mxu0 0.0
        %4761 = vmatprep.subr.mxu0 0.0
        %4762 = vmatpush1.msra.mxu0 0.0
        %4763 = vmatprep.subr.mxu0 0.0
        %4764 = vmatpush1.msra.mxu0 0.0
        %4765 = vmatprep.subr.mxu0 0.0
        %4766 = vmatpush1.msra.mxu0 0.0
        %4767 = vmatprep.subr.mxu0 0.0
        %4768 = vmatpush1.msra.mxu0 0.0
        %4769 = vmatprep.subr.mxu0 0.0
        %4770 = vmatpush1.msra.mxu0 0.0
        %4771 = vmatprep.subr.mxu0 0.0
        %4772 = vmatpush1.msra.mxu0 0.0
        %4773 = vmatprep.subr.mxu0 0.0
        %4774 = vmatpush1.msra.mxu0 0.0
        %4775 = vmatprep.subr.mxu0 0.0
        %4776 = vmatpush1.msra.mxu0 0.0
        %4777 = vmatprep.subr.mxu0 0.0
        %4778 = vmatpush1.msra.mxu0 0.0
        %4779 = vmatprep.subr.mxu0 0.0
        %4780 = vmatpush1.msra.mxu0 0.0
        %4781 = vmatprep.subr.mxu0 0.0
        %4782 = vmatpush1.msra.mxu0 0.0
        %4783 = vmatprep.subr.mxu0 0.0
        %4784 = vmatpush1.msra.mxu0 0.0
        %4785 = vmatprep.subr.mxu0 0.0
        %4786 = vmatpush1.msra.mxu0 0.0
        %4787 = vmatprep.subr.mxu0 0.0
        %4788 = vmatpush1.msra.mxu0 0.0
        %4789 = vmatprep.subr.mxu0 0.0
        %4790 = vmatpush1.msra.mxu0 0.0
        %4791 = vmatprep.subr.mxu0 0.0
        %4792 = vmatpush1.msra.mxu0 0.0
        %4793 = vmatprep.subr.mxu0 0.0
        %4794 = vmatpush1.msra.mxu0 0.0
        %4795 = vmatprep.subr.mxu0 0.0
        %4796 = vmatpush1.msra.mxu0 0.0
        %4797 = vmatprep.subr.mxu0 0.0
        %4798 = vmatpush1.msra.mxu0 0.0
        %4799 = vmatprep.subr.mxu0 0.0
        %4800 = vmatpush1.msra.mxu0 0.0
        %4801 = vmatprep.subr.mxu0 0.0
        %4802 = vmatpush1.msra.mxu0 0.0
        %4803 = vmatprep.mubr.f32.mxu0 0.0
        %4804 = vmatmul.mubr.f32.gmra.mrb[0].mxu0 %v3138
        %v4805 = vpop.f32.mrb[0].mxu0
        %v4806 = vadd.f32 %v4737, %v4805
        %v4807 = vpop.f32.mrb[0].mxu0
        %4808 = vmatprep.mubr.f32.mxu0 0.0
        %4809 = vmatmul.mubr.f32.gmra.mrb[0].mxu0 %v3141
        %v4810 = vpop.f32.mrb[0].mxu0
        %v4811 = vadd.f32 %v4737, %v4810
        %v4812 = vpop.f32.mrb[0].mxu0
        %4813 = vdwg.mxu0
        %v4815 = vsel %vm1302, %v4635, 0
        %v4818 = vsel %vm1302, %v4718, 0
        %v4821 = vsel %vm1302, %v4723, 0
        %4823 = vmatprep.subr.mxu0 0.0
        %4824 = vmatpush1.xpose.msra.mxu0 %v4818
        %4825 = vmatprep.subr.mxu0 0.0
        %4826 = vmatpush1.xpose.msra.mxu0 %v4821
        %4827 = vmatprep.subr.mxu0 0.0
        %4828 = vmatpush1.xpose.msra.mxu0 0.0
        %4829 = vmatprep.subr.mxu0 0.0
        %4830 = vmatpush1.xpose.msra.mxu0 0.0
        %4831 = vmatprep.subr.mxu0 0.0
        %4832 = vmatpush1.xpose.msra.mxu0 0.0
        %4833 = vmatprep.subr.mxu0 0.0
        %4834 = vmatpush1.xpose.msra.mxu0 0.0
        %4835 = vmatprep.subr.mxu0 0.0
        %4836 = vmatpush1.xpose.msra.mxu0 0.0
        %4837 = vmatprep.subr.mxu0 0.0
        %4838 = vmatpush1.xpose.msra.mxu0 0.0
        %4839 = vmatprep.subr.mxu0 0.0
        %4840 = vmatpush1.xpose.msra.mxu0 0.0
        %4841 = vmatprep.subr.mxu0 0.0
        %4842 = vmatpush1.xpose.msra.mxu0 0.0
        %4843 = vmatprep.subr.mxu0 0.0
        %4844 = vmatpush1.xpose.msra.mxu0 0.0
        %4845 = vmatprep.subr.mxu0 0.0
        %4846 = vmatpush1.xpose.msra.mxu0 0.0
        %4847 = vmatprep.subr.mxu0 0.0
        %4848 = vmatpush1.xpose.msra.mxu0 0.0
        %4849 = vmatprep.subr.mxu0 0.0
        %4850 = vmatpush1.xpose.msra.mxu0 0.0
        %4851 = vmatprep.subr.mxu0 0.0
        %4852 = vmatpush1.xpose.msra.mxu0 0.0
        %4853 = vmatprep.subr.mxu0 0.0
        %4854 = vmatpush1.xpose.msra.mxu0 0.0
        %4855 = vmatprep.subr.mxu0 0.0
        %4856 = vmatpush1.xpose.msra.mxu0 0.0
        %4857 = vmatprep.subr.mxu0 0.0
        %4858 = vmatpush1.xpose.msra.mxu0 0.0
        %4859 = vmatprep.subr.mxu0 0.0
        %4860 = vmatpush1.xpose.msra.mxu0 0.0
        %4861 = vmatprep.subr.mxu0 0.0
        %4862 = vmatpush1.xpose.msra.mxu0 0.0
        %4863 = vmatprep.subr.mxu0 0.0
        %4864 = vmatpush1.xpose.msra.mxu0 0.0
        %4865 = vmatprep.subr.mxu0 0.0
        %4866 = vmatpush1.xpose.msra.mxu0 0.0
        %4867 = vmatprep.subr.mxu0 0.0
        %4868 = vmatpush1.xpose.msra.mxu0 0.0
        %4869 = vmatprep.subr.mxu0 0.0
        %4870 = vmatpush1.xpose.msra.mxu0 0.0
        %4871 = vmatprep.subr.mxu0 0.0
        %4872 = vmatpush1.xpose.msra.mxu0 0.0
        %4873 = vmatprep.subr.mxu0 0.0
        %4874 = vmatpush1.xpose.msra.mxu0 0.0
        %4875 = vmatprep.subr.mxu0 0.0
        %4876 = vmatpush1.xpose.msra.mxu0 0.0
        %4877 = vmatprep.subr.mxu0 0.0
        %4878 = vmatpush1.xpose.msra.mxu0 0.0
        %4879 = vmatprep.subr.mxu0 0.0
        %4880 = vmatpush1.xpose.msra.mxu0 0.0
        %4881 = vmatprep.subr.mxu0 0.0
        %4882 = vmatpush1.xpose.msra.mxu0 0.0
        %4883 = vmatprep.subr.mxu0 0.0
        %4884 = vmatpush1.xpose.msra.mxu0 0.0
        %4885 = vmatprep.subr.mxu0 0.0
        %4886 = vmatpush1.xpose.msra.mxu0 0.0
        %4887 = vmatprep.mubr.f32.mxu0 0.0
        %4888 = vmatmul.mubr.f32.gmra.mrb[0].mxu0 %v4815
        %v4889 = vpop.f32.mrb[0].mxu0
        %v4890 = vadd.f32 0.0, %v4889
        %v4891 = vpop.f32.mrb[0].mxu0
        %4892 = vdwg.mxu0
        %v4893 = vmul.f32 %v4890, 0.35355338
        %v4894 = vsel %vm3039, -1e+09, %v4893
        %v4895 = vsel %vm3387, %v4894, -inf
        %4896 = vmax.xlane.f32.xlu0 %v4895
        %v4897 = vpop.xlane.xlu0 %4896
        %v4898 = vsub.f32 %v4894, %v4897
        %v4899 = vmul.f32 %v4898, 1.442695
        %v4900 = vpow.pop %v4899
        %v4901 = vsel %vm3387, %v4900, 0.0
        %4902 = vadd.xlane.f32.xlu0 %v4901
        %v4903 = vpop.xlane.xlu0 %4902
        %v4904 = vrcp.pop %v4903
        %v4905 = vmul.f32 %v4900, %v4904
        %v4907 = vsel %vm3387, %v4905, 0
        %v4910 = vsel %vm3402, %v4811, 0
        %4912 = vmatprep.subr.mxu0 0.0
        %4913 = vmatpush1.msra.mxu0 %v4806
        %4914 = vmatprep.subr.mxu0 0.0
        %4915 = vmatpush1.msra.mxu0 %v4910
        %4916 = vmatprep.subr.mxu0 0.0
        %4917 = vmatpush1.msra.mxu0 0.0
        %4918 = vmatprep.subr.mxu0 0.0
        %4919 = vmatpush1.msra.mxu0 0.0
        %4920 = vmatprep.subr.mxu0 0.0
        %4921 = vmatpush1.msra.mxu0 0.0
        %4922 = vmatprep.subr.mxu0 0.0
        %4923 = vmatpush1.msra.mxu0 0.0
        %4924 = vmatprep.subr.mxu0 0.0
        %4925 = vmatpush1.msra.mxu0 0.0
        %4926 = vmatprep.subr.mxu0 0.0
        %4927 = vmatpush1.msra.mxu0 0.0
        %4928 = vmatprep.subr.mxu0 0.0
        %4929 = vmatpush1.msra.mxu0 0.0
        %4930 = vmatprep.subr.mxu0 0.0
        %4931 = vmatpush1.msra.mxu0 0.0
        %4932 = vmatprep.subr.mxu0 0.0
        %4933 = vmatpush1.msra.mxu0 0.0
        %4934 = vmatprep.subr.mxu0 0.0
        %4935 = vmatpush1.msra.mxu0 0.0
        %4936 = vmatprep.subr.mxu0 0.0
        %4937 = vmatpush1.msra.mxu0 0.0
        %4938 = vmatprep.subr.mxu0 0.0
        %4939 = vmatpush1.msra.mxu0 0.0
        %4940 = vmatprep.subr.mxu0 0.0
        %4941 = vmatpush1.msra.mxu0 0.0
        %4942 = vmatprep.subr.mxu0 0.0
        %4943 = vmatpush1.msra.mxu0 0.0
        %4944 = vmatprep.subr.mxu0 0.0
        %4945 = vmatpush1.msra.mxu0 0.0
        %4946 = vmatprep.subr.mxu0 0.0
        %4947 = vmatpush1.msra.mxu0 0.0
        %4948 = vmatprep.subr.mxu0 0.0
        %4949 = vmatpush1.msra.mxu0 0.0
        %4950 = vmatprep.subr.mxu0 0.0
        %4951 = vmatpush1.msra.mxu0 0.0
        %4952 = vmatprep.subr.mxu0 0.0
        %4953 = vmatpush1.msra.mxu0 0.0
        %4954 = vmatprep.subr.mxu0 0.0
        %4955 = vmatpush1.msra.mxu0 0.0
        %4956 = vmatprep.subr.mxu0 0.0
        %4957 = vmatpush1.msra.mxu0 0.0
        %4958 = vmatprep.subr.mxu0 0.0
        %4959 = vmatpush1.msra.mxu0 0.0
        %4960 = vmatprep.subr.mxu0 0.0
        %4961 = vmatpush1.msra.mxu0 0.0
        %4962 = vmatprep.subr.mxu0 0.0
        %4963 = vmatpush1.msra.mxu0 0.0
        %4964 = vmatprep.subr.mxu0 0.0
        %4965 = vmatpush1.msra.mxu0 0.0
        %4966 = vmatprep.subr.mxu0 0.0
        %4967 = vmatpush1.msra.mxu0 0.0
        %4968 = vmatprep.subr.mxu0 0.0
        %4969 = vmatpush1.msra.mxu0 0.0
        %4970 = vmatprep.subr.mxu0 0.0
        %4971 = vmatpush1.msra.mxu0 0.0
        %4972 = vmatprep.subr.mxu0 0.0
        %4973 = vmatpush1.msra.mxu0 0.0
        %4974 = vmatprep.subr.mxu0 0.0
        %4975 = vmatpush1.msra.mxu0 0.0
        %4976 = vmatprep.mubr.f32.mxu0 0.0
        %4977 = vmatmul.mubr.f32.gmra.mrb[0].mxu0 %v4907
        %v4978 = vpop.f32.mrb[0].mxu0
        %v4979 = vadd.f32 0.0, %v4978
        %v4980 = vpop.f32.mrb[0].mxu0
        %4981 = vdwg.mxu0
        %s4982 = scalar_lea.vmem %s1007, 24
        %v4983 = vld [vmem:[%s4982] sm:$0xff]
        %v4985 = vsel %vm1302, %v4979, 0
        %4987 = vmatprep.subr.mxu0 0.0
        %4988 = vmatpush1.msra.mxu0 %v4983
        %4989 = vmatprep.subr.mxu0 0.0
        %4990 = vmatpush1.msra.mxu0 0.0
        %4991 = vmatprep.subr.mxu0 0.0
        %4992 = vmatpush1.msra.mxu0 0.0
        %4993 = vmatprep.subr.mxu0 0.0
        %4994 = vmatpush1.msra.mxu0 0.0
        %4995 = vmatprep.subr.mxu0 0.0
        %4996 = vmatpush1.msra.mxu0 0.0
        %4997 = vmatprep.subr.mxu0 0.0
        %4998 = vmatpush1.msra.mxu0 0.0
        %4999 = vmatprep.subr.mxu0 0.0
        %5000 = vmatpush1.msra.mxu0 0.0
        %5001 = vmatprep.subr.mxu0 0.0
        %5002 = vmatpush1.msra.mxu0 0.0
        %5003 = vmatprep.subr.mxu0 0.0
        %5004 = vmatpush1.msra.mxu0 0.0
        %5005 = vmatprep.subr.mxu0 0.0
        %5006 = vmatpush1.msra.mxu0 0.0
        %5007 = vmatprep.subr.mxu0 0.0
        %5008 = vmatpush1.msra.mxu0 0.0
        %5009 = vmatprep.subr.mxu0 0.0
        %5010 = vmatpush1.msra.mxu0 0.0
        %5011 = vmatprep.subr.mxu0 0.0
        %5012 = vmatpush1.msra.mxu0 0.0
        %5013 = vmatprep.subr.mxu0 0.0
        %5014 = vmatpush1.msra.mxu0 0.0
        %5015 = vmatprep.subr.mxu0 0.0
        %5016 = vmatpush1.msra.mxu0 0.0
        %5017 = vmatprep.subr.mxu0 0.0
        %5018 = vmatpush1.msra.mxu0 0.0
        %5019 = vmatprep.subr.mxu0 0.0
        %5020 = vmatpush1.msra.mxu0 0.0
        %5021 = vmatprep.subr.mxu0 0.0
        %5022 = vmatpush1.msra.mxu0 0.0
        %5023 = vmatprep.subr.mxu0 0.0
        %5024 = vmatpush1.msra.mxu0 0.0
        %5025 = vmatprep.subr.mxu0 0.0
        %5026 = vmatpush1.msra.mxu0 0.0
        %5027 = vmatprep.subr.mxu0 0.0
        %5028 = vmatpush1.msra.mxu0 0.0
        %5029 = vmatprep.subr.mxu0 0.0
        %5030 = vmatpush1.msra.mxu0 0.0
        %5031 = vmatprep.subr.mxu0 0.0
        %5032 = vmatpush1.msra.mxu0 0.0
        %5033 = vmatprep.subr.mxu0 0.0
        %5034 = vmatpush1.msra.mxu0 0.0
        %5035 = vmatprep.subr.mxu0 0.0
        %5036 = vmatpush1.msra.mxu0 0.0
        %5037 = vmatprep.subr.mxu0 0.0
        %5038 = vmatpush1.msra.mxu0 0.0
        %5039 = vmatprep.subr.mxu0 0.0
        %5040 = vmatpush1.msra.mxu0 0.0
        %5041 = vmatprep.subr.mxu0 0.0
        %5042 = vmatpush1.msra.mxu0 0.0
        %5043 = vmatprep.subr.mxu0 0.0
        %5044 = vmatpush1.msra.mxu0 0.0
        %5045 = vmatprep.subr.mxu0 0.0
        %5046 = vmatpush1.msra.mxu0 0.0
        %5047 = vmatprep.subr.mxu0 0.0
        %5048 = vmatpush1.msra.mxu0 0.0
        %5049 = vmatprep.subr.mxu0 0.0
        %5050 = vmatpush1.msra.mxu0 0.0
        %5051 = vmatprep.mubr.f32.mxu0 0.0
        %5052 = vmatmul.mubr.f32.gmra.mrb[0].mxu0 %v4985
        %v5053 = vpop.f32.mrb[0].mxu0
        %v5054 = vadd.f32 0.0, %v5053
        %v5055 = vpop.f32.mrb[0].mxu0
        %5056 = vdwg.mxu0
        %v5057 = vadd.f32 %v4554, %v5054
        %v5058 = vld [vmem:[%s1010] sm:$0x1]
        %v5060 = vlaneseq
        %v5061 = vshrl.u32 %v5060, 7
        %v5062 = vsub.s32 0, %v5061
        %v5063 = vrot.slane %v5058, %v5062
        %v5065 = vadd.f32 %v5057, %v5063
        %v5066 = vadd.f32 %v5065, %v3037
        %v5067 = vsel %vm1062, %v5066, 0.0
        %5068 = vadd.xlane.f32.xlu0 %v5067
        %v5069 = vpop.xlane.xlu0 %5068
        %v5070 = vmul.f32 %v5069, %v3011
        %v5071 = vsub.f32 %v5066, %v5070
        %v5072 = vmul.f32 %v5071, %v5071
        %v5073 = vsel %vm1062, %v5072, 0.0
        %5074 = vadd.xlane.f32.xlu0 %v5073
        %v5075 = vpop.xlane.xlu0 %5074
        %v5076 = vmul.f32 %v5075, %v3011
        %v5077 = vadd.f32 %v5076, 1e-05
        %v5078 = vrsqrt.pop %v5077
        %v5079 = vmul.f32 %v5071, %v5078
        %v5080 = vld [vmem:[%s1013] sm:$0x1]
        %v5082 = vlaneseq
        %v5083 = vshrl.u32 %v5082, 7
        %v5084 = vsub.s32 0, %v5083
        %v5085 = vrot.slane %v5080, %v5084
        %v5087 = vmul.f32 %v5079, %v5085
        %v5088 = vld [vmem:[%s1016] sm:$0x1]
        %v5090 = vlaneseq
        %v5091 = vshrl.u32 %v5090, 7
        %v5092 = vsub.s32 0, %v5091
        %v5093 = vrot.slane %v5088, %v5092
        %v5095 = vadd.f32 %v5087, %v5093
        %v5096 = vld [vmem:[%s1021] sm:$0xff]
        %v5097 = vld [vmem:[%s1021 + $0x8] sm:$0xff]
        %v5098 = vld [vmem:[%s1021 + $0x10] sm:$0xff]
        %v5099 = vld [vmem:[%s1021 + $0x18] sm:$0xff]
        %v5100 = vld [vmem:[%s1024] sm:$0x1]
        %v5102 = vlaneseq
        %v5103 = vshrl.u32 %v5102, 7
        %v5104 = vsub.s32 0, %v5103
        %v5105 = vrot.slane %v5100, %v5104
        %v5108 = vsel %vm1062, %v5095, 0
        %5110 = vmatprep.subr.mxu0 0.0
        %5111 = vmatpush1.msra.mxu0 %v5096
        %5112 = vmatprep.subr.mxu0 0.0
        %5113 = vmatpush1.msra.mxu0 %v5097
        %5114 = vmatprep.subr.mxu0 0.0
        %5115 = vmatpush1.msra.mxu0 %v5098
        %5116 = vmatprep.subr.mxu0 0.0
        %5117 = vmatpush1.msra.mxu0 %v5099
        %5118 = vmatprep.subr.mxu0 0.0
        %5119 = vmatpush1.msra.mxu0 0.0
        %5120 = vmatprep.subr.mxu0 0.0
        %5121 = vmatpush1.msra.mxu0 0.0
        %5122 = vmatprep.subr.mxu0 0.0
        %5123 = vmatpush1.msra.mxu0 0.0
        %5124 = vmatprep.subr.mxu0 0.0
        %5125 = vmatpush1.msra.mxu0 0.0
        %5126 = vmatprep.subr.mxu0 0.0
        %5127 = vmatpush1.msra.mxu0 0.0
        %5128 = vmatprep.subr.mxu0 0.0
        %5129 = vmatpush1.msra.mxu0 0.0
        %5130 = vmatprep.subr.mxu0 0.0
        %5131 = vmatpush1.msra.mxu0 0.0
        %5132 = vmatprep.subr.mxu0 0.0
        %5133 = vmatpush1.msra.mxu0 0.0
        %5134 = vmatprep.subr.mxu0 0.0
        %5135 = vmatpush1.msra.mxu0 0.0
        %5136 = vmatprep.subr.mxu0 0.0
        %5137 = vmatpush1.msra.mxu0 0.0
        %5138 = vmatprep.subr.mxu0 0.0
        %5139 = vmatpush1.msra.mxu0 0.0
        %5140 = vmatprep.subr.mxu0 0.0
        %5141 = vmatpush1.msra.mxu0 0.0
        %5142 = vmatprep.subr.mxu0 0.0
        %5143 = vmatpush1.msra.mxu0 0.0
        %5144 = vmatprep.subr.mxu0 0.0
        %5145 = vmatpush1.msra.mxu0 0.0
        %5146 = vmatprep.subr.mxu0 0.0
        %5147 = vmatpush1.msra.mxu0 0.0
        %5148 = vmatprep.subr.mxu0 0.0
        %5149 = vmatpush1.msra.mxu0 0.0
        %5150 = vmatprep.subr.mxu0 0.0
        %5151 = vmatpush1.msra.mxu0 0.0
        %5152 = vmatprep.subr.mxu0 0.0
        %5153 = vmatpush1.msra.mxu0 0.0
        %5154 = vmatprep.subr.mxu0 0.0
        %5155 = vmatpush1.msra.mxu0 0.0
        %5156 = vmatprep.subr.mxu0 0.0
        %5157 = vmatpush1.msra.mxu0 0.0
        %5158 = vmatprep.subr.mxu0 0.0
        %5159 = vmatpush1.msra.mxu0 0.0
        %5160 = vmatprep.subr.mxu0 0.0
        %5161 = vmatpush1.msra.mxu0 0.0
        %5162 = vmatprep.subr.mxu0 0.0
        %5163 = vmatpush1.msra.mxu0 0.0
        %5164 = vmatprep.subr.mxu0 0.0
        %5165 = vmatpush1.msra.mxu0 0.0
        %5166 = vmatprep.subr.mxu0 0.0
        %5167 = vmatpush1.msra.mxu0 0.0
        %5168 = vmatprep.subr.mxu0 0.0
        %5169 = vmatpush1.msra.mxu0 0.0
        %5170 = vmatprep.subr.mxu0 0.0
        %5171 = vmatpush1.msra.mxu0 0.0
        %5172 = vmatprep.subr.mxu0 0.0
        %5173 = vmatpush1.msra.mxu0 0.0
        %5174 = vmatprep.mubr.f32.mxu0 0.0
        %5175 = vmatmul.mubr.f32.gmra.mrb[0].mxu0 %v5108
        %v5176 = vpop.f32.mrb[0].mxu0
        %v5177 = vadd.f32 %v5105, %v5176
        %v5178 = vpop.f32.mrb[0].mxu0
        %5179 = vdwg.mxu0
        %v5180 = vmax.f32 %v5177, 0.0
        %v5181 = vld [vmem:[%s1029] sm:$0xff]
        %v5182 = vld [vmem:[%s1029 + $0x8] sm:$0xff]
        %v5183 = vld [vmem:[%s1029 + $0x10] sm:$0xff]
        %v5184 = vld [vmem:[%s1029 + $0x18] sm:$0xff]
        %v5185 = vld [vmem:[%s1029 + $0x20] sm:$0xff]
        %v5186 = vld [vmem:[%s1029 + $0x28] sm:$0xff]
        %v5187 = vld [vmem:[%s1029 + $0x30] sm:$0xff]
        %v5188 = vld [vmem:[%s1029 + $0x38] sm:$0xff]
        %v5189 = vld [vmem:[%s1032] sm:$0x1]
        %v5191 = vlaneseq
        %v5192 = vshrl.u32 %v5191, 7
        %v5193 = vsub.s32 0, %v5192
        %v5194 = vrot.slane %v5189, %v5193
        %vm5196 = vcmask 523264
        %v5198 = vsel %vm5196, %v5180, 0
        %5200 = vmatprep.subr.mxu0 0.0
        %5201 = vmatpush1.msra.mxu0 %v5181
        %5202 = vmatprep.subr.mxu0 0.0
        %5203 = vmatpush1.msra.mxu0 %v5182
        %5204 = vmatprep.subr.mxu0 0.0
        %5205 = vmatpush1.msra.mxu0 %v5183
        %5206 = vmatprep.subr.mxu0 0.0
        %5207 = vmatpush1.msra.mxu0 %v5184
        %5208 = vmatprep.subr.mxu0 0.0
        %5209 = vmatpush1.msra.mxu0 %v5185
        %5210 = vmatprep.subr.mxu0 0.0
        %5211 = vmatpush1.msra.mxu0 %v5186
        %5212 = vmatprep.subr.mxu0 0.0
        %5213 = vmatpush1.msra.mxu0 %v5187
        %5214 = vmatprep.subr.mxu0 0.0
        %5215 = vmatpush1.msra.mxu0 %v5188
        %5216 = vmatprep.subr.mxu0 0.0
        %5217 = vmatpush1.msra.mxu0 0.0
        %5218 = vmatprep.subr.mxu0 0.0
        %5219 = vmatpush1.msra.mxu0 0.0
        %5220 = vmatprep.subr.mxu0 0.0
        %5221 = vmatpush1.msra.mxu0 0.0
        %5222 = vmatprep.subr.mxu0 0.0
        %5223 = vmatpush1.msra.mxu0 0.0
        %5224 = vmatprep.subr.mxu0 0.0
        %5225 = vmatpush1.msra.mxu0 0.0
        %5226 = vmatprep.subr.mxu0 0.0
        %5227 = vmatpush1.msra.mxu0 0.0
        %5228 = vmatprep.subr.mxu0 0.0
        %5229 = vmatpush1.msra.mxu0 0.0
        %5230 = vmatprep.subr.mxu0 0.0
        %5231 = vmatpush1.msra.mxu0 0.0
        %5232 = vmatprep.subr.mxu0 0.0
        %5233 = vmatpush1.msra.mxu0 0.0
        %5234 = vmatprep.subr.mxu0 0.0
        %5235 = vmatpush1.msra.mxu0 0.0
        %5236 = vmatprep.subr.mxu0 0.0
        %5237 = vmatpush1.msra.mxu0 0.0
        %5238 = vmatprep.subr.mxu0 0.0
        %5239 = vmatpush1.msra.mxu0 0.0
        %5240 = vmatprep.subr.mxu0 0.0
        %5241 = vmatpush1.msra.mxu0 0.0
        %5242 = vmatprep.subr.mxu0 0.0
        %5243 = vmatpush1.msra.mxu0 0.0
        %5244 = vmatprep.subr.mxu0 0.0
        %5245 = vmatpush1.msra.mxu0 0.0
        %5246 = vmatprep.subr.mxu0 0.0
        %5247 = vmatpush1.msra.mxu0 0.0
        %5248 = vmatprep.subr.mxu0 0.0
        %5249 = vmatpush1.msra.mxu0 0.0
        %5250 = vmatprep.subr.mxu0 0.0
        %5251 = vmatpush1.msra.mxu0 0.0
        %5252 = vmatprep.subr.mxu0 0.0
        %5253 = vmatpush1.msra.mxu0 0.0
        %5254 = vmatprep.subr.mxu0 0.0
        %5255 = vmatpush1.msra.mxu0 0.0
        %5256 = vmatprep.subr.mxu0 0.0
        %5257 = vmatpush1.msra.mxu0 0.0
        %5258 = vmatprep.subr.mxu0 0.0
        %5259 = vmatpush1.msra.mxu0 0.0
        %5260 = vmatprep.subr.mxu0 0.0
        %5261 = vmatpush1.msra.mxu0 0.0
        %5262 = vmatprep.subr.mxu0 0.0
        %5263 = vmatpush1.msra.mxu0 0.0
        %5264 = vmatprep.mubr.f32.mxu0 0.0
        %5265 = vmatmul.mubr.f32.gmra.mrb[0].mxu0 %v5198
        %v5266 = vpop.f32.mrb[0].mxu0
        %v5267 = vadd.f32 %v5194, %v5266
        %v5268 = vpop.f32.mrb[0].mxu0
        %5269 = vdwg.mxu0
        %v5270 = vadd.f32 %v5267, %v5095
        %v5271 = vsel %vm1062, %v5270, 0.0
        %5272 = vadd.xlane.f32.xlu0 %v5271
        %v5273 = vpop.xlane.xlu0 %5272
        %v5274 = vmul.f32 %v5273, %v3011
        %v5275 = vsub.f32 %v5270, %v5274
        %v5276 = vmul.f32 %v5275, %v5275
        %v5277 = vsel %vm1062, %v5276, 0.0
        %5278 = vadd.xlane.f32.xlu0 %v5277
        %v5279 = vpop.xlane.xlu0 %5278
        %v5280 = vmul.f32 %v5279, %v3011
        %v5281 = vadd.f32 %v5280, 1e-05
        %v5282 = vrsqrt.pop %v5281
        %v5283 = vmul.f32 %v5275, %v5282
        %v5284 = vld [vmem:[%s1035] sm:$0x1]
        %v5286 = vlaneseq
        %v5287 = vshrl.u32 %v5286, 7
        %v5288 = vsub.s32 0, %v5287
        %v5289 = vrot.slane %v5284, %v5288
        %v5291 = vmul.f32 %v5283, %v5289
        %v5292 = vld [vmem:[%s1038] sm:$0x1]
        %v5294 = vlaneseq
        %v5295 = vshrl.u32 %v5294, 7
        %v5296 = vsub.s32 0, %v5295
        %v5297 = vrot.slane %v5292, %v5296
        %v5299 = vadd.f32 %v5291, %v5297
        %5300 = vst.msk [vmem:[#allocation2] sm:$0xff] %vm1062, %v5299
        %5301 = vst.msk [vmem:[%s953] sm:$0xff] %vm1062, %v5299
        %s5302 = sand.u32 %s628, 1
        %s5303 = scalar_lea.sflag [#allocation4], %s5302
        %s5304 = sand.u32 %s628, 1
        %s5305 = smul.addr %s5304, 8
        %s5306 = scalar_lea.vmem [#allocation3], %s5305
        // Predicated region
        $region113: #{decoder_forward.1} parent=107 // pred_check
          %p5307 = pneg %p638
        $region114: #{decoder_forward.1} parent=107 // pred_check_branch
          %5309 = sbr.rel (%p5307) target = $region116
        $region115: #{decoder_forward.1} parent=107 // pred_region
          %s5311 = ssub.s32 128, 128
          %5312 = vsyncadd %s5303, %s5311
          %s5313 = smul.addr %s40, 128
          %s5314 = scalar_lea.hbm %s22, %s5313
          %s5316 = sshll.u32 %s5306, 4
          %s5317 = int_to_ptr.vmem [resolvable:$true] %s5316
          %5319 = dma.vmem_to_hbm [thread:$0]  %s5317, 128, %s5314, %s5303
        $region116: #{decoder_forward.1} parent=107 // pred_fallthru
          _
      $region108: #{decoder_forward.1} parent=5 // pred_fallthru
        _
      %p5320 = scmp.le.s32.totalorder 2, %s31
      // Predicated region
      $region117: #{decoder_forward.1} parent=5 // pred_check
        %p5321 = pneg %p5320
      $region118: #{decoder_forward.1} parent=5 // pred_check_branch
        %5323 = sbr.rel (%p5321) target = $region120
      $region119: #{decoder_forward.1} parent=5 // pred_region
        %s5324 = ssub.s32 %s31, 2
        // Predicated region
        $region121: #{decoder_forward.1} parent=119 // pred_check
          %p5325 = pneg %p644
        $region122: #{decoder_forward.1} parent=119 // pred_check_branch
          %5327 = sbr.rel (%p5325) target = $region124
        $region123: #{decoder_forward.1} parent=119 // pred_region
          %s5328 = sand.u32 %s629, 1
          %s5329 = scalar_lea.sflag [#allocation4], %s5328
          %s5330 = sand.u32 %s629, 1
          %s5331 = smul.addr %s5330, 8
          %s5332 = scalar_lea.vmem [#allocation3], %s5331
          %5333 = dma.done %s5329, 128
        $region124: #{decoder_forward.1} parent=119 // pred_fallthru
          _
      $region120: #{decoder_forward.1} parent=5 // pred_fallthru
        _
    $region6: #{decoder_forward.1} parent=1 // loop_footer
      %s35 = sadd.s32 1, %s31
    $region7: #{decoder_forward.1} parent=1 // loop_footer_branch
      %30 = sbr.rel target = $region3
    $region8: #{decoder_forward.1} parent=1 // loop_exit
      _
    %5334 = vsyncpa [#allocation4], 1
    %s5335 = scalar_lea.sflag [#allocation4], 1
    %5336 = vsyncpa %s5335, 1

</llo_original>
